<compile_context>
chip_gen: v7x
topology: tpu7x:2x2x1
jax: 0.10.0
libtpu: 0.0.40
codegen_flags: <defaults>
</compile_context>

<pallas_src>
import jax
import jax.numpy as jnp
from jax.experimental import pallas as pl
from jax.experimental.pallas import tpu as pltpu


# ----------------------------------------------------------------------------
# Model configuration (small, consistent with the module's shape algebra)
# ----------------------------------------------------------------------------
SEQ_LEN = 8                 # R2D2 unroll length handled by one kernel launch
BATCH = 16                  # environments
BB = 8                      # batch rows per grid block (>= 8 f32 sublanes)
NB = BATCH // BB
N_ACT = 4
NUM_MIXTURES = 8            # model_hypr['num_mixtures']
HIDDEN = 128                # model_hypr['lstm_hidden_units'] (multiple of 128)
OBS_SHAPE = (1, 36, 36)     # (C, H, W); 36 -> 8 -> 3 -> 1 through the conv stack
C_IN, OBS_H, OBS_W = OBS_SHAPE

K1, S1 = 8, 4
K2, S2 = 4, 2
K3, S3 = 3, 1
C1, C2, C3 = 32, 64, 64

EXTRA = N_ACT + 1 + 1 + NUM_MIXTURES        # 14 per-step non-conv features

assert HIDDEN % 128 == 0, "gate slices assume a lane-aligned hidden size"
assert BATCH % BB == 0


def _conv_out(size, k, s):
    return (size - k) // s + 1


H1 = _conv_out(OBS_H, K1, S1)      # 8
H2 = _conv_out(H1, K2, S2)         # 3
H3 = _conv_out(H2, K3, S3)         # 1
assert H3 == 1, "flatten ordering assumes a 1x1 conv3 output map"

OFF2 = K2 * K2                     # 16 conv2 kernel offsets
POS2 = H2 * H2                     # 9 conv2 output positions
OFF3 = K3 * K3                     # 9 conv3 kernel offsets (== POS2)
PATCH_DIM = C_IN * K1 * K1         # 64
PATCH_ROWS = OFF2 * POS2 * BB      # 1152 duplicated conv1 rows per (batch-block, t)
ROWS2 = POS2 * BB                  # 72 rows per conv2 offset block
CONV_FEAT = H3 * H3 * C3           # 64 = flatten() width feeding the LSTM


def _sigmoid(x):
    # 0.5*(1+tanh(x/2)) == sigmoid(x): tanh runs on the EUP, numerically stable.
    return 0.5 * jnp.tanh(0.5 * x) + 0.5


# ----------------------------------------------------------------------------
# XLA glue: duplicated/ordered im2col of the raw observation (runs once, before
# the single launch).  Row ordering inside each (t, batch-block) tile is
# (conv2-offset, conv2-position, batch) so conv2/conv3 become static row slices
# in-kernel.
# ----------------------------------------------------------------------------
def _build_conv_patches(obs_seq):
    T, B = obs_seq.shape[0], obs_seq.shape[1]
    nb = B // BB
    x = obs_seq.reshape(T * B, C_IN, OBS_H, OBS_W)

    # conv1 im2col at every conv1 output position: (TB, H1, W1, C*K1*K1)
    cols = []
    for di in range(K1):
        for dj in range(K1):
            cols.append(x[:, :, di:di + S1 * H1:S1, dj:dj + S1 * H1:S1])
    p = jnp.stack(cols, axis=-1)                       # (TB, C, H1, W1, K1*K1)
    p = p.transpose(0, 2, 3, 1, 4)                     # (TB, H1, W1, C, K1*K1)
    p = p.reshape(T * B, H1, H1, PATCH_DIM)

    # duplicate per (conv2-offset, conv2-position); rows ordered (off2, pos2, b)
    rows = []
    for d2i in range(K2):
        for d2j in range(K2):
            for i2 in range(H2):
                for j2 in range(H2):
                    rows.append(p[:, S2 * i2 + d2i, S2 * j2 + d2j, :])  # (TB, 64)
    g = jnp.stack(rows, axis=0)                        # (OFF2*POS2, T*B, 64)
    g = g.reshape(OFF2 * POS2, T, nb, BB, PATCH_DIM)
    g = g.transpose(1, 2, 0, 3, 4)                     # (T, nb, OFF2*POS2, BB, 64)
    return g.reshape(T, nb, PATCH_ROWS, PATCH_DIM).astype(jnp.bfloat16)


# ----------------------------------------------------------------------------
# The single fused, sequence-rolled Pallas kernel
# ----------------------------------------------------------------------------
def _fused_step_kernel(patches_ref, extra_ref, hx_ref, cx_ref,
                       w1_ref, b1_ref, w2_ref, b2_ref, w3_ref, b3_ref,
                       wgx_ref, wge_ref, whh_ref, bg_ref,
                       h1w_ref, h1b_ref, wq_ref, bq_ref,
                       q_ref, hc_ref,
                       h_scr, c_scr):
    f32, bf16 = jnp.float32, jnp.bfloat16
    t = pl.program_id(1)

    # init the recurrent carry from the provided initial state on the first step
    @pl.when(t == 0)
    def _():
        h_scr[...] = hx_ref[...]
        c_scr[...] = cx_ref[...]

    # --- conv1 + ReLU: one tall im2col matmul (duplicated rows) ------------
    x1 = jnp.dot(patches_ref[...], w1_ref[...], preferred_element_type=f32)
    x1 = jnp.maximum(x1 + b1_ref[...], 0.0)            # (PATCH_ROWS, 32) f32

    # --- conv2 + ReLU: static sublane-aligned row slices per kernel offset --
    acc2 = jnp.zeros((ROWS2, C2), f32)
    for off in range(OFF2):
        xo = x1[off * ROWS2:(off + 1) * ROWS2, :].astype(bf16)
        acc2 = acc2 + jnp.dot(xo, w2_ref[off], preferred_element_type=f32)
    y2 = jnp.maximum(acc2 + b2_ref[...], 0.0)           # (POS2*BB, 64), (pos2, b)

    # --- conv3 + ReLU: 3x3 over the 3x3 map -> one output position ----------
    acc3 = jnp.zeros((BB, C3), f32)
    for off in range(OFF3):
        yo = y2[off * BB:(off + 1) * BB, :].astype(bf16)
        acc3 = acc3 + jnp.dot(yo, w3_ref[off], preferred_element_type=f32)
    x3 = jnp.maximum(acc3 + b3_ref[...], 0.0)            # (BB, 64) == flatten()

    # --- LSTMCell step (h/c carried in VMEM scratch) -------------------------
    h_prev = h_scr[...]
    c_prev = c_scr[...]
    gates = (jnp.dot(x3.astype(bf16), wgx_ref[...], preferred_element_type=f32)
             + jnp.dot(extra_ref[...].astype(bf16), wge_ref[...],
                       preferred_element_type=f32)
             + jnp.dot(h_prev.astype(bf16), whh_ref[...],
                       preferred_element_type=f32)
             + bg_ref[...])                               # (BB, 4*HIDDEN)
    i = _sigmoid(gates[:, 0 * HIDDEN:1 * HIDDEN])
    f = _sigmoid(gates[:, 1 * HIDDEN:2 * HIDDEN])
    g = jnp.tanh(gates[:, 2 * HIDDEN:3 * HIDDEN])
    o = _sigmoid(gates[:, 3 * HIDDEN:4 * HIDDEN])
    c_new = f * c_prev + i * g
    h_new = o * jnp.tanh(c_new)
    h_scr[...] = h_new
    c_scr[...] = c_new
    hc_ref[:, 0:HIDDEN] = h_new                           # resident output block;
    hc_ref[:, HIDDEN:2 * HIDDEN] = c_new                  # written back once per nb

    # --- dueling head: layer-1 fused [adv1|val1], layer-2 + mean folded ------
    h1 = jnp.dot(h_new.astype(bf16), h1w_ref[...], preferred_element_type=f32)
    h1 = jnp.maximum(h1 + h1b_ref[...], 0.0)              # (BB, 1024)
    q_ref[...] = (jnp.dot(h1.astype(bf16), wq_ref[...],
                          preferred_element_type=f32) + bq_ref[...])  # (BB, 128)


# ----------------------------------------------------------------------------
# Forward pass wrapper: im2col / feature prep in XLA, everything else in ONE
# sequence-rolled pallas_call.  Each grid step (nb, t) is exactly the module's
# forward() applied to step t of batch-block nb, with h/c carried in VMEM.
# ----------------------------------------------------------------------------
def dueling_lstm_forward(packed, obs_seq, prev_act, int_rew, ext_rew, beta, hx, cx):
    T, B = obs_seq.shape[0], obs_seq.shape[1]
    assert B % BB == 0
    nb = B // BB

    patches = _build_conv_patches(obs_seq)                 # (T, nb, 1152, 64) bf16
    act_oh = jax.nn.one_hot(prev_act, N_ACT, dtype=jnp.float32)
    extra = jnp.concatenate([act_oh, int_rew, ext_rew, beta], axis=-1)
    extra = extra.reshape(T, nb, BB, EXTRA)
    hx_b = hx.reshape(nb, BB, HIDDEN)
    cx_b = cx.reshape(nb, BB, HIDDEN)

    def const_spec(shape):
        zeros = (0,) * len(shape)
        return pl.BlockSpec(shape, lambda nbi, ti, _z=zeros: _z)

    in_specs = [
        pl.BlockSpec((None, None, PATCH_ROWS, PATCH_DIM),
                     lambda nbi, ti: (ti, nbi, 0, 0)),        # patches (per step)
        pl.BlockSpec((None, None, BB, EXTRA),
                     lambda nbi, ti: (ti, nbi, 0, 0)),        # extra features
        pl.BlockSpec((None, BB, HIDDEN), lambda nbi, ti: (nbi, 0, 0)),   # hx
        pl.BlockSpec((None, BB, HIDDEN), lambda nbi, ti: (nbi, 0, 0)),   # cx
        const_spec((PATCH_DIM, C1)),                          # w1
        const_spec((1, C1)),                                  # b1
        const_spec((OFF2, C1, C2)),                           # w2
        const_spec((1, C2)),                                  # b2
        const_spec((OFF3, C2, C3)),                           # w3
        const_spec((1, C3)),                                  # b3
        const_spec((CONV_FEAT, 4 * HIDDEN)),                  # wgx
        const_spec((EXTRA, 4 * HIDDEN)),                      # wge
        const_spec((HIDDEN, 4 * HIDDEN)),                     # whh
        const_spec((1, 4 * HIDDEN)),                          # bg
        const_spec((HIDDEN, 1024)),                           # h1w
        const_spec((1, 1024)),                                # h1b
        const_spec((1024, 128)),                              # wq (padded)
        const_spec((1, 128)),                                 # bq (padded)
    ]
    out_specs = (
        pl.BlockSpec((None, None, BB, 128), lambda nbi, ti: (ti, nbi, 0, 0)),
        pl.BlockSpec((None, BB, 2 * HIDDEN), lambda nbi, ti: (nbi, 0, 0)),
    )
    out_shape = (
        jax.ShapeDtypeStruct((T, nb, BB, 128), jnp.float32),      # q (padded lanes)
        jax.ShapeDtypeStruct((nb, BB, 2 * HIDDEN), jnp.float32),  # final [h|c]
    )
    scratch_shapes = [pltpu.VMEM((BB, HIDDEN), jnp.float32),
                      pltpu.VMEM((BB, HIDDEN), jnp.float32)]

    flops_per_step = (2 * PATCH_ROWS * PATCH_DIM * C1
                      + OFF2 * 2 * ROWS2 * C1 * C2
                      + OFF3 * 2 * BB * C2 * C3
                      + 2 * BB * (CONV_FEAT + EXTRA + HIDDEN) * 4 * HIDDEN
                      + 2 * BB * HIDDEN * 1024
                      + 2 * BB * 1024 * 128)
    bytes_accessed = int(patches.nbytes + extra.nbytes + hx_b.nbytes + cx_b.nbytes
                         + sum(int(v.nbytes) for v in packed.values())
                         + T * nb * BB * 128 * 4 + nb * BB * 2 * HIDDEN * 4)
    cost = pl.CostEstimate(flops=int(nb * T * flops_per_step),
                           transcendentals=int(nb * T * BB * 5 * HIDDEN),
                           bytes_accessed=bytes_accessed)

    q_pad, hc = pl.pallas_call(
        _fused_step_kernel,
        out_shape=out_shape,
        grid=(nb, T),
        in_specs=in_specs,
        out_specs=out_specs,
        scratch_shapes=scratch_shapes,
        compiler_params=pltpu.CompilerParams(
            dimension_semantics=("parallel", "arbitrary")),
        cost_estimate=cost,
    )(patches, extra, hx_b, cx_b,
      packed['w1'], packed['b1'], packed['w2'], packed['b2'],
      packed['w3'], packed['b3'],
      packed['wgx'], packed['wge'], packed['whh'], packed['bg'],
      packed['h1w'], packed['h1b'], packed['wq'], packed['bq'])

    q = q_pad.reshape(T, B, 128)[:, :, :N_ACT]
    hc = hc.reshape(B, 2 * HIDDEN)
    return q, hc[:, :HIDDEN], hc[:, HIDDEN:]


# ----------------------------------------------------------------------------
# One-time weight packing (NOT on the traced per-step path); bf16 matmul weights
# ----------------------------------------------------------------------------
def pack_params(p):
    bf16 = jnp.bfloat16
    w1 = p['conv1_w'].reshape(C1, PATCH_DIM).T.astype(bf16)
    b1 = p['conv1_b'].reshape(1, C1)
    w2 = jnp.transpose(p['conv2_w'], (2, 3, 1, 0)).reshape(OFF2, C1, C2).astype(bf16)
    b2 = p['conv2_b'].reshape(1, C2)
    w3 = jnp.transpose(p['conv3_w'], (2, 3, 1, 0)).reshape(OFF3, C2, C3).astype(bf16)
    b3 = p['conv3_b'].reshape(1, C3)

    # LSTM: split w_ih by [conv-features | extra-features]; keep w_hh separate
    wgx = p['w_ih'][:CONV_FEAT, :].astype(bf16)
    wge = p['w_ih'][CONV_FEAT:, :].astype(bf16)
    whh = p['w_hh'].astype(bf16)
    bg = (p['b_ih'] + p['b_hh']).reshape(1, -1)

    # dueling head layer-1 fused [adv1 | val1]
    h1w = jnp.concatenate([p['adv1_w'], p['val1_w']], axis=1).astype(bf16)
    h1b = jnp.concatenate([p['adv1_b'], p['val1_b']]).reshape(1, -1)

    # dueling head layer-2 + mean subtraction folded into one padded matmul:
    #   q = h1 @ Wq + bq, with Wq = [[adv2_w @ C], [val2_w . 1^T]],
    #   bq = adv2_b @ C + val2_b,  C = I - (1/n) 11^T   (exact identity)
    n = N_ACT
    cen = jnp.eye(n, dtype=jnp.float32) - jnp.full((n, n), 1.0 / n, jnp.float32)
    wq = jnp.concatenate([p['adv2_w'] @ cen, jnp.tile(p['val2_w'], (1, n))], axis=0)
    bq = p['adv2_b'] @ cen + p['val2_b']
    wq = jnp.pad(wq, ((0, 0), (0, 128 - n))).astype(bf16)          # (1024, 128)
    bq = jnp.pad(bq, (0, 128 - n)).reshape(1, 128)

    return dict(w1=w1, b1=b1, w2=w2, b2=b2, w3=w3, b3=b3,
                wgx=wgx, wge=wge, whh=whh, bg=bg,
                h1w=h1w, h1b=h1b, wq=wq, bq=bq)


# ----------------------------------------------------------------------------
# Pure-JAX f32 reference (module forward, looped over the sequence)
# ----------------------------------------------------------------------------
def reference_forward(params, obs, prev_act, int_rew, ext_rew, beta, hx, cx):
    def conv(x, w, b, s):
        y = jax.lax.conv_general_dilated(
            x, w, window_strides=(s, s), padding='VALID',
            dimension_numbers=('NCHW', 'OIHW', 'NCHW'))
        return jnp.maximum(y + b[None, :, None, None], 0.0)

    x = conv(obs, params['conv1_w'], params['conv1_b'], S1)
    x = conv(x, params['conv2_w'], params['conv2_b'], S2)
    x = conv(x, params['conv3_w'], params['conv3_b'], S3)
    B = obs.shape[0]
    x = x.reshape(B, -1)
    act_oh = jax.nn.one_hot(prev_act, N_ACT, dtype=jnp.float32)
    x = jnp.concatenate([x, act_oh, int_rew, ext_rew, beta], axis=1)
    gates = x @ params['w_ih'] + hx @ params['w_hh'] + params['b_ih'] + params['b_hh']
    i, f, g, o = jnp.split(gates, 4, axis=1)
    i, f, o = jax.nn.sigmoid(i), jax.nn.sigmoid(f), jax.nn.sigmoid(o)
    g = jnp.tanh(g)
    c = f * cx + i * g
    h = o * jnp.tanh(c)
    a = jnp.maximum(h @ params['adv1_w'] + params['adv1_b'], 0.0)
    adv = a @ params['adv2_w'] + params['adv2_b']
    v = jnp.maximum(h @ params['val1_w'] + params['val1_b'], 0.0)
    val = v @ params['val2_w'] + params['val2_b']
    return val + adv - jnp.mean(adv, axis=1, keepdims=True), h, c


def reference_sequence(params, obs_seq, act_seq, irew_seq, erew_seq, beta_seq, hx, cx):
    qs = []
    h, c = hx, cx
    for t in range(obs_seq.shape[0]):
        q, h, c = reference_forward(params, obs_seq[t], act_seq[t], irew_seq[t],
                                    erew_seq[t], beta_seq[t], h, c)
        qs.append(q)
    return jnp.stack(qs, axis=0), h, c


# ----------------------------------------------------------------------------
# Deterministic parameter construction (synthetic init, shapes match module)
# ----------------------------------------------------------------------------
def make_params(key):
    lstm_in = H3 * H3 * C3 + EXTRA
    keys = jax.random.split(key, 16)
    s = 0.05

    def rnd(k, shape):
        return s * jax.random.normal(k, shape, dtype=jnp.float32)

    return {
        'conv1_w': rnd(keys[0], (C1, C_IN, K1, K1)),
        'conv1_b': rnd(keys[1], (C1,)),
        'conv2_w': rnd(keys[2], (C2, C1, K2, K2)),
        'conv2_b': rnd(keys[3], (C2,)),
        'conv3_w': rnd(keys[4], (C3, C2, K3, K3)),
        'conv3_b': rnd(keys[5], (C3,)),
        # LSTMCell weights stored transposed: (in, 4*hidden), (hidden, 4*hidden)
        'w_ih': rnd(keys[6], (lstm_in, 4 * HIDDEN)),
        'w_hh': rnd(keys[7], (HIDDEN, 4 * HIDDEN)),
        'b_ih': rnd(keys[8], (4 * HIDDEN,)),
        'b_hh': rnd(keys[9], (4 * HIDDEN,)),
        'adv1_w': rnd(keys[10], (HIDDEN, 512)),
        'adv1_b': rnd(keys[11], (512,)),
        'adv2_w': 0.01 * rnd(keys[12], (512, N_ACT)),
        'adv2_b': jnp.zeros((N_ACT,), jnp.float32),
        'val1_w': rnd(keys[13], (HIDDEN, 512)),
        'val1_b': rnd(keys[14], (512,)),
        'val2_w': 0.01 * rnd(keys[15], (512, 1)),
        'val2_b': jnp.zeros((1,), jnp.float32),
    }


if __name__ == "__main__":
    key = jax.random.PRNGKey(0)
    pkey, okey, akey, ikey, ekey, bkey = jax.random.split(key, 6)

    params = make_params(pkey)
    packed = pack_params(params)           # one-time bf16 weight packing

    obs = jax.random.normal(okey, (SEQ_LEN, BATCH) + OBS_SHAPE, dtype=jnp.float32)
    prev_act = jax.random.randint(akey, (SEQ_LEN, BATCH), 0, N_ACT, dtype=jnp.int32)
    int_rew = jax.random.normal(ikey, (SEQ_LEN, BATCH, 1), dtype=jnp.float32)
    ext_rew = jax.random.normal(ekey, (SEQ_LEN, BATCH, 1), dtype=jnp.float32)
    beta_idx = jax.random.randint(bkey, (SEQ_LEN, BATCH), 0, NUM_MIXTURES,
                                  dtype=jnp.int32)
    beta = jax.nn.one_hot(beta_idx, NUM_MIXTURES, dtype=jnp.float32)
    hx = jnp.zeros((BATCH, HIDDEN), jnp.float32)
    cx = jnp.zeros((BATCH, HIDDEN), jnp.float32)

    fwd = jax.jit(dueling_lstm_forward)
    q, hx_new, cx_new = fwd(packed, obs, prev_act, int_rew, ext_rew, beta, hx, cx)
    jax.block_until_ready((q, hx_new, cx_new))

    # correctness vs. the f32 reference (kernel uses bf16 weights -> relaxed tol)
    q_ref, h_ref, c_ref = reference_sequence(
        params, obs, prev_act, int_rew, ext_rew, beta, hx, cx)
    assert q.shape == (SEQ_LEN, BATCH, N_ACT)
    assert jnp.allclose(q, q_ref, atol=3e-2, rtol=3e-2), "Pallas q mismatch"
    assert jnp.allclose(hx_new, h_ref, atol=3e-2, rtol=3e-2), "Pallas hx mismatch"
    assert jnp.allclose(cx_new, c_ref, atol=3e-2, rtol=3e-2), "Pallas cx mismatch"

    print("KERNEL_OK")
</pallas_src>

<mosaic_0001>
module attributes {stable_mosaic.version = 11 : i64} {
  func.func @_fused_step_kernel(%arg0: i32, %arg1: i32, %arg2: memref<1x1x1152x64xbf16, #tpu.memory_space<vmem>>, %arg3: memref<1x1x8x14xf32, #tpu.memory_space<vmem>>, %arg4: memref<1x8x128xf32, #tpu.memory_space<vmem>>, %arg5: memref<1x8x128xf32, #tpu.memory_space<vmem>>, %arg6: memref<64x32xbf16, #tpu.memory_space<vmem>>, %arg7: memref<1x32xf32, #tpu.memory_space<vmem>>, %arg8: memref<16x32x64xbf16, #tpu.memory_space<vmem>>, %arg9: memref<1x64xf32, #tpu.memory_space<vmem>>, %arg10: memref<9x64x64xbf16, #tpu.memory_space<vmem>>, %arg11: memref<1x64xf32, #tpu.memory_space<vmem>>, %arg12: memref<64x512xbf16, #tpu.memory_space<vmem>>, %arg13: memref<14x512xbf16, #tpu.memory_space<vmem>>, %arg14: memref<128x512xbf16, #tpu.memory_space<vmem>>, %arg15: memref<1x512xf32, #tpu.memory_space<vmem>>, %arg16: memref<128x1024xbf16, #tpu.memory_space<vmem>>, %arg17: memref<1x1024xf32, #tpu.memory_space<vmem>>, %arg18: memref<1024x128xbf16, #tpu.memory_space<vmem>>, %arg19: memref<1x128xf32, #tpu.memory_space<vmem>>, %arg20: memref<1x1x8x128xf32, #tpu.memory_space<vmem>>, %arg21: memref<1x8x256xf32, #tpu.memory_space<vmem>>, %arg22: memref<8x128xf32, #tpu.memory_space<vmem>>, %arg23: memref<8x128xf32, #tpu.memory_space<vmem>>) attributes {dimension_semantics = [#tpu.dimension_semantics<parallel>, #tpu.dimension_semantics<arbitrary>], iteration_bounds = array<i64: 2, 8>, scalar_prefetch = 0 : i64, scratch_operands = 2 : i64, tpu.core_type = #tpu.core_type<tc>, window_params = [{transform_indices = @transform_0, window_bounds = array<i64: 1, 1, 1152, 64>}, {transform_indices = @transform_1, window_bounds = array<i64: 1, 1, 8, 14>}, {transform_indices = @transform_2, window_bounds = array<i64: 1, 8, 128>}, {transform_indices = @transform_3, window_bounds = array<i64: 1, 8, 128>}, {pipeline_mode = #tpu.pipeline_mode<synchronous>, transform_indices = @transform_4, window_bounds = array<i64: 64, 32>}, {pipeline_mode = #tpu.pipeline_mode<synchronous>, transform_indices = @transform_5, window_bounds = array<i64: 1, 32>}, {pipeline_mode = #tpu.pipeline_mode<synchronous>, transform_indices = @transform_6, window_bounds = array<i64: 16, 32, 64>}, {pipeline_mode = #tpu.pipeline_mode<synchronous>, transform_indices = @transform_7, window_bounds = array<i64: 1, 64>}, {pipeline_mode = #tpu.pipeline_mode<synchronous>, transform_indices = @transform_8, window_bounds = array<i64: 9, 64, 64>}, {pipeline_mode = #tpu.pipeline_mode<synchronous>, transform_indices = @transform_9, window_bounds = array<i64: 1, 64>}, {pipeline_mode = #tpu.pipeline_mode<synchronous>, transform_indices = @transform_10, window_bounds = array<i64: 64, 512>}, {pipeline_mode = #tpu.pipeline_mode<synchronous>, transform_indices = @transform_11, window_bounds = array<i64: 14, 512>}, {pipeline_mode = #tpu.pipeline_mode<synchronous>, transform_indices = @transform_12, window_bounds = array<i64: 128, 512>}, {pipeline_mode = #tpu.pipeline_mode<synchronous>, transform_indices = @transform_13, window_bounds = array<i64: 1, 512>}, {pipeline_mode = #tpu.pipeline_mode<synchronous>, transform_indices = @transform_14, window_bounds = array<i64: 128, 1024>}, {pipeline_mode = #tpu.pipeline_mode<synchronous>, transform_indices = @transform_15, window_bounds = array<i64: 1, 1024>}, {pipeline_mode = #tpu.pipeline_mode<synchronous>, transform_indices = @transform_16, window_bounds = array<i64: 1024, 128>}, {pipeline_mode = #tpu.pipeline_mode<synchronous>, transform_indices = @transform_17, window_bounds = array<i64: 1, 128>}, {transform_indices = @transform_18, window_bounds = array<i64: 1, 1, 8, 128>}, {transform_indices = @transform_19, window_bounds = array<i64: 1, 8, 256>}]} {
    %c0_i32 = arith.constant 0 : i32
    %0 = arith.cmpi eq, %arg1, %c0_i32 : i32
    %1 = arith.extui %0 : i1 to i32
    %c0_i32_0 = arith.constant 0 : i32
    %2 = arith.cmpi ne, %1, %c0_i32_0 : i32
    scf.if %2 {
      %c0_154 = arith.constant 0 : index
      %c0_155 = arith.constant 0 : index
      %c0_156 = arith.constant 0 : index
      %248 = vector.load %arg4[%c0_154, %c0_155, %c0_156] : memref<1x8x128xf32, #tpu.memory_space<vmem>>, vector<1x8x128xf32>
      %249 = vector.shape_cast %248 : vector<1x8x128xf32> to vector<8x128xf32>
      %c0_157 = arith.constant 0 : index
      %c0_158 = arith.constant 0 : index
      %250 = vector.load %arg22[%c0_157, %c0_158] : memref<8x128xf32, #tpu.memory_space<vmem>>, vector<8x128xf32>
      tpu.vector_store %arg22[%c0_157, %c0_158], %249 {strides = array<i32>} : memref<8x128xf32, #tpu.memory_space<vmem>>, vector<8x128xf32>,
      %c0_159 = arith.constant 0 : index
      %c0_160 = arith.constant 0 : index
      %c0_161 = arith.constant 0 : index
      %251 = vector.load %arg5[%c0_159, %c0_160, %c0_161] : memref<1x8x128xf32, #tpu.memory_space<vmem>>, vector<1x8x128xf32>
      %252 = vector.shape_cast %251 : vector<1x8x128xf32> to vector<8x128xf32>
      %c0_162 = arith.constant 0 : index
      %c0_163 = arith.constant 0 : index
      %253 = vector.load %arg23[%c0_162, %c0_163] : memref<8x128xf32, #tpu.memory_space<vmem>>, vector<8x128xf32>
      tpu.vector_store %arg23[%c0_162, %c0_163], %252 {strides = array<i32>} : memref<8x128xf32, #tpu.memory_space<vmem>>, vector<8x128xf32>,
    } else {
    }
    %c0 = arith.constant 0 : index
    %c0_1 = arith.constant 0 : index
    %c0_2 = arith.constant 0 : index
    %c0_3 = arith.constant 0 : index
    %3 = vector.load %arg2[%c0, %c0_1, %c0_2, %c0_3] : memref<1x1x1152x64xbf16, #tpu.memory_space<vmem>>, vector<1x1x1152x64xbf16>
    %4 = vector.shape_cast %3 : vector<1x1x1152x64xbf16> to vector<1152x64xbf16>
    %c0_4 = arith.constant 0 : index
    %c0_5 = arith.constant 0 : index
    %5 = vector.load %arg6[%c0_4, %c0_5] : memref<64x32xbf16, #tpu.memory_space<vmem>>, vector<64x32xbf16>
    %cst = arith.constant dense<0.000000e+00> : vector<1152x32xf32>
    %6 = tpu.matmul %4, %5, %cst {dimension_numbers = #tpu.dot_dimension_numbers<[1], [0], [0], [1], [0, 0, 1, 1], [], []>} : vector<1152x64xbf16>, vector<64x32xbf16>, vector<1152x32xf32> -> vector<1152x32xf32>
    %c0_6 = arith.constant 0 : index
    %c0_7 = arith.constant 0 : index
    %7 = vector.load %arg7[%c0_6, %c0_7] : memref<1x32xf32, #tpu.memory_space<vmem>>, vector<1x32xf32>
    %8 = vector.broadcast %7 : vector<1x32xf32> to vector<1152x32xf32>
    %9 = arith.addf %6, %8 : vector<1152x32xf32>
    %cst_8 = arith.constant 0.000000e+00 : f32
    %10 = vector.broadcast %cst_8 : f32 to vector<1152x32xf32>
    %11 = arith.maximumf %9, %10 : vector<1152x32xf32>
    %cst_9 = arith.constant 0.000000e+00 : f32
    %12 = vector.broadcast %cst_9 : f32 to vector<72x64xf32>
    %13 = vector.extract_strided_slice %11 {offsets = [0, 0], sizes = [72, 32], strides = [1, 1]} : vector<1152x32xf32> to vector<72x32xf32>
    %14 = arith.truncf %13 : vector<72x32xf32> to vector<72x32xbf16>
    %c0_10 = arith.constant 0 : index
    %c0_11 = arith.constant 0 : index
    %c0_12 = arith.constant 0 : index
    %15 = vector.load %arg8[%c0_10, %c0_11, %c0_12] : memref<16x32x64xbf16, #tpu.memory_space<vmem>>, vector<1x32x64xbf16>
    %16 = vector.shape_cast %15 : vector<1x32x64xbf16> to vector<32x64xbf16>
    %cst_13 = arith.constant dense<0.000000e+00> : vector<72x64xf32>
    %17 = tpu.matmul %14, %16, %cst_13 {dimension_numbers = #tpu.dot_dimension_numbers<[1], [0], [0], [1], [0, 0, 1, 1], [], []>} : vector<72x32xbf16>, vector<32x64xbf16>, vector<72x64xf32> -> vector<72x64xf32>
    %18 = arith.addf %12, %17 : vector<72x64xf32>
    %19 = vector.extract_strided_slice %11 {offsets = [72, 0], sizes = [72, 32], strides = [1, 1]} : vector<1152x32xf32> to vector<72x32xf32>
    %20 = arith.truncf %19 : vector<72x32xf32> to vector<72x32xbf16>
    %c1 = arith.constant 1 : index
    %c0_14 = arith.constant 0 : index
    %c0_15 = arith.constant 0 : index
    %21 = vector.load %arg8[%c1, %c0_14, %c0_15] : memref<16x32x64xbf16, #tpu.memory_space<vmem>>, vector<1x32x64xbf16>
    %22 = vector.shape_cast %21 : vector<1x32x64xbf16> to vector<32x64xbf16>
    %cst_16 = arith.constant dense<0.000000e+00> : vector<72x64xf32>
    %23 = tpu.matmul %20, %22, %cst_16 {dimension_numbers = #tpu.dot_dimension_numbers<[1], [0], [0], [1], [0, 0, 1, 1], [], []>} : vector<72x32xbf16>, vector<32x64xbf16>, vector<72x64xf32> -> vector<72x64xf32>
    %24 = arith.addf %18, %23 : vector<72x64xf32>
    %25 = vector.extract_strided_slice %11 {offsets = [144, 0], sizes = [72, 32], strides = [1, 1]} : vector<1152x32xf32> to vector<72x32xf32>
    %26 = arith.truncf %25 : vector<72x32xf32> to vector<72x32xbf16>
    %c2 = arith.constant 2 : index
    %c0_17 = arith.constant 0 : index
    %c0_18 = arith.constant 0 : index
    %27 = vector.load %arg8[%c2, %c0_17, %c0_18] : memref<16x32x64xbf16, #tpu.memory_space<vmem>>, vector<1x32x64xbf16>
    %28 = vector.shape_cast %27 : vector<1x32x64xbf16> to vector<32x64xbf16>
    %cst_19 = arith.constant dense<0.000000e+00> : vector<72x64xf32>
    %29 = tpu.matmul %26, %28, %cst_19 {dimension_numbers = #tpu.dot_dimension_numbers<[1], [0], [0], [1], [0, 0, 1, 1], [], []>} : vector<72x32xbf16>, vector<32x64xbf16>, vector<72x64xf32> -> vector<72x64xf32>
    %30 = arith.addf %24, %29 : vector<72x64xf32>
    %31 = vector.extract_strided_slice %11 {offsets = [216, 0], sizes = [72, 32], strides = [1, 1]} : vector<1152x32xf32> to vector<72x32xf32>
    %32 = arith.truncf %31 : vector<72x32xf32> to vector<72x32xbf16>
    %c3 = arith.constant 3 : index
    %c0_20 = arith.constant 0 : index
    %c0_21 = arith.constant 0 : index
    %33 = vector.load %arg8[%c3, %c0_20, %c0_21] : memref<16x32x64xbf16, #tpu.memory_space<vmem>>, vector<1x32x64xbf16>
    %34 = vector.shape_cast %33 : vector<1x32x64xbf16> to vector<32x64xbf16>
    %cst_22 = arith.constant dense<0.000000e+00> : vector<72x64xf32>
    %35 = tpu.matmul %32, %34, %cst_22 {dimension_numbers = #tpu.dot_dimension_numbers<[1], [0], [0], [1], [0, 0, 1, 1], [], []>} : vector<72x32xbf16>, vector<32x64xbf16>, vector<72x64xf32> -> vector<72x64xf32>
    %36 = arith.addf %30, %35 : vector<72x64xf32>
    %37 = vector.extract_strided_slice %11 {offsets = [288, 0], sizes = [72, 32], strides = [1, 1]} : vector<1152x32xf32> to vector<72x32xf32>
    %38 = arith.truncf %37 : vector<72x32xf32> to vector<72x32xbf16>
    %c4 = arith.constant 4 : index
    %c0_23 = arith.constant 0 : index
    %c0_24 = arith.constant 0 : index
    %39 = vector.load %arg8[%c4, %c0_23, %c0_24] : memref<16x32x64xbf16, #tpu.memory_space<vmem>>, vector<1x32x64xbf16>
    %40 = vector.shape_cast %39 : vector<1x32x64xbf16> to vector<32x64xbf16>
    %cst_25 = arith.constant dense<0.000000e+00> : vector<72x64xf32>
    %41 = tpu.matmul %38, %40, %cst_25 {dimension_numbers = #tpu.dot_dimension_numbers<[1], [0], [0], [1], [0, 0, 1, 1], [], []>} : vector<72x32xbf16>, vector<32x64xbf16>, vector<72x64xf32> -> vector<72x64xf32>
    %42 = arith.addf %36, %41 : vector<72x64xf32>
    %43 = vector.extract_strided_slice %11 {offsets = [360, 0], sizes = [72, 32], strides = [1, 1]} : vector<1152x32xf32> to vector<72x32xf32>
    %44 = arith.truncf %43 : vector<72x32xf32> to vector<72x32xbf16>
    %c5 = arith.constant 5 : index
    %c0_26 = arith.constant 0 : index
    %c0_27 = arith.constant 0 : index
    %45 = vector.load %arg8[%c5, %c0_26, %c0_27] : memref<16x32x64xbf16, #tpu.memory_space<vmem>>, vector<1x32x64xbf16>
    %46 = vector.shape_cast %45 : vector<1x32x64xbf16> to vector<32x64xbf16>
    %cst_28 = arith.constant dense<0.000000e+00> : vector<72x64xf32>
    %47 = tpu.matmul %44, %46, %cst_28 {dimension_numbers = #tpu.dot_dimension_numbers<[1], [0], [0], [1], [0, 0, 1, 1], [], []>} : vector<72x32xbf16>, vector<32x64xbf16>, vector<72x64xf32> -> vector<72x64xf32>
    %48 = arith.addf %42, %47 : vector<72x64xf32>
    %49 = vector.extract_strided_slice %11 {offsets = [432, 0], sizes = [72, 32], strides = [1, 1]} : vector<1152x32xf32> to vector<72x32xf32>
    %50 = arith.truncf %49 : vector<72x32xf32> to vector<72x32xbf16>
    %c6 = arith.constant 6 : index
    %c0_29 = arith.constant 0 : index
    %c0_30 = arith.constant 0 : index
    %51 = vector.load %arg8[%c6, %c0_29, %c0_30] : memref<16x32x64xbf16, #tpu.memory_space<vmem>>, vector<1x32x64xbf16>
    %52 = vector.shape_cast %51 : vector<1x32x64xbf16> to vector<32x64xbf16>
    %cst_31 = arith.constant dense<0.000000e+00> : vector<72x64xf32>
    %53 = tpu.matmul %50, %52, %cst_31 {dimension_numbers = #tpu.dot_dimension_numbers<[1], [0], [0], [1], [0, 0, 1, 1], [], []>} : vector<72x32xbf16>, vector<32x64xbf16>, vector<72x64xf32> -> vector<72x64xf32>
    %54 = arith.addf %48, %53 : vector<72x64xf32>
    %55 = vector.extract_strided_slice %11 {offsets = [504, 0], sizes = [72, 32], strides = [1, 1]} : vector<1152x32xf32> to vector<72x32xf32>
    %56 = arith.truncf %55 : vector<72x32xf32> to vector<72x32xbf16>
    %c7 = arith.constant 7 : index
    %c0_32 = arith.constant 0 : index
    %c0_33 = arith.constant 0 : index
    %57 = vector.load %arg8[%c7, %c0_32, %c0_33] : memref<16x32x64xbf16, #tpu.memory_space<vmem>>, vector<1x32x64xbf16>
    %58 = vector.shape_cast %57 : vector<1x32x64xbf16> to vector<32x64xbf16>
    %cst_34 = arith.constant dense<0.000000e+00> : vector<72x64xf32>
    %59 = tpu.matmul %56, %58, %cst_34 {dimension_numbers = #tpu.dot_dimension_numbers<[1], [0], [0], [1], [0, 0, 1, 1], [], []>} : vector<72x32xbf16>, vector<32x64xbf16>, vector<72x64xf32> -> vector<72x64xf32>
    %60 = arith.addf %54, %59 : vector<72x64xf32>
    %61 = vector.extract_strided_slice %11 {offsets = [576, 0], sizes = [72, 32], strides = [1, 1]} : vector<1152x32xf32> to vector<72x32xf32>
    %62 = arith.truncf %61 : vector<72x32xf32> to vector<72x32xbf16>
    %c8 = arith.constant 8 : index
    %c0_35 = arith.constant 0 : index
    %c0_36 = arith.constant 0 : index
    %63 = vector.load %arg8[%c8, %c0_35, %c0_36] : memref<16x32x64xbf16, #tpu.memory_space<vmem>>, vector<1x32x64xbf16>
    %64 = vector.shape_cast %63 : vector<1x32x64xbf16> to vector<32x64xbf16>
    %cst_37 = arith.constant dense<0.000000e+00> : vector<72x64xf32>
    %65 = tpu.matmul %62, %64, %cst_37 {dimension_numbers = #tpu.dot_dimension_numbers<[1], [0], [0], [1], [0, 0, 1, 1], [], []>} : vector<72x32xbf16>, vector<32x64xbf16>, vector<72x64xf32> -> vector<72x64xf32>
    %66 = arith.addf %60, %65 : vector<72x64xf32>
    %67 = vector.extract_strided_slice %11 {offsets = [648, 0], sizes = [72, 32], strides = [1, 1]} : vector<1152x32xf32> to vector<72x32xf32>
    %68 = arith.truncf %67 : vector<72x32xf32> to vector<72x32xbf16>
    %c9 = arith.constant 9 : index
    %c0_38 = arith.constant 0 : index
    %c0_39 = arith.constant 0 : index
    %69 = vector.load %arg8[%c9, %c0_38, %c0_39] : memref<16x32x64xbf16, #tpu.memory_space<vmem>>, vector<1x32x64xbf16>
    %70 = vector.shape_cast %69 : vector<1x32x64xbf16> to vector<32x64xbf16>
    %cst_40 = arith.constant dense<0.000000e+00> : vector<72x64xf32>
    %71 = tpu.matmul %68, %70, %cst_40 {dimension_numbers = #tpu.dot_dimension_numbers<[1], [0], [0], [1], [0, 0, 1, 1], [], []>} : vector<72x32xbf16>, vector<32x64xbf16>, vector<72x64xf32> -> vector<72x64xf32>
    %72 = arith.addf %66, %71 : vector<72x64xf32>
    %73 = vector.extract_strided_slice %11 {offsets = [720, 0], sizes = [72, 32], strides = [1, 1]} : vector<1152x32xf32> to vector<72x32xf32>
    %74 = arith.truncf %73 : vector<72x32xf32> to vector<72x32xbf16>
    %c10 = arith.constant 10 : index
    %c0_41 = arith.constant 0 : index
    %c0_42 = arith.constant 0 : index
    %75 = vector.load %arg8[%c10, %c0_41, %c0_42] : memref<16x32x64xbf16, #tpu.memory_space<vmem>>, vector<1x32x64xbf16>
    %76 = vector.shape_cast %75 : vector<1x32x64xbf16> to vector<32x64xbf16>
    %cst_43 = arith.constant dense<0.000000e+00> : vector<72x64xf32>
    %77 = tpu.matmul %74, %76, %cst_43 {dimension_numbers = #tpu.dot_dimension_numbers<[1], [0], [0], [1], [0, 0, 1, 1], [], []>} : vector<72x32xbf16>, vector<32x64xbf16>, vector<72x64xf32> -> vector<72x64xf32>
    %78 = arith.addf %72, %77 : vector<72x64xf32>
    %79 = vector.extract_strided_slice %11 {offsets = [792, 0], sizes = [72, 32], strides = [1, 1]} : vector<1152x32xf32> to vector<72x32xf32>
    %80 = arith.truncf %79 : vector<72x32xf32> to vector<72x32xbf16>
    %c11 = arith.constant 11 : index
    %c0_44 = arith.constant 0 : index
    %c0_45 = arith.constant 0 : index
    %81 = vector.load %arg8[%c11, %c0_44, %c0_45] : memref<16x32x64xbf16, #tpu.memory_space<vmem>>, vector<1x32x64xbf16>
    %82 = vector.shape_cast %81 : vector<1x32x64xbf16> to vector<32x64xbf16>
    %cst_46 = arith.constant dense<0.000000e+00> : vector<72x64xf32>
    %83 = tpu.matmul %80, %82, %cst_46 {dimension_numbers = #tpu.dot_dimension_numbers<[1], [0], [0], [1], [0, 0, 1, 1], [], []>} : vector<72x32xbf16>, vector<32x64xbf16>, vector<72x64xf32> -> vector<72x64xf32>
    %84 = arith.addf %78, %83 : vector<72x64xf32>
    %85 = vector.extract_strided_slice %11 {offsets = [864, 0], sizes = [72, 32], strides = [1, 1]} : vector<1152x32xf32> to vector<72x32xf32>
    %86 = arith.truncf %85 : vector<72x32xf32> to vector<72x32xbf16>
    %c12 = arith.constant 12 : index
    %c0_47 = arith.constant 0 : index
    %c0_48 = arith.constant 0 : index
    %87 = vector.load %arg8[%c12, %c0_47, %c0_48] : memref<16x32x64xbf16, #tpu.memory_space<vmem>>, vector<1x32x64xbf16>
    %88 = vector.shape_cast %87 : vector<1x32x64xbf16> to vector<32x64xbf16>
    %cst_49 = arith.constant dense<0.000000e+00> : vector<72x64xf32>
    %89 = tpu.matmul %86, %88, %cst_49 {dimension_numbers = #tpu.dot_dimension_numbers<[1], [0], [0], [1], [0, 0, 1, 1], [], []>} : vector<72x32xbf16>, vector<32x64xbf16>, vector<72x64xf32> -> vector<72x64xf32>
    %90 = arith.addf %84, %89 : vector<72x64xf32>
    %91 = vector.extract_strided_slice %11 {offsets = [936, 0], sizes = [72, 32], strides = [1, 1]} : vector<1152x32xf32> to vector<72x32xf32>
    %92 = arith.truncf %91 : vector<72x32xf32> to vector<72x32xbf16>
    %c13 = arith.constant 13 : index
    %c0_50 = arith.constant 0 : index
    %c0_51 = arith.constant 0 : index
    %93 = vector.load %arg8[%c13, %c0_50, %c0_51] : memref<16x32x64xbf16, #tpu.memory_space<vmem>>, vector<1x32x64xbf16>
    %94 = vector.shape_cast %93 : vector<1x32x64xbf16> to vector<32x64xbf16>
    %cst_52 = arith.constant dense<0.000000e+00> : vector<72x64xf32>
    %95 = tpu.matmul %92, %94, %cst_52 {dimension_numbers = #tpu.dot_dimension_numbers<[1], [0], [0], [1], [0, 0, 1, 1], [], []>} : vector<72x32xbf16>, vector<32x64xbf16>, vector<72x64xf32> -> vector<72x64xf32>
    %96 = arith.addf %90, %95 : vector<72x64xf32>
    %97 = vector.extract_strided_slice %11 {offsets = [1008, 0], sizes = [72, 32], strides = [1, 1]} : vector<1152x32xf32> to vector<72x32xf32>
    %98 = arith.truncf %97 : vector<72x32xf32> to vector<72x32xbf16>
    %c14 = arith.constant 14 : index
    %c0_53 = arith.constant 0 : index
    %c0_54 = arith.constant 0 : index
    %99 = vector.load %arg8[%c14, %c0_53, %c0_54] : memref<16x32x64xbf16, #tpu.memory_space<vmem>>, vector<1x32x64xbf16>
    %100 = vector.shape_cast %99 : vector<1x32x64xbf16> to vector<32x64xbf16>
    %cst_55 = arith.constant dense<0.000000e+00> : vector<72x64xf32>
    %101 = tpu.matmul %98, %100, %cst_55 {dimension_numbers = #tpu.dot_dimension_numbers<[1], [0], [0], [1], [0, 0, 1, 1], [], []>} : vector<72x32xbf16>, vector<32x64xbf16>, vector<72x64xf32> -> vector<72x64xf32>
    %102 = arith.addf %96, %101 : vector<72x64xf32>
    %103 = vector.extract_strided_slice %11 {offsets = [1080, 0], sizes = [72, 32], strides = [1, 1]} : vector<1152x32xf32> to vector<72x32xf32>
    %104 = arith.truncf %103 : vector<72x32xf32> to vector<72x32xbf16>
    %c15 = arith.constant 15 : index
    %c0_56 = arith.constant 0 : index
    %c0_57 = arith.constant 0 : index
    %105 = vector.load %arg8[%c15, %c0_56, %c0_57] : memref<16x32x64xbf16, #tpu.memory_space<vmem>>, vector<1x32x64xbf16>
    %106 = vector.shape_cast %105 : vector<1x32x64xbf16> to vector<32x64xbf16>
    %cst_58 = arith.constant dense<0.000000e+00> : vector<72x64xf32>
    %107 = tpu.matmul %104, %106, %cst_58 {dimension_numbers = #tpu.dot_dimension_numbers<[1], [0], [0], [1], [0, 0, 1, 1], [], []>} : vector<72x32xbf16>, vector<32x64xbf16>, vector<72x64xf32> -> vector<72x64xf32>
    %108 = arith.addf %102, %107 : vector<72x64xf32>
    %c0_59 = arith.constant 0 : index
    %c0_60 = arith.constant 0 : index
    %109 = vector.load %arg9[%c0_59, %c0_60] : memref<1x64xf32, #tpu.memory_space<vmem>>, vector<1x64xf32>
    %110 = vector.broadcast %109 : vector<1x64xf32> to vector<72x64xf32>
    %111 = arith.addf %108, %110 : vector<72x64xf32>
    %cst_61 = arith.constant 0.000000e+00 : f32
    %112 = vector.broadcast %cst_61 : f32 to vector<72x64xf32>
    %113 = arith.maximumf %111, %112 : vector<72x64xf32>
    %cst_62 = arith.constant 0.000000e+00 : f32
    %114 = vector.broadcast %cst_62 : f32 to vector<8x64xf32>
    %115 = vector.extract_strided_slice %113 {offsets = [0, 0], sizes = [8, 64], strides = [1, 1]} : vector<72x64xf32> to vector<8x64xf32>
    %116 = arith.truncf %115 : vector<8x64xf32> to vector<8x64xbf16>
    %c0_63 = arith.constant 0 : index
    %c0_64 = arith.constant 0 : index
    %c0_65 = arith.constant 0 : index
    %117 = vector.load %arg10[%c0_63, %c0_64, %c0_65] : memref<9x64x64xbf16, #tpu.memory_space<vmem>>, vector<1x64x64xbf16>
    %118 = vector.shape_cast %117 : vector<1x64x64xbf16> to vector<64x64xbf16>
    %cst_66 = arith.constant dense<0.000000e+00> : vector<8x64xf32>
    %119 = tpu.matmul %116, %118, %cst_66 {dimension_numbers = #tpu.dot_dimension_numbers<[1], [0], [0], [1], [0, 0, 1, 1], [], []>} : vector<8x64xbf16>, vector<64x64xbf16>, vector<8x64xf32> -> vector<8x64xf32>
    %120 = arith.addf %114, %119 : vector<8x64xf32>
    %121 = vector.extract_strided_slice %113 {offsets = [8, 0], sizes = [8, 64], strides = [1, 1]} : vector<72x64xf32> to vector<8x64xf32>
    %122 = arith.truncf %121 : vector<8x64xf32> to vector<8x64xbf16>
    %c1_67 = arith.constant 1 : index
    %c0_68 = arith.constant 0 : index
    %c0_69 = arith.constant 0 : index
    %123 = vector.load %arg10[%c1_67, %c0_68, %c0_69] : memref<9x64x64xbf16, #tpu.memory_space<vmem>>, vector<1x64x64xbf16>
    %124 = vector.shape_cast %123 : vector<1x64x64xbf16> to vector<64x64xbf16>
    %cst_70 = arith.constant dense<0.000000e+00> : vector<8x64xf32>
    %125 = tpu.matmul %122, %124, %cst_70 {dimension_numbers = #tpu.dot_dimension_numbers<[1], [0], [0], [1], [0, 0, 1, 1], [], []>} : vector<8x64xbf16>, vector<64x64xbf16>, vector<8x64xf32> -> vector<8x64xf32>
    %126 = arith.addf %120, %125 : vector<8x64xf32>
    %127 = vector.extract_strided_slice %113 {offsets = [16, 0], sizes = [8, 64], strides = [1, 1]} : vector<72x64xf32> to vector<8x64xf32>
    %128 = arith.truncf %127 : vector<8x64xf32> to vector<8x64xbf16>
    %c2_71 = arith.constant 2 : index
    %c0_72 = arith.constant 0 : index
    %c0_73 = arith.constant 0 : index
    %129 = vector.load %arg10[%c2_71, %c0_72, %c0_73] : memref<9x64x64xbf16, #tpu.memory_space<vmem>>, vector<1x64x64xbf16>
    %130 = vector.shape_cast %129 : vector<1x64x64xbf16> to vector<64x64xbf16>
    %cst_74 = arith.constant dense<0.000000e+00> : vector<8x64xf32>
    %131 = tpu.matmul %128, %130, %cst_74 {dimension_numbers = #tpu.dot_dimension_numbers<[1], [0], [0], [1], [0, 0, 1, 1], [], []>} : vector<8x64xbf16>, vector<64x64xbf16>, vector<8x64xf32> -> vector<8x64xf32>
    %132 = arith.addf %126, %131 : vector<8x64xf32>
    %133 = vector.extract_strided_slice %113 {offsets = [24, 0], sizes = [8, 64], strides = [1, 1]} : vector<72x64xf32> to vector<8x64xf32>
    %134 = arith.truncf %133 : vector<8x64xf32> to vector<8x64xbf16>
    %c3_75 = arith.constant 3 : index
    %c0_76 = arith.constant 0 : index
    %c0_77 = arith.constant 0 : index
    %135 = vector.load %arg10[%c3_75, %c0_76, %c0_77] : memref<9x64x64xbf16, #tpu.memory_space<vmem>>, vector<1x64x64xbf16>
    %136 = vector.shape_cast %135 : vector<1x64x64xbf16> to vector<64x64xbf16>
    %cst_78 = arith.constant dense<0.000000e+00> : vector<8x64xf32>
    %137 = tpu.matmul %134, %136, %cst_78 {dimension_numbers = #tpu.dot_dimension_numbers<[1], [0], [0], [1], [0, 0, 1, 1], [], []>} : vector<8x64xbf16>, vector<64x64xbf16>, vector<8x64xf32> -> vector<8x64xf32>
    %138 = arith.addf %132, %137 : vector<8x64xf32>
    %139 = vector.extract_strided_slice %113 {offsets = [32, 0], sizes = [8, 64], strides = [1, 1]} : vector<72x64xf32> to vector<8x64xf32>
    %140 = arith.truncf %139 : vector<8x64xf32> to vector<8x64xbf16>
    %c4_79 = arith.constant 4 : index
    %c0_80 = arith.constant 0 : index
    %c0_81 = arith.constant 0 : index
    %141 = vector.load %arg10[%c4_79, %c0_80, %c0_81] : memref<9x64x64xbf16, #tpu.memory_space<vmem>>, vector<1x64x64xbf16>
    %142 = vector.shape_cast %141 : vector<1x64x64xbf16> to vector<64x64xbf16>
    %cst_82 = arith.constant dense<0.000000e+00> : vector<8x64xf32>
    %143 = tpu.matmul %140, %142, %cst_82 {dimension_numbers = #tpu.dot_dimension_numbers<[1], [0], [0], [1], [0, 0, 1, 1], [], []>} : vector<8x64xbf16>, vector<64x64xbf16>, vector<8x64xf32> -> vector<8x64xf32>
    %144 = arith.addf %138, %143 : vector<8x64xf32>
    %145 = vector.extract_strided_slice %113 {offsets = [40, 0], sizes = [8, 64], strides = [1, 1]} : vector<72x64xf32> to vector<8x64xf32>
    %146 = arith.truncf %145 : vector<8x64xf32> to vector<8x64xbf16>
    %c5_83 = arith.constant 5 : index
    %c0_84 = arith.constant 0 : index
    %c0_85 = arith.constant 0 : index
    %147 = vector.load %arg10[%c5_83, %c0_84, %c0_85] : memref<9x64x64xbf16, #tpu.memory_space<vmem>>, vector<1x64x64xbf16>
    %148 = vector.shape_cast %147 : vector<1x64x64xbf16> to vector<64x64xbf16>
    %cst_86 = arith.constant dense<0.000000e+00> : vector<8x64xf32>
    %149 = tpu.matmul %146, %148, %cst_86 {dimension_numbers = #tpu.dot_dimension_numbers<[1], [0], [0], [1], [0, 0, 1, 1], [], []>} : vector<8x64xbf16>, vector<64x64xbf16>, vector<8x64xf32> -> vector<8x64xf32>
    %150 = arith.addf %144, %149 : vector<8x64xf32>
    %151 = vector.extract_strided_slice %113 {offsets = [48, 0], sizes = [8, 64], strides = [1, 1]} : vector<72x64xf32> to vector<8x64xf32>
    %152 = arith.truncf %151 : vector<8x64xf32> to vector<8x64xbf16>
    %c6_87 = arith.constant 6 : index
    %c0_88 = arith.constant 0 : index
    %c0_89 = arith.constant 0 : index
    %153 = vector.load %arg10[%c6_87, %c0_88, %c0_89] : memref<9x64x64xbf16, #tpu.memory_space<vmem>>, vector<1x64x64xbf16>
    %154 = vector.shape_cast %153 : vector<1x64x64xbf16> to vector<64x64xbf16>
    %cst_90 = arith.constant dense<0.000000e+00> : vector<8x64xf32>
    %155 = tpu.matmul %152, %154, %cst_90 {dimension_numbers = #tpu.dot_dimension_numbers<[1], [0], [0], [1], [0, 0, 1, 1], [], []>} : vector<8x64xbf16>, vector<64x64xbf16>, vector<8x64xf32> -> vector<8x64xf32>
    %156 = arith.addf %150, %155 : vector<8x64xf32>
    %157 = vector.extract_strided_slice %113 {offsets = [56, 0], sizes = [8, 64], strides = [1, 1]} : vector<72x64xf32> to vector<8x64xf32>
    %158 = arith.truncf %157 : vector<8x64xf32> to vector<8x64xbf16>
    %c7_91 = arith.constant 7 : index
    %c0_92 = arith.constant 0 : index
    %c0_93 = arith.constant 0 : index
    %159 = vector.load %arg10[%c7_91, %c0_92, %c0_93] : memref<9x64x64xbf16, #tpu.memory_space<vmem>>, vector<1x64x64xbf16>
    %160 = vector.shape_cast %159 : vector<1x64x64xbf16> to vector<64x64xbf16>
    %cst_94 = arith.constant dense<0.000000e+00> : vector<8x64xf32>
    %161 = tpu.matmul %158, %160, %cst_94 {dimension_numbers = #tpu.dot_dimension_numbers<[1], [0], [0], [1], [0, 0, 1, 1], [], []>} : vector<8x64xbf16>, vector<64x64xbf16>, vector<8x64xf32> -> vector<8x64xf32>
    %162 = arith.addf %156, %161 : vector<8x64xf32>
    %163 = vector.extract_strided_slice %113 {offsets = [64, 0], sizes = [8, 64], strides = [1, 1]} : vector<72x64xf32> to vector<8x64xf32>
    %164 = arith.truncf %163 : vector<8x64xf32> to vector<8x64xbf16>
    %c8_95 = arith.constant 8 : index
    %c0_96 = arith.constant 0 : index
    %c0_97 = arith.constant 0 : index
    %165 = vector.load %arg10[%c8_95, %c0_96, %c0_97] : memref<9x64x64xbf16, #tpu.memory_space<vmem>>, vector<1x64x64xbf16>
    %166 = vector.shape_cast %165 : vector<1x64x64xbf16> to vector<64x64xbf16>
    %cst_98 = arith.constant dense<0.000000e+00> : vector<8x64xf32>
    %167 = tpu.matmul %164, %166, %cst_98 {dimension_numbers = #tpu.dot_dimension_numbers<[1], [0], [0], [1], [0, 0, 1, 1], [], []>} : vector<8x64xbf16>, vector<64x64xbf16>, vector<8x64xf32> -> vector<8x64xf32>
    %168 = arith.addf %162, %167 : vector<8x64xf32>
    %c0_99 = arith.constant 0 : index
    %c0_100 = arith.constant 0 : index
    %169 = vector.load %arg11[%c0_99, %c0_100] : memref<1x64xf32, #tpu.memory_space<vmem>>, vector<1x64xf32>
    %170 = vector.broadcast %169 : vector<1x64xf32> to vector<8x64xf32>
    %171 = arith.addf %168, %170 : vector<8x64xf32>
    %cst_101 = arith.constant 0.000000e+00 : f32
    %172 = vector.broadcast %cst_101 : f32 to vector<8x64xf32>
    %173 = arith.maximumf %171, %172 : vector<8x64xf32>
    %c0_102 = arith.constant 0 : index
    %c0_103 = arith.constant 0 : index
    %174 = vector.load %arg22[%c0_102, %c0_103] : memref<8x128xf32, #tpu.memory_space<vmem>>, vector<8x128xf32>
    %c0_104 = arith.constant 0 : index
    %c0_105 = arith.constant 0 : index
    %175 = vector.load %arg23[%c0_104, %c0_105] : memref<8x128xf32, #tpu.memory_space<vmem>>, vector<8x128xf32>
    %176 = arith.truncf %173 : vector<8x64xf32> to vector<8x64xbf16>
    %c0_106 = arith.constant 0 : index
    %c0_107 = arith.constant 0 : index
    %177 = vector.load %arg12[%c0_106, %c0_107] : memref<64x512xbf16, #tpu.memory_space<vmem>>, vector<64x512xbf16>
    %cst_108 = arith.constant dense<0.000000e+00> : vector<8x512xf32>
    %178 = tpu.matmul %176, %177, %cst_108 {dimension_numbers = #tpu.dot_dimension_numbers<[1], [0], [0], [1], [0, 0, 1, 1], [], []>} : vector<8x64xbf16>, vector<64x512xbf16>, vector<8x512xf32> -> vector<8x512xf32>
    %c0_109 = arith.constant 0 : index
    %c0_110 = arith.constant 0 : index
    %c0_111 = arith.constant 0 : index
    %c0_112 = arith.constant 0 : index
    %179 = vector.load %arg3[%c0_109, %c0_110, %c0_111, %c0_112] : memref<1x1x8x14xf32, #tpu.memory_space<vmem>>, vector<1x1x8x14xf32>
    %180 = vector.shape_cast %179 : vector<1x1x8x14xf32> to vector<8x14xf32>
    %181 = arith.truncf %180 : vector<8x14xf32> to vector<8x14xbf16>
    %c0_113 = arith.constant 0 : index
    %c0_114 = arith.constant 0 : index
    %182 = vector.load %arg13[%c0_113, %c0_114] : memref<14x512xbf16, #tpu.memory_space<vmem>>, vector<14x512xbf16>
    %cst_115 = arith.constant dense<0.000000e+00> : vector<8x512xf32>
    %183 = tpu.matmul %181, %182, %cst_115 {dimension_numbers = #tpu.dot_dimension_numbers<[1], [0], [0], [1], [0, 0, 1, 1], [], []>} : vector<8x14xbf16>, vector<14x512xbf16>, vector<8x512xf32> -> vector<8x512xf32>
    %184 = arith.addf %178, %183 : vector<8x512xf32>
    %185 = arith.truncf %174 : vector<8x128xf32> to vector<8x128xbf16>
    %c0_116 = arith.constant 0 : index
    %c0_117 = arith.constant 0 : index
    %186 = vector.load %arg14[%c0_116, %c0_117] : memref<128x512xbf16, #tpu.memory_space<vmem>>, vector<128x512xbf16>
    %cst_118 = arith.constant dense<0.000000e+00> : vector<8x512xf32>
    %187 = tpu.matmul %185, %186, %cst_118 {dimension_numbers = #tpu.dot_dimension_numbers<[1], [0], [0], [1], [0, 0, 1, 1], [], []>} : vector<8x128xbf16>, vector<128x512xbf16>, vector<8x512xf32> -> vector<8x512xf32>
    %188 = arith.addf %184, %187 : vector<8x512xf32>
    %c0_119 = arith.constant 0 : index
    %c0_120 = arith.constant 0 : index
    %189 = vector.load %arg15[%c0_119, %c0_120] : memref<1x512xf32, #tpu.memory_space<vmem>>, vector<1x512xf32>
    %190 = vector.broadcast %189 : vector<1x512xf32> to vector<8x512xf32>
    %191 = arith.addf %188, %190 : vector<8x512xf32>
    %192 = vector.extract_strided_slice %191 {offsets = [0, 0], sizes = [8, 128], strides = [1, 1]} : vector<8x512xf32> to vector<8x128xf32>
    %cst_121 = arith.constant 5.000000e-01 : f32
    %193 = vector.broadcast %cst_121 : f32 to vector<8x128xf32>
    %194 = arith.mulf %193, %192 : vector<8x128xf32>
    %195 = math.tanh %194 : vector<8x128xf32>
    %cst_122 = arith.constant 5.000000e-01 : f32
    %196 = vector.broadcast %cst_122 : f32 to vector<8x128xf32>
    %197 = arith.mulf %196, %195 : vector<8x128xf32>
    %cst_123 = arith.constant 5.000000e-01 : f32
    %198 = vector.broadcast %cst_123 : f32 to vector<8x128xf32>
    %199 = arith.addf %197, %198 : vector<8x128xf32>
    %200 = vector.extract_strided_slice %191 {offsets = [0, 128], sizes = [8, 128], strides = [1, 1]} : vector<8x512xf32> to vector<8x128xf32>
    %cst_124 = arith.constant 5.000000e-01 : f32
    %201 = vector.broadcast %cst_124 : f32 to vector<8x128xf32>
    %202 = arith.mulf %201, %200 : vector<8x128xf32>
    %203 = math.tanh %202 : vector<8x128xf32>
    %cst_125 = arith.constant 5.000000e-01 : f32
    %204 = vector.broadcast %cst_125 : f32 to vector<8x128xf32>
    %205 = arith.mulf %204, %203 : vector<8x128xf32>
    %cst_126 = arith.constant 5.000000e-01 : f32
    %206 = vector.broadcast %cst_126 : f32 to vector<8x128xf32>
    %207 = arith.addf %205, %206 : vector<8x128xf32>
    %208 = vector.extract_strided_slice %191 {offsets = [0, 256], sizes = [8, 128], strides = [1, 1]} : vector<8x512xf32> to vector<8x128xf32>
    %209 = math.tanh %208 : vector<8x128xf32>
    %210 = vector.extract_strided_slice %191 {offsets = [0, 384], sizes = [8, 128], strides = [1, 1]} : vector<8x512xf32> to vector<8x128xf32>
    %cst_127 = arith.constant 5.000000e-01 : f32
    %211 = vector.broadcast %cst_127 : f32 to vector<8x128xf32>
    %212 = arith.mulf %211, %210 : vector<8x128xf32>
    %213 = math.tanh %212 : vector<8x128xf32>
    %cst_128 = arith.constant 5.000000e-01 : f32
    %214 = vector.broadcast %cst_128 : f32 to vector<8x128xf32>
    %215 = arith.mulf %214, %213 : vector<8x128xf32>
    %cst_129 = arith.constant 5.000000e-01 : f32
    %216 = vector.broadcast %cst_129 : f32 to vector<8x128xf32>
    %217 = arith.addf %215, %216 : vector<8x128xf32>
    %218 = arith.mulf %207, %175 : vector<8x128xf32>
    %219 = arith.mulf %199, %209 : vector<8x128xf32>
    %220 = arith.addf %218, %219 : vector<8x128xf32>
    %221 = math.tanh %220 : vector<8x128xf32>
    %222 = arith.mulf %217, %221 : vector<8x128xf32>
    %c0_130 = arith.constant 0 : index
    %c0_131 = arith.constant 0 : index
    %223 = vector.load %arg22[%c0_130, %c0_131] : memref<8x128xf32, #tpu.memory_space<vmem>>, vector<8x128xf32>
    tpu.vector_store %arg22[%c0_130, %c0_131], %222 {strides = array<i32>} : memref<8x128xf32, #tpu.memory_space<vmem>>, vector<8x128xf32>,
    %c0_132 = arith.constant 0 : index
    %c0_133 = arith.constant 0 : index
    %224 = vector.load %arg23[%c0_132, %c0_133] : memref<8x128xf32, #tpu.memory_space<vmem>>, vector<8x128xf32>
    tpu.vector_store %arg23[%c0_132, %c0_133], %220 {strides = array<i32>} : memref<8x128xf32, #tpu.memory_space<vmem>>, vector<8x128xf32>,
    %c0_134 = arith.constant 0 : index
    %c0_135 = arith.constant 0 : index
    %c0_136 = arith.constant 0 : index
    %225 = vector.load %arg21[%c0_134, %c0_135, %c0_136] : memref<1x8x256xf32, #tpu.memory_space<vmem>>, vector<1x8x128xf32>
    %226 = vector.shape_cast %225 : vector<1x8x128xf32> to vector<8x128xf32>
    %227 = vector.shape_cast %222 : vector<8x128xf32> to vector<1x8x128xf32>
    tpu.vector_store %arg21[%c0_134, %c0_135, %c0_136], %227 {strides = array<i32>} : memref<1x8x256xf32, #tpu.memory_space<vmem>>, vector<1x8x128xf32>,
    %c0_137 = arith.constant 0 : index
    %c0_138 = arith.constant 0 : index
    %c128 = arith.constant 128 : index
    %228 = vector.load %arg21[%c0_137, %c0_138, %c128] : memref<1x8x256xf32, #tpu.memory_space<vmem>>, vector<1x8x128xf32>
    %229 = vector.shape_cast %228 : vector<1x8x128xf32> to vector<8x128xf32>
    %230 = vector.shape_cast %220 : vector<8x128xf32> to vector<1x8x128xf32>
    tpu.vector_store %arg21[%c0_137, %c0_138, %c128], %230 {strides = array<i32>} : memref<1x8x256xf32, #tpu.memory_space<vmem>>, vector<1x8x128xf32>,
    %231 = arith.truncf %222 : vector<8x128xf32> to vector<8x128xbf16>
    %c0_139 = arith.constant 0 : index
    %c0_140 = arith.constant 0 : index
    %232 = vector.load %arg16[%c0_139, %c0_140] : memref<128x1024xbf16, #tpu.memory_space<vmem>>, vector<128x1024xbf16>
    %cst_141 = arith.constant dense<0.000000e+00> : vector<8x1024xf32>
    %233 = tpu.matmul %231, %232, %cst_141 {dimension_numbers = #tpu.dot_dimension_numbers<[1], [0], [0], [1], [0, 0, 1, 1], [], []>} : vector<8x128xbf16>, vector<128x1024xbf16>, vector<8x1024xf32> -> vector<8x1024xf32>
    %c0_142 = arith.constant 0 : index
    %c0_143 = arith.constant 0 : index
    %234 = vector.load %arg17[%c0_142, %c0_143] : memref<1x1024xf32, #tpu.memory_space<vmem>>, vector<1x1024xf32>
    %235 = vector.broadcast %234 : vector<1x1024xf32> to vector<8x1024xf32>
    %236 = arith.addf %233, %235 : vector<8x1024xf32>
    %cst_144 = arith.constant 0.000000e+00 : f32
    %237 = vector.broadcast %cst_144 : f32 to vector<8x1024xf32>
    %238 = arith.maximumf %236, %237 : vector<8x1024xf32>
    %239 = arith.truncf %238 : vector<8x1024xf32> to vector<8x1024xbf16>
    %c0_145 = arith.constant 0 : index
    %c0_146 = arith.constant 0 : index
    %240 = vector.load %arg18[%c0_145, %c0_146] : memref<1024x128xbf16, #tpu.memory_space<vmem>>, vector<1024x128xbf16>
    %cst_147 = arith.constant dense<0.000000e+00> : vector<8x128xf32>
    %241 = tpu.matmul %239, %240, %cst_147 {dimension_numbers = #tpu.dot_dimension_numbers<[1], [0], [0], [1], [0, 0, 1, 1], [], []>} : vector<8x1024xbf16>, vector<1024x128xbf16>, vector<8x128xf32> -> vector<8x128xf32>
    %c0_148 = arith.constant 0 : index
    %c0_149 = arith.constant 0 : index
    %242 = vector.load %arg19[%c0_148, %c0_149] : memref<1x128xf32, #tpu.memory_space<vmem>>, vector<1x128xf32>
    %243 = vector.broadcast %242 : vector<1x128xf32> to vector<8x128xf32>
    %244 = arith.addf %241, %243 : vector<8x128xf32>
    %c0_150 = arith.constant 0 : index
    %c0_151 = arith.constant 0 : index
    %c0_152 = arith.constant 0 : index
    %c0_153 = arith.constant 0 : index
    %245 = vector.load %arg20[%c0_150, %c0_151, %c0_152, %c0_153] : memref<1x1x8x128xf32, #tpu.memory_space<vmem>>, vector<1x1x8x128xf32>
    %246 = vector.shape_cast %245 : vector<1x1x8x128xf32> to vector<8x128xf32>
    %247 = vector.shape_cast %244 : vector<8x128xf32> to vector<1x1x8x128xf32>
    tpu.vector_store %arg20[%c0_150, %c0_151, %c0_152, %c0_153], %247 {strides = array<i32>} : memref<1x1x8x128xf32, #tpu.memory_space<vmem>>, vector<1x1x8x128xf32>,
    return
  }
  func.func @transform_0(%arg0: i32, %arg1: i32) -> (i32, i32, i32, i32) {
    %c0_i32 = arith.constant 0 : i32
    %c0_i32_0 = arith.constant 0 : i32
    %c0_i32_1 = arith.constant 0 : i32
    return %arg1, %arg0, %c0_i32, %c0_i32_0 : i32, i32, i32, i32
  }
  func.func @transform_1(%arg0: i32, %arg1: i32) -> (i32, i32, i32, i32) {
    %c0_i32 = arith.constant 0 : i32
    %c0_i32_0 = arith.constant 0 : i32
    %c0_i32_1 = arith.constant 0 : i32
    return %arg1, %arg0, %c0_i32, %c0_i32_0 : i32, i32, i32, i32
  }
  func.func @transform_2(%arg0: i32, %arg1: i32) -> (i32, i32, i32) {
    %c0_i32 = arith.constant 0 : i32
    %c0_i32_0 = arith.constant 0 : i32
    %c0_i32_1 = arith.constant 0 : i32
    return %arg0, %c0_i32, %c0_i32_0 : i32, i32, i32
  }
  func.func @transform_3(%arg0: i32, %arg1: i32) -> (i32, i32, i32) {
    %c0_i32 = arith.constant 0 : i32
    %c0_i32_0 = arith.constant 0 : i32
    %c0_i32_1 = arith.constant 0 : i32
    return %arg0, %c0_i32, %c0_i32_0 : i32, i32, i32
  }
  func.func @transform_4(%arg0: i32, %arg1: i32) -> (i32, i32) {
    %c0_i32 = arith.constant 0 : i32
    %c0_i32_0 = arith.constant 0 : i32
    %c0_i32_1 = arith.constant 0 : i32
    return %c0_i32, %c0_i32_0 : i32, i32
  }
  func.func @transform_5(%arg0: i32, %arg1: i32) -> (i32, i32) {
    %c0_i32 = arith.constant 0 : i32
    %c0_i32_0 = arith.constant 0 : i32
    %c0_i32_1 = arith.constant 0 : i32
    return %c0_i32, %c0_i32_0 : i32, i32
  }
  func.func @transform_6(%arg0: i32, %arg1: i32) -> (i32, i32, i32) {
    %c0_i32 = arith.constant 0 : i32
    %c0_i32_0 = arith.constant 0 : i32
    %c0_i32_1 = arith.constant 0 : i32
    %c0_i32_2 = arith.constant 0 : i32
    return %c0_i32, %c0_i32_0, %c0_i32_1 : i32, i32, i32
  }
  func.func @transform_7(%arg0: i32, %arg1: i32) -> (i32, i32) {
    %c0_i32 = arith.constant 0 : i32
    %c0_i32_0 = arith.constant 0 : i32
    %c0_i32_1 = arith.constant 0 : i32
    return %c0_i32, %c0_i32_0 : i32, i32
  }
  func.func @transform_8(%arg0: i32, %arg1: i32) -> (i32, i32, i32) {
    %c0_i32 = arith.constant 0 : i32
    %c0_i32_0 = arith.constant 0 : i32
    %c0_i32_1 = arith.constant 0 : i32
    %c0_i32_2 = arith.constant 0 : i32
    return %c0_i32, %c0_i32_0, %c0_i32_1 : i32, i32, i32
  }
  func.func @transform_9(%arg0: i32, %arg1: i32) -> (i32, i32) {
    %c0_i32 = arith.constant 0 : i32
    %c0_i32_0 = arith.constant 0 : i32
    %c0_i32_1 = arith.constant 0 : i32
    return %c0_i32, %c0_i32_0 : i32, i32
  }
  func.func @transform_10(%arg0: i32, %arg1: i32) -> (i32, i32) {
    %c0_i32 = arith.constant 0 : i32
    %c0_i32_0 = arith.constant 0 : i32
    %c0_i32_1 = arith.constant 0 : i32
    return %c0_i32, %c0_i32_0 : i32, i32
  }
  func.func @transform_11(%arg0: i32, %arg1: i32) -> (i32, i32) {
    %c0_i32 = arith.constant 0 : i32
    %c0_i32_0 = arith.constant 0 : i32
    %c0_i32_1 = arith.constant 0 : i32
    return %c0_i32, %c0_i32_0 : i32, i32
  }
  func.func @transform_12(%arg0: i32, %arg1: i32) -> (i32, i32) {
    %c0_i32 = arith.constant 0 : i32
    %c0_i32_0 = arith.constant 0 : i32
    %c0_i32_1 = arith.constant 0 : i32
    return %c0_i32, %c0_i32_0 : i32, i32
  }
  func.func @transform_13(%arg0: i32, %arg1: i32) -> (i32, i32) {
    %c0_i32 = arith.constant 0 : i32
    %c0_i32_0 = arith.constant 0 : i32
    %c0_i32_1 = arith.constant 0 : i32
    return %c0_i32, %c0_i32_0 : i32, i32
  }
  func.func @transform_14(%arg0: i32, %arg1: i32) -> (i32, i32) {
    %c0_i32 = arith.constant 0 : i32
    %c0_i32_0 = arith.constant 0 : i32
    %c0_i32_1 = arith.constant 0 : i32
    return %c0_i32, %c0_i32_0 : i32, i32
  }
  func.func @transform_15(%arg0: i32, %arg1: i32) -> (i32, i32) {
    %c0_i32 = arith.constant 0 : i32
    %c0_i32_0 = arith.constant 0 : i32
    %c0_i32_1 = arith.constant 0 : i32
    return %c0_i32, %c0_i32_0 : i32, i32
  }
  func.func @transform_16(%arg0: i32, %arg1: i32) -> (i32, i32) {
    %c0_i32 = arith.constant 0 : i32
    %c0_i32_0 = arith.constant 0 : i32
    %c0_i32_1 = arith.constant 0 : i32
    return %c0_i32, %c0_i32_0 : i32, i32
  }
  func.func @transform_17(%arg0: i32, %arg1: i32) -> (i32, i32) {
    %c0_i32 = arith.constant 0 : i32
    %c0_i32_0 = arith.constant 0 : i32
    %c0_i32_1 = arith.constant 0 : i32
    return %c0_i32, %c0_i32_0 : i32, i32
  }
  func.func @transform_18(%arg0: i32, %arg1: i32) -> (i32, i32, i32, i32) {
    %c0_i32 = arith.constant 0 : i32
    %c0_i32_0 = arith.constant 0 : i32
    %c0_i32_1 = arith.constant 0 : i32
    return %arg1, %arg0, %c0_i32, %c0_i32_0 : i32, i32, i32, i32
  }
  func.func @transform_19(%arg0: i32, %arg1: i32) -> (i32, i32, i32) {
    %c0_i32 = arith.constant 0 : i32
    %c0_i32_0 = arith.constant 0 : i32
    %c0_i32_1 = arith.constant 0 : i32
    return %arg0, %c0_i32, %c0_i32_0 : i32, i32, i32
  }
}

</mosaic_0001>

<llo_original>
// kernel: dueling_lstm_forward.1
$region0: #{dueling_lstm_forward.1}
  #allocation0 [shape = 'u32[]', space=smem, size = 0x4, offset = 0x4, fixed_abs, tag = 'smem constant byte address 0x4 - core index']
  #allocation1 [shape = 'u32[144,128]{1,0:T(1,128)}', space=vmem, size = 0x12000, scoped, tag = 'internal scratch']
  #allocation2 [shape = 'f32[8,128]{1,0:T(8,128)}', space=vmem, size = 0x1000, scoped, tag = 'scratch operand']
  #allocation3 [shape = 'f32[8,128]{1,0:T(8,128)}', space=vmem, size = 0x1000, scoped, tag = 'scratch operand']
  %s0 = inlined_call_operand.vmem [shape: bf16[8,2,1152,64], index: 0, kind: input, shape index: {}]
  %s1 = inlined_call_operand.vmem [shape: f32[8,2,8,14], index: 1, kind: input, shape index: {}]
  %s2 = inlined_call_operand.vmem [shape: f32[2,8,128], index: 2, kind: input, shape index: {}]
  %s3 = inlined_call_operand.vmem [shape: f32[2,8,128], index: 3, kind: input, shape index: {}]
  %s4 = inlined_call_operand.vmem [shape: bf16[64,32], index: 4, kind: input, shape index: {}]
  %s5 = inlined_call_operand.vmem [shape: f32[1,32], index: 5, kind: input, shape index: {}]
  %s6 = inlined_call_operand.vmem [shape: bf16[16,32,64], index: 6, kind: input, shape index: {}]
  %s7 = inlined_call_operand.vmem [shape: f32[1,64], index: 7, kind: input, shape index: {}]
  %s8 = inlined_call_operand.vmem [shape: bf16[9,64,64], index: 8, kind: input, shape index: {}]
  %s9 = inlined_call_operand.vmem [shape: f32[1,64], index: 9, kind: input, shape index: {}]
  %s10 = inlined_call_operand.vmem [shape: bf16[64,512], index: 10, kind: input, shape index: {}]
  %s11 = inlined_call_operand.vmem [shape: bf16[14,512], index: 11, kind: input, shape index: {}]
  %s12 = inlined_call_operand.vmem [shape: bf16[128,512], index: 12, kind: input, shape index: {}]
  %s13 = inlined_call_operand.vmem [shape: f32[1,512], index: 13, kind: input, shape index: {}]
  %s14 = inlined_call_operand.vmem [shape: bf16[128,1024], index: 14, kind: input, shape index: {}]
  %s15 = inlined_call_operand.vmem [shape: f32[1,1024], index: 15, kind: input, shape index: {}]
  %s16 = inlined_call_operand.vmem [shape: bf16[1024,128], index: 16, kind: input, shape index: {}]
  %s17 = inlined_call_operand.vmem [shape: f32[1,128], index: 17, kind: input, shape index: {}]
  %s18 = inlined_call_operand.vmem [shape: f32[8,2,8,128], index: 18, kind: output, shape index: {0}]
  %s19 = inlined_call_operand.vmem [shape: f32[2,8,256], index: 19, kind: output, shape index: {1}]
  %20 = xla_tuple %s18, %s19
  %s21 = sld [smem:[#allocation0]]
  $region117: #{dueling_lstm_forward.1} parent=0
    _
  %s23 = ssub.s32 1, %s21
  %s24 = scalar_select 0, %s23, %s21
  loop: start=0, step=1, limit=18
  $region2: #{dueling_lstm_forward.1} parent=0 // loop_pre_header
    _
  $region3: #{dueling_lstm_forward.1} parent=0 // loop_header
    %s26 = sphi 0, %s30
    %p27 = scmp.ge.s32.totalorder %s26, 18
    %s33 = sphi 0, %s45
    %s34 = sphi 0, %s41
    %s35 = sphi 0, %s33
    %s36 = sphi 0, %s34
    %s37 = sphi 0, %s35
    %s38 = sphi 0, %s36
    %s50 = sphi 0, %s52
    %s53 = sphi 0, %s50
    %s54 = sphi 0, %s53
    %s70 = sphi 0, %s54
    %s78 = sphi 0, %s80
    %s81 = sphi 0, %s78
    %s82 = sphi 0, %s81
    %s98 = sphi 0, %s82
    %s104 = sphi 0, %s106
    %s107 = sphi 0, %s104
    %s108 = sphi 0, %s107
    %s124 = sphi 0, %s108
    %s130 = sphi 0, %s132
    %s133 = sphi 0, %s130
    %s134 = sphi 0, %s133
    %s150 = sphi 0, %s134
    %s154 = sphi 0, %s154
    %s156 = sphi 0, %s154
    %s157 = sphi 0, %s156
    %s171 = sphi 0, %s157
    %s175 = sphi 0, %s175
    %s177 = sphi 0, %s175
    %s178 = sphi 0, %s177
    %s192 = sphi 0, %s178
    %s196 = sphi 0, %s196
    %s198 = sphi 0, %s196
    %s199 = sphi 0, %s198
    %s213 = sphi 0, %s199
    %s217 = sphi 0, %s217
    %s219 = sphi 0, %s217
    %s220 = sphi 0, %s219
    %s234 = sphi 0, %s220
    %s238 = sphi 0, %s238
    %s240 = sphi 0, %s238
    %s241 = sphi 0, %s240
    %s255 = sphi 0, %s241
    %s259 = sphi 0, %s259
    %s261 = sphi 0, %s259
    %s262 = sphi 0, %s261
    %s276 = sphi 0, %s262
    %s280 = sphi 0, %s280
    %s282 = sphi 0, %s280
    %s283 = sphi 0, %s282
    %s297 = sphi 0, %s283
    %s301 = sphi 0, %s301
    %s303 = sphi 0, %s301
    %s304 = sphi 0, %s303
    %s318 = sphi 0, %s304
    %s322 = sphi 0, %s322
    %s324 = sphi 0, %s322
    %s325 = sphi 0, %s324
    %s339 = sphi 0, %s325
    %s343 = sphi 0, %s343
    %s345 = sphi 0, %s343
    %s346 = sphi 0, %s345
    %s360 = sphi 0, %s346
    %s364 = sphi 0, %s364
    %s366 = sphi 0, %s364
    %s367 = sphi 0, %s366
    %s381 = sphi 0, %s367
    %s385 = sphi 0, %s385
    %s387 = sphi 0, %s385
    %s388 = sphi 0, %s387
    %s402 = sphi 0, %s388
    %s406 = sphi 0, %s406
    %s408 = sphi 0, %s406
    %s409 = sphi 0, %s408
    %s423 = sphi 0, %s409
    %s427 = sphi 0, %s427
    %s429 = sphi 0, %s427
    %s430 = sphi 0, %s429
    %s444 = sphi 0, %s430
    %s452 = sphi 0, %s454
    %s455 = sphi 0, %s452
    %s456 = sphi 0, %s455
    %s472 = sphi 0, %s456
    %s478 = sphi 0, %s480
    %s481 = sphi 0, %s478
    %s482 = sphi 0, %s481
    %s498 = sphi 0, %s482
  $region4: #{dueling_lstm_forward.1} parent=0 // loop_header_branch
    %29 = sbr.rel (%p27) target = $region8
  $region5: #{dueling_lstm_forward.1} parent=0 // loop_body
    %s31 = ssub.s32 %s26, 1
    %s32 = ssub.s32 %s26, 2
    %s39 = sadd.s32 1, %s34
    %p40 = scmp.ge.s32.totalorder %s39, 8
    %s41 = scalar_select %p40, 0, %s39
    %s42 = sadd.s32 1, %s33
    %s43 = scalar_select %p40, %s42, %s33
    %p44 = scmp.ge.s32.totalorder %s43, 2
    %s45 = scalar_select %p44, 0, %s43
    %s46 = ssub.s32 %s34, %s41
    %s47 = ssub.s32 %s33, %s45
    %s48 = sor.u32 %s46, %s47
    %p49 = scmp.eq.s32.totalorder %s48, 0
    %s51 = sadd.s32 %s50, 1
    %s52 = scalar_select %p49, %s50, %s51
    %p55 = pneg %p49
    %p56 = scmp.eq.s32.totalorder %s26, 15
    %p57 = por %p55, %p56
    %p58 = scmp.ne.s32.totalorder %s50, %s53
    %p59 = scmp.eq.s32.totalorder %s26, 0
    %p60 = por %p58, %p59
    %p61 = scmp.ne.s32.totalorder %s50, %s53
    %p62 = scmp.eq.s32.totalorder %s31, 15
    %p63 = por %p61, %p62
    %p64 = scmp.ne.s32.totalorder %s53, %s54
    %p65 = scmp.eq.s32.totalorder %s31, 0
    %p66 = por %p64, %p65
    %p67 = scmp.ne.s32.totalorder %s53, %s54
    %p68 = scmp.eq.s32.totalorder %s32, 15
    %p69 = por %p67, %p68
    %p71 = scmp.ne.s32.totalorder %s54, %s70
    %p72 = scmp.eq.s32.totalorder %s32, 0
    %p73 = por %p71, %p72
    %s74 = ssub.s32 %s34, %s41
    %s75 = ssub.s32 %s33, %s45
    %s76 = sor.u32 %s74, %s75
    %p77 = scmp.eq.s32.totalorder %s76, 0
    %s79 = sadd.s32 %s78, 1
    %s80 = scalar_select %p77, %s78, %s79
    %p83 = pneg %p77
    %p84 = scmp.eq.s32.totalorder %s26, 15
    %p85 = por %p83, %p84
    %p86 = scmp.ne.s32.totalorder %s78, %s81
    %p87 = scmp.eq.s32.totalorder %s26, 0
    %p88 = por %p86, %p87
    %p89 = scmp.ne.s32.totalorder %s78, %s81
    %p90 = scmp.eq.s32.totalorder %s31, 15
    %p91 = por %p89, %p90
    %p92 = scmp.ne.s32.totalorder %s81, %s82
    %p93 = scmp.eq.s32.totalorder %s31, 0
    %p94 = por %p92, %p93
    %p95 = scmp.ne.s32.totalorder %s81, %s82
    %p96 = scmp.eq.s32.totalorder %s32, 15
    %p97 = por %p95, %p96
    %p99 = scmp.ne.s32.totalorder %s82, %s98
    %p100 = scmp.eq.s32.totalorder %s32, 0
    %p101 = por %p99, %p100
    %s102 = ssub.s32 %s33, %s45
    %p103 = scmp.eq.s32.totalorder %s102, 0
    %s105 = sadd.s32 %s104, 1
    %s106 = scalar_select %p103, %s104, %s105
    %p109 = pneg %p103
    %p110 = scmp.eq.s32.totalorder %s26, 15
    %p111 = por %p109, %p110
    %p112 = scmp.ne.s32.totalorder %s104, %s107
    %p113 = scmp.eq.s32.totalorder %s26, 0
    %p114 = por %p112, %p113
    %p115 = scmp.ne.s32.totalorder %s104, %s107
    %p116 = scmp.eq.s32.totalorder %s31, 15
    %p117 = por %p115, %p116
    %p118 = scmp.ne.s32.totalorder %s107, %s108
    %p119 = scmp.eq.s32.totalorder %s31, 0
    %p120 = por %p118, %p119
    %p121 = scmp.ne.s32.totalorder %s107, %s108
    %p122 = scmp.eq.s32.totalorder %s32, 15
    %p123 = por %p121, %p122
    %p125 = scmp.ne.s32.totalorder %s108, %s124
    %p126 = scmp.eq.s32.totalorder %s32, 0
    %p127 = por %p125, %p126
    %s128 = ssub.s32 %s33, %s45
    %p129 = scmp.eq.s32.totalorder %s128, 0
    %s131 = sadd.s32 %s130, 1
    %s132 = scalar_select %p129, %s130, %s131
    %p135 = pneg %p129
    %p136 = scmp.eq.s32.totalorder %s26, 15
    %p137 = por %p135, %p136
    %p138 = scmp.ne.s32.totalorder %s130, %s133
    %p139 = scmp.eq.s32.totalorder %s26, 0
    %p140 = por %p138, %p139
    %p141 = scmp.ne.s32.totalorder %s130, %s133
    %p142 = scmp.eq.s32.totalorder %s31, 15
    %p143 = por %p141, %p142
    %p144 = scmp.ne.s32.totalorder %s133, %s134
    %p145 = scmp.eq.s32.totalorder %s31, 0
    %p146 = por %p144, %p145
    %p147 = scmp.ne.s32.totalorder %s133, %s134
    %p148 = scmp.eq.s32.totalorder %s32, 15
    %p149 = por %p147, %p148
    %p151 = scmp.ne.s32.totalorder %s134, %s150
    %p152 = scmp.eq.s32.totalorder %s32, 0
    %p153 = por %p151, %p152
    %s155 = sadd.s32 %s154, 1
    %p158 = scmp.eq.s32.totalorder %s26, 15
    %p159 = scmp.ne.s32.totalorder %s154, %s156
    %p160 = scmp.eq.s32.totalorder %s26, 0
    %p161 = por %p159, %p160
    %p162 = scmp.ne.s32.totalorder %s154, %s156
    %p163 = scmp.eq.s32.totalorder %s31, 15
    %p164 = por %p162, %p163
    %p165 = scmp.ne.s32.totalorder %s156, %s157
    %p166 = scmp.eq.s32.totalorder %s31, 0
    %p167 = por %p165, %p166
    %p168 = scmp.ne.s32.totalorder %s156, %s157
    %p169 = scmp.eq.s32.totalorder %s32, 15
    %p170 = por %p168, %p169
    %p172 = scmp.ne.s32.totalorder %s157, %s171
    %p173 = scmp.eq.s32.totalorder %s32, 0
    %p174 = por %p172, %p173
    %s176 = sadd.s32 %s175, 1
    %p179 = scmp.eq.s32.totalorder %s26, 15
    %p180 = scmp.ne.s32.totalorder %s175, %s177
    %p181 = scmp.eq.s32.totalorder %s26, 0
    %p182 = por %p180, %p181
    %p183 = scmp.ne.s32.totalorder %s175, %s177
    %p184 = scmp.eq.s32.totalorder %s31, 15
    %p185 = por %p183, %p184
    %p186 = scmp.ne.s32.totalorder %s177, %s178
    %p187 = scmp.eq.s32.totalorder %s31, 0
    %p188 = por %p186, %p187
    %p189 = scmp.ne.s32.totalorder %s177, %s178
    %p190 = scmp.eq.s32.totalorder %s32, 15
    %p191 = por %p189, %p190
    %p193 = scmp.ne.s32.totalorder %s178, %s192
    %p194 = scmp.eq.s32.totalorder %s32, 0
    %p195 = por %p193, %p194
    %s197 = sadd.s32 %s196, 1
    %p200 = scmp.eq.s32.totalorder %s26, 15
    %p201 = scmp.ne.s32.totalorder %s196, %s198
    %p202 = scmp.eq.s32.totalorder %s26, 0
    %p203 = por %p201, %p202
    %p204 = scmp.ne.s32.totalorder %s196, %s198
    %p205 = scmp.eq.s32.totalorder %s31, 15
    %p206 = por %p204, %p205
    %p207 = scmp.ne.s32.totalorder %s198, %s199
    %p208 = scmp.eq.s32.totalorder %s31, 0
    %p209 = por %p207, %p208
    %p210 = scmp.ne.s32.totalorder %s198, %s199
    %p211 = scmp.eq.s32.totalorder %s32, 15
    %p212 = por %p210, %p211
    %p214 = scmp.ne.s32.totalorder %s199, %s213
    %p215 = scmp.eq.s32.totalorder %s32, 0
    %p216 = por %p214, %p215
    %s218 = sadd.s32 %s217, 1
    %p221 = scmp.eq.s32.totalorder %s26, 15
    %p222 = scmp.ne.s32.totalorder %s217, %s219
    %p223 = scmp.eq.s32.totalorder %s26, 0
    %p224 = por %p222, %p223
    %p225 = scmp.ne.s32.totalorder %s217, %s219
    %p226 = scmp.eq.s32.totalorder %s31, 15
    %p227 = por %p225, %p226
    %p228 = scmp.ne.s32.totalorder %s219, %s220
    %p229 = scmp.eq.s32.totalorder %s31, 0
    %p230 = por %p228, %p229
    %p231 = scmp.ne.s32.totalorder %s219, %s220
    %p232 = scmp.eq.s32.totalorder %s32, 15
    %p233 = por %p231, %p232
    %p235 = scmp.ne.s32.totalorder %s220, %s234
    %p236 = scmp.eq.s32.totalorder %s32, 0
    %p237 = por %p235, %p236
    %s239 = sadd.s32 %s238, 1
    %p242 = scmp.eq.s32.totalorder %s26, 15
    %p243 = scmp.ne.s32.totalorder %s238, %s240
    %p244 = scmp.eq.s32.totalorder %s26, 0
    %p245 = por %p243, %p244
    %p246 = scmp.ne.s32.totalorder %s238, %s240
    %p247 = scmp.eq.s32.totalorder %s31, 15
    %p248 = por %p246, %p247
    %p249 = scmp.ne.s32.totalorder %s240, %s241
    %p250 = scmp.eq.s32.totalorder %s31, 0
    %p251 = por %p249, %p250
    %p252 = scmp.ne.s32.totalorder %s240, %s241
    %p253 = scmp.eq.s32.totalorder %s32, 15
    %p254 = por %p252, %p253
    %p256 = scmp.ne.s32.totalorder %s241, %s255
    %p257 = scmp.eq.s32.totalorder %s32, 0
    %p258 = por %p256, %p257
    %s260 = sadd.s32 %s259, 1
    %p263 = scmp.eq.s32.totalorder %s26, 15
    %p264 = scmp.ne.s32.totalorder %s259, %s261
    %p265 = scmp.eq.s32.totalorder %s26, 0
    %p266 = por %p264, %p265
    %p267 = scmp.ne.s32.totalorder %s259, %s261
    %p268 = scmp.eq.s32.totalorder %s31, 15
    %p269 = por %p267, %p268
    %p270 = scmp.ne.s32.totalorder %s261, %s262
    %p271 = scmp.eq.s32.totalorder %s31, 0
    %p272 = por %p270, %p271
    %p273 = scmp.ne.s32.totalorder %s261, %s262
    %p274 = scmp.eq.s32.totalorder %s32, 15
    %p275 = por %p273, %p274
    %p277 = scmp.ne.s32.totalorder %s262, %s276
    %p278 = scmp.eq.s32.totalorder %s32, 0
    %p279 = por %p277, %p278
    %s281 = sadd.s32 %s280, 1
    %p284 = scmp.eq.s32.totalorder %s26, 15
    %p285 = scmp.ne.s32.totalorder %s280, %s282
    %p286 = scmp.eq.s32.totalorder %s26, 0
    %p287 = por %p285, %p286
    %p288 = scmp.ne.s32.totalorder %s280, %s282
    %p289 = scmp.eq.s32.totalorder %s31, 15
    %p290 = por %p288, %p289
    %p291 = scmp.ne.s32.totalorder %s282, %s283
    %p292 = scmp.eq.s32.totalorder %s31, 0
    %p293 = por %p291, %p292
    %p294 = scmp.ne.s32.totalorder %s282, %s283
    %p295 = scmp.eq.s32.totalorder %s32, 15
    %p296 = por %p294, %p295
    %p298 = scmp.ne.s32.totalorder %s283, %s297
    %p299 = scmp.eq.s32.totalorder %s32, 0
    %p300 = por %p298, %p299
    %s302 = sadd.s32 %s301, 1
    %p305 = scmp.eq.s32.totalorder %s26, 15
    %p306 = scmp.ne.s32.totalorder %s301, %s303
    %p307 = scmp.eq.s32.totalorder %s26, 0
    %p308 = por %p306, %p307
    %p309 = scmp.ne.s32.totalorder %s301, %s303
    %p310 = scmp.eq.s32.totalorder %s31, 15
    %p311 = por %p309, %p310
    %p312 = scmp.ne.s32.totalorder %s303, %s304
    %p313 = scmp.eq.s32.totalorder %s31, 0
    %p314 = por %p312, %p313
    %p315 = scmp.ne.s32.totalorder %s303, %s304
    %p316 = scmp.eq.s32.totalorder %s32, 15
    %p317 = por %p315, %p316
    %p319 = scmp.ne.s32.totalorder %s304, %s318
    %p320 = scmp.eq.s32.totalorder %s32, 0
    %p321 = por %p319, %p320
    %s323 = sadd.s32 %s322, 1
    %p326 = scmp.eq.s32.totalorder %s26, 15
    %p327 = scmp.ne.s32.totalorder %s322, %s324
    %p328 = scmp.eq.s32.totalorder %s26, 0
    %p329 = por %p327, %p328
    %p330 = scmp.ne.s32.totalorder %s322, %s324
    %p331 = scmp.eq.s32.totalorder %s31, 15
    %p332 = por %p330, %p331
    %p333 = scmp.ne.s32.totalorder %s324, %s325
    %p334 = scmp.eq.s32.totalorder %s31, 0
    %p335 = por %p333, %p334
    %p336 = scmp.ne.s32.totalorder %s324, %s325
    %p337 = scmp.eq.s32.totalorder %s32, 15
    %p338 = por %p336, %p337
    %p340 = scmp.ne.s32.totalorder %s325, %s339
    %p341 = scmp.eq.s32.totalorder %s32, 0
    %p342 = por %p340, %p341
    %s344 = sadd.s32 %s343, 1
    %p347 = scmp.eq.s32.totalorder %s26, 15
    %p348 = scmp.ne.s32.totalorder %s343, %s345
    %p349 = scmp.eq.s32.totalorder %s26, 0
    %p350 = por %p348, %p349
    %p351 = scmp.ne.s32.totalorder %s343, %s345
    %p352 = scmp.eq.s32.totalorder %s31, 15
    %p353 = por %p351, %p352
    %p354 = scmp.ne.s32.totalorder %s345, %s346
    %p355 = scmp.eq.s32.totalorder %s31, 0
    %p356 = por %p354, %p355
    %p357 = scmp.ne.s32.totalorder %s345, %s346
    %p358 = scmp.eq.s32.totalorder %s32, 15
    %p359 = por %p357, %p358
    %p361 = scmp.ne.s32.totalorder %s346, %s360
    %p362 = scmp.eq.s32.totalorder %s32, 0
    %p363 = por %p361, %p362
    %s365 = sadd.s32 %s364, 1
    %p368 = scmp.eq.s32.totalorder %s26, 15
    %p369 = scmp.ne.s32.totalorder %s364, %s366
    %p370 = scmp.eq.s32.totalorder %s26, 0
    %p371 = por %p369, %p370
    %p372 = scmp.ne.s32.totalorder %s364, %s366
    %p373 = scmp.eq.s32.totalorder %s31, 15
    %p374 = por %p372, %p373
    %p375 = scmp.ne.s32.totalorder %s366, %s367
    %p376 = scmp.eq.s32.totalorder %s31, 0
    %p377 = por %p375, %p376
    %p378 = scmp.ne.s32.totalorder %s366, %s367
    %p379 = scmp.eq.s32.totalorder %s32, 15
    %p380 = por %p378, %p379
    %p382 = scmp.ne.s32.totalorder %s367, %s381
    %p383 = scmp.eq.s32.totalorder %s32, 0
    %p384 = por %p382, %p383
    %s386 = sadd.s32 %s385, 1
    %p389 = scmp.eq.s32.totalorder %s26, 15
    %p390 = scmp.ne.s32.totalorder %s385, %s387
    %p391 = scmp.eq.s32.totalorder %s26, 0
    %p392 = por %p390, %p391
    %p393 = scmp.ne.s32.totalorder %s385, %s387
    %p394 = scmp.eq.s32.totalorder %s31, 15
    %p395 = por %p393, %p394
    %p396 = scmp.ne.s32.totalorder %s387, %s388
    %p397 = scmp.eq.s32.totalorder %s31, 0
    %p398 = por %p396, %p397
    %p399 = scmp.ne.s32.totalorder %s387, %s388
    %p400 = scmp.eq.s32.totalorder %s32, 15
    %p401 = por %p399, %p400
    %p403 = scmp.ne.s32.totalorder %s388, %s402
    %p404 = scmp.eq.s32.totalorder %s32, 0
    %p405 = por %p403, %p404
    %s407 = sadd.s32 %s406, 1
    %p410 = scmp.eq.s32.totalorder %s26, 15
    %p411 = scmp.ne.s32.totalorder %s406, %s408
    %p412 = scmp.eq.s32.totalorder %s26, 0
    %p413 = por %p411, %p412
    %p414 = scmp.ne.s32.totalorder %s406, %s408
    %p415 = scmp.eq.s32.totalorder %s31, 15
    %p416 = por %p414, %p415
    %p417 = scmp.ne.s32.totalorder %s408, %s409
    %p418 = scmp.eq.s32.totalorder %s31, 0
    %p419 = por %p417, %p418
    %p420 = scmp.ne.s32.totalorder %s408, %s409
    %p421 = scmp.eq.s32.totalorder %s32, 15
    %p422 = por %p420, %p421
    %p424 = scmp.ne.s32.totalorder %s409, %s423
    %p425 = scmp.eq.s32.totalorder %s32, 0
    %p426 = por %p424, %p425
    %s428 = sadd.s32 %s427, 1
    %p431 = scmp.eq.s32.totalorder %s26, 15
    %p432 = scmp.ne.s32.totalorder %s427, %s429
    %p433 = scmp.eq.s32.totalorder %s26, 0
    %p434 = por %p432, %p433
    %p435 = scmp.ne.s32.totalorder %s427, %s429
    %p436 = scmp.eq.s32.totalorder %s31, 15
    %p437 = por %p435, %p436
    %p438 = scmp.ne.s32.totalorder %s429, %s430
    %p439 = scmp.eq.s32.totalorder %s31, 0
    %p440 = por %p438, %p439
    %p441 = scmp.ne.s32.totalorder %s429, %s430
    %p442 = scmp.eq.s32.totalorder %s32, 15
    %p443 = por %p441, %p442
    %p445 = scmp.ne.s32.totalorder %s430, %s444
    %p446 = scmp.eq.s32.totalorder %s32, 0
    %p447 = por %p445, %p446
    %s448 = ssub.s32 %s34, %s41
    %s449 = ssub.s32 %s33, %s45
    %s450 = sor.u32 %s448, %s449
    %p451 = scmp.eq.s32.totalorder %s450, 0
    %s453 = sadd.s32 %s452, 1
    %s454 = scalar_select %p451, %s452, %s453
    %p457 = pneg %p451
    %p458 = scmp.eq.s32.totalorder %s26, 15
    %p459 = por %p457, %p458
    %p460 = scmp.ne.s32.totalorder %s452, %s455
    %p461 = scmp.eq.s32.totalorder %s26, 0
    %p462 = por %p460, %p461
    %p463 = scmp.ne.s32.totalorder %s452, %s455
    %p464 = scmp.eq.s32.totalorder %s31, 15
    %p465 = por %p463, %p464
    %p466 = scmp.ne.s32.totalorder %s455, %s456
    %p467 = scmp.eq.s32.totalorder %s31, 0
    %p468 = por %p466, %p467
    %p469 = scmp.ne.s32.totalorder %s455, %s456
    %p470 = scmp.eq.s32.totalorder %s32, 15
    %p471 = por %p469, %p470
    %p473 = scmp.ne.s32.totalorder %s456, %s472
    %p474 = scmp.eq.s32.totalorder %s32, 0
    %p475 = por %p473, %p474
    %s476 = ssub.s32 %s33, %s45
    %p477 = scmp.eq.s32.totalorder %s476, 0
    %s479 = sadd.s32 %s478, 1
    %s480 = scalar_select %p477, %s478, %s479
    %p483 = pneg %p477
    %p484 = scmp.eq.s32.totalorder %s26, 15
    %p485 = por %p483, %p484
    %p486 = scmp.ne.s32.totalorder %s478, %s481
    %p487 = scmp.eq.s32.totalorder %s26, 0
    %p488 = por %p486, %p487
    %p489 = scmp.ne.s32.totalorder %s478, %s481
    %p490 = scmp.eq.s32.totalorder %s31, 15
    %p491 = por %p489, %p490
    %p492 = scmp.ne.s32.totalorder %s481, %s482
    %p493 = scmp.eq.s32.totalorder %s31, 0
    %p494 = por %p492, %p493
    %p495 = scmp.ne.s32.totalorder %s481, %s482
    %p496 = scmp.eq.s32.totalorder %s32, 15
    %p497 = por %p495, %p496
    %p499 = scmp.ne.s32.totalorder %s482, %s498
    %p500 = scmp.eq.s32.totalorder %s32, 0
    %p501 = por %p499, %p500
    %p502 = scmp.le.s32.totalorder 1, %s26
    %p503 = scmp.lt.s32.totalorder %s26, 17
    %p504 = pnand %p502, %p503
    %p505 = pneg %p504
    // Predicated region
    $region9: #{dueling_lstm_forward.1} parent=5 // pred_check
      _
    $region10: #{dueling_lstm_forward.1} parent=5 // pred_check_branch
      %507 = sbr.rel (%p504) target = $region12
    $region11: #{dueling_lstm_forward.1} parent=5 // pred_region
      %s508 = ssub.s32 %s26, 1
      // Predicated region
      $region13: #{dueling_lstm_forward.1} parent=11 // pred_check
        %p509 = pneg %p167
      $region14: #{dueling_lstm_forward.1} parent=11 // pred_check_branch
        %511 = sbr.rel (%p509) target = $region16
      $region15: #{dueling_lstm_forward.1} parent=11 // pred_region
        _
      $region16: #{dueling_lstm_forward.1} parent=11 // pred_fallthru
        _
      // Predicated region
      $region17: #{dueling_lstm_forward.1} parent=11 // pred_check
        %p512 = pneg %p188
      $region18: #{dueling_lstm_forward.1} parent=11 // pred_check_branch
        %514 = sbr.rel (%p512) target = $region20
      $region19: #{dueling_lstm_forward.1} parent=11 // pred_region
        _
      $region20: #{dueling_lstm_forward.1} parent=11 // pred_fallthru
        _
      // Predicated region
      $region21: #{dueling_lstm_forward.1} parent=11 // pred_check
        %p515 = pneg %p209
      $region22: #{dueling_lstm_forward.1} parent=11 // pred_check_branch
        %517 = sbr.rel (%p515) target = $region24
      $region23: #{dueling_lstm_forward.1} parent=11 // pred_region
        _
      $region24: #{dueling_lstm_forward.1} parent=11 // pred_fallthru
        _
      // Predicated region
      $region25: #{dueling_lstm_forward.1} parent=11 // pred_check
        %p518 = pneg %p230
      $region26: #{dueling_lstm_forward.1} parent=11 // pred_check_branch
        %520 = sbr.rel (%p518) target = $region28
      $region27: #{dueling_lstm_forward.1} parent=11 // pred_region
        _
      $region28: #{dueling_lstm_forward.1} parent=11 // pred_fallthru
        _
      // Predicated region
      $region29: #{dueling_lstm_forward.1} parent=11 // pred_check
        %p521 = pneg %p251
      $region30: #{dueling_lstm_forward.1} parent=11 // pred_check_branch
        %523 = sbr.rel (%p521) target = $region32
      $region31: #{dueling_lstm_forward.1} parent=11 // pred_region
        _
      $region32: #{dueling_lstm_forward.1} parent=11 // pred_fallthru
        _
      // Predicated region
      $region33: #{dueling_lstm_forward.1} parent=11 // pred_check
        %p524 = pneg %p272
      $region34: #{dueling_lstm_forward.1} parent=11 // pred_check_branch
        %526 = sbr.rel (%p524) target = $region36
      $region35: #{dueling_lstm_forward.1} parent=11 // pred_region
        _
      $region36: #{dueling_lstm_forward.1} parent=11 // pred_fallthru
        _
      // Predicated region
      $region37: #{dueling_lstm_forward.1} parent=11 // pred_check
        %p527 = pneg %p293
      $region38: #{dueling_lstm_forward.1} parent=11 // pred_check_branch
        %529 = sbr.rel (%p527) target = $region40
      $region39: #{dueling_lstm_forward.1} parent=11 // pred_region
        _
      $region40: #{dueling_lstm_forward.1} parent=11 // pred_fallthru
        _
      // Predicated region
      $region41: #{dueling_lstm_forward.1} parent=11 // pred_check
        %p530 = pneg %p314
      $region42: #{dueling_lstm_forward.1} parent=11 // pred_check_branch
        %532 = sbr.rel (%p530) target = $region44
      $region43: #{dueling_lstm_forward.1} parent=11 // pred_region
        _
      $region44: #{dueling_lstm_forward.1} parent=11 // pred_fallthru
        _
      // Predicated region
      $region45: #{dueling_lstm_forward.1} parent=11 // pred_check
        %p533 = pneg %p335
      $region46: #{dueling_lstm_forward.1} parent=11 // pred_check_branch
        %535 = sbr.rel (%p533) target = $region48
      $region47: #{dueling_lstm_forward.1} parent=11 // pred_region
        _
      $region48: #{dueling_lstm_forward.1} parent=11 // pred_fallthru
        _
      // Predicated region
      $region49: #{dueling_lstm_forward.1} parent=11 // pred_check
        %p536 = pneg %p356
      $region50: #{dueling_lstm_forward.1} parent=11 // pred_check_branch
        %538 = sbr.rel (%p536) target = $region52
      $region51: #{dueling_lstm_forward.1} parent=11 // pred_region
        _
      $region52: #{dueling_lstm_forward.1} parent=11 // pred_fallthru
        _
      // Predicated region
      $region53: #{dueling_lstm_forward.1} parent=11 // pred_check
        %p539 = pneg %p377
      $region54: #{dueling_lstm_forward.1} parent=11 // pred_check_branch
        %541 = sbr.rel (%p539) target = $region56
      $region55: #{dueling_lstm_forward.1} parent=11 // pred_region
        _
      $region56: #{dueling_lstm_forward.1} parent=11 // pred_fallthru
        _
      // Predicated region
      $region57: #{dueling_lstm_forward.1} parent=11 // pred_check
        %p542 = pneg %p398
      $region58: #{dueling_lstm_forward.1} parent=11 // pred_check_branch
        %544 = sbr.rel (%p542) target = $region60
      $region59: #{dueling_lstm_forward.1} parent=11 // pred_region
        _
      $region60: #{dueling_lstm_forward.1} parent=11 // pred_fallthru
        _
      // Predicated region
      $region61: #{dueling_lstm_forward.1} parent=11 // pred_check
        %p545 = pneg %p419
      $region62: #{dueling_lstm_forward.1} parent=11 // pred_check_branch
        %547 = sbr.rel (%p545) target = $region64
      $region63: #{dueling_lstm_forward.1} parent=11 // pred_region
        _
      $region64: #{dueling_lstm_forward.1} parent=11 // pred_fallthru
        _
      // Predicated region
      $region65: #{dueling_lstm_forward.1} parent=11 // pred_check
        %p548 = pneg %p440
      $region66: #{dueling_lstm_forward.1} parent=11 // pred_check_branch
        %550 = sbr.rel (%p548) target = $region68
      $region67: #{dueling_lstm_forward.1} parent=11 // pred_region
        _
      $region68: #{dueling_lstm_forward.1} parent=11 // pred_fallthru
        _
    $region12: #{dueling_lstm_forward.1} parent=5 // pred_fallthru
      _
    %p551 = scmp.lt.s32.totalorder %s26, 16
    // Predicated region
    $region69: #{dueling_lstm_forward.1} parent=5 // pred_check
      %p552 = pneg %p551
    $region70: #{dueling_lstm_forward.1} parent=5 // pred_check_branch
      %554 = sbr.rel (%p552) target = $region72
    $region71: #{dueling_lstm_forward.1} parent=5 // pred_region
      // Predicated region
      $region73: #{dueling_lstm_forward.1} parent=71 // pred_check
        %p555 = pneg %p60
      $region74: #{dueling_lstm_forward.1} parent=71 // pred_check_branch
        %557 = sbr.rel (%p555) target = $region76
      $region75: #{dueling_lstm_forward.1} parent=71 // pred_region
        %p558 = scmp.lt.s32.totalorder %s34, 7
        %s559 = scalar_select %p558, %s34, 7
        %p560 = scmp.lt.s32.totalorder %s33, 1
        %s561 = scalar_select %p560, %s33, 1
        %s562 = smul.addr %s561, 144
        %s563 = smul.addr %s559, 288
        %s564 = sadd.s32 %s562, %s563
        %s565 = smul.addr %s564, 4
        %s566 = scalar_lea.vmem %s0, %s565
      $region76: #{dueling_lstm_forward.1} parent=71 // pred_fallthru
        _
      // Predicated region
      $region77: #{dueling_lstm_forward.1} parent=71 // pred_check
        %p567 = pneg %p88
      $region78: #{dueling_lstm_forward.1} parent=71 // pred_check_branch
        %569 = sbr.rel (%p567) target = $region80
      $region79: #{dueling_lstm_forward.1} parent=71 // pred_region
        %p570 = scmp.lt.s32.totalorder %s34, 7
        %s571 = scalar_select %p570, %s34, 7
        %p572 = scmp.lt.s32.totalorder %s33, 1
        %s573 = scalar_select %p572, %s33, 1
        %s574 = smul.addr %s571, 2
        %s575 = sadd.s32 %s573, %s574
        %s576 = smul.addr %s575, 8
        %s577 = scalar_lea.vmem %s1, %s576
      $region80: #{dueling_lstm_forward.1} parent=71 // pred_fallthru
        _
      // Predicated region
      $region81: #{dueling_lstm_forward.1} parent=71 // pred_check
        %p578 = pneg %p114
      $region82: #{dueling_lstm_forward.1} parent=71 // pred_check_branch
        %580 = sbr.rel (%p578) target = $region84
      $region83: #{dueling_lstm_forward.1} parent=71 // pred_region
        %p581 = scmp.lt.s32.totalorder %s33, 1
        %s582 = scalar_select %p581, %s33, 1
        %s583 = smul.addr %s582, 8
        %s584 = scalar_lea.vmem %s2, %s583
      $region84: #{dueling_lstm_forward.1} parent=71 // pred_fallthru
        _
      // Predicated region
      $region85: #{dueling_lstm_forward.1} parent=71 // pred_check
        %p585 = pneg %p140
      $region86: #{dueling_lstm_forward.1} parent=71 // pred_check_branch
        %587 = sbr.rel (%p585) target = $region88
      $region87: #{dueling_lstm_forward.1} parent=71 // pred_region
        %p588 = scmp.lt.s32.totalorder %s33, 1
        %s589 = scalar_select %p588, %s33, 1
        %s590 = smul.addr %s589, 8
        %s591 = scalar_lea.vmem %s3, %s590
      $region88: #{dueling_lstm_forward.1} parent=71 // pred_fallthru
        _
    $region72: #{dueling_lstm_forward.1} parent=5 // pred_fallthru
      _
    %p592 = scmp.le.s32.totalorder 1, %s26
    %p593 = scmp.lt.s32.totalorder %s26, 17
    %p594 = pnand %p592, %p593
    %p595 = pneg %p594
    // Predicated region
    $region89: #{dueling_lstm_forward.1} parent=5 // pred_check
      _
    $region90: #{dueling_lstm_forward.1} parent=5 // pred_check_branch
      %597 = sbr.rel (%p594) target = $region92
    $region91: #{dueling_lstm_forward.1} parent=5 // pred_region
      %s598 = ssub.s32 %s26, 1
      %p599 = scmp.lt.s32.totalorder %s36, 7
      %s600 = scalar_select %p599, %s36, 7
      %p601 = scmp.lt.s32.totalorder %s35, 1
      %s602 = scalar_select %p601, %s35, 1
      %s603 = smul.addr %s602, 144
      %s604 = smul.addr %s600, 288
      %s605 = sadd.s32 %s603, %s604
      %s606 = smul.addr %s605, 4
      %s607 = scalar_lea.vmem %s0, %s606
      %p608 = pneg %p66
      %p609 = pneg %p63
      %p610 = scmp.lt.s32.totalorder %s36, 7
      %s611 = scalar_select %p610, %s36, 7
      %p612 = scmp.lt.s32.totalorder %s35, 1
      %s613 = scalar_select %p612, %s35, 1
      %s614 = smul.addr %s611, 2
      %s615 = sadd.s32 %s613, %s614
      %s616 = smul.addr %s615, 8
      %s617 = scalar_lea.vmem %s1, %s616
      %p618 = pneg %p94
      %p619 = pneg %p91
      %p620 = scmp.lt.s32.totalorder %s35, 1
      %s621 = scalar_select %p620, %s35, 1
      %s622 = smul.addr %s621, 8
      %s623 = scalar_lea.vmem %s2, %s622
      %p624 = pneg %p120
      %p625 = pneg %p117
      %p626 = scmp.lt.s32.totalorder %s35, 1
      %s627 = scalar_select %p626, %s35, 1
      %s628 = smul.addr %s627, 8
      %s629 = scalar_lea.vmem %s3, %s628
      %p630 = pneg %p146
      %p631 = pneg %p143
      %p632 = pneg %p167
      %p633 = pneg %p164
      %p634 = pneg %p188
      %p635 = pneg %p185
      %p636 = pneg %p209
      %p637 = pneg %p206
      %p638 = pneg %p230
      %p639 = pneg %p227
      %p640 = pneg %p251
      %p641 = pneg %p248
      %p642 = pneg %p272
      %p643 = pneg %p269
      %p644 = pneg %p293
      %p645 = pneg %p290
      %p646 = pneg %p314
      %p647 = pneg %p311
      %p648 = pneg %p335
      %p649 = pneg %p332
      %p650 = pneg %p356
      %p651 = pneg %p353
      %p652 = pneg %p377
      %p653 = pneg %p374
      %p654 = pneg %p398
      %p655 = pneg %p395
      %p656 = pneg %p419
      %p657 = pneg %p416
      %p658 = pneg %p440
      %p659 = pneg %p437
      %p660 = pneg %p468
      %p661 = pneg %p465
      %p662 = scmp.lt.s32.totalorder %s36, 7
      %s663 = scalar_select %p662, %s36, 7
      %p664 = scmp.lt.s32.totalorder %s35, 1
      %s665 = scalar_select %p664, %s35, 1
      %s666 = smul.addr %s663, 2
      %s667 = sadd.s32 %s665, %s666
      %s668 = smul.addr %s667, 8
      %s669 = scalar_lea.vmem %s18, %s668
      %p670 = pneg %p494
      %p671 = pneg %p491
      %p672 = scmp.lt.s32.totalorder %s35, 1
      %s673 = scalar_select %p672, %s35, 1
      %s674 = smul.addr %s673, 2
      %s675 = smul.addr %s674, 8
      %s676 = scalar_lea.vmem %s19, %s675
      %p677 = scmp.lt.s32.totalorder %s36, 7
      %s678 = scalar_select %p677, %s36, 7
      %p679 = scmp.lt.s32.totalorder %s35, 1
      %s680 = scalar_select %p679, %s35, 1
      %s681 = smul.addr %s680, 144
      %s682 = smul.addr %s678, 288
      %s683 = sadd.s32 %s681, %s682
      %s684 = smul.addr %s683, 4
      %s685 = scalar_lea.vmem %s0, %s684
      %p686 = scmp.lt.s32.totalorder %s36, 7
      %s687 = scalar_select %p686, %s36, 7
      %p688 = scmp.lt.s32.totalorder %s35, 1
      %s689 = scalar_select %p688, %s35, 1
      %s690 = smul.addr %s687, 2
      %s691 = sadd.s32 %s689, %s690
      %s692 = smul.addr %s691, 8
      %s693 = scalar_lea.vmem %s1, %s692
      %p694 = scmp.lt.s32.totalorder %s35, 1
      %s695 = scalar_select %p694, %s35, 1
      %s696 = smul.addr %s695, 8
      %s697 = scalar_lea.vmem %s2, %s696
      %p698 = scmp.lt.s32.totalorder %s35, 1
      %s699 = scalar_select %p698, %s35, 1
      %s700 = smul.addr %s699, 8
      %s701 = scalar_lea.vmem %s3, %s700
      %p702 = scmp.lt.s32.totalorder %s36, 7
      %s703 = scalar_select %p702, %s36, 7
      %p704 = scmp.lt.s32.totalorder %s35, 1
      %s705 = scalar_select %p704, %s35, 1
      %s706 = smul.addr %s703, 2
      %s707 = sadd.s32 %s705, %s706
      %s708 = smul.addr %s707, 8
      %s709 = scalar_lea.vmem %s18, %s708
      %p710 = scmp.lt.s32.totalorder %s35, 1
      %s711 = scalar_select %p710, %s35, 1
      %s712 = smul.addr %s711, 2
      %s713 = smul.addr %s712, 8
      %s714 = scalar_lea.vmem %s19, %s713
      %p716 = scmp.eq.s32.totalorder %s36, 0
      // Predicated region
      $region93: #{dueling_lstm_forward.1} parent=91 // pred_check
        %p717 = pneg %p716
      $region94: #{dueling_lstm_forward.1} parent=91 // pred_check_branch
        %719 = sbr.rel (%p717) target = $region96
      $region95: #{dueling_lstm_forward.1} parent=91 // pred_region
        %v720 = vld [vmem:[%s697] sm:$0xff]
        %721 = vst [vmem:[#allocation2] sm:$0xff] %v720
        %v722 = vld [vmem:[%s701] sm:$0xff]
        %723 = vst [vmem:[#allocation3] sm:$0xff] %v722
      $region96: #{dueling_lstm_forward.1} parent=91 // pred_fallthru
        _
      %v724 = vld [vmem:[%s685] sm:$0xf]
      %v725 = vld [vmem:[%s685 + $0x4] sm:$0xf]
      %v726 = vld [vmem:[%s685 + $0x8] sm:$0xf]
      %v727 = vld [vmem:[%s685 + $0xc] sm:$0xf]
      %v728 = vld [vmem:[%s685 + $0x10] sm:$0xf]
      %v729 = vld [vmem:[%s685 + $0x14] sm:$0xf]
      %v730 = vld [vmem:[%s685 + $0x18] sm:$0xf]
      %v731 = vld [vmem:[%s685 + $0x1c] sm:$0xf]
      %v732 = vld [vmem:[%s685 + $0x20] sm:$0xf]
      %v733 = vld [vmem:[%s685 + $0x24] sm:$0xf]
      %v734 = vld [vmem:[%s685 + $0x28] sm:$0xf]
      %v735 = vld [vmem:[%s685 + $0x2c] sm:$0xf]
      %v736 = vld [vmem:[%s685 + $0x30] sm:$0xf]
      %v737 = vld [vmem:[%s685 + $0x34] sm:$0xf]
      %v738 = vld [vmem:[%s685 + $0x38] sm:$0xf]
      %v739 = vld [vmem:[%s685 + $0x3c] sm:$0xf]
      %v740 = vld [vmem:[%s685 + $0x40] sm:$0xf]
      %v741 = vld [vmem:[%s685 + $0x44] sm:$0xf]
      %v742 = vld [vmem:[%s685 + $0x48] sm:$0xf]
      %v743 = vld [vmem:[%s685 + $0x4c] sm:$0xf]
      %v744 = vld [vmem:[%s685 + $0x50] sm:$0xf]
      %v745 = vld [vmem:[%s685 + $0x54] sm:$0xf]
      %v746 = vld [vmem:[%s685 + $0x58] sm:$0xf]
      %v747 = vld [vmem:[%s685 + $0x5c] sm:$0xf]
      %v748 = vld [vmem:[%s685 + $0x60] sm:$0xf]
      %v749 = vld [vmem:[%s685 + $0x64] sm:$0xf]
      %v750 = vld [vmem:[%s685 + $0x68] sm:$0xf]
      %v751 = vld [vmem:[%s685 + $0x6c] sm:$0xf]
      %v752 = vld [vmem:[%s685 + $0x70] sm:$0xf]
      %v753 = vld [vmem:[%s685 + $0x74] sm:$0xf]
      %v754 = vld [vmem:[%s685 + $0x78] sm:$0xf]
      %v755 = vld [vmem:[%s685 + $0x7c] sm:$0xf]
      %v756 = vld [vmem:[%s685 + $0x80] sm:$0xf]
      %v757 = vld [vmem:[%s685 + $0x84] sm:$0xf]
      %v758 = vld [vmem:[%s685 + $0x88] sm:$0xf]
      %v759 = vld [vmem:[%s685 + $0x8c] sm:$0xf]
      %v760 = vld [vmem:[%s685 + $0x90] sm:$0xf]
      %v761 = vld [vmem:[%s685 + $0x94] sm:$0xf]
      %v762 = vld [vmem:[%s685 + $0x98] sm:$0xf]
      %v763 = vld [vmem:[%s685 + $0x9c] sm:$0xf]
      %v764 = vld [vmem:[%s685 + $0xa0] sm:$0xf]
      %v765 = vld [vmem:[%s685 + $0xa4] sm:$0xf]
      %v766 = vld [vmem:[%s685 + $0xa8] sm:$0xf]
      %v767 = vld [vmem:[%s685 + $0xac] sm:$0xf]
      %v768 = vld [vmem:[%s685 + $0xb0] sm:$0xf]
      %v769 = vld [vmem:[%s685 + $0xb4] sm:$0xf]
      %v770 = vld [vmem:[%s685 + $0xb8] sm:$0xf]
      %v771 = vld [vmem:[%s685 + $0xbc] sm:$0xf]
      %v772 = vld [vmem:[%s685 + $0xc0] sm:$0xf]
      %v773 = vld [vmem:[%s685 + $0xc4] sm:$0xf]
      %v774 = vld [vmem:[%s685 + $0xc8] sm:$0xf]
      %v775 = vld [vmem:[%s685 + $0xcc] sm:$0xf]
      %v776 = vld [vmem:[%s685 + $0xd0] sm:$0xf]
      %v777 = vld [vmem:[%s685 + $0xd4] sm:$0xf]
      %v778 = vld [vmem:[%s685 + $0xd8] sm:$0xf]
      %v779 = vld [vmem:[%s685 + $0xdc] sm:$0xf]
      %v780 = vld [vmem:[%s685 + $0xe0] sm:$0xf]
      %v781 = vld [vmem:[%s685 + $0xe4] sm:$0xf]
      %v782 = vld [vmem:[%s685 + $0xe8] sm:$0xf]
      %v783 = vld [vmem:[%s685 + $0xec] sm:$0xf]
      %v784 = vld [vmem:[%s685 + $0xf0] sm:$0xf]
      %v785 = vld [vmem:[%s685 + $0xf4] sm:$0xf]
      %v786 = vld [vmem:[%s685 + $0xf8] sm:$0xf]
      %v787 = vld [vmem:[%s685 + $0xfc] sm:$0xf]
      %v788 = vld [vmem:[%s685 + $0x100] sm:$0xf]
      %v789 = vld [vmem:[%s685 + $0x104] sm:$0xf]
      %v790 = vld [vmem:[%s685 + $0x108] sm:$0xf]
      %v791 = vld [vmem:[%s685 + $0x10c] sm:$0xf]
      %v792 = vld [vmem:[%s685 + $0x110] sm:$0xf]
      %v793 = vld [vmem:[%s685 + $0x114] sm:$0xf]
      %v794 = vld [vmem:[%s685 + $0x118] sm:$0xf]
      %v795 = vld [vmem:[%s685 + $0x11c] sm:$0xf]
      %v796 = vld [vmem:[%s685 + $0x120] sm:$0xf]
      %v797 = vld [vmem:[%s685 + $0x124] sm:$0xf]
      %v798 = vld [vmem:[%s685 + $0x128] sm:$0xf]
      %v799 = vld [vmem:[%s685 + $0x12c] sm:$0xf]
      %v800 = vld [vmem:[%s685 + $0x130] sm:$0xf]
      %v801 = vld [vmem:[%s685 + $0x134] sm:$0xf]
      %v802 = vld [vmem:[%s685 + $0x138] sm:$0xf]
      %v803 = vld [vmem:[%s685 + $0x13c] sm:$0xf]
      %v804 = vld [vmem:[%s685 + $0x140] sm:$0xf]
      %v805 = vld [vmem:[%s685 + $0x144] sm:$0xf]
      %v806 = vld [vmem:[%s685 + $0x148] sm:$0xf]
      %v807 = vld [vmem:[%s685 + $0x14c] sm:$0xf]
      %v808 = vld [vmem:[%s685 + $0x150] sm:$0xf]
      %v809 = vld [vmem:[%s685 + $0x154] sm:$0xf]
      %v810 = vld [vmem:[%s685 + $0x158] sm:$0xf]
      %v811 = vld [vmem:[%s685 + $0x15c] sm:$0xf]
      %v812 = vld [vmem:[%s685 + $0x160] sm:$0xf]
      %v813 = vld [vmem:[%s685 + $0x164] sm:$0xf]
      %v814 = vld [vmem:[%s685 + $0x168] sm:$0xf]
      %v815 = vld [vmem:[%s685 + $0x16c] sm:$0xf]
      %v816 = vld [vmem:[%s685 + $0x170] sm:$0xf]
      %v817 = vld [vmem:[%s685 + $0x174] sm:$0xf]
      %v818 = vld [vmem:[%s685 + $0x178] sm:$0xf]
      %v819 = vld [vmem:[%s685 + $0x17c] sm:$0xf]
      %v820 = vld [vmem:[%s685 + $0x180] sm:$0xf]
      %v821 = vld [vmem:[%s685 + $0x184] sm:$0xf]
      %v822 = vld [vmem:[%s685 + $0x188] sm:$0xf]
      %v823 = vld [vmem:[%s685 + $0x18c] sm:$0xf]
      %v824 = vld [vmem:[%s685 + $0x190] sm:$0xf]
      %v825 = vld [vmem:[%s685 + $0x194] sm:$0xf]
      %v826 = vld [vmem:[%s685 + $0x198] sm:$0xf]
      %v827 = vld [vmem:[%s685 + $0x19c] sm:$0xf]
      %v828 = vld [vmem:[%s685 + $0x1a0] sm:$0xf]
      %v829 = vld [vmem:[%s685 + $0x1a4] sm:$0xf]
      %v830 = vld [vmem:[%s685 + $0x1a8] sm:$0xf]
      %v831 = vld [vmem:[%s685 + $0x1ac] sm:$0xf]
      %v832 = vld [vmem:[%s685 + $0x1b0] sm:$0xf]
      %v833 = vld [vmem:[%s685 + $0x1b4] sm:$0xf]
      %v834 = vld [vmem:[%s685 + $0x1b8] sm:$0xf]
      %v835 = vld [vmem:[%s685 + $0x1bc] sm:$0xf]
      %v836 = vld [vmem:[%s685 + $0x1c0] sm:$0xf]
      %v837 = vld [vmem:[%s685 + $0x1c4] sm:$0xf]
      %v838 = vld [vmem:[%s685 + $0x1c8] sm:$0xf]
      %v839 = vld [vmem:[%s685 + $0x1cc] sm:$0xf]
      %v840 = vld [vmem:[%s685 + $0x1d0] sm:$0xf]
      %v841 = vld [vmem:[%s685 + $0x1d4] sm:$0xf]
      %v842 = vld [vmem:[%s685 + $0x1d8] sm:$0xf]
      %v843 = vld [vmem:[%s685 + $0x1dc] sm:$0xf]
      %v844 = vld [vmem:[%s685 + $0x1e0] sm:$0xf]
      %v845 = vld [vmem:[%s685 + $0x1e4] sm:$0xf]
      %v846 = vld [vmem:[%s685 + $0x1e8] sm:$0xf]
      %v847 = vld [vmem:[%s685 + $0x1ec] sm:$0xf]
      %v848 = vld [vmem:[%s685 + $0x1f0] sm:$0xf]
      %v849 = vld [vmem:[%s685 + $0x1f4] sm:$0xf]
      %v850 = vld [vmem:[%s685 + $0x1f8] sm:$0xf]
      %v851 = vld [vmem:[%s685 + $0x1fc] sm:$0xf]
      %v852 = vld [vmem:[%s685 + $0x200] sm:$0xf]
      %v853 = vld [vmem:[%s685 + $0x204] sm:$0xf]
      %v854 = vld [vmem:[%s685 + $0x208] sm:$0xf]
      %v855 = vld [vmem:[%s685 + $0x20c] sm:$0xf]
      %v856 = vld [vmem:[%s685 + $0x210] sm:$0xf]
      %v857 = vld [vmem:[%s685 + $0x214] sm:$0xf]
      %v858 = vld [vmem:[%s685 + $0x218] sm:$0xf]
      %v859 = vld [vmem:[%s685 + $0x21c] sm:$0xf]
      %v860 = vld [vmem:[%s685 + $0x220] sm:$0xf]
      %v861 = vld [vmem:[%s685 + $0x224] sm:$0xf]
      %v862 = vld [vmem:[%s685 + $0x228] sm:$0xf]
      %v863 = vld [vmem:[%s685 + $0x22c] sm:$0xf]
      %v864 = vld [vmem:[%s685 + $0x230] sm:$0xf]
      %v865 = vld [vmem:[%s685 + $0x234] sm:$0xf]
      %v866 = vld [vmem:[%s685 + $0x238] sm:$0xf]
      %v867 = vld [vmem:[%s685 + $0x23c] sm:$0xf]
      %v868 = vld [vmem:[%s4] sm:$0xf]
      %v869 = vld [vmem:[%s4 + $0x4] sm:$0xf]
      %v870 = vld [vmem:[%s4 + $0x8] sm:$0xf]
      %v871 = vld [vmem:[%s4 + $0xc] sm:$0xf]
      %v872 = vld [vmem:[%s4 + $0x10] sm:$0xf]
      %v873 = vld [vmem:[%s4 + $0x14] sm:$0xf]
      %v874 = vld [vmem:[%s4 + $0x18] sm:$0xf]
      %v875 = vld [vmem:[%s4 + $0x1c] sm:$0xf]
      %v876 = vld [vmem:[%s5] sm:$0x1]
      %v878 = vlaneseq
      %v879 = vshrl.u32 %v878, 7
      %v880 = vsub.s32 0, %v879
      %v881 = vrot.slane %v876, %v880
      %v1027 = vunpack.c.l.b16 %v724
      %v1028 = vunpack.c.l.b16 %v725
      %v1029 = vunpack.c.l.b16 %v726
      %v1030 = vunpack.c.l.b16 %v727
      %v1031 = vunpack.c.l.b16 %v728
      %v1032 = vunpack.c.l.b16 %v729
      %v1033 = vunpack.c.l.b16 %v730
      %v1034 = vunpack.c.l.b16 %v731
      %v1035 = vunpack.c.l.b16 %v732
      %v1036 = vunpack.c.l.b16 %v733
      %v1037 = vunpack.c.l.b16 %v734
      %v1038 = vunpack.c.l.b16 %v735
      %v1039 = vunpack.c.l.b16 %v736
      %v1040 = vunpack.c.l.b16 %v737
      %v1041 = vunpack.c.l.b16 %v738
      %v1042 = vunpack.c.l.b16 %v739
      %v1043 = vunpack.c.l.b16 %v740
      %v1044 = vunpack.c.l.b16 %v741
      %v1045 = vunpack.c.l.b16 %v742
      %v1046 = vunpack.c.l.b16 %v743
      %v1047 = vunpack.c.l.b16 %v744
      %v1048 = vunpack.c.l.b16 %v745
      %v1049 = vunpack.c.l.b16 %v746
      %v1050 = vunpack.c.l.b16 %v747
      %v1051 = vunpack.c.l.b16 %v748
      %v1052 = vunpack.c.l.b16 %v749
      %v1053 = vunpack.c.l.b16 %v750
      %v1054 = vunpack.c.l.b16 %v751
      %v1055 = vunpack.c.l.b16 %v752
      %v1056 = vunpack.c.l.b16 %v753
      %v1057 = vunpack.c.l.b16 %v754
      %v1058 = vunpack.c.l.b16 %v755
      %v1059 = vunpack.c.l.b16 %v756
      %v1060 = vunpack.c.l.b16 %v757
      %v1061 = vunpack.c.l.b16 %v758
      %v1062 = vunpack.c.l.b16 %v759
      %v1063 = vunpack.c.l.b16 %v760
      %v1064 = vunpack.c.l.b16 %v761
      %v1065 = vunpack.c.l.b16 %v762
      %v1066 = vunpack.c.l.b16 %v763
      %v1067 = vunpack.c.l.b16 %v764
      %v1068 = vunpack.c.l.b16 %v765
      %v1069 = vunpack.c.l.b16 %v766
      %v1070 = vunpack.c.l.b16 %v767
      %v1071 = vunpack.c.l.b16 %v768
      %v1072 = vunpack.c.l.b16 %v769
      %v1073 = vunpack.c.l.b16 %v770
      %v1074 = vunpack.c.l.b16 %v771
      %v1075 = vunpack.c.l.b16 %v772
      %v1076 = vunpack.c.l.b16 %v773
      %v1077 = vunpack.c.l.b16 %v774
      %v1078 = vunpack.c.l.b16 %v775
      %v1079 = vunpack.c.l.b16 %v776
      %v1080 = vunpack.c.l.b16 %v777
      %v1081 = vunpack.c.l.b16 %v778
      %v1082 = vunpack.c.l.b16 %v779
      %v1083 = vunpack.c.l.b16 %v780
      %v1084 = vunpack.c.l.b16 %v781
      %v1085 = vunpack.c.l.b16 %v782
      %v1086 = vunpack.c.l.b16 %v783
      %v1087 = vunpack.c.l.b16 %v784
      %v1088 = vunpack.c.l.b16 %v785
      %v1089 = vunpack.c.l.b16 %v786
      %v1090 = vunpack.c.l.b16 %v787
      %v1091 = vunpack.c.l.b16 %v788
      %v1092 = vunpack.c.l.b16 %v789
      %v1093 = vunpack.c.l.b16 %v790
      %v1094 = vunpack.c.l.b16 %v791
      %v1095 = vunpack.c.l.b16 %v792
      %v1096 = vunpack.c.l.b16 %v793
      %v1097 = vunpack.c.l.b16 %v794
      %v1098 = vunpack.c.l.b16 %v795
      %v1099 = vunpack.c.l.b16 %v796
      %v1100 = vunpack.c.l.b16 %v797
      %v1101 = vunpack.c.l.b16 %v798
      %v1102 = vunpack.c.l.b16 %v799
      %v1103 = vunpack.c.l.b16 %v800
      %v1104 = vunpack.c.l.b16 %v801
      %v1105 = vunpack.c.l.b16 %v802
      %v1106 = vunpack.c.l.b16 %v803
      %v1107 = vunpack.c.l.b16 %v804
      %v1108 = vunpack.c.l.b16 %v805
      %v1109 = vunpack.c.l.b16 %v806
      %v1110 = vunpack.c.l.b16 %v807
      %v1111 = vunpack.c.l.b16 %v808
      %v1112 = vunpack.c.l.b16 %v809
      %v1113 = vunpack.c.l.b16 %v810
      %v1114 = vunpack.c.l.b16 %v811
      %v1115 = vunpack.c.l.b16 %v812
      %v1116 = vunpack.c.l.b16 %v813
      %v1117 = vunpack.c.l.b16 %v814
      %v1118 = vunpack.c.l.b16 %v815
      %v1119 = vunpack.c.l.b16 %v816
      %v1120 = vunpack.c.l.b16 %v817
      %v1121 = vunpack.c.l.b16 %v818
      %v1122 = vunpack.c.l.b16 %v819
      %v1123 = vunpack.c.l.b16 %v820
      %v1124 = vunpack.c.l.b16 %v821
      %v1125 = vunpack.c.l.b16 %v822
      %v1126 = vunpack.c.l.b16 %v823
      %v1127 = vunpack.c.l.b16 %v824
      %v1128 = vunpack.c.l.b16 %v825
      %v1129 = vunpack.c.l.b16 %v826
      %v1130 = vunpack.c.l.b16 %v827
      %v1131 = vunpack.c.l.b16 %v828
      %v1132 = vunpack.c.l.b16 %v829
      %v1133 = vunpack.c.l.b16 %v830
      %v1134 = vunpack.c.l.b16 %v831
      %v1135 = vunpack.c.l.b16 %v832
      %v1136 = vunpack.c.l.b16 %v833
      %v1137 = vunpack.c.l.b16 %v834
      %v1138 = vunpack.c.l.b16 %v835
      %v1139 = vunpack.c.l.b16 %v836
      %v1140 = vunpack.c.l.b16 %v837
      %v1141 = vunpack.c.l.b16 %v838
      %v1142 = vunpack.c.l.b16 %v839
      %v1143 = vunpack.c.l.b16 %v840
      %v1144 = vunpack.c.l.b16 %v841
      %v1145 = vunpack.c.l.b16 %v842
      %v1146 = vunpack.c.l.b16 %v843
      %v1147 = vunpack.c.l.b16 %v844
      %v1148 = vunpack.c.l.b16 %v845
      %v1149 = vunpack.c.l.b16 %v846
      %v1150 = vunpack.c.l.b16 %v847
      %v1151 = vunpack.c.l.b16 %v848
      %v1152 = vunpack.c.l.b16 %v849
      %v1153 = vunpack.c.l.b16 %v850
      %v1154 = vunpack.c.l.b16 %v851
      %v1155 = vunpack.c.l.b16 %v852
      %v1156 = vunpack.c.l.b16 %v853
      %v1157 = vunpack.c.l.b16 %v854
      %v1158 = vunpack.c.l.b16 %v855
      %v1159 = vunpack.c.l.b16 %v856
      %v1160 = vunpack.c.l.b16 %v857
      %v1161 = vunpack.c.l.b16 %v858
      %v1162 = vunpack.c.l.b16 %v859
      %v1163 = vunpack.c.l.b16 %v860
      %v1164 = vunpack.c.l.b16 %v861
      %v1165 = vunpack.c.l.b16 %v862
      %v1166 = vunpack.c.l.b16 %v863
      %v1167 = vunpack.c.l.b16 %v864
      %v1168 = vunpack.c.l.b16 %v865
      %v1169 = vunpack.c.l.b16 %v866
      %v1170 = vunpack.c.l.b16 %v867
      %v1171 = vpack.c.b16 %v1028, %v1027
      %v1172 = vpack.c.b16 %v1030, %v1029
      %v1173 = vpack.c.b16 %v1032, %v1031
      %v1174 = vpack.c.b16 %v1034, %v1033
      %v1175 = vpack.c.b16 %v1036, %v1035
      %v1176 = vpack.c.b16 %v1038, %v1037
      %v1177 = vpack.c.b16 %v1040, %v1039
      %v1178 = vpack.c.b16 %v1042, %v1041
      %v1179 = vpack.c.b16 %v1044, %v1043
      %v1180 = vpack.c.b16 %v1046, %v1045
      %v1181 = vpack.c.b16 %v1048, %v1047
      %v1182 = vpack.c.b16 %v1050, %v1049
      %v1183 = vpack.c.b16 %v1052, %v1051
      %v1184 = vpack.c.b16 %v1054, %v1053
      %v1185 = vpack.c.b16 %v1056, %v1055
      %v1186 = vpack.c.b16 %v1058, %v1057
      %v1187 = vpack.c.b16 %v1060, %v1059
      %v1188 = vpack.c.b16 %v1062, %v1061
      %v1189 = vpack.c.b16 %v1064, %v1063
      %v1190 = vpack.c.b16 %v1066, %v1065
      %v1191 = vpack.c.b16 %v1068, %v1067
      %v1192 = vpack.c.b16 %v1070, %v1069
      %v1193 = vpack.c.b16 %v1072, %v1071
      %v1194 = vpack.c.b16 %v1074, %v1073
      %v1195 = vpack.c.b16 %v1076, %v1075
      %v1196 = vpack.c.b16 %v1078, %v1077
      %v1197 = vpack.c.b16 %v1080, %v1079
      %v1198 = vpack.c.b16 %v1082, %v1081
      %v1199 = vpack.c.b16 %v1084, %v1083
      %v1200 = vpack.c.b16 %v1086, %v1085
      %v1201 = vpack.c.b16 %v1088, %v1087
      %v1202 = vpack.c.b16 %v1090, %v1089
      %v1203 = vpack.c.b16 %v1092, %v1091
      %v1204 = vpack.c.b16 %v1094, %v1093
      %v1205 = vpack.c.b16 %v1096, %v1095
      %v1206 = vpack.c.b16 %v1098, %v1097
      %v1207 = vpack.c.b16 %v1100, %v1099
      %v1208 = vpack.c.b16 %v1102, %v1101
      %v1209 = vpack.c.b16 %v1104, %v1103
      %v1210 = vpack.c.b16 %v1106, %v1105
      %v1211 = vpack.c.b16 %v1108, %v1107
      %v1212 = vpack.c.b16 %v1110, %v1109
      %v1213 = vpack.c.b16 %v1112, %v1111
      %v1214 = vpack.c.b16 %v1114, %v1113
      %v1215 = vpack.c.b16 %v1116, %v1115
      %v1216 = vpack.c.b16 %v1118, %v1117
      %v1217 = vpack.c.b16 %v1120, %v1119
      %v1218 = vpack.c.b16 %v1122, %v1121
      %v1219 = vpack.c.b16 %v1124, %v1123
      %v1220 = vpack.c.b16 %v1126, %v1125
      %v1221 = vpack.c.b16 %v1128, %v1127
      %v1222 = vpack.c.b16 %v1130, %v1129
      %v1223 = vpack.c.b16 %v1132, %v1131
      %v1224 = vpack.c.b16 %v1134, %v1133
      %v1225 = vpack.c.b16 %v1136, %v1135
      %v1226 = vpack.c.b16 %v1138, %v1137
      %v1227 = vpack.c.b16 %v1140, %v1139
      %v1228 = vpack.c.b16 %v1142, %v1141
      %v1229 = vpack.c.b16 %v1144, %v1143
      %v1230 = vpack.c.b16 %v1146, %v1145
      %v1231 = vpack.c.b16 %v1148, %v1147
      %v1232 = vpack.c.b16 %v1150, %v1149
      %v1233 = vpack.c.b16 %v1152, %v1151
      %v1234 = vpack.c.b16 %v1154, %v1153
      %v1235 = vpack.c.b16 %v1156, %v1155
      %v1236 = vpack.c.b16 %v1158, %v1157
      %v1237 = vpack.c.b16 %v1160, %v1159
      %v1238 = vpack.c.b16 %v1162, %v1161
      %v1239 = vpack.c.b16 %v1164, %v1163
      %v1240 = vpack.c.b16 %v1166, %v1165
      %v1241 = vpack.c.b16 %v1168, %v1167
      %v1242 = vpack.c.b16 %v1170, %v1169
      %v1251 = vunpack.c.l.b16 %v868
      %v1252 = vunpack.c.l.b16 %v869
      %v1253 = vunpack.c.l.b16 %v870
      %v1254 = vunpack.c.l.b16 %v871
      %v1255 = vunpack.c.l.b16 %v872
      %v1256 = vunpack.c.l.b16 %v873
      %v1257 = vunpack.c.l.b16 %v874
      %v1258 = vunpack.c.l.b16 %v875
      %v1259 = vpack.c.b16 %v1252, %v1251
      %v1260 = vpack.c.b16 %v1254, %v1253
      %v1261 = vpack.c.b16 %v1256, %v1255
      %v1262 = vpack.c.b16 %v1258, %v1257
      %vm1267 = vcmask 523264
      %v1269 = vsel %vm1267, %v1171, 0
      %v1272 = vsel %vm1267, %v1172, 0
      %v1275 = vsel %vm1267, %v1173, 0
      %v1278 = vsel %vm1267, %v1174, 0
      %v1281 = vsel %vm1267, %v1175, 0
      %v1284 = vsel %vm1267, %v1176, 0
      %v1287 = vsel %vm1267, %v1177, 0
      %v1290 = vsel %vm1267, %v1178, 0
      %v1293 = vsel %vm1267, %v1179, 0
      %v1296 = vsel %vm1267, %v1180, 0
      %v1299 = vsel %vm1267, %v1181, 0
      %v1302 = vsel %vm1267, %v1182, 0
      %v1305 = vsel %vm1267, %v1183, 0
      %v1308 = vsel %vm1267, %v1184, 0
      %v1311 = vsel %vm1267, %v1185, 0
      %v1314 = vsel %vm1267, %v1186, 0
      %v1317 = vsel %vm1267, %v1187, 0
      %v1320 = vsel %vm1267, %v1188, 0
      %v1323 = vsel %vm1267, %v1189, 0
      %v1326 = vsel %vm1267, %v1190, 0
      %v1329 = vsel %vm1267, %v1191, 0
      %v1332 = vsel %vm1267, %v1192, 0
      %v1335 = vsel %vm1267, %v1193, 0
      %v1338 = vsel %vm1267, %v1194, 0
      %v1341 = vsel %vm1267, %v1195, 0
      %v1344 = vsel %vm1267, %v1196, 0
      %v1347 = vsel %vm1267, %v1197, 0
      %v1350 = vsel %vm1267, %v1198, 0
      %v1353 = vsel %vm1267, %v1199, 0
      %v1356 = vsel %vm1267, %v1200, 0
      %v1359 = vsel %vm1267, %v1201, 0
      %v1362 = vsel %vm1267, %v1202, 0
      %v1365 = vsel %vm1267, %v1203, 0
      %v1368 = vsel %vm1267, %v1204, 0
      %v1371 = vsel %vm1267, %v1205, 0
      %v1374 = vsel %vm1267, %v1206, 0
      %v1377 = vsel %vm1267, %v1207, 0
      %v1380 = vsel %vm1267, %v1208, 0
      %v1383 = vsel %vm1267, %v1209, 0
      %v1386 = vsel %vm1267, %v1210, 0
      %v1389 = vsel %vm1267, %v1211, 0
      %v1392 = vsel %vm1267, %v1212, 0
      %v1395 = vsel %vm1267, %v1213, 0
      %v1398 = vsel %vm1267, %v1214, 0
      %v1401 = vsel %vm1267, %v1215, 0
      %v1404 = vsel %vm1267, %v1216, 0
      %v1407 = vsel %vm1267, %v1217, 0
      %v1410 = vsel %vm1267, %v1218, 0
      %v1413 = vsel %vm1267, %v1219, 0
      %v1416 = vsel %vm1267, %v1220, 0
      %v1419 = vsel %vm1267, %v1221, 0
      %v1422 = vsel %vm1267, %v1222, 0
      %v1425 = vsel %vm1267, %v1223, 0
      %v1428 = vsel %vm1267, %v1224, 0
      %v1431 = vsel %vm1267, %v1225, 0
      %v1434 = vsel %vm1267, %v1226, 0
      %v1437 = vsel %vm1267, %v1227, 0
      %v1440 = vsel %vm1267, %v1228, 0
      %v1443 = vsel %vm1267, %v1229, 0
      %v1446 = vsel %vm1267, %v1230, 0
      %v1449 = vsel %vm1267, %v1231, 0
      %v1452 = vsel %vm1267, %v1232, 0
      %v1455 = vsel %vm1267, %v1233, 0
      %v1458 = vsel %vm1267, %v1234, 0
      %v1461 = vsel %vm1267, %v1235, 0
      %v1464 = vsel %vm1267, %v1236, 0
      %v1467 = vsel %vm1267, %v1237, 0
      %v1470 = vsel %vm1267, %v1238, 0
      %v1473 = vsel %vm1267, %v1239, 0
      %v1476 = vsel %vm1267, %v1240, 0
      %v1479 = vsel %vm1267, %v1241, 0
      %v1482 = vsel %vm1267, %v1242, 0
      %1484 = vmatprep.subr.bf16.mxu0 0
      %1485 = vmatpush1.bf16.msra.mxu0 %v1259
      %1486 = vmatprep.subr.bf16.mxu0 0
      %1487 = vmatpush1.bf16.msra.mxu0 %v1260
      %1488 = vmatprep.subr.bf16.mxu0 0
      %1489 = vmatpush1.bf16.msra.mxu0 %v1261
      %1490 = vmatprep.subr.bf16.mxu0 0
      %1491 = vmatpush1.bf16.msra.mxu0 %v1262
      %1492 = vmatprep.subr.bf16.mxu0 0
      %1493 = vmatpush1.bf16.msra.mxu0 0
      %1494 = vmatprep.subr.bf16.mxu0 0
      %1495 = vmatpush1.bf16.msra.mxu0 0
      %1496 = vmatprep.subr.bf16.mxu0 0
      %1497 = vmatpush1.bf16.msra.mxu0 0
      %1498 = vmatprep.subr.bf16.mxu0 0
      %1499 = vmatpush1.bf16.msra.mxu0 0
      %1500 = vmatprep.subr.bf16.mxu0 0
      %1501 = vmatpush1.bf16.msra.mxu0 0
      %1502 = vmatprep.subr.bf16.mxu0 0
      %1503 = vmatpush1.bf16.msra.mxu0 0
      %1504 = vmatprep.subr.bf16.mxu0 0
      %1505 = vmatpush1.bf16.msra.mxu0 0
      %1506 = vmatprep.subr.bf16.mxu0 0
      %1507 = vmatpush1.bf16.msra.mxu0 0
      %1508 = vmatprep.subr.bf16.mxu0 0
      %1509 = vmatpush1.bf16.msra.mxu0 0
      %1510 = vmatprep.subr.bf16.mxu0 0
      %1511 = vmatpush1.bf16.msra.mxu0 0
      %1512 = vmatprep.subr.bf16.mxu0 0
      %1513 = vmatpush1.bf16.msra.mxu0 0
      %1514 = vmatprep.subr.bf16.mxu0 0
      %1515 = vmatpush1.bf16.msra.mxu0 0
      %1516 = vmatprep.mubr.bf16.mxu0 0
      %1517 = vmatmul.mubr.bf16.gmra.mrb[0].mxu0 %v1269
      %v1518 = vpop.f32.mrb[0].mxu0
      %v1519 = vadd.f32 %v881, %v1518
      %v1520 = vpop.f32.mrb[0].mxu0
      %v1521 = vpop.f32.mrb[0].mxu0
      %v1522 = vadd.f32 %v881, %v1521
      %v1523 = vpop.f32.mrb[0].mxu0
      %1524 = vmatprep.mubr.bf16.mxu0 0
      %1525 = vmatmul.mubr.bf16.gmra.mrb[0].mxu0 %v1272
      %v1526 = vpop.f32.mrb[0].mxu0
      %v1527 = vadd.f32 %v881, %v1526
      %v1528 = vpop.f32.mrb[0].mxu0
      %v1529 = vpop.f32.mrb[0].mxu0
      %v1530 = vadd.f32 %v881, %v1529
      %v1531 = vpop.f32.mrb[0].mxu0
      %1532 = vmatprep.mubr.bf16.mxu0 0
      %1533 = vmatmul.mubr.bf16.gmra.mrb[0].mxu0 %v1275
      %v1534 = vpop.f32.mrb[0].mxu0
      %v1535 = vadd.f32 %v881, %v1534
      %v1536 = vpop.f32.mrb[0].mxu0
      %v1537 = vpop.f32.mrb[0].mxu0
      %v1538 = vadd.f32 %v881, %v1537
      %v1539 = vpop.f32.mrb[0].mxu0
      %1540 = vmatprep.mubr.bf16.mxu0 0
      %1541 = vmatmul.mubr.bf16.gmra.mrb[0].mxu0 %v1278
      %v1542 = vpop.f32.mrb[0].mxu0
      %v1543 = vadd.f32 %v881, %v1542
      %v1544 = vpop.f32.mrb[0].mxu0
      %v1545 = vpop.f32.mrb[0].mxu0
      %v1546 = vadd.f32 %v881, %v1545
      %v1547 = vpop.f32.mrb[0].mxu0
      %1548 = vmatprep.mubr.bf16.mxu0 0
      %1549 = vmatmul.mubr.bf16.gmra.mrb[0].mxu0 %v1281
      %v1550 = vpop.f32.mrb[0].mxu0
      %v1551 = vadd.f32 %v881, %v1550
      %v1552 = vpop.f32.mrb[0].mxu0
      %v1553 = vpop.f32.mrb[0].mxu0
      %v1554 = vadd.f32 %v881, %v1553
      %v1555 = vpop.f32.mrb[0].mxu0
      %1556 = vmatprep.mubr.bf16.mxu0 0
      %1557 = vmatmul.mubr.bf16.gmra.mrb[0].mxu0 %v1284
      %v1558 = vpop.f32.mrb[0].mxu0
      %v1559 = vadd.f32 %v881, %v1558
      %v1560 = vpop.f32.mrb[0].mxu0
      %v1561 = vpop.f32.mrb[0].mxu0
      %v1562 = vadd.f32 %v881, %v1561
      %v1563 = vpop.f32.mrb[0].mxu0
      %1564 = vmatprep.mubr.bf16.mxu0 0
      %1565 = vmatmul.mubr.bf16.gmra.mrb[0].mxu0 %v1287
      %v1566 = vpop.f32.mrb[0].mxu0
      %v1567 = vadd.f32 %v881, %v1566
      %v1568 = vpop.f32.mrb[0].mxu0
      %v1569 = vpop.f32.mrb[0].mxu0
      %v1570 = vadd.f32 %v881, %v1569
      %v1571 = vpop.f32.mrb[0].mxu0
      %1572 = vmatprep.mubr.bf16.mxu0 0
      %1573 = vmatmul.mubr.bf16.gmra.mrb[0].mxu0 %v1290
      %v1574 = vpop.f32.mrb[0].mxu0
      %v1575 = vadd.f32 %v881, %v1574
      %v1576 = vpop.f32.mrb[0].mxu0
      %v1577 = vpop.f32.mrb[0].mxu0
      %v1578 = vadd.f32 %v881, %v1577
      %v1579 = vpop.f32.mrb[0].mxu0
      %1580 = vmatprep.mubr.bf16.mxu0 0
      %1581 = vmatmul.mubr.bf16.gmra.mrb[0].mxu0 %v1293
      %v1582 = vpop.f32.mrb[0].mxu0
      %v1583 = vadd.f32 %v881, %v1582
      %v1584 = vpop.f32.mrb[0].mxu0
      %v1585 = vpop.f32.mrb[0].mxu0
      %v1586 = vadd.f32 %v881, %v1585
      %v1587 = vpop.f32.mrb[0].mxu0
      %1588 = vmatprep.mubr.bf16.mxu0 0
      %1589 = vmatmul.mubr.bf16.gmra.mrb[0].mxu0 %v1296
      %v1590 = vpop.f32.mrb[0].mxu0
      %v1591 = vadd.f32 %v881, %v1590
      %v1592 = vpop.f32.mrb[0].mxu0
      %v1593 = vpop.f32.mrb[0].mxu0
      %v1594 = vadd.f32 %v881, %v1593
      %v1595 = vpop.f32.mrb[0].mxu0
      %1596 = vmatprep.mubr.bf16.mxu0 0
      %1597 = vmatmul.mubr.bf16.gmra.mrb[0].mxu0 %v1299
      %v1598 = vpop.f32.mrb[0].mxu0
      %v1599 = vadd.f32 %v881, %v1598
      %v1600 = vpop.f32.mrb[0].mxu0
      %v1601 = vpop.f32.mrb[0].mxu0
      %v1602 = vadd.f32 %v881, %v1601
      %v1603 = vpop.f32.mrb[0].mxu0
      %1604 = vmatprep.mubr.bf16.mxu0 0
      %1605 = vmatmul.mubr.bf16.gmra.mrb[0].mxu0 %v1302
      %v1606 = vpop.f32.mrb[0].mxu0
      %v1607 = vadd.f32 %v881, %v1606
      %v1608 = vpop.f32.mrb[0].mxu0
      %v1609 = vpop.f32.mrb[0].mxu0
      %v1610 = vadd.f32 %v881, %v1609
      %v1611 = vpop.f32.mrb[0].mxu0
      %1612 = vmatprep.mubr.bf16.mxu0 0
      %1613 = vmatmul.mubr.bf16.gmra.mrb[0].mxu0 %v1305
      %v1614 = vpop.f32.mrb[0].mxu0
      %v1615 = vadd.f32 %v881, %v1614
      %v1616 = vpop.f32.mrb[0].mxu0
      %v1617 = vpop.f32.mrb[0].mxu0
      %v1618 = vadd.f32 %v881, %v1617
      %v1619 = vpop.f32.mrb[0].mxu0
      %1620 = vmatprep.mubr.bf16.mxu0 0
      %1621 = vmatmul.mubr.bf16.gmra.mrb[0].mxu0 %v1308
      %v1622 = vpop.f32.mrb[0].mxu0
      %v1623 = vadd.f32 %v881, %v1622
      %v1624 = vpop.f32.mrb[0].mxu0
      %v1625 = vpop.f32.mrb[0].mxu0
      %v1626 = vadd.f32 %v881, %v1625
      %v1627 = vpop.f32.mrb[0].mxu0
      %1628 = vmatprep.mubr.bf16.mxu0 0
      %1629 = vmatmul.mubr.bf16.gmra.mrb[0].mxu0 %v1311
      %v1630 = vpop.f32.mrb[0].mxu0
      %v1631 = vadd.f32 %v881, %v1630
      %v1632 = vpop.f32.mrb[0].mxu0
      %v1633 = vpop.f32.mrb[0].mxu0
      %v1634 = vadd.f32 %v881, %v1633
      %v1635 = vpop.f32.mrb[0].mxu0
      %1636 = vmatprep.mubr.bf16.mxu0 0
      %1637 = vmatmul.mubr.bf16.gmra.mrb[0].mxu0 %v1314
      %v1638 = vpop.f32.mrb[0].mxu0
      %v1639 = vadd.f32 %v881, %v1638
      %v1640 = vpop.f32.mrb[0].mxu0
      %v1641 = vpop.f32.mrb[0].mxu0
      %v1642 = vadd.f32 %v881, %v1641
      %v1643 = vpop.f32.mrb[0].mxu0
      %1644 = vmatprep.mubr.bf16.mxu0 0
      %1645 = vmatmul.mubr.bf16.gmra.mrb[0].mxu0 %v1317
      %v1646 = vpop.f32.mrb[0].mxu0
      %v1647 = vadd.f32 %v881, %v1646
      %v1648 = vpop.f32.mrb[0].mxu0
      %v1649 = vpop.f32.mrb[0].mxu0
      %v1650 = vadd.f32 %v881, %v1649
      %v1651 = vpop.f32.mrb[0].mxu0
      %1652 = vmatprep.mubr.bf16.mxu0 0
      %1653 = vmatmul.mubr.bf16.gmra.mrb[0].mxu0 %v1320
      %v1654 = vpop.f32.mrb[0].mxu0
      %v1655 = vadd.f32 %v881, %v1654
      %v1656 = vpop.f32.mrb[0].mxu0
      %v1657 = vpop.f32.mrb[0].mxu0
      %v1658 = vadd.f32 %v881, %v1657
      %v1659 = vpop.f32.mrb[0].mxu0
      %1660 = vmatprep.mubr.bf16.mxu0 0
      %1661 = vmatmul.mubr.bf16.gmra.mrb[0].mxu0 %v1323
      %v1662 = vpop.f32.mrb[0].mxu0
      %v1663 = vadd.f32 %v881, %v1662
      %v1664 = vpop.f32.mrb[0].mxu0
      %v1665 = vpop.f32.mrb[0].mxu0
      %v1666 = vadd.f32 %v881, %v1665
      %v1667 = vpop.f32.mrb[0].mxu0
      %1668 = vmatprep.mubr.bf16.mxu0 0
      %1669 = vmatmul.mubr.bf16.gmra.mrb[0].mxu0 %v1326
      %v1670 = vpop.f32.mrb[0].mxu0
      %v1671 = vadd.f32 %v881, %v1670
      %v1672 = vpop.f32.mrb[0].mxu0
      %v1673 = vpop.f32.mrb[0].mxu0
      %v1674 = vadd.f32 %v881, %v1673
      %v1675 = vpop.f32.mrb[0].mxu0
      %1676 = vmatprep.mubr.bf16.mxu0 0
      %1677 = vmatmul.mubr.bf16.gmra.mrb[0].mxu0 %v1329
      %v1678 = vpop.f32.mrb[0].mxu0
      %v1679 = vadd.f32 %v881, %v1678
      %v1680 = vpop.f32.mrb[0].mxu0
      %v1681 = vpop.f32.mrb[0].mxu0
      %v1682 = vadd.f32 %v881, %v1681
      %v1683 = vpop.f32.mrb[0].mxu0
      %1684 = vmatprep.mubr.bf16.mxu0 0
      %1685 = vmatmul.mubr.bf16.gmra.mrb[0].mxu0 %v1332
      %v1686 = vpop.f32.mrb[0].mxu0
      %v1687 = vadd.f32 %v881, %v1686
      %v1688 = vpop.f32.mrb[0].mxu0
      %v1689 = vpop.f32.mrb[0].mxu0
      %v1690 = vadd.f32 %v881, %v1689
      %v1691 = vpop.f32.mrb[0].mxu0
      %1692 = vmatprep.mubr.bf16.mxu0 0
      %1693 = vmatmul.mubr.bf16.gmra.mrb[0].mxu0 %v1335
      %v1694 = vpop.f32.mrb[0].mxu0
      %v1695 = vadd.f32 %v881, %v1694
      %v1696 = vpop.f32.mrb[0].mxu0
      %v1697 = vpop.f32.mrb[0].mxu0
      %v1698 = vadd.f32 %v881, %v1697
      %v1699 = vpop.f32.mrb[0].mxu0
      %1700 = vmatprep.mubr.bf16.mxu0 0
      %1701 = vmatmul.mubr.bf16.gmra.mrb[0].mxu0 %v1338
      %v1702 = vpop.f32.mrb[0].mxu0
      %v1703 = vadd.f32 %v881, %v1702
      %v1704 = vpop.f32.mrb[0].mxu0
      %v1705 = vpop.f32.mrb[0].mxu0
      %v1706 = vadd.f32 %v881, %v1705
      %v1707 = vpop.f32.mrb[0].mxu0
      %1708 = vmatprep.mubr.bf16.mxu0 0
      %1709 = vmatmul.mubr.bf16.gmra.mrb[0].mxu0 %v1341
      %v1710 = vpop.f32.mrb[0].mxu0
      %v1711 = vadd.f32 %v881, %v1710
      %v1712 = vpop.f32.mrb[0].mxu0
      %v1713 = vpop.f32.mrb[0].mxu0
      %v1714 = vadd.f32 %v881, %v1713
      %v1715 = vpop.f32.mrb[0].mxu0
      %1716 = vmatprep.mubr.bf16.mxu0 0
      %1717 = vmatmul.mubr.bf16.gmra.mrb[0].mxu0 %v1344
      %v1718 = vpop.f32.mrb[0].mxu0
      %v1719 = vadd.f32 %v881, %v1718
      %v1720 = vpop.f32.mrb[0].mxu0
      %v1721 = vpop.f32.mrb[0].mxu0
      %v1722 = vadd.f32 %v881, %v1721
      %v1723 = vpop.f32.mrb[0].mxu0
      %1724 = vmatprep.mubr.bf16.mxu0 0
      %1725 = vmatmul.mubr.bf16.gmra.mrb[0].mxu0 %v1347
      %v1726 = vpop.f32.mrb[0].mxu0
      %v1727 = vadd.f32 %v881, %v1726
      %v1728 = vpop.f32.mrb[0].mxu0
      %v1729 = vpop.f32.mrb[0].mxu0
      %v1730 = vadd.f32 %v881, %v1729
      %v1731 = vpop.f32.mrb[0].mxu0
      %1732 = vmatprep.mubr.bf16.mxu0 0
      %1733 = vmatmul.mubr.bf16.gmra.mrb[0].mxu0 %v1350
      %v1734 = vpop.f32.mrb[0].mxu0
      %v1735 = vadd.f32 %v881, %v1734
      %v1736 = vpop.f32.mrb[0].mxu0
      %v1737 = vpop.f32.mrb[0].mxu0
      %v1738 = vadd.f32 %v881, %v1737
      %v1739 = vpop.f32.mrb[0].mxu0
      %1740 = vmatprep.mubr.bf16.mxu0 0
      %1741 = vmatmul.mubr.bf16.gmra.mrb[0].mxu0 %v1353
      %v1742 = vpop.f32.mrb[0].mxu0
      %v1743 = vadd.f32 %v881, %v1742
      %v1744 = vpop.f32.mrb[0].mxu0
      %v1745 = vpop.f32.mrb[0].mxu0
      %v1746 = vadd.f32 %v881, %v1745
      %v1747 = vpop.f32.mrb[0].mxu0
      %1748 = vmatprep.mubr.bf16.mxu0 0
      %1749 = vmatmul.mubr.bf16.gmra.mrb[0].mxu0 %v1356
      %v1750 = vpop.f32.mrb[0].mxu0
      %v1751 = vadd.f32 %v881, %v1750
      %v1752 = vpop.f32.mrb[0].mxu0
      %v1753 = vpop.f32.mrb[0].mxu0
      %v1754 = vadd.f32 %v881, %v1753
      %v1755 = vpop.f32.mrb[0].mxu0
      %1756 = vmatprep.mubr.bf16.mxu0 0
      %1757 = vmatmul.mubr.bf16.gmra.mrb[0].mxu0 %v1359
      %v1758 = vpop.f32.mrb[0].mxu0
      %v1759 = vadd.f32 %v881, %v1758
      %v1760 = vpop.f32.mrb[0].mxu0
      %v1761 = vpop.f32.mrb[0].mxu0
      %v1762 = vadd.f32 %v881, %v1761
      %v1763 = vpop.f32.mrb[0].mxu0
      %1764 = vmatprep.mubr.bf16.mxu0 0
      %1765 = vmatmul.mubr.bf16.gmra.mrb[0].mxu0 %v1362
      %v1766 = vpop.f32.mrb[0].mxu0
      %v1767 = vadd.f32 %v881, %v1766
      %v1768 = vpop.f32.mrb[0].mxu0
      %v1769 = vpop.f32.mrb[0].mxu0
      %v1770 = vadd.f32 %v881, %v1769
      %v1771 = vpop.f32.mrb[0].mxu0
      %1772 = vmatprep.mubr.bf16.mxu0 0
      %1773 = vmatmul.mubr.bf16.gmra.mrb[0].mxu0 %v1365
      %v1774 = vpop.f32.mrb[0].mxu0
      %v1775 = vadd.f32 %v881, %v1774
      %v1776 = vpop.f32.mrb[0].mxu0
      %v1777 = vpop.f32.mrb[0].mxu0
      %v1778 = vadd.f32 %v881, %v1777
      %v1779 = vpop.f32.mrb[0].mxu0
      %1780 = vmatprep.mubr.bf16.mxu0 0
      %1781 = vmatmul.mubr.bf16.gmra.mrb[0].mxu0 %v1368
      %v1782 = vpop.f32.mrb[0].mxu0
      %v1783 = vadd.f32 %v881, %v1782
      %v1784 = vpop.f32.mrb[0].mxu0
      %v1785 = vpop.f32.mrb[0].mxu0
      %v1786 = vadd.f32 %v881, %v1785
      %v1787 = vpop.f32.mrb[0].mxu0
      %1788 = vmatprep.mubr.bf16.mxu0 0
      %1789 = vmatmul.mubr.bf16.gmra.mrb[0].mxu0 %v1371
      %v1790 = vpop.f32.mrb[0].mxu0
      %v1791 = vadd.f32 %v881, %v1790
      %v1792 = vpop.f32.mrb[0].mxu0
      %v1793 = vpop.f32.mrb[0].mxu0
      %v1794 = vadd.f32 %v881, %v1793
      %v1795 = vpop.f32.mrb[0].mxu0
      %1796 = vmatprep.mubr.bf16.mxu0 0
      %1797 = vmatmul.mubr.bf16.gmra.mrb[0].mxu0 %v1374
      %v1798 = vpop.f32.mrb[0].mxu0
      %v1799 = vadd.f32 %v881, %v1798
      %v1800 = vpop.f32.mrb[0].mxu0
      %v1801 = vpop.f32.mrb[0].mxu0
      %v1802 = vadd.f32 %v881, %v1801
      %v1803 = vpop.f32.mrb[0].mxu0
      %1804 = vmatprep.mubr.bf16.mxu0 0
      %1805 = vmatmul.mubr.bf16.gmra.mrb[0].mxu0 %v1377
      %v1806 = vpop.f32.mrb[0].mxu0
      %v1807 = vadd.f32 %v881, %v1806
      %v1808 = vpop.f32.mrb[0].mxu0
      %v1809 = vpop.f32.mrb[0].mxu0
      %v1810 = vadd.f32 %v881, %v1809
      %v1811 = vpop.f32.mrb[0].mxu0
      %1812 = vmatprep.mubr.bf16.mxu0 0
      %1813 = vmatmul.mubr.bf16.gmra.mrb[0].mxu0 %v1380
      %v1814 = vpop.f32.mrb[0].mxu0
      %v1815 = vadd.f32 %v881, %v1814
      %v1816 = vpop.f32.mrb[0].mxu0
      %v1817 = vpop.f32.mrb[0].mxu0
      %v1818 = vadd.f32 %v881, %v1817
      %v1819 = vpop.f32.mrb[0].mxu0
      %1820 = vmatprep.mubr.bf16.mxu0 0
      %1821 = vmatmul.mubr.bf16.gmra.mrb[0].mxu0 %v1383
      %v1822 = vpop.f32.mrb[0].mxu0
      %v1823 = vadd.f32 %v881, %v1822
      %v1824 = vpop.f32.mrb[0].mxu0
      %v1825 = vpop.f32.mrb[0].mxu0
      %v1826 = vadd.f32 %v881, %v1825
      %v1827 = vpop.f32.mrb[0].mxu0
      %1828 = vmatprep.mubr.bf16.mxu0 0
      %1829 = vmatmul.mubr.bf16.gmra.mrb[0].mxu0 %v1386
      %v1830 = vpop.f32.mrb[0].mxu0
      %v1831 = vadd.f32 %v881, %v1830
      %v1832 = vpop.f32.mrb[0].mxu0
      %v1833 = vpop.f32.mrb[0].mxu0
      %v1834 = vadd.f32 %v881, %v1833
      %v1835 = vpop.f32.mrb[0].mxu0
      %1836 = vmatprep.mubr.bf16.mxu0 0
      %1837 = vmatmul.mubr.bf16.gmra.mrb[0].mxu0 %v1389
      %v1838 = vpop.f32.mrb[0].mxu0
      %v1839 = vadd.f32 %v881, %v1838
      %v1840 = vpop.f32.mrb[0].mxu0
      %v1841 = vpop.f32.mrb[0].mxu0
      %v1842 = vadd.f32 %v881, %v1841
      %v1843 = vpop.f32.mrb[0].mxu0
      %1844 = vmatprep.mubr.bf16.mxu0 0
      %1845 = vmatmul.mubr.bf16.gmra.mrb[0].mxu0 %v1392
      %v1846 = vpop.f32.mrb[0].mxu0
      %v1847 = vadd.f32 %v881, %v1846
      %v1848 = vpop.f32.mrb[0].mxu0
      %v1849 = vpop.f32.mrb[0].mxu0
      %v1850 = vadd.f32 %v881, %v1849
      %v1851 = vpop.f32.mrb[0].mxu0
      %1852 = vmatprep.mubr.bf16.mxu0 0
      %1853 = vmatmul.mubr.bf16.gmra.mrb[0].mxu0 %v1395
      %v1854 = vpop.f32.mrb[0].mxu0
      %v1855 = vadd.f32 %v881, %v1854
      %v1856 = vpop.f32.mrb[0].mxu0
      %v1857 = vpop.f32.mrb[0].mxu0
      %v1858 = vadd.f32 %v881, %v1857
      %v1859 = vpop.f32.mrb[0].mxu0
      %1860 = vmatprep.mubr.bf16.mxu0 0
      %1861 = vmatmul.mubr.bf16.gmra.mrb[0].mxu0 %v1398
      %v1862 = vpop.f32.mrb[0].mxu0
      %v1863 = vadd.f32 %v881, %v1862
      %v1864 = vpop.f32.mrb[0].mxu0
      %v1865 = vpop.f32.mrb[0].mxu0
      %v1866 = vadd.f32 %v881, %v1865
      %v1867 = vpop.f32.mrb[0].mxu0
      %1868 = vmatprep.mubr.bf16.mxu0 0
      %1869 = vmatmul.mubr.bf16.gmra.mrb[0].mxu0 %v1401
      %v1870 = vpop.f32.mrb[0].mxu0
      %v1871 = vadd.f32 %v881, %v1870
      %v1872 = vpop.f32.mrb[0].mxu0
      %v1873 = vpop.f32.mrb[0].mxu0
      %v1874 = vadd.f32 %v881, %v1873
      %v1875 = vpop.f32.mrb[0].mxu0
      %1876 = vmatprep.mubr.bf16.mxu0 0
      %1877 = vmatmul.mubr.bf16.gmra.mrb[0].mxu0 %v1404
      %v1878 = vpop.f32.mrb[0].mxu0
      %v1879 = vadd.f32 %v881, %v1878
      %v1880 = vpop.f32.mrb[0].mxu0
      %v1881 = vpop.f32.mrb[0].mxu0
      %v1882 = vadd.f32 %v881, %v1881
      %v1883 = vpop.f32.mrb[0].mxu0
      %1884 = vmatprep.mubr.bf16.mxu0 0
      %1885 = vmatmul.mubr.bf16.gmra.mrb[0].mxu0 %v1407
      %v1886 = vpop.f32.mrb[0].mxu0
      %v1887 = vadd.f32 %v881, %v1886
      %v1888 = vpop.f32.mrb[0].mxu0
      %v1889 = vpop.f32.mrb[0].mxu0
      %v1890 = vadd.f32 %v881, %v1889
      %v1891 = vpop.f32.mrb[0].mxu0
      %1892 = vmatprep.mubr.bf16.mxu0 0
      %1893 = vmatmul.mubr.bf16.gmra.mrb[0].mxu0 %v1410
      %v1894 = vpop.f32.mrb[0].mxu0
      %v1895 = vadd.f32 %v881, %v1894
      %v1896 = vpop.f32.mrb[0].mxu0
      %v1897 = vpop.f32.mrb[0].mxu0
      %v1898 = vadd.f32 %v881, %v1897
      %v1899 = vpop.f32.mrb[0].mxu0
      %1900 = vmatprep.mubr.bf16.mxu0 0
      %1901 = vmatmul.mubr.bf16.gmra.mrb[0].mxu0 %v1413
      %v1902 = vpop.f32.mrb[0].mxu0
      %v1903 = vadd.f32 %v881, %v1902
      %v1904 = vpop.f32.mrb[0].mxu0
      %v1905 = vpop.f32.mrb[0].mxu0
      %v1906 = vadd.f32 %v881, %v1905
      %v1907 = vpop.f32.mrb[0].mxu0
      %1908 = vmatprep.mubr.bf16.mxu0 0
      %1909 = vmatmul.mubr.bf16.gmra.mrb[0].mxu0 %v1416
      %v1910 = vpop.f32.mrb[0].mxu0
      %v1911 = vadd.f32 %v881, %v1910
      %v1912 = vpop.f32.mrb[0].mxu0
      %v1913 = vpop.f32.mrb[0].mxu0
      %v1914 = vadd.f32 %v881, %v1913
      %v1915 = vpop.f32.mrb[0].mxu0
      %1916 = vmatprep.mubr.bf16.mxu0 0
      %1917 = vmatmul.mubr.bf16.gmra.mrb[0].mxu0 %v1419
      %v1918 = vpop.f32.mrb[0].mxu0
      %v1919 = vadd.f32 %v881, %v1918
      %v1920 = vpop.f32.mrb[0].mxu0
      %v1921 = vpop.f32.mrb[0].mxu0
      %v1922 = vadd.f32 %v881, %v1921
      %v1923 = vpop.f32.mrb[0].mxu0
      %1924 = vmatprep.mubr.bf16.mxu0 0
      %1925 = vmatmul.mubr.bf16.gmra.mrb[0].mxu0 %v1422
      %v1926 = vpop.f32.mrb[0].mxu0
      %v1927 = vadd.f32 %v881, %v1926
      %v1928 = vpop.f32.mrb[0].mxu0
      %v1929 = vpop.f32.mrb[0].mxu0
      %v1930 = vadd.f32 %v881, %v1929
      %v1931 = vpop.f32.mrb[0].mxu0
      %1932 = vmatprep.mubr.bf16.mxu0 0
      %1933 = vmatmul.mubr.bf16.gmra.mrb[0].mxu0 %v1425
      %v1934 = vpop.f32.mrb[0].mxu0
      %v1935 = vadd.f32 %v881, %v1934
      %v1936 = vpop.f32.mrb[0].mxu0
      %v1937 = vpop.f32.mrb[0].mxu0
      %v1938 = vadd.f32 %v881, %v1937
      %v1939 = vpop.f32.mrb[0].mxu0
      %1940 = vmatprep.mubr.bf16.mxu0 0
      %1941 = vmatmul.mubr.bf16.gmra.mrb[0].mxu0 %v1428
      %v1942 = vpop.f32.mrb[0].mxu0
      %v1943 = vadd.f32 %v881, %v1942
      %v1944 = vpop.f32.mrb[0].mxu0
      %v1945 = vpop.f32.mrb[0].mxu0
      %v1946 = vadd.f32 %v881, %v1945
      %v1947 = vpop.f32.mrb[0].mxu0
      %1948 = vmatprep.mubr.bf16.mxu0 0
      %1949 = vmatmul.mubr.bf16.gmra.mrb[0].mxu0 %v1431
      %v1950 = vpop.f32.mrb[0].mxu0
      %v1951 = vadd.f32 %v881, %v1950
      %v1952 = vpop.f32.mrb[0].mxu0
      %v1953 = vpop.f32.mrb[0].mxu0
      %v1954 = vadd.f32 %v881, %v1953
      %v1955 = vpop.f32.mrb[0].mxu0
      %1956 = vmatprep.mubr.bf16.mxu0 0
      %1957 = vmatmul.mubr.bf16.gmra.mrb[0].mxu0 %v1434
      %v1958 = vpop.f32.mrb[0].mxu0
      %v1959 = vadd.f32 %v881, %v1958
      %v1960 = vpop.f32.mrb[0].mxu0
      %v1961 = vpop.f32.mrb[0].mxu0
      %v1962 = vadd.f32 %v881, %v1961
      %v1963 = vpop.f32.mrb[0].mxu0
      %1964 = vmatprep.mubr.bf16.mxu0 0
      %1965 = vmatmul.mubr.bf16.gmra.mrb[0].mxu0 %v1437
      %v1966 = vpop.f32.mrb[0].mxu0
      %v1967 = vadd.f32 %v881, %v1966
      %v1968 = vpop.f32.mrb[0].mxu0
      %v1969 = vpop.f32.mrb[0].mxu0
      %v1970 = vadd.f32 %v881, %v1969
      %v1971 = vpop.f32.mrb[0].mxu0
      %1972 = vmatprep.mubr.bf16.mxu0 0
      %1973 = vmatmul.mubr.bf16.gmra.mrb[0].mxu0 %v1440
      %v1974 = vpop.f32.mrb[0].mxu0
      %v1975 = vadd.f32 %v881, %v1974
      %v1976 = vpop.f32.mrb[0].mxu0
      %v1977 = vpop.f32.mrb[0].mxu0
      %v1978 = vadd.f32 %v881, %v1977
      %v1979 = vpop.f32.mrb[0].mxu0
      %1980 = vmatprep.mubr.bf16.mxu0 0
      %1981 = vmatmul.mubr.bf16.gmra.mrb[0].mxu0 %v1443
      %v1982 = vpop.f32.mrb[0].mxu0
      %v1983 = vadd.f32 %v881, %v1982
      %v1984 = vpop.f32.mrb[0].mxu0
      %v1985 = vpop.f32.mrb[0].mxu0
      %v1986 = vadd.f32 %v881, %v1985
      %v1987 = vpop.f32.mrb[0].mxu0
      %1988 = vmatprep.mubr.bf16.mxu0 0
      %1989 = vmatmul.mubr.bf16.gmra.mrb[0].mxu0 %v1446
      %v1990 = vpop.f32.mrb[0].mxu0
      %v1991 = vadd.f32 %v881, %v1990
      %v1992 = vpop.f32.mrb[0].mxu0
      %v1993 = vpop.f32.mrb[0].mxu0
      %v1994 = vadd.f32 %v881, %v1993
      %v1995 = vpop.f32.mrb[0].mxu0
      %1996 = vmatprep.mubr.bf16.mxu0 0
      %1997 = vmatmul.mubr.bf16.gmra.mrb[0].mxu0 %v1449
      %v1998 = vpop.f32.mrb[0].mxu0
      %v1999 = vadd.f32 %v881, %v1998
      %v2000 = vpop.f32.mrb[0].mxu0
      %v2001 = vpop.f32.mrb[0].mxu0
      %v2002 = vadd.f32 %v881, %v2001
      %v2003 = vpop.f32.mrb[0].mxu0
      %2004 = vmatprep.mubr.bf16.mxu0 0
      %2005 = vmatmul.mubr.bf16.gmra.mrb[0].mxu0 %v1452
      %v2006 = vpop.f32.mrb[0].mxu0
      %v2007 = vadd.f32 %v881, %v2006
      %v2008 = vpop.f32.mrb[0].mxu0
      %v2009 = vpop.f32.mrb[0].mxu0
      %v2010 = vadd.f32 %v881, %v2009
      %v2011 = vpop.f32.mrb[0].mxu0
      %2012 = vmatprep.mubr.bf16.mxu0 0
      %2013 = vmatmul.mubr.bf16.gmra.mrb[0].mxu0 %v1455
      %v2014 = vpop.f32.mrb[0].mxu0
      %v2015 = vadd.f32 %v881, %v2014
      %v2016 = vpop.f32.mrb[0].mxu0
      %v2017 = vpop.f32.mrb[0].mxu0
      %v2018 = vadd.f32 %v881, %v2017
      %v2019 = vpop.f32.mrb[0].mxu0
      %2020 = vmatprep.mubr.bf16.mxu0 0
      %2021 = vmatmul.mubr.bf16.gmra.mrb[0].mxu0 %v1458
      %v2022 = vpop.f32.mrb[0].mxu0
      %v2023 = vadd.f32 %v881, %v2022
      %v2024 = vpop.f32.mrb[0].mxu0
      %v2025 = vpop.f32.mrb[0].mxu0
      %v2026 = vadd.f32 %v881, %v2025
      %v2027 = vpop.f32.mrb[0].mxu0
      %2028 = vmatprep.mubr.bf16.mxu0 0
      %2029 = vmatmul.mubr.bf16.gmra.mrb[0].mxu0 %v1461
      %v2030 = vpop.f32.mrb[0].mxu0
      %v2031 = vadd.f32 %v881, %v2030
      %v2032 = vpop.f32.mrb[0].mxu0
      %v2033 = vpop.f32.mrb[0].mxu0
      %v2034 = vadd.f32 %v881, %v2033
      %v2035 = vpop.f32.mrb[0].mxu0
      %2036 = vmatprep.mubr.bf16.mxu0 0
      %2037 = vmatmul.mubr.bf16.gmra.mrb[0].mxu0 %v1464
      %v2038 = vpop.f32.mrb[0].mxu0
      %v2039 = vadd.f32 %v881, %v2038
      %v2040 = vpop.f32.mrb[0].mxu0
      %v2041 = vpop.f32.mrb[0].mxu0
      %v2042 = vadd.f32 %v881, %v2041
      %v2043 = vpop.f32.mrb[0].mxu0
      %2044 = vmatprep.mubr.bf16.mxu0 0
      %2045 = vmatmul.mubr.bf16.gmra.mrb[0].mxu0 %v1467
      %v2046 = vpop.f32.mrb[0].mxu0
      %v2047 = vadd.f32 %v881, %v2046
      %v2048 = vpop.f32.mrb[0].mxu0
      %v2049 = vpop.f32.mrb[0].mxu0
      %v2050 = vadd.f32 %v881, %v2049
      %v2051 = vpop.f32.mrb[0].mxu0
      %2052 = vmatprep.mubr.bf16.mxu0 0
      %2053 = vmatmul.mubr.bf16.gmra.mrb[0].mxu0 %v1470
      %v2054 = vpop.f32.mrb[0].mxu0
      %v2055 = vadd.f32 %v881, %v2054
      %v2056 = vpop.f32.mrb[0].mxu0
      %v2057 = vpop.f32.mrb[0].mxu0
      %v2058 = vadd.f32 %v881, %v2057
      %v2059 = vpop.f32.mrb[0].mxu0
      %2060 = vmatprep.mubr.bf16.mxu0 0
      %2061 = vmatmul.mubr.bf16.gmra.mrb[0].mxu0 %v1473
      %v2062 = vpop.f32.mrb[0].mxu0
      %v2063 = vadd.f32 %v881, %v2062
      %v2064 = vpop.f32.mrb[0].mxu0
      %v2065 = vpop.f32.mrb[0].mxu0
      %v2066 = vadd.f32 %v881, %v2065
      %v2067 = vpop.f32.mrb[0].mxu0
      %2068 = vmatprep.mubr.bf16.mxu0 0
      %2069 = vmatmul.mubr.bf16.gmra.mrb[0].mxu0 %v1476
      %v2070 = vpop.f32.mrb[0].mxu0
      %v2071 = vadd.f32 %v881, %v2070
      %v2072 = vpop.f32.mrb[0].mxu0
      %v2073 = vpop.f32.mrb[0].mxu0
      %v2074 = vadd.f32 %v881, %v2073
      %v2075 = vpop.f32.mrb[0].mxu0
      %2076 = vmatprep.mubr.bf16.mxu0 0
      %2077 = vmatmul.mubr.bf16.gmra.mrb[0].mxu0 %v1479
      %v2078 = vpop.f32.mrb[0].mxu0
      %v2079 = vadd.f32 %v881, %v2078
      %v2080 = vpop.f32.mrb[0].mxu0
      %v2081 = vpop.f32.mrb[0].mxu0
      %v2082 = vadd.f32 %v881, %v2081
      %v2083 = vpop.f32.mrb[0].mxu0
      %2084 = vmatprep.mubr.bf16.mxu0 0
      %2085 = vmatmul.mubr.bf16.gmra.mrb[0].mxu0 %v1482
      %v2086 = vpop.f32.mrb[0].mxu0
      %v2087 = vadd.f32 %v881, %v2086
      %v2088 = vpop.f32.mrb[0].mxu0
      %v2089 = vpop.f32.mrb[0].mxu0
      %v2090 = vadd.f32 %v881, %v2089
      %v2091 = vpop.f32.mrb[0].mxu0
      %2092 = vdwg.mxu0
      %v2093 = vmax.f32 %v1519, 0.0
      %v2094 = vmax.f32 %v1522, 0.0
      %v2095 = vmax.f32 %v1527, 0.0
      %v2096 = vmax.f32 %v1530, 0.0
      %v2097 = vmax.f32 %v1535, 0.0
      %v2098 = vmax.f32 %v1538, 0.0
      %v2099 = vmax.f32 %v1543, 0.0
      %v2100 = vmax.f32 %v1546, 0.0
      %v2101 = vmax.f32 %v1551, 0.0
      %v2102 = vmax.f32 %v1554, 0.0
      %v2103 = vmax.f32 %v1559, 0.0
      %v2104 = vmax.f32 %v1562, 0.0
      %v2105 = vmax.f32 %v1567, 0.0
      %v2106 = vmax.f32 %v1570, 0.0
      %v2107 = vmax.f32 %v1575, 0.0
      %v2108 = vmax.f32 %v1578, 0.0
      %v2109 = vmax.f32 %v1583, 0.0
      %v2110 = vmax.f32 %v1586, 0.0
      %v2111 = vmax.f32 %v1591, 0.0
      %v2112 = vmax.f32 %v1594, 0.0
      %v2113 = vmax.f32 %v1599, 0.0
      %v2114 = vmax.f32 %v1602, 0.0
      %v2115 = vmax.f32 %v1607, 0.0
      %v2116 = vmax.f32 %v1610, 0.0
      %v2117 = vmax.f32 %v1615, 0.0
      %v2118 = vmax.f32 %v1618, 0.0
      %v2119 = vmax.f32 %v1623, 0.0
      %v2120 = vmax.f32 %v1626, 0.0
      %v2121 = vmax.f32 %v1631, 0.0
      %v2122 = vmax.f32 %v1634, 0.0
      %v2123 = vmax.f32 %v1639, 0.0
      %v2124 = vmax.f32 %v1642, 0.0
      %v2125 = vmax.f32 %v1647, 0.0
      %v2126 = vmax.f32 %v1650, 0.0
      %v2127 = vmax.f32 %v1655, 0.0
      %v2128 = vmax.f32 %v1658, 0.0
      %v2129 = vmax.f32 %v1663, 0.0
      %v2130 = vmax.f32 %v1666, 0.0
      %v2131 = vmax.f32 %v1671, 0.0
      %v2132 = vmax.f32 %v1674, 0.0
      %v2133 = vmax.f32 %v1679, 0.0
      %v2134 = vmax.f32 %v1682, 0.0
      %v2135 = vmax.f32 %v1687, 0.0
      %v2136 = vmax.f32 %v1690, 0.0
      %v2137 = vmax.f32 %v1695, 0.0
      %v2138 = vmax.f32 %v1698, 0.0
      %v2139 = vmax.f32 %v1703, 0.0
      %v2140 = vmax.f32 %v1706, 0.0
      %v2141 = vmax.f32 %v1711, 0.0
      %v2142 = vmax.f32 %v1714, 0.0
      %v2143 = vmax.f32 %v1719, 0.0
      %v2144 = vmax.f32 %v1722, 0.0
      %v2145 = vmax.f32 %v1727, 0.0
      %v2146 = vmax.f32 %v1730, 0.0
      %v2147 = vmax.f32 %v1735, 0.0
      %v2148 = vmax.f32 %v1738, 0.0
      %v2149 = vmax.f32 %v1743, 0.0
      %v2150 = vmax.f32 %v1746, 0.0
      %v2151 = vmax.f32 %v1751, 0.0
      %v2152 = vmax.f32 %v1754, 0.0
      %v2153 = vmax.f32 %v1759, 0.0
      %v2154 = vmax.f32 %v1762, 0.0
      %v2155 = vmax.f32 %v1767, 0.0
      %v2156 = vmax.f32 %v1770, 0.0
      %v2157 = vmax.f32 %v1775, 0.0
      %v2158 = vmax.f32 %v1778, 0.0
      %v2159 = vmax.f32 %v1783, 0.0
      %v2160 = vmax.f32 %v1786, 0.0
      %v2161 = vmax.f32 %v1791, 0.0
      %v2162 = vmax.f32 %v1794, 0.0
      %v2163 = vmax.f32 %v1799, 0.0
      %v2164 = vmax.f32 %v1802, 0.0
      %v2165 = vmax.f32 %v1807, 0.0
      %v2166 = vmax.f32 %v1810, 0.0
      %v2167 = vmax.f32 %v1815, 0.0
      %v2168 = vmax.f32 %v1818, 0.0
      %v2169 = vmax.f32 %v1823, 0.0
      %v2170 = vmax.f32 %v1826, 0.0
      %v2171 = vmax.f32 %v1831, 0.0
      %v2172 = vmax.f32 %v1834, 0.0
      %v2173 = vmax.f32 %v1839, 0.0
      %v2174 = vmax.f32 %v1842, 0.0
      %v2175 = vmax.f32 %v1847, 0.0
      %v2176 = vmax.f32 %v1850, 0.0
      %v2177 = vmax.f32 %v1855, 0.0
      %v2178 = vmax.f32 %v1858, 0.0
      %v2179 = vmax.f32 %v1863, 0.0
      %v2180 = vmax.f32 %v1866, 0.0
      %v2181 = vmax.f32 %v1871, 0.0
      %v2182 = vmax.f32 %v1874, 0.0
      %v2183 = vmax.f32 %v1879, 0.0
      %v2184 = vmax.f32 %v1882, 0.0
      %v2185 = vmax.f32 %v1887, 0.0
      %v2186 = vmax.f32 %v1890, 0.0
      %v2187 = vmax.f32 %v1895, 0.0
      %v2188 = vmax.f32 %v1898, 0.0
      %v2189 = vmax.f32 %v1903, 0.0
      %v2190 = vmax.f32 %v1906, 0.0
      %v2191 = vmax.f32 %v1911, 0.0
      %v2192 = vmax.f32 %v1914, 0.0
      %v2193 = vmax.f32 %v1919, 0.0
      %v2194 = vmax.f32 %v1922, 0.0
      %v2195 = vmax.f32 %v1927, 0.0
      %v2196 = vmax.f32 %v1930, 0.0
      %v2197 = vmax.f32 %v1935, 0.0
      %v2198 = vmax.f32 %v1938, 0.0
      %v2199 = vmax.f32 %v1943, 0.0
      %v2200 = vmax.f32 %v1946, 0.0
      %v2201 = vmax.f32 %v1951, 0.0
      %v2202 = vmax.f32 %v1954, 0.0
      %v2203 = vmax.f32 %v1959, 0.0
      %v2204 = vmax.f32 %v1962, 0.0
      %v2205 = vmax.f32 %v1967, 0.0
      %v2206 = vmax.f32 %v1970, 0.0
      %v2207 = vmax.f32 %v1975, 0.0
      %v2208 = vmax.f32 %v1978, 0.0
      %v2209 = vmax.f32 %v1983, 0.0
      %v2210 = vmax.f32 %v1986, 0.0
      %v2211 = vmax.f32 %v1991, 0.0
      %v2212 = vmax.f32 %v1994, 0.0
      %v2213 = vmax.f32 %v1999, 0.0
      %v2214 = vmax.f32 %v2002, 0.0
      %v2215 = vmax.f32 %v2007, 0.0
      %v2216 = vmax.f32 %v2010, 0.0
      %v2217 = vmax.f32 %v2015, 0.0
      %v2218 = vmax.f32 %v2018, 0.0
      %v2219 = vmax.f32 %v2023, 0.0
      %v2220 = vmax.f32 %v2026, 0.0
      %v2221 = vmax.f32 %v2031, 0.0
      %v2222 = vmax.f32 %v2034, 0.0
      %v2223 = vmax.f32 %v2039, 0.0
      %v2224 = vmax.f32 %v2042, 0.0
      %v2225 = vmax.f32 %v2047, 0.0
      %v2226 = vmax.f32 %v2050, 0.0
      %v2227 = vmax.f32 %v2055, 0.0
      %v2228 = vmax.f32 %v2058, 0.0
      %v2229 = vmax.f32 %v2063, 0.0
      %v2230 = vmax.f32 %v2066, 0.0
      %v2231 = vmax.f32 %v2071, 0.0
      %v2232 = vmax.f32 %v2074, 0.0
      %v2233 = vmax.f32 %v2079, 0.0
      %v2234 = vmax.f32 %v2082, 0.0
      %v2235 = vmax.f32 %v2087, 0.0
      %v2236 = vmax.f32 %v2090, 0.0
      %v2237 = vpack.c.bf16 %v2094, %v2093
      %v2238 = vpack.c.bf16 %v2096, %v2095
      %v2239 = vpack.c.bf16 %v2098, %v2097
      %v2240 = vpack.c.bf16 %v2100, %v2099
      %v2241 = vpack.c.bf16 %v2101, %v2101
      %v2242 = vld [vmem:[%s6] sm:$0xf]
      %v2243 = vld [vmem:[%s6 + $0x4] sm:$0xf]
      %v2244 = vld [vmem:[%s6 + $0x8] sm:$0xf]
      %v2245 = vld [vmem:[%s6 + $0xc] sm:$0xf]
      %v2246 = vpack.c.bf16 %v2103, %v2102
      %v2247 = vpack.c.bf16 %v2105, %v2104
      %v2248 = vpack.c.bf16 %v2107, %v2106
      %v2249 = vpack.c.bf16 %v2109, %v2108
      %v2250 = vpack.c.bf16 %v2110, %v2110
      %s2251 = scalar_lea.vmem %s6, 16
      %v2252 = vld [vmem:[%s2251] sm:$0xf]
      %v2253 = vld [vmem:[%s2251 + $0x4] sm:$0xf]
      %v2254 = vld [vmem:[%s2251 + $0x8] sm:$0xf]
      %v2255 = vld [vmem:[%s2251 + $0xc] sm:$0xf]
      %v2260 = vunpack.c.l.b16 %v2252
      %v2261 = vunpack.c.l.b16 %v2253
      %v2262 = vunpack.c.l.b16 %v2254
      %v2263 = vunpack.c.l.b16 %v2255
      %v2264 = vpack.c.b16 %v2261, %v2260
      %v2265 = vpack.c.b16 %v2263, %v2262
      %vm2268 = vcmask 261120
      %v2270 = vsel %vm2268, %v2246, 0
      %v2273 = vsel %vm2268, %v2247, 0
      %v2276 = vsel %vm2268, %v2248, 0
      %v2279 = vsel %vm2268, %v2249, 0
      %v2282 = vsel %vm2268, %v2250, 0
      %2284 = vmatprep.subr.bf16.mxu0 0
      %2285 = vmatpush1.bf16.msra.mxu0 %v2264
      %2286 = vmatprep.subr.bf16.mxu0 0
      %2287 = vmatpush1.bf16.msra.mxu0 %v2265
      %2288 = vmatprep.subr.bf16.mxu0 0
      %2289 = vmatpush1.bf16.msra.mxu0 0
      %2290 = vmatprep.subr.bf16.mxu0 0
      %2291 = vmatpush1.bf16.msra.mxu0 0
      %2292 = vmatprep.subr.bf16.mxu0 0
      %2293 = vmatpush1.bf16.msra.mxu0 0
      %2294 = vmatprep.subr.bf16.mxu0 0
      %2295 = vmatpush1.bf16.msra.mxu0 0
      %2296 = vmatprep.subr.bf16.mxu0 0
      %2297 = vmatpush1.bf16.msra.mxu0 0
      %2298 = vmatprep.subr.bf16.mxu0 0
      %2299 = vmatpush1.bf16.msra.mxu0 0
      %2300 = vmatprep.subr.bf16.mxu0 0
      %2301 = vmatpush1.bf16.msra.mxu0 0
      %2302 = vmatprep.subr.bf16.mxu0 0
      %2303 = vmatpush1.bf16.msra.mxu0 0
      %2304 = vmatprep.subr.bf16.mxu0 0
      %2305 = vmatpush1.bf16.msra.mxu0 0
      %2306 = vmatprep.subr.bf16.mxu0 0
      %2307 = vmatpush1.bf16.msra.mxu0 0
      %2308 = vmatprep.subr.bf16.mxu0 0
      %2309 = vmatpush1.bf16.msra.mxu0 0
      %2310 = vmatprep.subr.bf16.mxu0 0
      %2311 = vmatpush1.bf16.msra.mxu0 0
      %2312 = vmatprep.subr.bf16.mxu0 0
      %2313 = vmatpush1.bf16.msra.mxu0 0
      %2314 = vmatprep.subr.bf16.mxu0 0
      %2315 = vmatpush1.bf16.msra.mxu0 0
      %2316 = vmatprep.mubr.bf16.mxu0 0
      %2317 = vmatmul.mubr.bf16.gmra.mrb[0].mxu0 %v2270
      %v2318 = vpop.f32.mrb[0].mxu0
      %v2319 = vadd.f32 0.0, %v2318
      %v2320 = vpop.f32.mrb[0].mxu0
      %v2321 = vpop.f32.mrb[0].mxu0
      %v2322 = vadd.f32 0.0, %v2321
      %v2323 = vpop.f32.mrb[0].mxu0
      %2324 = vmatprep.mubr.bf16.mxu0 0
      %2325 = vmatmul.mubr.bf16.gmra.mrb[0].mxu0 %v2273
      %v2326 = vpop.f32.mrb[0].mxu0
      %v2327 = vadd.f32 0.0, %v2326
      %v2328 = vpop.f32.mrb[0].mxu0
      %v2329 = vpop.f32.mrb[0].mxu0
      %v2330 = vadd.f32 0.0, %v2329
      %v2331 = vpop.f32.mrb[0].mxu0
      %2332 = vmatprep.mubr.bf16.mxu0 0
      %2333 = vmatmul.mubr.bf16.gmra.mrb[0].mxu0 %v2276
      %v2334 = vpop.f32.mrb[0].mxu0
      %v2335 = vadd.f32 0.0, %v2334
      %v2336 = vpop.f32.mrb[0].mxu0
      %v2337 = vpop.f32.mrb[0].mxu0
      %v2338 = vadd.f32 0.0, %v2337
      %v2339 = vpop.f32.mrb[0].mxu0
      %2340 = vmatprep.mubr.bf16.mxu0 0
      %2341 = vmatmul.mubr.bf16.gmra.mrb[0].mxu0 %v2279
      %v2342 = vpop.f32.mrb[0].mxu0
      %v2343 = vadd.f32 0.0, %v2342
      %v2344 = vpop.f32.mrb[0].mxu0
      %v2345 = vpop.f32.mrb[0].mxu0
      %v2346 = vadd.f32 0.0, %v2345
      %v2347 = vpop.f32.mrb[0].mxu0
      %2348 = vmatprep.mubr.bf16.mxu0 0
      %2349 = vmatmul.mubr.bf16.gmra.mrb[0].mxu0 %v2282
      %v2350 = vpop.f32.mrb[0].mxu0
      %v2351 = vadd.f32 0.0, %v2350
      %v2352 = vpop.f32.mrb[0].mxu0
      %v2353 = vpop.f32.mrb[0].mxu0
      %v2354 = vpop.f32.mrb[0].mxu0
      %2355 = vdwg.mxu0
      %v2360 = vunpack.c.l.b16 %v2242
      %v2361 = vunpack.c.l.b16 %v2243
      %v2362 = vunpack.c.l.b16 %v2244
      %v2363 = vunpack.c.l.b16 %v2245
      %v2364 = vpack.c.b16 %v2361, %v2360
      %v2365 = vpack.c.b16 %v2363, %v2362
      %v2369 = vsel %vm2268, %v2237, 0
      %v2372 = vsel %vm2268, %v2238, 0
      %v2375 = vsel %vm2268, %v2239, 0
      %v2378 = vsel %vm2268, %v2240, 0
      %v2381 = vsel %vm2268, %v2241, 0
      %2383 = vmatprep.subr.bf16.mxu0 0
      %2384 = vmatpush1.bf16.msra.mxu0 %v2364
      %2385 = vmatprep.subr.bf16.mxu0 0
      %2386 = vmatpush1.bf16.msra.mxu0 %v2365
      %2387 = vmatprep.subr.bf16.mxu0 0
      %2388 = vmatpush1.bf16.msra.mxu0 0
      %2389 = vmatprep.subr.bf16.mxu0 0
      %2390 = vmatpush1.bf16.msra.mxu0 0
      %2391 = vmatprep.subr.bf16.mxu0 0
      %2392 = vmatpush1.bf16.msra.mxu0 0
      %2393 = vmatprep.subr.bf16.mxu0 0
      %2394 = vmatpush1.bf16.msra.mxu0 0
      %2395 = vmatprep.subr.bf16.mxu0 0
      %2396 = vmatpush1.bf16.msra.mxu0 0
      %2397 = vmatprep.subr.bf16.mxu0 0
      %2398 = vmatpush1.bf16.msra.mxu0 0
      %2399 = vmatprep.subr.bf16.mxu0 0
      %2400 = vmatpush1.bf16.msra.mxu0 0
      %2401 = vmatprep.subr.bf16.mxu0 0
      %2402 = vmatpush1.bf16.msra.mxu0 0
      %2403 = vmatprep.subr.bf16.mxu0 0
      %2404 = vmatpush1.bf16.msra.mxu0 0
      %2405 = vmatprep.subr.bf16.mxu0 0
      %2406 = vmatpush1.bf16.msra.mxu0 0
      %2407 = vmatprep.subr.bf16.mxu0 0
      %2408 = vmatpush1.bf16.msra.mxu0 0
      %2409 = vmatprep.subr.bf16.mxu0 0
      %2410 = vmatpush1.bf16.msra.mxu0 0
      %2411 = vmatprep.subr.bf16.mxu0 0
      %2412 = vmatpush1.bf16.msra.mxu0 0
      %2413 = vmatprep.subr.bf16.mxu0 0
      %2414 = vmatpush1.bf16.msra.mxu0 0
      %2415 = vmatprep.mubr.bf16.mxu0 0
      %2416 = vmatmul.mubr.bf16.gmra.mrb[0].mxu0 %v2369
      %v2417 = vpop.f32.mrb[0].mxu0
      %v2418 = vadd.f32 %v2319, %v2417
      %v2419 = vpop.f32.mrb[0].mxu0
      %v2420 = vpop.f32.mrb[0].mxu0
      %v2421 = vadd.f32 %v2322, %v2420
      %v2422 = vpop.f32.mrb[0].mxu0
      %2423 = vmatprep.mubr.bf16.mxu0 0
      %2424 = vmatmul.mubr.bf16.gmra.mrb[0].mxu0 %v2372
      %v2425 = vpop.f32.mrb[0].mxu0
      %v2426 = vadd.f32 %v2327, %v2425
      %v2427 = vpop.f32.mrb[0].mxu0
      %v2428 = vpop.f32.mrb[0].mxu0
      %v2429 = vadd.f32 %v2330, %v2428
      %v2430 = vpop.f32.mrb[0].mxu0
      %2431 = vmatprep.mubr.bf16.mxu0 0
      %2432 = vmatmul.mubr.bf16.gmra.mrb[0].mxu0 %v2375
      %v2433 = vpop.f32.mrb[0].mxu0
      %v2434 = vadd.f32 %v2335, %v2433
      %v2435 = vpop.f32.mrb[0].mxu0
      %v2436 = vpop.f32.mrb[0].mxu0
      %v2437 = vadd.f32 %v2338, %v2436
      %v2438 = vpop.f32.mrb[0].mxu0
      %2439 = vmatprep.mubr.bf16.mxu0 0
      %2440 = vmatmul.mubr.bf16.gmra.mrb[0].mxu0 %v2378
      %v2441 = vpop.f32.mrb[0].mxu0
      %v2442 = vadd.f32 %v2343, %v2441
      %v2443 = vpop.f32.mrb[0].mxu0
      %v2444 = vpop.f32.mrb[0].mxu0
      %v2445 = vadd.f32 %v2346, %v2444
      %v2446 = vpop.f32.mrb[0].mxu0
      %2447 = vmatprep.mubr.bf16.mxu0 0
      %2448 = vmatmul.mubr.bf16.gmra.mrb[0].mxu0 %v2381
      %v2449 = vpop.f32.mrb[0].mxu0
      %v2450 = vadd.f32 %v2351, %v2449
      %v2451 = vpop.f32.mrb[0].mxu0
      %v2452 = vpop.f32.mrb[0].mxu0
      %v2453 = vpop.f32.mrb[0].mxu0
      %2454 = vdwg.mxu0
      %v2455 = vpack.c.bf16 %v2112, %v2111
      %v2456 = vpack.c.bf16 %v2114, %v2113
      %v2457 = vpack.c.bf16 %v2116, %v2115
      %v2458 = vpack.c.bf16 %v2118, %v2117
      %v2459 = vpack.c.bf16 %v2119, %v2119
      %s2460 = scalar_lea.vmem %s6, 32
      %v2461 = vld [vmem:[%s2460] sm:$0xf]
      %v2462 = vld [vmem:[%s2460 + $0x4] sm:$0xf]
      %v2463 = vld [vmem:[%s2460 + $0x8] sm:$0xf]
      %v2464 = vld [vmem:[%s2460 + $0xc] sm:$0xf]
      %v2469 = vunpack.c.l.b16 %v2461
      %v2470 = vunpack.c.l.b16 %v2462
      %v2471 = vunpack.c.l.b16 %v2463
      %v2472 = vunpack.c.l.b16 %v2464
      %v2473 = vpack.c.b16 %v2470, %v2469
      %v2474 = vpack.c.b16 %v2472, %v2471
      %v2478 = vsel %vm2268, %v2455, 0
      %v2481 = vsel %vm2268, %v2456, 0
      %v2484 = vsel %vm2268, %v2457, 0
      %v2487 = vsel %vm2268, %v2458, 0
      %v2490 = vsel %vm2268, %v2459, 0
      %2492 = vmatprep.subr.bf16.mxu0 0
      %2493 = vmatpush1.bf16.msra.mxu0 %v2473
      %2494 = vmatprep.subr.bf16.mxu0 0
      %2495 = vmatpush1.bf16.msra.mxu0 %v2474
      %2496 = vmatprep.subr.bf16.mxu0 0
      %2497 = vmatpush1.bf16.msra.mxu0 0
      %2498 = vmatprep.subr.bf16.mxu0 0
      %2499 = vmatpush1.bf16.msra.mxu0 0
      %2500 = vmatprep.subr.bf16.mxu0 0
      %2501 = vmatpush1.bf16.msra.mxu0 0
      %2502 = vmatprep.subr.bf16.mxu0 0
      %2503 = vmatpush1.bf16.msra.mxu0 0
      %2504 = vmatprep.subr.bf16.mxu0 0
      %2505 = vmatpush1.bf16.msra.mxu0 0
      %2506 = vmatprep.subr.bf16.mxu0 0
      %2507 = vmatpush1.bf16.msra.mxu0 0
      %2508 = vmatprep.subr.bf16.mxu0 0
      %2509 = vmatpush1.bf16.msra.mxu0 0
      %2510 = vmatprep.subr.bf16.mxu0 0
      %2511 = vmatpush1.bf16.msra.mxu0 0
      %2512 = vmatprep.subr.bf16.mxu0 0
      %2513 = vmatpush1.bf16.msra.mxu0 0
      %2514 = vmatprep.subr.bf16.mxu0 0
      %2515 = vmatpush1.bf16.msra.mxu0 0
      %2516 = vmatprep.subr.bf16.mxu0 0
      %2517 = vmatpush1.bf16.msra.mxu0 0
      %2518 = vmatprep.subr.bf16.mxu0 0
      %2519 = vmatpush1.bf16.msra.mxu0 0
      %2520 = vmatprep.subr.bf16.mxu0 0
      %2521 = vmatpush1.bf16.msra.mxu0 0
      %2522 = vmatprep.subr.bf16.mxu0 0
      %2523 = vmatpush1.bf16.msra.mxu0 0
      %2524 = vmatprep.mubr.bf16.mxu0 0
      %2525 = vmatmul.mubr.bf16.gmra.mrb[0].mxu0 %v2478
      %v2526 = vpop.f32.mrb[0].mxu0
      %v2527 = vadd.f32 0.0, %v2526
      %v2528 = vpop.f32.mrb[0].mxu0
      %v2529 = vpop.f32.mrb[0].mxu0
      %v2530 = vadd.f32 0.0, %v2529
      %v2531 = vpop.f32.mrb[0].mxu0
      %2532 = vmatprep.mubr.bf16.mxu0 0
      %2533 = vmatmul.mubr.bf16.gmra.mrb[0].mxu0 %v2481
      %v2534 = vpop.f32.mrb[0].mxu0
      %v2535 = vadd.f32 0.0, %v2534
      %v2536 = vpop.f32.mrb[0].mxu0
      %v2537 = vpop.f32.mrb[0].mxu0
      %v2538 = vadd.f32 0.0, %v2537
      %v2539 = vpop.f32.mrb[0].mxu0
      %2540 = vmatprep.mubr.bf16.mxu0 0
      %2541 = vmatmul.mubr.bf16.gmra.mrb[0].mxu0 %v2484
      %v2542 = vpop.f32.mrb[0].mxu0
      %v2543 = vadd.f32 0.0, %v2542
      %v2544 = vpop.f32.mrb[0].mxu0
      %v2545 = vpop.f32.mrb[0].mxu0
      %v2546 = vadd.f32 0.0, %v2545
      %v2547 = vpop.f32.mrb[0].mxu0
      %2548 = vmatprep.mubr.bf16.mxu0 0
      %2549 = vmatmul.mubr.bf16.gmra.mrb[0].mxu0 %v2487
      %v2550 = vpop.f32.mrb[0].mxu0
      %v2551 = vadd.f32 0.0, %v2550
      %v2552 = vpop.f32.mrb[0].mxu0
      %v2553 = vpop.f32.mrb[0].mxu0
      %v2554 = vadd.f32 0.0, %v2553
      %v2555 = vpop.f32.mrb[0].mxu0
      %2556 = vmatprep.mubr.bf16.mxu0 0
      %2557 = vmatmul.mubr.bf16.gmra.mrb[0].mxu0 %v2490
      %v2558 = vpop.f32.mrb[0].mxu0
      %v2559 = vadd.f32 0.0, %v2558
      %v2560 = vpop.f32.mrb[0].mxu0
      %v2561 = vpop.f32.mrb[0].mxu0
      %v2562 = vpop.f32.mrb[0].mxu0
      %2563 = vdwg.mxu0
      %v2564 = vadd.f32 %v2418, %v2527
      %v2565 = vadd.f32 %v2421, %v2530
      %v2566 = vadd.f32 %v2426, %v2535
      %v2567 = vadd.f32 %v2429, %v2538
      %v2568 = vadd.f32 %v2434, %v2543
      %v2569 = vadd.f32 %v2437, %v2546
      %v2570 = vadd.f32 %v2442, %v2551
      %v2571 = vadd.f32 %v2445, %v2554
      %v2572 = vadd.f32 %v2450, %v2559
      %v2573 = vpack.c.bf16 %v2121, %v2120
      %v2574 = vpack.c.bf16 %v2123, %v2122
      %v2575 = vpack.c.bf16 %v2125, %v2124
      %v2576 = vpack.c.bf16 %v2127, %v2126
      %v2577 = vpack.c.bf16 %v2128, %v2128
      %s2578 = scalar_lea.vmem %s6, 48
      %v2579 = vld [vmem:[%s2578] sm:$0xf]
      %v2580 = vld [vmem:[%s2578 + $0x4] sm:$0xf]
      %v2581 = vld [vmem:[%s2578 + $0x8] sm:$0xf]
      %v2582 = vld [vmem:[%s2578 + $0xc] sm:$0xf]
      %v2587 = vunpack.c.l.b16 %v2579
      %v2588 = vunpack.c.l.b16 %v2580
      %v2589 = vunpack.c.l.b16 %v2581
      %v2590 = vunpack.c.l.b16 %v2582
      %v2591 = vpack.c.b16 %v2588, %v2587
      %v2592 = vpack.c.b16 %v2590, %v2589
      %v2596 = vsel %vm2268, %v2573, 0
      %v2599 = vsel %vm2268, %v2574, 0
      %v2602 = vsel %vm2268, %v2575, 0
      %v2605 = vsel %vm2268, %v2576, 0
      %v2608 = vsel %vm2268, %v2577, 0
      %2610 = vmatprep.subr.bf16.mxu0 0
      %2611 = vmatpush1.bf16.msra.mxu0 %v2591
      %2612 = vmatprep.subr.bf16.mxu0 0
      %2613 = vmatpush1.bf16.msra.mxu0 %v2592
      %2614 = vmatprep.subr.bf16.mxu0 0
      %2615 = vmatpush1.bf16.msra.mxu0 0
      %2616 = vmatprep.subr.bf16.mxu0 0
      %2617 = vmatpush1.bf16.msra.mxu0 0
      %2618 = vmatprep.subr.bf16.mxu0 0
      %2619 = vmatpush1.bf16.msra.mxu0 0
      %2620 = vmatprep.subr.bf16.mxu0 0
      %2621 = vmatpush1.bf16.msra.mxu0 0
      %2622 = vmatprep.subr.bf16.mxu0 0
      %2623 = vmatpush1.bf16.msra.mxu0 0
      %2624 = vmatprep.subr.bf16.mxu0 0
      %2625 = vmatpush1.bf16.msra.mxu0 0
      %2626 = vmatprep.subr.bf16.mxu0 0
      %2627 = vmatpush1.bf16.msra.mxu0 0
      %2628 = vmatprep.subr.bf16.mxu0 0
      %2629 = vmatpush1.bf16.msra.mxu0 0
      %2630 = vmatprep.subr.bf16.mxu0 0
      %2631 = vmatpush1.bf16.msra.mxu0 0
      %2632 = vmatprep.subr.bf16.mxu0 0
      %2633 = vmatpush1.bf16.msra.mxu0 0
      %2634 = vmatprep.subr.bf16.mxu0 0
      %2635 = vmatpush1.bf16.msra.mxu0 0
      %2636 = vmatprep.subr.bf16.mxu0 0
      %2637 = vmatpush1.bf16.msra.mxu0 0
      %2638 = vmatprep.subr.bf16.mxu0 0
      %2639 = vmatpush1.bf16.msra.mxu0 0
      %2640 = vmatprep.subr.bf16.mxu0 0
      %2641 = vmatpush1.bf16.msra.mxu0 0
      %2642 = vmatprep.mubr.bf16.mxu0 0
      %2643 = vmatmul.mubr.bf16.gmra.mrb[0].mxu0 %v2596
      %v2644 = vpop.f32.mrb[0].mxu0
      %v2645 = vadd.f32 0.0, %v2644
      %v2646 = vpop.f32.mrb[0].mxu0
      %v2647 = vpop.f32.mrb[0].mxu0
      %v2648 = vadd.f32 0.0, %v2647
      %v2649 = vpop.f32.mrb[0].mxu0
      %2650 = vmatprep.mubr.bf16.mxu0 0
      %2651 = vmatmul.mubr.bf16.gmra.mrb[0].mxu0 %v2599
      %v2652 = vpop.f32.mrb[0].mxu0
      %v2653 = vadd.f32 0.0, %v2652
      %v2654 = vpop.f32.mrb[0].mxu0
      %v2655 = vpop.f32.mrb[0].mxu0
      %v2656 = vadd.f32 0.0, %v2655
      %v2657 = vpop.f32.mrb[0].mxu0
      %2658 = vmatprep.mubr.bf16.mxu0 0
      %2659 = vmatmul.mubr.bf16.gmra.mrb[0].mxu0 %v2602
      %v2660 = vpop.f32.mrb[0].mxu0
      %v2661 = vadd.f32 0.0, %v2660
      %v2662 = vpop.f32.mrb[0].mxu0
      %v2663 = vpop.f32.mrb[0].mxu0
      %v2664 = vadd.f32 0.0, %v2663
      %v2665 = vpop.f32.mrb[0].mxu0
      %2666 = vmatprep.mubr.bf16.mxu0 0
      %2667 = vmatmul.mubr.bf16.gmra.mrb[0].mxu0 %v2605
      %v2668 = vpop.f32.mrb[0].mxu0
      %v2669 = vadd.f32 0.0, %v2668
      %v2670 = vpop.f32.mrb[0].mxu0
      %v2671 = vpop.f32.mrb[0].mxu0
      %v2672 = vadd.f32 0.0, %v2671
      %v2673 = vpop.f32.mrb[0].mxu0
      %2674 = vmatprep.mubr.bf16.mxu0 0
      %2675 = vmatmul.mubr.bf16.gmra.mrb[0].mxu0 %v2608
      %v2676 = vpop.f32.mrb[0].mxu0
      %v2677 = vadd.f32 0.0, %v2676
      %v2678 = vpop.f32.mrb[0].mxu0
      %v2679 = vpop.f32.mrb[0].mxu0
      %v2680 = vpop.f32.mrb[0].mxu0
      %2681 = vdwg.mxu0
      %v2682 = vadd.f32 %v2564, %v2645
      %v2683 = vadd.f32 %v2565, %v2648
      %v2684 = vadd.f32 %v2566, %v2653
      %v2685 = vadd.f32 %v2567, %v2656
      %v2686 = vadd.f32 %v2568, %v2661
      %v2687 = vadd.f32 %v2569, %v2664
      %v2688 = vadd.f32 %v2570, %v2669
      %v2689 = vadd.f32 %v2571, %v2672
      %v2690 = vadd.f32 %v2572, %v2677
      %v2691 = vpack.c.bf16 %v2130, %v2129
      %v2692 = vpack.c.bf16 %v2132, %v2131
      %v2693 = vpack.c.bf16 %v2134, %v2133
      %v2694 = vpack.c.bf16 %v2136, %v2135
      %v2695 = vpack.c.bf16 %v2137, %v2137
      %s2696 = scalar_lea.vmem %s6, 64
      %v2697 = vld [vmem:[%s2696] sm:$0xf]
      %v2698 = vld [vmem:[%s2696 + $0x4] sm:$0xf]
      %v2699 = vld [vmem:[%s2696 + $0x8] sm:$0xf]
      %v2700 = vld [vmem:[%s2696 + $0xc] sm:$0xf]
      %v2705 = vunpack.c.l.b16 %v2697
      %v2706 = vunpack.c.l.b16 %v2698
      %v2707 = vunpack.c.l.b16 %v2699
      %v2708 = vunpack.c.l.b16 %v2700
      %v2709 = vpack.c.b16 %v2706, %v2705
      %v2710 = vpack.c.b16 %v2708, %v2707
      %v2714 = vsel %vm2268, %v2691, 0
      %v2717 = vsel %vm2268, %v2692, 0
      %v2720 = vsel %vm2268, %v2693, 0
      %v2723 = vsel %vm2268, %v2694, 0
      %v2726 = vsel %vm2268, %v2695, 0
      %2728 = vmatprep.subr.bf16.mxu0 0
      %2729 = vmatpush1.bf16.msra.mxu0 %v2709
      %2730 = vmatprep.subr.bf16.mxu0 0
      %2731 = vmatpush1.bf16.msra.mxu0 %v2710
      %2732 = vmatprep.subr.bf16.mxu0 0
      %2733 = vmatpush1.bf16.msra.mxu0 0
      %2734 = vmatprep.subr.bf16.mxu0 0
      %2735 = vmatpush1.bf16.msra.mxu0 0
      %2736 = vmatprep.subr.bf16.mxu0 0
      %2737 = vmatpush1.bf16.msra.mxu0 0
      %2738 = vmatprep.subr.bf16.mxu0 0
      %2739 = vmatpush1.bf16.msra.mxu0 0
      %2740 = vmatprep.subr.bf16.mxu0 0
      %2741 = vmatpush1.bf16.msra.mxu0 0
      %2742 = vmatprep.subr.bf16.mxu0 0
      %2743 = vmatpush1.bf16.msra.mxu0 0
      %2744 = vmatprep.subr.bf16.mxu0 0
      %2745 = vmatpush1.bf16.msra.mxu0 0
      %2746 = vmatprep.subr.bf16.mxu0 0
      %2747 = vmatpush1.bf16.msra.mxu0 0
      %2748 = vmatprep.subr.bf16.mxu0 0
      %2749 = vmatpush1.bf16.msra.mxu0 0
      %2750 = vmatprep.subr.bf16.mxu0 0
      %2751 = vmatpush1.bf16.msra.mxu0 0
      %2752 = vmatprep.subr.bf16.mxu0 0
      %2753 = vmatpush1.bf16.msra.mxu0 0
      %2754 = vmatprep.subr.bf16.mxu0 0
      %2755 = vmatpush1.bf16.msra.mxu0 0
      %2756 = vmatprep.subr.bf16.mxu0 0
      %2757 = vmatpush1.bf16.msra.mxu0 0
      %2758 = vmatprep.subr.bf16.mxu0 0
      %2759 = vmatpush1.bf16.msra.mxu0 0
      %2760 = vmatprep.mubr.bf16.mxu0 0
      %2761 = vmatmul.mubr.bf16.gmra.mrb[0].mxu0 %v2714
      %v2762 = vpop.f32.mrb[0].mxu0
      %v2763 = vadd.f32 0.0, %v2762
      %v2764 = vpop.f32.mrb[0].mxu0
      %v2765 = vpop.f32.mrb[0].mxu0
      %v2766 = vadd.f32 0.0, %v2765
      %v2767 = vpop.f32.mrb[0].mxu0
      %2768 = vmatprep.mubr.bf16.mxu0 0
      %2769 = vmatmul.mubr.bf16.gmra.mrb[0].mxu0 %v2717
      %v2770 = vpop.f32.mrb[0].mxu0
      %v2771 = vadd.f32 0.0, %v2770
      %v2772 = vpop.f32.mrb[0].mxu0
      %v2773 = vpop.f32.mrb[0].mxu0
      %v2774 = vadd.f32 0.0, %v2773
      %v2775 = vpop.f32.mrb[0].mxu0
      %2776 = vmatprep.mubr.bf16.mxu0 0
      %2777 = vmatmul.mubr.bf16.gmra.mrb[0].mxu0 %v2720
      %v2778 = vpop.f32.mrb[0].mxu0
      %v2779 = vadd.f32 0.0, %v2778
      %v2780 = vpop.f32.mrb[0].mxu0
      %v2781 = vpop.f32.mrb[0].mxu0
      %v2782 = vadd.f32 0.0, %v2781
      %v2783 = vpop.f32.mrb[0].mxu0
      %2784 = vmatprep.mubr.bf16.mxu0 0
      %2785 = vmatmul.mubr.bf16.gmra.mrb[0].mxu0 %v2723
      %v2786 = vpop.f32.mrb[0].mxu0
      %v2787 = vadd.f32 0.0, %v2786
      %v2788 = vpop.f32.mrb[0].mxu0
      %v2789 = vpop.f32.mrb[0].mxu0
      %v2790 = vadd.f32 0.0, %v2789
      %v2791 = vpop.f32.mrb[0].mxu0
      %2792 = vmatprep.mubr.bf16.mxu0 0
      %2793 = vmatmul.mubr.bf16.gmra.mrb[0].mxu0 %v2726
      %v2794 = vpop.f32.mrb[0].mxu0
      %v2795 = vadd.f32 0.0, %v2794
      %v2796 = vpop.f32.mrb[0].mxu0
      %v2797 = vpop.f32.mrb[0].mxu0
      %v2798 = vpop.f32.mrb[0].mxu0
      %2799 = vdwg.mxu0
      %v2800 = vadd.f32 %v2682, %v2763
      %v2801 = vadd.f32 %v2683, %v2766
      %v2802 = vadd.f32 %v2684, %v2771
      %v2803 = vadd.f32 %v2685, %v2774
      %v2804 = vadd.f32 %v2686, %v2779
      %v2805 = vadd.f32 %v2687, %v2782
      %v2806 = vadd.f32 %v2688, %v2787
      %v2807 = vadd.f32 %v2689, %v2790
      %v2808 = vadd.f32 %v2690, %v2795
      %v2809 = vpack.c.bf16 %v2139, %v2138
      %v2810 = vpack.c.bf16 %v2141, %v2140
      %v2811 = vpack.c.bf16 %v2143, %v2142
      %v2812 = vpack.c.bf16 %v2145, %v2144
      %v2813 = vpack.c.bf16 %v2146, %v2146
      %s2814 = scalar_lea.vmem %s6, 80
      %v2815 = vld [vmem:[%s2814] sm:$0xf]
      %v2816 = vld [vmem:[%s2814 + $0x4] sm:$0xf]
      %v2817 = vld [vmem:[%s2814 + $0x8] sm:$0xf]
      %v2818 = vld [vmem:[%s2814 + $0xc] sm:$0xf]
      %v2823 = vunpack.c.l.b16 %v2815
      %v2824 = vunpack.c.l.b16 %v2816
      %v2825 = vunpack.c.l.b16 %v2817
      %v2826 = vunpack.c.l.b16 %v2818
      %v2827 = vpack.c.b16 %v2824, %v2823
      %v2828 = vpack.c.b16 %v2826, %v2825
      %v2832 = vsel %vm2268, %v2809, 0
      %v2835 = vsel %vm2268, %v2810, 0
      %v2838 = vsel %vm2268, %v2811, 0
      %v2841 = vsel %vm2268, %v2812, 0
      %v2844 = vsel %vm2268, %v2813, 0
      %2846 = vmatprep.subr.bf16.mxu0 0
      %2847 = vmatpush1.bf16.msra.mxu0 %v2827
      %2848 = vmatprep.subr.bf16.mxu0 0
      %2849 = vmatpush1.bf16.msra.mxu0 %v2828
      %2850 = vmatprep.subr.bf16.mxu0 0
      %2851 = vmatpush1.bf16.msra.mxu0 0
      %2852 = vmatprep.subr.bf16.mxu0 0
      %2853 = vmatpush1.bf16.msra.mxu0 0
      %2854 = vmatprep.subr.bf16.mxu0 0
      %2855 = vmatpush1.bf16.msra.mxu0 0
      %2856 = vmatprep.subr.bf16.mxu0 0
      %2857 = vmatpush1.bf16.msra.mxu0 0
      %2858 = vmatprep.subr.bf16.mxu0 0
      %2859 = vmatpush1.bf16.msra.mxu0 0
      %2860 = vmatprep.subr.bf16.mxu0 0
      %2861 = vmatpush1.bf16.msra.mxu0 0
      %2862 = vmatprep.subr.bf16.mxu0 0
      %2863 = vmatpush1.bf16.msra.mxu0 0
      %2864 = vmatprep.subr.bf16.mxu0 0
      %2865 = vmatpush1.bf16.msra.mxu0 0
      %2866 = vmatprep.subr.bf16.mxu0 0
      %2867 = vmatpush1.bf16.msra.mxu0 0
      %2868 = vmatprep.subr.bf16.mxu0 0
      %2869 = vmatpush1.bf16.msra.mxu0 0
      %2870 = vmatprep.subr.bf16.mxu0 0
      %2871 = vmatpush1.bf16.msra.mxu0 0
      %2872 = vmatprep.subr.bf16.mxu0 0
      %2873 = vmatpush1.bf16.msra.mxu0 0
      %2874 = vmatprep.subr.bf16.mxu0 0
      %2875 = vmatpush1.bf16.msra.mxu0 0
      %2876 = vmatprep.subr.bf16.mxu0 0
      %2877 = vmatpush1.bf16.msra.mxu0 0
      %2878 = vmatprep.mubr.bf16.mxu0 0
      %2879 = vmatmul.mubr.bf16.gmra.mrb[0].mxu0 %v2832
      %v2880 = vpop.f32.mrb[0].mxu0
      %v2881 = vadd.f32 0.0, %v2880
      %v2882 = vpop.f32.mrb[0].mxu0
      %v2883 = vpop.f32.mrb[0].mxu0
      %v2884 = vadd.f32 0.0, %v2883
      %v2885 = vpop.f32.mrb[0].mxu0
      %2886 = vmatprep.mubr.bf16.mxu0 0
      %2887 = vmatmul.mubr.bf16.gmra.mrb[0].mxu0 %v2835
      %v2888 = vpop.f32.mrb[0].mxu0
      %v2889 = vadd.f32 0.0, %v2888
      %v2890 = vpop.f32.mrb[0].mxu0
      %v2891 = vpop.f32.mrb[0].mxu0
      %v2892 = vadd.f32 0.0, %v2891
      %v2893 = vpop.f32.mrb[0].mxu0
      %2894 = vmatprep.mubr.bf16.mxu0 0
      %2895 = vmatmul.mubr.bf16.gmra.mrb[0].mxu0 %v2838
      %v2896 = vpop.f32.mrb[0].mxu0
      %v2897 = vadd.f32 0.0, %v2896
      %v2898 = vpop.f32.mrb[0].mxu0
      %v2899 = vpop.f32.mrb[0].mxu0
      %v2900 = vadd.f32 0.0, %v2899
      %v2901 = vpop.f32.mrb[0].mxu0
      %2902 = vmatprep.mubr.bf16.mxu0 0
      %2903 = vmatmul.mubr.bf16.gmra.mrb[0].mxu0 %v2841
      %v2904 = vpop.f32.mrb[0].mxu0
      %v2905 = vadd.f32 0.0, %v2904
      %v2906 = vpop.f32.mrb[0].mxu0
      %v2907 = vpop.f32.mrb[0].mxu0
      %v2908 = vadd.f32 0.0, %v2907
      %v2909 = vpop.f32.mrb[0].mxu0
      %2910 = vmatprep.mubr.bf16.mxu0 0
      %2911 = vmatmul.mubr.bf16.gmra.mrb[0].mxu0 %v2844
      %v2912 = vpop.f32.mrb[0].mxu0
      %v2913 = vadd.f32 0.0, %v2912
      %v2914 = vpop.f32.mrb[0].mxu0
      %v2915 = vpop.f32.mrb[0].mxu0
      %v2916 = vpop.f32.mrb[0].mxu0
      %2917 = vdwg.mxu0
      %v2918 = vadd.f32 %v2800, %v2881
      %v2919 = vadd.f32 %v2801, %v2884
      %v2920 = vadd.f32 %v2802, %v2889
      %v2921 = vadd.f32 %v2803, %v2892
      %v2922 = vadd.f32 %v2804, %v2897
      %v2923 = vadd.f32 %v2805, %v2900
      %v2924 = vadd.f32 %v2806, %v2905
      %v2925 = vadd.f32 %v2807, %v2908
      %v2926 = vadd.f32 %v2808, %v2913
      %v2927 = vpack.c.bf16 %v2148, %v2147
      %v2928 = vpack.c.bf16 %v2150, %v2149
      %v2929 = vpack.c.bf16 %v2152, %v2151
      %v2930 = vpack.c.bf16 %v2154, %v2153
      %v2931 = vpack.c.bf16 %v2155, %v2155
      %s2932 = scalar_lea.vmem %s6, 96
      %v2933 = vld [vmem:[%s2932] sm:$0xf]
      %v2934 = vld [vmem:[%s2932 + $0x4] sm:$0xf]
      %v2935 = vld [vmem:[%s2932 + $0x8] sm:$0xf]
      %v2936 = vld [vmem:[%s2932 + $0xc] sm:$0xf]
      %v2941 = vunpack.c.l.b16 %v2933
      %v2942 = vunpack.c.l.b16 %v2934
      %v2943 = vunpack.c.l.b16 %v2935
      %v2944 = vunpack.c.l.b16 %v2936
      %v2945 = vpack.c.b16 %v2942, %v2941
      %v2946 = vpack.c.b16 %v2944, %v2943
      %v2950 = vsel %vm2268, %v2927, 0
      %v2953 = vsel %vm2268, %v2928, 0
      %v2956 = vsel %vm2268, %v2929, 0
      %v2959 = vsel %vm2268, %v2930, 0
      %v2962 = vsel %vm2268, %v2931, 0
      %2964 = vmatprep.subr.bf16.mxu0 0
      %2965 = vmatpush1.bf16.msra.mxu0 %v2945
      %2966 = vmatprep.subr.bf16.mxu0 0
      %2967 = vmatpush1.bf16.msra.mxu0 %v2946
      %2968 = vmatprep.subr.bf16.mxu0 0
      %2969 = vmatpush1.bf16.msra.mxu0 0
      %2970 = vmatprep.subr.bf16.mxu0 0
      %2971 = vmatpush1.bf16.msra.mxu0 0
      %2972 = vmatprep.subr.bf16.mxu0 0
      %2973 = vmatpush1.bf16.msra.mxu0 0
      %2974 = vmatprep.subr.bf16.mxu0 0
      %2975 = vmatpush1.bf16.msra.mxu0 0
      %2976 = vmatprep.subr.bf16.mxu0 0
      %2977 = vmatpush1.bf16.msra.mxu0 0
      %2978 = vmatprep.subr.bf16.mxu0 0
      %2979 = vmatpush1.bf16.msra.mxu0 0
      %2980 = vmatprep.subr.bf16.mxu0 0
      %2981 = vmatpush1.bf16.msra.mxu0 0
      %2982 = vmatprep.subr.bf16.mxu0 0
      %2983 = vmatpush1.bf16.msra.mxu0 0
      %2984 = vmatprep.subr.bf16.mxu0 0
      %2985 = vmatpush1.bf16.msra.mxu0 0
      %2986 = vmatprep.subr.bf16.mxu0 0
      %2987 = vmatpush1.bf16.msra.mxu0 0
      %2988 = vmatprep.subr.bf16.mxu0 0
      %2989 = vmatpush1.bf16.msra.mxu0 0
      %2990 = vmatprep.subr.bf16.mxu0 0
      %2991 = vmatpush1.bf16.msra.mxu0 0
      %2992 = vmatprep.subr.bf16.mxu0 0
      %2993 = vmatpush1.bf16.msra.mxu0 0
      %2994 = vmatprep.subr.bf16.mxu0 0
      %2995 = vmatpush1.bf16.msra.mxu0 0
      %2996 = vmatprep.mubr.bf16.mxu0 0
      %2997 = vmatmul.mubr.bf16.gmra.mrb[0].mxu0 %v2950
      %v2998 = vpop.f32.mrb[0].mxu0
      %v2999 = vadd.f32 0.0, %v2998
      %v3000 = vpop.f32.mrb[0].mxu0
      %v3001 = vpop.f32.mrb[0].mxu0
      %v3002 = vadd.f32 0.0, %v3001
      %v3003 = vpop.f32.mrb[0].mxu0
      %3004 = vmatprep.mubr.bf16.mxu0 0
      %3005 = vmatmul.mubr.bf16.gmra.mrb[0].mxu0 %v2953
      %v3006 = vpop.f32.mrb[0].mxu0
      %v3007 = vadd.f32 0.0, %v3006
      %v3008 = vpop.f32.mrb[0].mxu0
      %v3009 = vpop.f32.mrb[0].mxu0
      %v3010 = vadd.f32 0.0, %v3009
      %v3011 = vpop.f32.mrb[0].mxu0
      %3012 = vmatprep.mubr.bf16.mxu0 0
      %3013 = vmatmul.mubr.bf16.gmra.mrb[0].mxu0 %v2956
      %v3014 = vpop.f32.mrb[0].mxu0
      %v3015 = vadd.f32 0.0, %v3014
      %v3016 = vpop.f32.mrb[0].mxu0
      %v3017 = vpop.f32.mrb[0].mxu0
      %v3018 = vadd.f32 0.0, %v3017
      %v3019 = vpop.f32.mrb[0].mxu0
      %3020 = vmatprep.mubr.bf16.mxu0 0
      %3021 = vmatmul.mubr.bf16.gmra.mrb[0].mxu0 %v2959
      %v3022 = vpop.f32.mrb[0].mxu0
      %v3023 = vadd.f32 0.0, %v3022
      %v3024 = vpop.f32.mrb[0].mxu0
      %v3025 = vpop.f32.mrb[0].mxu0
      %v3026 = vadd.f32 0.0, %v3025
      %v3027 = vpop.f32.mrb[0].mxu0
      %3028 = vmatprep.mubr.bf16.mxu0 0
      %3029 = vmatmul.mubr.bf16.gmra.mrb[0].mxu0 %v2962
      %v3030 = vpop.f32.mrb[0].mxu0
      %v3031 = vadd.f32 0.0, %v3030
      %v3032 = vpop.f32.mrb[0].mxu0
      %v3033 = vpop.f32.mrb[0].mxu0
      %v3034 = vpop.f32.mrb[0].mxu0
      %3035 = vdwg.mxu0
      %v3036 = vadd.f32 %v2918, %v2999
      %v3037 = vadd.f32 %v2919, %v3002
      %v3038 = vadd.f32 %v2920, %v3007
      %v3039 = vadd.f32 %v2921, %v3010
      %v3040 = vadd.f32 %v2922, %v3015
      %v3041 = vadd.f32 %v2923, %v3018
      %v3042 = vadd.f32 %v2924, %v3023
      %v3043 = vadd.f32 %v2925, %v3026
      %v3044 = vadd.f32 %v2926, %v3031
      %v3045 = vpack.c.bf16 %v2157, %v2156
      %v3046 = vpack.c.bf16 %v2159, %v2158
      %v3047 = vpack.c.bf16 %v2161, %v2160
      %v3048 = vpack.c.bf16 %v2163, %v2162
      %v3049 = vpack.c.bf16 %v2164, %v2164
      %s3050 = scalar_lea.vmem %s6, 112
      %v3051 = vld [vmem:[%s3050] sm:$0xf]
      %v3052 = vld [vmem:[%s3050 + $0x4] sm:$0xf]
      %v3053 = vld [vmem:[%s3050 + $0x8] sm:$0xf]
      %v3054 = vld [vmem:[%s3050 + $0xc] sm:$0xf]
      %v3059 = vunpack.c.l.b16 %v3051
      %v3060 = vunpack.c.l.b16 %v3052
      %v3061 = vunpack.c.l.b16 %v3053
      %v3062 = vunpack.c.l.b16 %v3054
      %v3063 = vpack.c.b16 %v3060, %v3059
      %v3064 = vpack.c.b16 %v3062, %v3061
      %v3068 = vsel %vm2268, %v3045, 0
      %v3071 = vsel %vm2268, %v3046, 0
      %v3074 = vsel %vm2268, %v3047, 0
      %v3077 = vsel %vm2268, %v3048, 0
      %v3080 = vsel %vm2268, %v3049, 0
      %3082 = vmatprep.subr.bf16.mxu0 0
      %3083 = vmatpush1.bf16.msra.mxu0 %v3063
      %3084 = vmatprep.subr.bf16.mxu0 0
      %3085 = vmatpush1.bf16.msra.mxu0 %v3064
      %3086 = vmatprep.subr.bf16.mxu0 0
      %3087 = vmatpush1.bf16.msra.mxu0 0
      %3088 = vmatprep.subr.bf16.mxu0 0
      %3089 = vmatpush1.bf16.msra.mxu0 0
      %3090 = vmatprep.subr.bf16.mxu0 0
      %3091 = vmatpush1.bf16.msra.mxu0 0
      %3092 = vmatprep.subr.bf16.mxu0 0
      %3093 = vmatpush1.bf16.msra.mxu0 0
      %3094 = vmatprep.subr.bf16.mxu0 0
      %3095 = vmatpush1.bf16.msra.mxu0 0
      %3096 = vmatprep.subr.bf16.mxu0 0
      %3097 = vmatpush1.bf16.msra.mxu0 0
      %3098 = vmatprep.subr.bf16.mxu0 0
      %3099 = vmatpush1.bf16.msra.mxu0 0
      %3100 = vmatprep.subr.bf16.mxu0 0
      %3101 = vmatpush1.bf16.msra.mxu0 0
      %3102 = vmatprep.subr.bf16.mxu0 0
      %3103 = vmatpush1.bf16.msra.mxu0 0
      %3104 = vmatprep.subr.bf16.mxu0 0
      %3105 = vmatpush1.bf16.msra.mxu0 0
      %3106 = vmatprep.subr.bf16.mxu0 0
      %3107 = vmatpush1.bf16.msra.mxu0 0
      %3108 = vmatprep.subr.bf16.mxu0 0
      %3109 = vmatpush1.bf16.msra.mxu0 0
      %3110 = vmatprep.subr.bf16.mxu0 0
      %3111 = vmatpush1.bf16.msra.mxu0 0
      %3112 = vmatprep.subr.bf16.mxu0 0
      %3113 = vmatpush1.bf16.msra.mxu0 0
      %3114 = vmatprep.mubr.bf16.mxu0 0
      %3115 = vmatmul.mubr.bf16.gmra.mrb[0].mxu0 %v3068
      %v3116 = vpop.f32.mrb[0].mxu0
      %v3117 = vadd.f32 0.0, %v3116
      %v3118 = vpop.f32.mrb[0].mxu0
      %v3119 = vpop.f32.mrb[0].mxu0
      %v3120 = vadd.f32 0.0, %v3119
      %v3121 = vpop.f32.mrb[0].mxu0
      %3122 = vmatprep.mubr.bf16.mxu0 0
      %3123 = vmatmul.mubr.bf16.gmra.mrb[0].mxu0 %v3071
      %v3124 = vpop.f32.mrb[0].mxu0
      %v3125 = vadd.f32 0.0, %v3124
      %v3126 = vpop.f32.mrb[0].mxu0
      %v3127 = vpop.f32.mrb[0].mxu0
      %v3128 = vadd.f32 0.0, %v3127
      %v3129 = vpop.f32.mrb[0].mxu0
      %3130 = vmatprep.mubr.bf16.mxu0 0
      %3131 = vmatmul.mubr.bf16.gmra.mrb[0].mxu0 %v3074
      %v3132 = vpop.f32.mrb[0].mxu0
      %v3133 = vadd.f32 0.0, %v3132
      %v3134 = vpop.f32.mrb[0].mxu0
      %v3135 = vpop.f32.mrb[0].mxu0
      %v3136 = vadd.f32 0.0, %v3135
      %v3137 = vpop.f32.mrb[0].mxu0
      %3138 = vmatprep.mubr.bf16.mxu0 0
      %3139 = vmatmul.mubr.bf16.gmra.mrb[0].mxu0 %v3077
      %v3140 = vpop.f32.mrb[0].mxu0
      %v3141 = vadd.f32 0.0, %v3140
      %v3142 = vpop.f32.mrb[0].mxu0
      %v3143 = vpop.f32.mrb[0].mxu0
      %v3144 = vadd.f32 0.0, %v3143
      %v3145 = vpop.f32.mrb[0].mxu0
      %3146 = vmatprep.mubr.bf16.mxu0 0
      %3147 = vmatmul.mubr.bf16.gmra.mrb[0].mxu0 %v3080
      %v3148 = vpop.f32.mrb[0].mxu0
      %v3149 = vadd.f32 0.0, %v3148
      %v3150 = vpop.f32.mrb[0].mxu0
      %v3151 = vpop.f32.mrb[0].mxu0
      %v3152 = vpop.f32.mrb[0].mxu0
      %3153 = vdwg.mxu0
      %v3154 = vadd.f32 %v3036, %v3117
      %v3155 = vadd.f32 %v3037, %v3120
      %v3156 = vadd.f32 %v3038, %v3125
      %v3157 = vadd.f32 %v3039, %v3128
      %v3158 = vadd.f32 %v3040, %v3133
      %v3159 = vadd.f32 %v3041, %v3136
      %v3160 = vadd.f32 %v3042, %v3141
      %v3161 = vadd.f32 %v3043, %v3144
      %v3162 = vadd.f32 %v3044, %v3149
      %v3163 = vpack.c.bf16 %v2166, %v2165
      %v3164 = vpack.c.bf16 %v2168, %v2167
      %v3165 = vpack.c.bf16 %v2170, %v2169
      %v3166 = vpack.c.bf16 %v2172, %v2171
      %v3167 = vpack.c.bf16 %v2173, %v2173
      %s3168 = scalar_lea.vmem %s6, 128
      %v3169 = vld [vmem:[%s3168] sm:$0xf]
      %v3170 = vld [vmem:[%s3168 + $0x4] sm:$0xf]
      %v3171 = vld [vmem:[%s3168 + $0x8] sm:$0xf]
      %v3172 = vld [vmem:[%s3168 + $0xc] sm:$0xf]
      %v3177 = vunpack.c.l.b16 %v3169
      %v3178 = vunpack.c.l.b16 %v3170
      %v3179 = vunpack.c.l.b16 %v3171
      %v3180 = vunpack.c.l.b16 %v3172
      %v3181 = vpack.c.b16 %v3178, %v3177
      %v3182 = vpack.c.b16 %v3180, %v3179
      %v3186 = vsel %vm2268, %v3163, 0
      %v3189 = vsel %vm2268, %v3164, 0
      %v3192 = vsel %vm2268, %v3165, 0
      %v3195 = vsel %vm2268, %v3166, 0
      %v3198 = vsel %vm2268, %v3167, 0
      %3200 = vmatprep.subr.bf16.mxu0 0
      %3201 = vmatpush1.bf16.msra.mxu0 %v3181
      %3202 = vmatprep.subr.bf16.mxu0 0
      %3203 = vmatpush1.bf16.msra.mxu0 %v3182
      %3204 = vmatprep.subr.bf16.mxu0 0
      %3205 = vmatpush1.bf16.msra.mxu0 0
      %3206 = vmatprep.subr.bf16.mxu0 0
      %3207 = vmatpush1.bf16.msra.mxu0 0
      %3208 = vmatprep.subr.bf16.mxu0 0
      %3209 = vmatpush1.bf16.msra.mxu0 0
      %3210 = vmatprep.subr.bf16.mxu0 0
      %3211 = vmatpush1.bf16.msra.mxu0 0
      %3212 = vmatprep.subr.bf16.mxu0 0
      %3213 = vmatpush1.bf16.msra.mxu0 0
      %3214 = vmatprep.subr.bf16.mxu0 0
      %3215 = vmatpush1.bf16.msra.mxu0 0
      %3216 = vmatprep.subr.bf16.mxu0 0
      %3217 = vmatpush1.bf16.msra.mxu0 0
      %3218 = vmatprep.subr.bf16.mxu0 0
      %3219 = vmatpush1.bf16.msra.mxu0 0
      %3220 = vmatprep.subr.bf16.mxu0 0
      %3221 = vmatpush1.bf16.msra.mxu0 0
      %3222 = vmatprep.subr.bf16.mxu0 0
      %3223 = vmatpush1.bf16.msra.mxu0 0
      %3224 = vmatprep.subr.bf16.mxu0 0
      %3225 = vmatpush1.bf16.msra.mxu0 0
      %3226 = vmatprep.subr.bf16.mxu0 0
      %3227 = vmatpush1.bf16.msra.mxu0 0
      %3228 = vmatprep.subr.bf16.mxu0 0
      %3229 = vmatpush1.bf16.msra.mxu0 0
      %3230 = vmatprep.subr.bf16.mxu0 0
      %3231 = vmatpush1.bf16.msra.mxu0 0
      %3232 = vmatprep.mubr.bf16.mxu0 0
      %3233 = vmatmul.mubr.bf16.gmra.mrb[0].mxu0 %v3186
      %v3234 = vpop.f32.mrb[0].mxu0
      %v3235 = vadd.f32 0.0, %v3234
      %v3236 = vpop.f32.mrb[0].mxu0
      %v3237 = vpop.f32.mrb[0].mxu0
      %v3238 = vadd.f32 0.0, %v3237
      %v3239 = vpop.f32.mrb[0].mxu0
      %3240 = vmatprep.mubr.bf16.mxu0 0
      %3241 = vmatmul.mubr.bf16.gmra.mrb[0].mxu0 %v3189
      %v3242 = vpop.f32.mrb[0].mxu0
      %v3243 = vadd.f32 0.0, %v3242
      %v3244 = vpop.f32.mrb[0].mxu0
      %v3245 = vpop.f32.mrb[0].mxu0
      %v3246 = vadd.f32 0.0, %v3245
      %v3247 = vpop.f32.mrb[0].mxu0
      %3248 = vmatprep.mubr.bf16.mxu0 0
      %3249 = vmatmul.mubr.bf16.gmra.mrb[0].mxu0 %v3192
      %v3250 = vpop.f32.mrb[0].mxu0
      %v3251 = vadd.f32 0.0, %v3250
      %v3252 = vpop.f32.mrb[0].mxu0
      %v3253 = vpop.f32.mrb[0].mxu0
      %v3254 = vadd.f32 0.0, %v3253
      %v3255 = vpop.f32.mrb[0].mxu0
      %3256 = vmatprep.mubr.bf16.mxu0 0
      %3257 = vmatmul.mubr.bf16.gmra.mrb[0].mxu0 %v3195
      %v3258 = vpop.f32.mrb[0].mxu0
      %v3259 = vadd.f32 0.0, %v3258
      %v3260 = vpop.f32.mrb[0].mxu0
      %v3261 = vpop.f32.mrb[0].mxu0
      %v3262 = vadd.f32 0.0, %v3261
      %v3263 = vpop.f32.mrb[0].mxu0
      %3264 = vmatprep.mubr.bf16.mxu0 0
      %3265 = vmatmul.mubr.bf16.gmra.mrb[0].mxu0 %v3198
      %v3266 = vpop.f32.mrb[0].mxu0
      %v3267 = vadd.f32 0.0, %v3266
      %v3268 = vpop.f32.mrb[0].mxu0
      %v3269 = vpop.f32.mrb[0].mxu0
      %v3270 = vpop.f32.mrb[0].mxu0
      %3271 = vdwg.mxu0
      %v3272 = vadd.f32 %v3154, %v3235
      %v3273 = vadd.f32 %v3155, %v3238
      %v3274 = vadd.f32 %v3156, %v3243
      %v3275 = vadd.f32 %v3157, %v3246
      %v3276 = vadd.f32 %v3158, %v3251
      %v3277 = vadd.f32 %v3159, %v3254
      %v3278 = vadd.f32 %v3160, %v3259
      %v3279 = vadd.f32 %v3161, %v3262
      %v3280 = vadd.f32 %v3162, %v3267
      %v3281 = vpack.c.bf16 %v2175, %v2174
      %v3282 = vpack.c.bf16 %v2177, %v2176
      %v3283 = vpack.c.bf16 %v2179, %v2178
      %v3284 = vpack.c.bf16 %v2181, %v2180
      %v3285 = vpack.c.bf16 %v2182, %v2182
      %s3286 = scalar_lea.vmem %s6, 144
      %v3287 = vld [vmem:[%s3286] sm:$0xf]
      %v3288 = vld [vmem:[%s3286 + $0x4] sm:$0xf]
      %v3289 = vld [vmem:[%s3286 + $0x8] sm:$0xf]
      %v3290 = vld [vmem:[%s3286 + $0xc] sm:$0xf]
      %v3295 = vunpack.c.l.b16 %v3287
      %v3296 = vunpack.c.l.b16 %v3288
      %v3297 = vunpack.c.l.b16 %v3289
      %v3298 = vunpack.c.l.b16 %v3290
      %v3299 = vpack.c.b16 %v3296, %v3295
      %v3300 = vpack.c.b16 %v3298, %v3297
      %v3304 = vsel %vm2268, %v3281, 0
      %v3307 = vsel %vm2268, %v3282, 0
      %v3310 = vsel %vm2268, %v3283, 0
      %v3313 = vsel %vm2268, %v3284, 0
      %v3316 = vsel %vm2268, %v3285, 0
      %3318 = vmatprep.subr.bf16.mxu0 0
      %3319 = vmatpush1.bf16.msra.mxu0 %v3299
      %3320 = vmatprep.subr.bf16.mxu0 0
      %3321 = vmatpush1.bf16.msra.mxu0 %v3300
      %3322 = vmatprep.subr.bf16.mxu0 0
      %3323 = vmatpush1.bf16.msra.mxu0 0
      %3324 = vmatprep.subr.bf16.mxu0 0
      %3325 = vmatpush1.bf16.msra.mxu0 0
      %3326 = vmatprep.subr.bf16.mxu0 0
      %3327 = vmatpush1.bf16.msra.mxu0 0
      %3328 = vmatprep.subr.bf16.mxu0 0
      %3329 = vmatpush1.bf16.msra.mxu0 0
      %3330 = vmatprep.subr.bf16.mxu0 0
      %3331 = vmatpush1.bf16.msra.mxu0 0
      %3332 = vmatprep.subr.bf16.mxu0 0
      %3333 = vmatpush1.bf16.msra.mxu0 0
      %3334 = vmatprep.subr.bf16.mxu0 0
      %3335 = vmatpush1.bf16.msra.mxu0 0
      %3336 = vmatprep.subr.bf16.mxu0 0
      %3337 = vmatpush1.bf16.msra.mxu0 0
      %3338 = vmatprep.subr.bf16.mxu0 0
      %3339 = vmatpush1.bf16.msra.mxu0 0
      %3340 = vmatprep.subr.bf16.mxu0 0
      %3341 = vmatpush1.bf16.msra.mxu0 0
      %3342 = vmatprep.subr.bf16.mxu0 0
      %3343 = vmatpush1.bf16.msra.mxu0 0
      %3344 = vmatprep.subr.bf16.mxu0 0
      %3345 = vmatpush1.bf16.msra.mxu0 0
      %3346 = vmatprep.subr.bf16.mxu0 0
      %3347 = vmatpush1.bf16.msra.mxu0 0
      %3348 = vmatprep.subr.bf16.mxu0 0
      %3349 = vmatpush1.bf16.msra.mxu0 0
      %3350 = vmatprep.mubr.bf16.mxu0 0
      %3351 = vmatmul.mubr.bf16.gmra.mrb[0].mxu0 %v3304
      %v3352 = vpop.f32.mrb[0].mxu0
      %v3353 = vadd.f32 0.0, %v3352
      %v3354 = vpop.f32.mrb[0].mxu0
      %v3355 = vpop.f32.mrb[0].mxu0
      %v3356 = vadd.f32 0.0, %v3355
      %v3357 = vpop.f32.mrb[0].mxu0
      %3358 = vmatprep.mubr.bf16.mxu0 0
      %3359 = vmatmul.mubr.bf16.gmra.mrb[0].mxu0 %v3307
      %v3360 = vpop.f32.mrb[0].mxu0
      %v3361 = vadd.f32 0.0, %v3360
      %v3362 = vpop.f32.mrb[0].mxu0
      %v3363 = vpop.f32.mrb[0].mxu0
      %v3364 = vadd.f32 0.0, %v3363
      %v3365 = vpop.f32.mrb[0].mxu0
      %3366 = vmatprep.mubr.bf16.mxu0 0
      %3367 = vmatmul.mubr.bf16.gmra.mrb[0].mxu0 %v3310
      %v3368 = vpop.f32.mrb[0].mxu0
      %v3369 = vadd.f32 0.0, %v3368
      %v3370 = vpop.f32.mrb[0].mxu0
      %v3371 = vpop.f32.mrb[0].mxu0
      %v3372 = vadd.f32 0.0, %v3371
      %v3373 = vpop.f32.mrb[0].mxu0
      %3374 = vmatprep.mubr.bf16.mxu0 0
      %3375 = vmatmul.mubr.bf16.gmra.mrb[0].mxu0 %v3313
      %v3376 = vpop.f32.mrb[0].mxu0
      %v3377 = vadd.f32 0.0, %v3376
      %v3378 = vpop.f32.mrb[0].mxu0
      %v3379 = vpop.f32.mrb[0].mxu0
      %v3380 = vadd.f32 0.0, %v3379
      %v3381 = vpop.f32.mrb[0].mxu0
      %3382 = vmatprep.mubr.bf16.mxu0 0
      %3383 = vmatmul.mubr.bf16.gmra.mrb[0].mxu0 %v3316
      %v3384 = vpop.f32.mrb[0].mxu0
      %v3385 = vadd.f32 0.0, %v3384
      %v3386 = vpop.f32.mrb[0].mxu0
      %v3387 = vpop.f32.mrb[0].mxu0
      %v3388 = vpop.f32.mrb[0].mxu0
      %3389 = vdwg.mxu0
      %v3390 = vadd.f32 %v3272, %v3353
      %v3391 = vadd.f32 %v3273, %v3356
      %v3392 = vadd.f32 %v3274, %v3361
      %v3393 = vadd.f32 %v3275, %v3364
      %v3394 = vadd.f32 %v3276, %v3369
      %v3395 = vadd.f32 %v3277, %v3372
      %v3396 = vadd.f32 %v3278, %v3377
      %v3397 = vadd.f32 %v3279, %v3380
      %v3398 = vadd.f32 %v3280, %v3385
      %v3399 = vpack.c.bf16 %v2184, %v2183
      %v3400 = vpack.c.bf16 %v2186, %v2185
      %v3401 = vpack.c.bf16 %v2188, %v2187
      %v3402 = vpack.c.bf16 %v2190, %v2189
      %v3403 = vpack.c.bf16 %v2191, %v2191
      %s3404 = scalar_lea.vmem %s6, 160
      %v3405 = vld [vmem:[%s3404] sm:$0xf]
      %v3406 = vld [vmem:[%s3404 + $0x4] sm:$0xf]
      %v3407 = vld [vmem:[%s3404 + $0x8] sm:$0xf]
      %v3408 = vld [vmem:[%s3404 + $0xc] sm:$0xf]
      %v3413 = vunpack.c.l.b16 %v3405
      %v3414 = vunpack.c.l.b16 %v3406
      %v3415 = vunpack.c.l.b16 %v3407
      %v3416 = vunpack.c.l.b16 %v3408
      %v3417 = vpack.c.b16 %v3414, %v3413
      %v3418 = vpack.c.b16 %v3416, %v3415
      %v3422 = vsel %vm2268, %v3399, 0
      %v3425 = vsel %vm2268, %v3400, 0
      %v3428 = vsel %vm2268, %v3401, 0
      %v3431 = vsel %vm2268, %v3402, 0
      %v3434 = vsel %vm2268, %v3403, 0
      %3436 = vmatprep.subr.bf16.mxu0 0
      %3437 = vmatpush1.bf16.msra.mxu0 %v3417
      %3438 = vmatprep.subr.bf16.mxu0 0
      %3439 = vmatpush1.bf16.msra.mxu0 %v3418
      %3440 = vmatprep.subr.bf16.mxu0 0
      %3441 = vmatpush1.bf16.msra.mxu0 0
      %3442 = vmatprep.subr.bf16.mxu0 0
      %3443 = vmatpush1.bf16.msra.mxu0 0
      %3444 = vmatprep.subr.bf16.mxu0 0
      %3445 = vmatpush1.bf16.msra.mxu0 0
      %3446 = vmatprep.subr.bf16.mxu0 0
      %3447 = vmatpush1.bf16.msra.mxu0 0
      %3448 = vmatprep.subr.bf16.mxu0 0
      %3449 = vmatpush1.bf16.msra.mxu0 0
      %3450 = vmatprep.subr.bf16.mxu0 0
      %3451 = vmatpush1.bf16.msra.mxu0 0
      %3452 = vmatprep.subr.bf16.mxu0 0
      %3453 = vmatpush1.bf16.msra.mxu0 0
      %3454 = vmatprep.subr.bf16.mxu0 0
      %3455 = vmatpush1.bf16.msra.mxu0 0
      %3456 = vmatprep.subr.bf16.mxu0 0
      %3457 = vmatpush1.bf16.msra.mxu0 0
      %3458 = vmatprep.subr.bf16.mxu0 0
      %3459 = vmatpush1.bf16.msra.mxu0 0
      %3460 = vmatprep.subr.bf16.mxu0 0
      %3461 = vmatpush1.bf16.msra.mxu0 0
      %3462 = vmatprep.subr.bf16.mxu0 0
      %3463 = vmatpush1.bf16.msra.mxu0 0
      %3464 = vmatprep.subr.bf16.mxu0 0
      %3465 = vmatpush1.bf16.msra.mxu0 0
      %3466 = vmatprep.subr.bf16.mxu0 0
      %3467 = vmatpush1.bf16.msra.mxu0 0
      %3468 = vmatprep.mubr.bf16.mxu0 0
      %3469 = vmatmul.mubr.bf16.gmra.mrb[0].mxu0 %v3422
      %v3470 = vpop.f32.mrb[0].mxu0
      %v3471 = vadd.f32 0.0, %v3470
      %v3472 = vpop.f32.mrb[0].mxu0
      %v3473 = vpop.f32.mrb[0].mxu0
      %v3474 = vadd.f32 0.0, %v3473
      %v3475 = vpop.f32.mrb[0].mxu0
      %3476 = vmatprep.mubr.bf16.mxu0 0
      %3477 = vmatmul.mubr.bf16.gmra.mrb[0].mxu0 %v3425
      %v3478 = vpop.f32.mrb[0].mxu0
      %v3479 = vadd.f32 0.0, %v3478
      %v3480 = vpop.f32.mrb[0].mxu0
      %v3481 = vpop.f32.mrb[0].mxu0
      %v3482 = vadd.f32 0.0, %v3481
      %v3483 = vpop.f32.mrb[0].mxu0
      %3484 = vmatprep.mubr.bf16.mxu0 0
      %3485 = vmatmul.mubr.bf16.gmra.mrb[0].mxu0 %v3428
      %v3486 = vpop.f32.mrb[0].mxu0
      %v3487 = vadd.f32 0.0, %v3486
      %v3488 = vpop.f32.mrb[0].mxu0
      %v3489 = vpop.f32.mrb[0].mxu0
      %v3490 = vadd.f32 0.0, %v3489
      %v3491 = vpop.f32.mrb[0].mxu0
      %3492 = vmatprep.mubr.bf16.mxu0 0
      %3493 = vmatmul.mubr.bf16.gmra.mrb[0].mxu0 %v3431
      %v3494 = vpop.f32.mrb[0].mxu0
      %v3495 = vadd.f32 0.0, %v3494
      %v3496 = vpop.f32.mrb[0].mxu0
      %v3497 = vpop.f32.mrb[0].mxu0
      %v3498 = vadd.f32 0.0, %v3497
      %v3499 = vpop.f32.mrb[0].mxu0
      %3500 = vmatprep.mubr.bf16.mxu0 0
      %3501 = vmatmul.mubr.bf16.gmra.mrb[0].mxu0 %v3434
      %v3502 = vpop.f32.mrb[0].mxu0
      %v3503 = vadd.f32 0.0, %v3502
      %v3504 = vpop.f32.mrb[0].mxu0
      %v3505 = vpop.f32.mrb[0].mxu0
      %v3506 = vpop.f32.mrb[0].mxu0
      %3507 = vdwg.mxu0
      %v3508 = vadd.f32 %v3390, %v3471
      %v3509 = vadd.f32 %v3391, %v3474
      %v3510 = vadd.f32 %v3392, %v3479
      %v3511 = vadd.f32 %v3393, %v3482
      %v3512 = vadd.f32 %v3394, %v3487
      %v3513 = vadd.f32 %v3395, %v3490
      %v3514 = vadd.f32 %v3396, %v3495
      %v3515 = vadd.f32 %v3397, %v3498
      %v3516 = vadd.f32 %v3398, %v3503
      %v3517 = vpack.c.bf16 %v2193, %v2192
      %v3518 = vpack.c.bf16 %v2195, %v2194
      %v3519 = vpack.c.bf16 %v2197, %v2196
      %v3520 = vpack.c.bf16 %v2199, %v2198
      %v3521 = vpack.c.bf16 %v2200, %v2200
      %s3522 = scalar_lea.vmem %s6, 176
      %v3523 = vld [vmem:[%s3522] sm:$0xf]
      %v3524 = vld [vmem:[%s3522 + $0x4] sm:$0xf]
      %v3525 = vld [vmem:[%s3522 + $0x8] sm:$0xf]
      %v3526 = vld [vmem:[%s3522 + $0xc] sm:$0xf]
      %v3531 = vunpack.c.l.b16 %v3523
      %v3532 = vunpack.c.l.b16 %v3524
      %v3533 = vunpack.c.l.b16 %v3525
      %v3534 = vunpack.c.l.b16 %v3526
      %v3535 = vpack.c.b16 %v3532, %v3531
      %v3536 = vpack.c.b16 %v3534, %v3533
      %v3540 = vsel %vm2268, %v3517, 0
      %v3543 = vsel %vm2268, %v3518, 0
      %v3546 = vsel %vm2268, %v3519, 0
      %v3549 = vsel %vm2268, %v3520, 0
      %v3552 = vsel %vm2268, %v3521, 0
      %3554 = vmatprep.subr.bf16.mxu0 0
      %3555 = vmatpush1.bf16.msra.mxu0 %v3535
      %3556 = vmatprep.subr.bf16.mxu0 0
      %3557 = vmatpush1.bf16.msra.mxu0 %v3536
      %3558 = vmatprep.subr.bf16.mxu0 0
      %3559 = vmatpush1.bf16.msra.mxu0 0
      %3560 = vmatprep.subr.bf16.mxu0 0
      %3561 = vmatpush1.bf16.msra.mxu0 0
      %3562 = vmatprep.subr.bf16.mxu0 0
      %3563 = vmatpush1.bf16.msra.mxu0 0
      %3564 = vmatprep.subr.bf16.mxu0 0
      %3565 = vmatpush1.bf16.msra.mxu0 0
      %3566 = vmatprep.subr.bf16.mxu0 0
      %3567 = vmatpush1.bf16.msra.mxu0 0
      %3568 = vmatprep.subr.bf16.mxu0 0
      %3569 = vmatpush1.bf16.msra.mxu0 0
      %3570 = vmatprep.subr.bf16.mxu0 0
      %3571 = vmatpush1.bf16.msra.mxu0 0
      %3572 = vmatprep.subr.bf16.mxu0 0
      %3573 = vmatpush1.bf16.msra.mxu0 0
      %3574 = vmatprep.subr.bf16.mxu0 0
      %3575 = vmatpush1.bf16.msra.mxu0 0
      %3576 = vmatprep.subr.bf16.mxu0 0
      %3577 = vmatpush1.bf16.msra.mxu0 0
      %3578 = vmatprep.subr.bf16.mxu0 0
      %3579 = vmatpush1.bf16.msra.mxu0 0
      %3580 = vmatprep.subr.bf16.mxu0 0
      %3581 = vmatpush1.bf16.msra.mxu0 0
      %3582 = vmatprep.subr.bf16.mxu0 0
      %3583 = vmatpush1.bf16.msra.mxu0 0
      %3584 = vmatprep.subr.bf16.mxu0 0
      %3585 = vmatpush1.bf16.msra.mxu0 0
      %3586 = vmatprep.mubr.bf16.mxu0 0
      %3587 = vmatmul.mubr.bf16.gmra.mrb[0].mxu0 %v3540
      %v3588 = vpop.f32.mrb[0].mxu0
      %v3589 = vadd.f32 0.0, %v3588
      %v3590 = vpop.f32.mrb[0].mxu0
      %v3591 = vpop.f32.mrb[0].mxu0
      %v3592 = vadd.f32 0.0, %v3591
      %v3593 = vpop.f32.mrb[0].mxu0
      %3594 = vmatprep.mubr.bf16.mxu0 0
      %3595 = vmatmul.mubr.bf16.gmra.mrb[0].mxu0 %v3543
      %v3596 = vpop.f32.mrb[0].mxu0
      %v3597 = vadd.f32 0.0, %v3596
      %v3598 = vpop.f32.mrb[0].mxu0
      %v3599 = vpop.f32.mrb[0].mxu0
      %v3600 = vadd.f32 0.0, %v3599
      %v3601 = vpop.f32.mrb[0].mxu0
      %3602 = vmatprep.mubr.bf16.mxu0 0
      %3603 = vmatmul.mubr.bf16.gmra.mrb[0].mxu0 %v3546
      %v3604 = vpop.f32.mrb[0].mxu0
      %v3605 = vadd.f32 0.0, %v3604
      %v3606 = vpop.f32.mrb[0].mxu0
      %v3607 = vpop.f32.mrb[0].mxu0
      %v3608 = vadd.f32 0.0, %v3607
      %v3609 = vpop.f32.mrb[0].mxu0
      %3610 = vmatprep.mubr.bf16.mxu0 0
      %3611 = vmatmul.mubr.bf16.gmra.mrb[0].mxu0 %v3549
      %v3612 = vpop.f32.mrb[0].mxu0
      %v3613 = vadd.f32 0.0, %v3612
      %v3614 = vpop.f32.mrb[0].mxu0
      %v3615 = vpop.f32.mrb[0].mxu0
      %v3616 = vadd.f32 0.0, %v3615
      %v3617 = vpop.f32.mrb[0].mxu0
      %3618 = vmatprep.mubr.bf16.mxu0 0
      %3619 = vmatmul.mubr.bf16.gmra.mrb[0].mxu0 %v3552
      %v3620 = vpop.f32.mrb[0].mxu0
      %v3621 = vadd.f32 0.0, %v3620
      %v3622 = vpop.f32.mrb[0].mxu0
      %v3623 = vpop.f32.mrb[0].mxu0
      %v3624 = vpop.f32.mrb[0].mxu0
      %3625 = vdwg.mxu0
      %v3626 = vadd.f32 %v3508, %v3589
      %v3627 = vadd.f32 %v3509, %v3592
      %v3628 = vadd.f32 %v3510, %v3597
      %v3629 = vadd.f32 %v3511, %v3600
      %v3630 = vadd.f32 %v3512, %v3605
      %v3631 = vadd.f32 %v3513, %v3608
      %v3632 = vadd.f32 %v3514, %v3613
      %v3633 = vadd.f32 %v3515, %v3616
      %v3634 = vadd.f32 %v3516, %v3621
      %v3635 = vpack.c.bf16 %v2202, %v2201
      %v3636 = vpack.c.bf16 %v2204, %v2203
      %v3637 = vpack.c.bf16 %v2206, %v2205
      %v3638 = vpack.c.bf16 %v2208, %v2207
      %v3639 = vpack.c.bf16 %v2209, %v2209
      %s3640 = scalar_lea.vmem %s6, 192
      %v3641 = vld [vmem:[%s3640] sm:$0xf]
      %v3642 = vld [vmem:[%s3640 + $0x4] sm:$0xf]
      %v3643 = vld [vmem:[%s3640 + $0x8] sm:$0xf]
      %v3644 = vld [vmem:[%s3640 + $0xc] sm:$0xf]
      %v3649 = vunpack.c.l.b16 %v3641
      %v3650 = vunpack.c.l.b16 %v3642
      %v3651 = vunpack.c.l.b16 %v3643
      %v3652 = vunpack.c.l.b16 %v3644
      %v3653 = vpack.c.b16 %v3650, %v3649
      %v3654 = vpack.c.b16 %v3652, %v3651
      %v3658 = vsel %vm2268, %v3635, 0
      %v3661 = vsel %vm2268, %v3636, 0
      %v3664 = vsel %vm2268, %v3637, 0
      %v3667 = vsel %vm2268, %v3638, 0
      %v3670 = vsel %vm2268, %v3639, 0
      %3672 = vmatprep.subr.bf16.mxu0 0
      %3673 = vmatpush1.bf16.msra.mxu0 %v3653
      %3674 = vmatprep.subr.bf16.mxu0 0
      %3675 = vmatpush1.bf16.msra.mxu0 %v3654
      %3676 = vmatprep.subr.bf16.mxu0 0
      %3677 = vmatpush1.bf16.msra.mxu0 0
      %3678 = vmatprep.subr.bf16.mxu0 0
      %3679 = vmatpush1.bf16.msra.mxu0 0
      %3680 = vmatprep.subr.bf16.mxu0 0
      %3681 = vmatpush1.bf16.msra.mxu0 0
      %3682 = vmatprep.subr.bf16.mxu0 0
      %3683 = vmatpush1.bf16.msra.mxu0 0
      %3684 = vmatprep.subr.bf16.mxu0 0
      %3685 = vmatpush1.bf16.msra.mxu0 0
      %3686 = vmatprep.subr.bf16.mxu0 0
      %3687 = vmatpush1.bf16.msra.mxu0 0
      %3688 = vmatprep.subr.bf16.mxu0 0
      %3689 = vmatpush1.bf16.msra.mxu0 0
      %3690 = vmatprep.subr.bf16.mxu0 0
      %3691 = vmatpush1.bf16.msra.mxu0 0
      %3692 = vmatprep.subr.bf16.mxu0 0
      %3693 = vmatpush1.bf16.msra.mxu0 0
      %3694 = vmatprep.subr.bf16.mxu0 0
      %3695 = vmatpush1.bf16.msra.mxu0 0
      %3696 = vmatprep.subr.bf16.mxu0 0
      %3697 = vmatpush1.bf16.msra.mxu0 0
      %3698 = vmatprep.subr.bf16.mxu0 0
      %3699 = vmatpush1.bf16.msra.mxu0 0
      %3700 = vmatprep.subr.bf16.mxu0 0
      %3701 = vmatpush1.bf16.msra.mxu0 0
      %3702 = vmatprep.subr.bf16.mxu0 0
      %3703 = vmatpush1.bf16.msra.mxu0 0
      %3704 = vmatprep.mubr.bf16.mxu0 0
      %3705 = vmatmul.mubr.bf16.gmra.mrb[0].mxu0 %v3658
      %v3706 = vpop.f32.mrb[0].mxu0
      %v3707 = vadd.f32 0.0, %v3706
      %v3708 = vpop.f32.mrb[0].mxu0
      %v3709 = vpop.f32.mrb[0].mxu0
      %v3710 = vadd.f32 0.0, %v3709
      %v3711 = vpop.f32.mrb[0].mxu0
      %3712 = vmatprep.mubr.bf16.mxu0 0
      %3713 = vmatmul.mubr.bf16.gmra.mrb[0].mxu0 %v3661
      %v3714 = vpop.f32.mrb[0].mxu0
      %v3715 = vadd.f32 0.0, %v3714
      %v3716 = vpop.f32.mrb[0].mxu0
      %v3717 = vpop.f32.mrb[0].mxu0
      %v3718 = vadd.f32 0.0, %v3717
      %v3719 = vpop.f32.mrb[0].mxu0
      %3720 = vmatprep.mubr.bf16.mxu0 0
      %3721 = vmatmul.mubr.bf16.gmra.mrb[0].mxu0 %v3664
      %v3722 = vpop.f32.mrb[0].mxu0
      %v3723 = vadd.f32 0.0, %v3722
      %v3724 = vpop.f32.mrb[0].mxu0
      %v3725 = vpop.f32.mrb[0].mxu0
      %v3726 = vadd.f32 0.0, %v3725
      %v3727 = vpop.f32.mrb[0].mxu0
      %3728 = vmatprep.mubr.bf16.mxu0 0
      %3729 = vmatmul.mubr.bf16.gmra.mrb[0].mxu0 %v3667
      %v3730 = vpop.f32.mrb[0].mxu0
      %v3731 = vadd.f32 0.0, %v3730
      %v3732 = vpop.f32.mrb[0].mxu0
      %v3733 = vpop.f32.mrb[0].mxu0
      %v3734 = vadd.f32 0.0, %v3733
      %v3735 = vpop.f32.mrb[0].mxu0
      %3736 = vmatprep.mubr.bf16.mxu0 0
      %3737 = vmatmul.mubr.bf16.gmra.mrb[0].mxu0 %v3670
      %v3738 = vpop.f32.mrb[0].mxu0
      %v3739 = vadd.f32 0.0, %v3738
      %v3740 = vpop.f32.mrb[0].mxu0
      %v3741 = vpop.f32.mrb[0].mxu0
      %v3742 = vpop.f32.mrb[0].mxu0
      %3743 = vdwg.mxu0
      %v3744 = vadd.f32 %v3626, %v3707
      %v3745 = vadd.f32 %v3627, %v3710
      %v3746 = vadd.f32 %v3628, %v3715
      %v3747 = vadd.f32 %v3629, %v3718
      %v3748 = vadd.f32 %v3630, %v3723
      %v3749 = vadd.f32 %v3631, %v3726
      %v3750 = vadd.f32 %v3632, %v3731
      %v3751 = vadd.f32 %v3633, %v3734
      %v3752 = vadd.f32 %v3634, %v3739
      %v3753 = vpack.c.bf16 %v2211, %v2210
      %v3754 = vpack.c.bf16 %v2213, %v2212
      %v3755 = vpack.c.bf16 %v2215, %v2214
      %v3756 = vpack.c.bf16 %v2217, %v2216
      %v3757 = vpack.c.bf16 %v2218, %v2218
      %s3758 = scalar_lea.vmem %s6, 208
      %v3759 = vld [vmem:[%s3758] sm:$0xf]
      %v3760 = vld [vmem:[%s3758 + $0x4] sm:$0xf]
      %v3761 = vld [vmem:[%s3758 + $0x8] sm:$0xf]
      %v3762 = vld [vmem:[%s3758 + $0xc] sm:$0xf]
      %v3767 = vunpack.c.l.b16 %v3759
      %v3768 = vunpack.c.l.b16 %v3760
      %v3769 = vunpack.c.l.b16 %v3761
      %v3770 = vunpack.c.l.b16 %v3762
      %v3771 = vpack.c.b16 %v3768, %v3767
      %v3772 = vpack.c.b16 %v3770, %v3769
      %v3776 = vsel %vm2268, %v3753, 0
      %v3779 = vsel %vm2268, %v3754, 0
      %v3782 = vsel %vm2268, %v3755, 0
      %v3785 = vsel %vm2268, %v3756, 0
      %v3788 = vsel %vm2268, %v3757, 0
      %3790 = vmatprep.subr.bf16.mxu0 0
      %3791 = vmatpush1.bf16.msra.mxu0 %v3771
      %3792 = vmatprep.subr.bf16.mxu0 0
      %3793 = vmatpush1.bf16.msra.mxu0 %v3772
      %3794 = vmatprep.subr.bf16.mxu0 0
      %3795 = vmatpush1.bf16.msra.mxu0 0
      %3796 = vmatprep.subr.bf16.mxu0 0
      %3797 = vmatpush1.bf16.msra.mxu0 0
      %3798 = vmatprep.subr.bf16.mxu0 0
      %3799 = vmatpush1.bf16.msra.mxu0 0
      %3800 = vmatprep.subr.bf16.mxu0 0
      %3801 = vmatpush1.bf16.msra.mxu0 0
      %3802 = vmatprep.subr.bf16.mxu0 0
      %3803 = vmatpush1.bf16.msra.mxu0 0
      %3804 = vmatprep.subr.bf16.mxu0 0
      %3805 = vmatpush1.bf16.msra.mxu0 0
      %3806 = vmatprep.subr.bf16.mxu0 0
      %3807 = vmatpush1.bf16.msra.mxu0 0
      %3808 = vmatprep.subr.bf16.mxu0 0
      %3809 = vmatpush1.bf16.msra.mxu0 0
      %3810 = vmatprep.subr.bf16.mxu0 0
      %3811 = vmatpush1.bf16.msra.mxu0 0
      %3812 = vmatprep.subr.bf16.mxu0 0
      %3813 = vmatpush1.bf16.msra.mxu0 0
      %3814 = vmatprep.subr.bf16.mxu0 0
      %3815 = vmatpush1.bf16.msra.mxu0 0
      %3816 = vmatprep.subr.bf16.mxu0 0
      %3817 = vmatpush1.bf16.msra.mxu0 0
      %3818 = vmatprep.subr.bf16.mxu0 0
      %3819 = vmatpush1.bf16.msra.mxu0 0
      %3820 = vmatprep.subr.bf16.mxu0 0
      %3821 = vmatpush1.bf16.msra.mxu0 0
      %3822 = vmatprep.mubr.bf16.mxu0 0
      %3823 = vmatmul.mubr.bf16.gmra.mrb[0].mxu0 %v3776
      %v3824 = vpop.f32.mrb[0].mxu0
      %v3825 = vadd.f32 0.0, %v3824
      %v3826 = vpop.f32.mrb[0].mxu0
      %v3827 = vpop.f32.mrb[0].mxu0
      %v3828 = vadd.f32 0.0, %v3827
      %v3829 = vpop.f32.mrb[0].mxu0
      %3830 = vmatprep.mubr.bf16.mxu0 0
      %3831 = vmatmul.mubr.bf16.gmra.mrb[0].mxu0 %v3779
      %v3832 = vpop.f32.mrb[0].mxu0
      %v3833 = vadd.f32 0.0, %v3832
      %v3834 = vpop.f32.mrb[0].mxu0
      %v3835 = vpop.f32.mrb[0].mxu0
      %v3836 = vadd.f32 0.0, %v3835
      %v3837 = vpop.f32.mrb[0].mxu0
      %3838 = vmatprep.mubr.bf16.mxu0 0
      %3839 = vmatmul.mubr.bf16.gmra.mrb[0].mxu0 %v3782
      %v3840 = vpop.f32.mrb[0].mxu0
      %v3841 = vadd.f32 0.0, %v3840
      %v3842 = vpop.f32.mrb[0].mxu0
      %v3843 = vpop.f32.mrb[0].mxu0
      %v3844 = vadd.f32 0.0, %v3843
      %v3845 = vpop.f32.mrb[0].mxu0
      %3846 = vmatprep.mubr.bf16.mxu0 0
      %3847 = vmatmul.mubr.bf16.gmra.mrb[0].mxu0 %v3785
      %v3848 = vpop.f32.mrb[0].mxu0
      %v3849 = vadd.f32 0.0, %v3848
      %v3850 = vpop.f32.mrb[0].mxu0
      %v3851 = vpop.f32.mrb[0].mxu0
      %v3852 = vadd.f32 0.0, %v3851
      %v3853 = vpop.f32.mrb[0].mxu0
      %3854 = vmatprep.mubr.bf16.mxu0 0
      %3855 = vmatmul.mubr.bf16.gmra.mrb[0].mxu0 %v3788
      %v3856 = vpop.f32.mrb[0].mxu0
      %v3857 = vadd.f32 0.0, %v3856
      %v3858 = vpop.f32.mrb[0].mxu0
      %v3859 = vpop.f32.mrb[0].mxu0
      %v3860 = vpop.f32.mrb[0].mxu0
      %3861 = vdwg.mxu0
      %v3862 = vadd.f32 %v3744, %v3825
      %v3863 = vadd.f32 %v3745, %v3828
      %v3864 = vadd.f32 %v3746, %v3833
      %v3865 = vadd.f32 %v3747, %v3836
      %v3866 = vadd.f32 %v3748, %v3841
      %v3867 = vadd.f32 %v3749, %v3844
      %v3868 = vadd.f32 %v3750, %v3849
      %v3869 = vadd.f32 %v3751, %v3852
      %v3870 = vadd.f32 %v3752, %v3857
      %v3871 = vpack.c.bf16 %v2220, %v2219
      %v3872 = vpack.c.bf16 %v2222, %v2221
      %v3873 = vpack.c.bf16 %v2224, %v2223
      %v3874 = vpack.c.bf16 %v2226, %v2225
      %v3875 = vpack.c.bf16 %v2227, %v2227
      %s3876 = scalar_lea.vmem %s6, 224
      %v3877 = vld [vmem:[%s3876] sm:$0xf]
      %v3878 = vld [vmem:[%s3876 + $0x4] sm:$0xf]
      %v3879 = vld [vmem:[%s3876 + $0x8] sm:$0xf]
      %v3880 = vld [vmem:[%s3876 + $0xc] sm:$0xf]
      %v3885 = vunpack.c.l.b16 %v3877
      %v3886 = vunpack.c.l.b16 %v3878
      %v3887 = vunpack.c.l.b16 %v3879
      %v3888 = vunpack.c.l.b16 %v3880
      %v3889 = vpack.c.b16 %v3886, %v3885
      %v3890 = vpack.c.b16 %v3888, %v3887
      %v3894 = vsel %vm2268, %v3871, 0
      %v3897 = vsel %vm2268, %v3872, 0
      %v3900 = vsel %vm2268, %v3873, 0
      %v3903 = vsel %vm2268, %v3874, 0
      %v3906 = vsel %vm2268, %v3875, 0
      %3908 = vmatprep.subr.bf16.mxu0 0
      %3909 = vmatpush1.bf16.msra.mxu0 %v3889
      %3910 = vmatprep.subr.bf16.mxu0 0
      %3911 = vmatpush1.bf16.msra.mxu0 %v3890
      %3912 = vmatprep.subr.bf16.mxu0 0
      %3913 = vmatpush1.bf16.msra.mxu0 0
      %3914 = vmatprep.subr.bf16.mxu0 0
      %3915 = vmatpush1.bf16.msra.mxu0 0
      %3916 = vmatprep.subr.bf16.mxu0 0
      %3917 = vmatpush1.bf16.msra.mxu0 0
      %3918 = vmatprep.subr.bf16.mxu0 0
      %3919 = vmatpush1.bf16.msra.mxu0 0
      %3920 = vmatprep.subr.bf16.mxu0 0
      %3921 = vmatpush1.bf16.msra.mxu0 0
      %3922 = vmatprep.subr.bf16.mxu0 0
      %3923 = vmatpush1.bf16.msra.mxu0 0
      %3924 = vmatprep.subr.bf16.mxu0 0
      %3925 = vmatpush1.bf16.msra.mxu0 0
      %3926 = vmatprep.subr.bf16.mxu0 0
      %3927 = vmatpush1.bf16.msra.mxu0 0
      %3928 = vmatprep.subr.bf16.mxu0 0
      %3929 = vmatpush1.bf16.msra.mxu0 0
      %3930 = vmatprep.subr.bf16.mxu0 0
      %3931 = vmatpush1.bf16.msra.mxu0 0
      %3932 = vmatprep.subr.bf16.mxu0 0
      %3933 = vmatpush1.bf16.msra.mxu0 0
      %3934 = vmatprep.subr.bf16.mxu0 0
      %3935 = vmatpush1.bf16.msra.mxu0 0
      %3936 = vmatprep.subr.bf16.mxu0 0
      %3937 = vmatpush1.bf16.msra.mxu0 0
      %3938 = vmatprep.subr.bf16.mxu0 0
      %3939 = vmatpush1.bf16.msra.mxu0 0
      %3940 = vmatprep.mubr.bf16.mxu0 0
      %3941 = vmatmul.mubr.bf16.gmra.mrb[0].mxu0 %v3894
      %v3942 = vpop.f32.mrb[0].mxu0
      %v3943 = vadd.f32 0.0, %v3942
      %v3944 = vpop.f32.mrb[0].mxu0
      %v3945 = vpop.f32.mrb[0].mxu0
      %v3946 = vadd.f32 0.0, %v3945
      %v3947 = vpop.f32.mrb[0].mxu0
      %3948 = vmatprep.mubr.bf16.mxu0 0
      %3949 = vmatmul.mubr.bf16.gmra.mrb[0].mxu0 %v3897
      %v3950 = vpop.f32.mrb[0].mxu0
      %v3951 = vadd.f32 0.0, %v3950
      %v3952 = vpop.f32.mrb[0].mxu0
      %v3953 = vpop.f32.mrb[0].mxu0
      %v3954 = vadd.f32 0.0, %v3953
      %v3955 = vpop.f32.mrb[0].mxu0
      %3956 = vmatprep.mubr.bf16.mxu0 0
      %3957 = vmatmul.mubr.bf16.gmra.mrb[0].mxu0 %v3900
      %v3958 = vpop.f32.mrb[0].mxu0
      %v3959 = vadd.f32 0.0, %v3958
      %v3960 = vpop.f32.mrb[0].mxu0
      %v3961 = vpop.f32.mrb[0].mxu0
      %v3962 = vadd.f32 0.0, %v3961
      %v3963 = vpop.f32.mrb[0].mxu0
      %3964 = vmatprep.mubr.bf16.mxu0 0
      %3965 = vmatmul.mubr.bf16.gmra.mrb[0].mxu0 %v3903
      %v3966 = vpop.f32.mrb[0].mxu0
      %v3967 = vadd.f32 0.0, %v3966
      %v3968 = vpop.f32.mrb[0].mxu0
      %v3969 = vpop.f32.mrb[0].mxu0
      %v3970 = vadd.f32 0.0, %v3969
      %v3971 = vpop.f32.mrb[0].mxu0
      %3972 = vmatprep.mubr.bf16.mxu0 0
      %3973 = vmatmul.mubr.bf16.gmra.mrb[0].mxu0 %v3906
      %v3974 = vpop.f32.mrb[0].mxu0
      %v3975 = vadd.f32 0.0, %v3974
      %v3976 = vpop.f32.mrb[0].mxu0
      %v3977 = vpop.f32.mrb[0].mxu0
      %v3978 = vpop.f32.mrb[0].mxu0
      %3979 = vdwg.mxu0
      %v3980 = vadd.f32 %v3862, %v3943
      %v3981 = vadd.f32 %v3863, %v3946
      %v3982 = vadd.f32 %v3864, %v3951
      %v3983 = vadd.f32 %v3865, %v3954
      %v3984 = vadd.f32 %v3866, %v3959
      %v3985 = vadd.f32 %v3867, %v3962
      %v3986 = vadd.f32 %v3868, %v3967
      %v3987 = vadd.f32 %v3869, %v3970
      %v3988 = vadd.f32 %v3870, %v3975
      %v3989 = vpack.c.bf16 %v2229, %v2228
      %v3990 = vpack.c.bf16 %v2231, %v2230
      %v3991 = vpack.c.bf16 %v2233, %v2232
      %v3992 = vpack.c.bf16 %v2235, %v2234
      %v3993 = vpack.c.bf16 %v2236, %v2236
      %s3994 = scalar_lea.vmem %s6, 240
      %v3995 = vld [vmem:[%s3994] sm:$0xf]
      %v3996 = vld [vmem:[%s3994 + $0x4] sm:$0xf]
      %v3997 = vld [vmem:[%s3994 + $0x8] sm:$0xf]
      %v3998 = vld [vmem:[%s3994 + $0xc] sm:$0xf]
      %v4003 = vunpack.c.l.b16 %v3995
      %v4004 = vunpack.c.l.b16 %v3996
      %v4005 = vunpack.c.l.b16 %v3997
      %v4006 = vunpack.c.l.b16 %v3998
      %v4007 = vpack.c.b16 %v4004, %v4003
      %v4008 = vpack.c.b16 %v4006, %v4005
      %v4012 = vsel %vm2268, %v3989, 0
      %v4015 = vsel %vm2268, %v3990, 0
      %v4018 = vsel %vm2268, %v3991, 0
      %v4021 = vsel %vm2268, %v3992, 0
      %v4024 = vsel %vm2268, %v3993, 0
      %4026 = vmatprep.subr.bf16.mxu0 0
      %4027 = vmatpush1.bf16.msra.mxu0 %v4007
      %4028 = vmatprep.subr.bf16.mxu0 0
      %4029 = vmatpush1.bf16.msra.mxu0 %v4008
      %4030 = vmatprep.subr.bf16.mxu0 0
      %4031 = vmatpush1.bf16.msra.mxu0 0
      %4032 = vmatprep.subr.bf16.mxu0 0
      %4033 = vmatpush1.bf16.msra.mxu0 0
      %4034 = vmatprep.subr.bf16.mxu0 0
      %4035 = vmatpush1.bf16.msra.mxu0 0
      %4036 = vmatprep.subr.bf16.mxu0 0
      %4037 = vmatpush1.bf16.msra.mxu0 0
      %4038 = vmatprep.subr.bf16.mxu0 0
      %4039 = vmatpush1.bf16.msra.mxu0 0
      %4040 = vmatprep.subr.bf16.mxu0 0
      %4041 = vmatpush1.bf16.msra.mxu0 0
      %4042 = vmatprep.subr.bf16.mxu0 0
      %4043 = vmatpush1.bf16.msra.mxu0 0
      %4044 = vmatprep.subr.bf16.mxu0 0
      %4045 = vmatpush1.bf16.msra.mxu0 0
      %4046 = vmatprep.subr.bf16.mxu0 0
      %4047 = vmatpush1.bf16.msra.mxu0 0
      %4048 = vmatprep.subr.bf16.mxu0 0
      %4049 = vmatpush1.bf16.msra.mxu0 0
      %4050 = vmatprep.subr.bf16.mxu0 0
      %4051 = vmatpush1.bf16.msra.mxu0 0
      %4052 = vmatprep.subr.bf16.mxu0 0
      %4053 = vmatpush1.bf16.msra.mxu0 0
      %4054 = vmatprep.subr.bf16.mxu0 0
      %4055 = vmatpush1.bf16.msra.mxu0 0
      %4056 = vmatprep.subr.bf16.mxu0 0
      %4057 = vmatpush1.bf16.msra.mxu0 0
      %4058 = vmatprep.mubr.bf16.mxu0 0
      %4059 = vmatmul.mubr.bf16.gmra.mrb[0].mxu0 %v4012
      %v4060 = vpop.f32.mrb[0].mxu0
      %v4061 = vadd.f32 0.0, %v4060
      %v4062 = vpop.f32.mrb[0].mxu0
      %v4063 = vpop.f32.mrb[0].mxu0
      %v4064 = vadd.f32 0.0, %v4063
      %v4065 = vpop.f32.mrb[0].mxu0
      %4066 = vmatprep.mubr.bf16.mxu0 0
      %4067 = vmatmul.mubr.bf16.gmra.mrb[0].mxu0 %v4015
      %v4068 = vpop.f32.mrb[0].mxu0
      %v4069 = vadd.f32 0.0, %v4068
      %v4070 = vpop.f32.mrb[0].mxu0
      %v4071 = vpop.f32.mrb[0].mxu0
      %v4072 = vadd.f32 0.0, %v4071
      %v4073 = vpop.f32.mrb[0].mxu0
      %4074 = vmatprep.mubr.bf16.mxu0 0
      %4075 = vmatmul.mubr.bf16.gmra.mrb[0].mxu0 %v4018
      %v4076 = vpop.f32.mrb[0].mxu0
      %v4077 = vadd.f32 0.0, %v4076
      %v4078 = vpop.f32.mrb[0].mxu0
      %v4079 = vpop.f32.mrb[0].mxu0
      %v4080 = vadd.f32 0.0, %v4079
      %v4081 = vpop.f32.mrb[0].mxu0
      %4082 = vmatprep.mubr.bf16.mxu0 0
      %4083 = vmatmul.mubr.bf16.gmra.mrb[0].mxu0 %v4021
      %v4084 = vpop.f32.mrb[0].mxu0
      %v4085 = vadd.f32 0.0, %v4084
      %v4086 = vpop.f32.mrb[0].mxu0
      %v4087 = vpop.f32.mrb[0].mxu0
      %v4088 = vadd.f32 0.0, %v4087
      %v4089 = vpop.f32.mrb[0].mxu0
      %4090 = vmatprep.mubr.bf16.mxu0 0
      %4091 = vmatmul.mubr.bf16.gmra.mrb[0].mxu0 %v4024
      %v4092 = vpop.f32.mrb[0].mxu0
      %v4093 = vadd.f32 0.0, %v4092
      %v4094 = vpop.f32.mrb[0].mxu0
      %v4095 = vpop.f32.mrb[0].mxu0
      %v4096 = vpop.f32.mrb[0].mxu0
      %4097 = vdwg.mxu0
      %v4098 = vadd.f32 %v3980, %v4061
      %v4099 = vadd.f32 %v3981, %v4064
      %v4100 = vadd.f32 %v3982, %v4069
      %v4101 = vadd.f32 %v3983, %v4072
      %v4102 = vadd.f32 %v3984, %v4077
      %v4103 = vadd.f32 %v3985, %v4080
      %v4104 = vadd.f32 %v3986, %v4085
      %v4105 = vadd.f32 %v3987, %v4088
      %v4106 = vadd.f32 %v3988, %v4093
      %v4107 = vld [vmem:[%s7] sm:$0x1]
      %v4109 = vlaneseq
      %v4110 = vshrl.u32 %v4109, 7
      %v4111 = vsub.s32 0, %v4110
      %v4112 = vrot.slane %v4107, %v4111
      %v4114 = vadd.f32 %v4098, %v4112
      %v4115 = vadd.f32 %v4099, %v4112
      %v4116 = vadd.f32 %v4100, %v4112
      %v4117 = vadd.f32 %v4101, %v4112
      %v4118 = vadd.f32 %v4102, %v4112
      %v4119 = vadd.f32 %v4103, %v4112
      %v4120 = vadd.f32 %v4104, %v4112
      %v4121 = vadd.f32 %v4105, %v4112
      %v4122 = vadd.f32 %v4106, %v4112
      %v4123 = vmax.f32 %v4114, 0.0
      %v4124 = vmax.f32 %v4115, 0.0
      %v4125 = vmax.f32 %v4116, 0.0
      %v4126 = vmax.f32 %v4117, 0.0
      %v4127 = vmax.f32 %v4118, 0.0
      %v4128 = vmax.f32 %v4119, 0.0
      %v4129 = vmax.f32 %v4120, 0.0
      %v4130 = vmax.f32 %v4121, 0.0
      %v4131 = vmax.f32 %v4122, 0.0
      %v4132 = vpack.c.bf16 %v4123, %v4123
      %v4133 = vld [vmem:[%s8] sm:$0xf]
      %v4134 = vld [vmem:[%s8 + $0x4] sm:$0xf]
      %v4135 = vld [vmem:[%s8 + $0x8] sm:$0xf]
      %v4136 = vld [vmem:[%s8 + $0xc] sm:$0xf]
      %v4137 = vld [vmem:[%s8 + $0x10] sm:$0xf]
      %v4138 = vld [vmem:[%s8 + $0x14] sm:$0xf]
      %v4139 = vld [vmem:[%s8 + $0x18] sm:$0xf]
      %v4140 = vld [vmem:[%s8 + $0x1c] sm:$0xf]
      %v4141 = vpack.c.bf16 %v4124, %v4124
      %s4142 = scalar_lea.vmem %s8, 32
      %v4143 = vld [vmem:[%s4142] sm:$0xf]
      %v4144 = vld [vmem:[%s4142 + $0x4] sm:$0xf]
      %v4145 = vld [vmem:[%s4142 + $0x8] sm:$0xf]
      %v4146 = vld [vmem:[%s4142 + $0xc] sm:$0xf]
      %v4147 = vld [vmem:[%s4142 + $0x10] sm:$0xf]
      %v4148 = vld [vmem:[%s4142 + $0x14] sm:$0xf]
      %v4149 = vld [vmem:[%s4142 + $0x18] sm:$0xf]
      %v4150 = vld [vmem:[%s4142 + $0x1c] sm:$0xf]
      %v4159 = vunpack.c.l.b16 %v4143
      %v4160 = vunpack.c.l.b16 %v4144
      %v4161 = vunpack.c.l.b16 %v4145
      %v4162 = vunpack.c.l.b16 %v4146
      %v4163 = vunpack.c.l.b16 %v4147
      %v4164 = vunpack.c.l.b16 %v4148
      %v4165 = vunpack.c.l.b16 %v4149
      %v4166 = vunpack.c.l.b16 %v4150
      %v4167 = vpack.c.b16 %v4160, %v4159
      %v4168 = vpack.c.b16 %v4162, %v4161
      %v4169 = vpack.c.b16 %v4164, %v4163
      %v4170 = vpack.c.b16 %v4166, %v4165
      %v4176 = vsel %vm1267, %v4141, 0
      %4178 = vmatprep.subr.bf16.mxu0 0
      %4179 = vmatpush1.bf16.msra.mxu0 %v4167
      %4180 = vmatprep.subr.bf16.mxu0 0
      %4181 = vmatpush1.bf16.msra.mxu0 %v4168
      %4182 = vmatprep.subr.bf16.mxu0 0
      %4183 = vmatpush1.bf16.msra.mxu0 %v4169
      %4184 = vmatprep.subr.bf16.mxu0 0
      %4185 = vmatpush1.bf16.msra.mxu0 %v4170
      %4186 = vmatprep.subr.bf16.mxu0 0
      %4187 = vmatpush1.bf16.msra.mxu0 0
      %4188 = vmatprep.subr.bf16.mxu0 0
      %4189 = vmatpush1.bf16.msra.mxu0 0
      %4190 = vmatprep.subr.bf16.mxu0 0
      %4191 = vmatpush1.bf16.msra.mxu0 0
      %4192 = vmatprep.subr.bf16.mxu0 0
      %4193 = vmatpush1.bf16.msra.mxu0 0
      %4194 = vmatprep.subr.bf16.mxu0 0
      %4195 = vmatpush1.bf16.msra.mxu0 0
      %4196 = vmatprep.subr.bf16.mxu0 0
      %4197 = vmatpush1.bf16.msra.mxu0 0
      %4198 = vmatprep.subr.bf16.mxu0 0
      %4199 = vmatpush1.bf16.msra.mxu0 0
      %4200 = vmatprep.subr.bf16.mxu0 0
      %4201 = vmatpush1.bf16.msra.mxu0 0
      %4202 = vmatprep.subr.bf16.mxu0 0
      %4203 = vmatpush1.bf16.msra.mxu0 0
      %4204 = vmatprep.subr.bf16.mxu0 0
      %4205 = vmatpush1.bf16.msra.mxu0 0
      %4206 = vmatprep.subr.bf16.mxu0 0
      %4207 = vmatpush1.bf16.msra.mxu0 0
      %4208 = vmatprep.subr.bf16.mxu0 0
      %4209 = vmatpush1.bf16.msra.mxu0 0
      %4210 = vmatprep.mubr.bf16.mxu0 0
      %4211 = vmatmul.mubr.bf16.gmra.mrb[0].mxu0 %v4176
      %v4212 = vpop.f32.mrb[0].mxu0
      %v4213 = vadd.f32 0.0, %v4212
      %v4214 = vpop.f32.mrb[0].mxu0
      %v4215 = vpop.f32.mrb[0].mxu0
      %v4216 = vpop.f32.mrb[0].mxu0
      %4217 = vdwg.mxu0
      %v4226 = vunpack.c.l.b16 %v4133
      %v4227 = vunpack.c.l.b16 %v4134
      %v4228 = vunpack.c.l.b16 %v4135
      %v4229 = vunpack.c.l.b16 %v4136
      %v4230 = vunpack.c.l.b16 %v4137
      %v4231 = vunpack.c.l.b16 %v4138
      %v4232 = vunpack.c.l.b16 %v4139
      %v4233 = vunpack.c.l.b16 %v4140
      %v4234 = vpack.c.b16 %v4227, %v4226
      %v4235 = vpack.c.b16 %v4229, %v4228
      %v4236 = vpack.c.b16 %v4231, %v4230
      %v4237 = vpack.c.b16 %v4233, %v4232
      %v4243 = vsel %vm1267, %v4132, 0
      %4245 = vmatprep.subr.bf16.mxu0 0
      %4246 = vmatpush1.bf16.msra.mxu0 %v4234
      %4247 = vmatprep.subr.bf16.mxu0 0
      %4248 = vmatpush1.bf16.msra.mxu0 %v4235
      %4249 = vmatprep.subr.bf16.mxu0 0
      %4250 = vmatpush1.bf16.msra.mxu0 %v4236
      %4251 = vmatprep.subr.bf16.mxu0 0
      %4252 = vmatpush1.bf16.msra.mxu0 %v4237
      %4253 = vmatprep.subr.bf16.mxu0 0
      %4254 = vmatpush1.bf16.msra.mxu0 0
      %4255 = vmatprep.subr.bf16.mxu0 0
      %4256 = vmatpush1.bf16.msra.mxu0 0
      %4257 = vmatprep.subr.bf16.mxu0 0
      %4258 = vmatpush1.bf16.msra.mxu0 0
      %4259 = vmatprep.subr.bf16.mxu0 0
      %4260 = vmatpush1.bf16.msra.mxu0 0
      %4261 = vmatprep.subr.bf16.mxu0 0
      %4262 = vmatpush1.bf16.msra.mxu0 0
      %4263 = vmatprep.subr.bf16.mxu0 0
      %4264 = vmatpush1.bf16.msra.mxu0 0
      %4265 = vmatprep.subr.bf16.mxu0 0
      %4266 = vmatpush1.bf16.msra.mxu0 0
      %4267 = vmatprep.subr.bf16.mxu0 0
      %4268 = vmatpush1.bf16.msra.mxu0 0
      %4269 = vmatprep.subr.bf16.mxu0 0
      %4270 = vmatpush1.bf16.msra.mxu0 0
      %4271 = vmatprep.subr.bf16.mxu0 0
      %4272 = vmatpush1.bf16.msra.mxu0 0
      %4273 = vmatprep.subr.bf16.mxu0 0
      %4274 = vmatpush1.bf16.msra.mxu0 0
      %4275 = vmatprep.subr.bf16.mxu0 0
      %4276 = vmatpush1.bf16.msra.mxu0 0
      %4277 = vmatprep.mubr.bf16.mxu0 0
      %4278 = vmatmul.mubr.bf16.gmra.mrb[0].mxu0 %v4243
      %v4279 = vpop.f32.mrb[0].mxu0
      %v4280 = vadd.f32 %v4213, %v4279
      %v4281 = vpop.f32.mrb[0].mxu0
      %v4282 = vpop.f32.mrb[0].mxu0
      %v4283 = vpop.f32.mrb[0].mxu0
      %4284 = vdwg.mxu0
      %v4285 = vpack.c.bf16 %v4125, %v4125
      %s4286 = scalar_lea.vmem %s8, 64
      %v4287 = vld [vmem:[%s4286] sm:$0xf]
      %v4288 = vld [vmem:[%s4286 + $0x4] sm:$0xf]
      %v4289 = vld [vmem:[%s4286 + $0x8] sm:$0xf]
      %v4290 = vld [vmem:[%s4286 + $0xc] sm:$0xf]
      %v4291 = vld [vmem:[%s4286 + $0x10] sm:$0xf]
      %v4292 = vld [vmem:[%s4286 + $0x14] sm:$0xf]
      %v4293 = vld [vmem:[%s4286 + $0x18] sm:$0xf]
      %v4294 = vld [vmem:[%s4286 + $0x1c] sm:$0xf]
      %v4303 = vunpack.c.l.b16 %v4287
      %v4304 = vunpack.c.l.b16 %v4288
      %v4305 = vunpack.c.l.b16 %v4289
      %v4306 = vunpack.c.l.b16 %v4290
      %v4307 = vunpack.c.l.b16 %v4291
      %v4308 = vunpack.c.l.b16 %v4292
      %v4309 = vunpack.c.l.b16 %v4293
      %v4310 = vunpack.c.l.b16 %v4294
      %v4311 = vpack.c.b16 %v4304, %v4303
      %v4312 = vpack.c.b16 %v4306, %v4305
      %v4313 = vpack.c.b16 %v4308, %v4307
      %v4314 = vpack.c.b16 %v4310, %v4309
      %v4320 = vsel %vm1267, %v4285, 0
      %4322 = vmatprep.subr.bf16.mxu0 0
      %4323 = vmatpush1.bf16.msra.mxu0 %v4311
      %4324 = vmatprep.subr.bf16.mxu0 0
      %4325 = vmatpush1.bf16.msra.mxu0 %v4312
      %4326 = vmatprep.subr.bf16.mxu0 0
      %4327 = vmatpush1.bf16.msra.mxu0 %v4313
      %4328 = vmatprep.subr.bf16.mxu0 0
      %4329 = vmatpush1.bf16.msra.mxu0 %v4314
      %4330 = vmatprep.subr.bf16.mxu0 0
      %4331 = vmatpush1.bf16.msra.mxu0 0
      %4332 = vmatprep.subr.bf16.mxu0 0
      %4333 = vmatpush1.bf16.msra.mxu0 0
      %4334 = vmatprep.subr.bf16.mxu0 0
      %4335 = vmatpush1.bf16.msra.mxu0 0
      %4336 = vmatprep.subr.bf16.mxu0 0
      %4337 = vmatpush1.bf16.msra.mxu0 0
      %4338 = vmatprep.subr.bf16.mxu0 0
      %4339 = vmatpush1.bf16.msra.mxu0 0
      %4340 = vmatprep.subr.bf16.mxu0 0
      %4341 = vmatpush1.bf16.msra.mxu0 0
      %4342 = vmatprep.subr.bf16.mxu0 0
      %4343 = vmatpush1.bf16.msra.mxu0 0
      %4344 = vmatprep.subr.bf16.mxu0 0
      %4345 = vmatpush1.bf16.msra.mxu0 0
      %4346 = vmatprep.subr.bf16.mxu0 0
      %4347 = vmatpush1.bf16.msra.mxu0 0
      %4348 = vmatprep.subr.bf16.mxu0 0
      %4349 = vmatpush1.bf16.msra.mxu0 0
      %4350 = vmatprep.subr.bf16.mxu0 0
      %4351 = vmatpush1.bf16.msra.mxu0 0
      %4352 = vmatprep.subr.bf16.mxu0 0
      %4353 = vmatpush1.bf16.msra.mxu0 0
      %4354 = vmatprep.mubr.bf16.mxu0 0
      %4355 = vmatmul.mubr.bf16.gmra.mrb[0].mxu0 %v4320
      %v4356 = vpop.f32.mrb[0].mxu0
      %v4357 = vadd.f32 0.0, %v4356
      %v4358 = vpop.f32.mrb[0].mxu0
      %v4359 = vpop.f32.mrb[0].mxu0
      %v4360 = vpop.f32.mrb[0].mxu0
      %4361 = vdwg.mxu0
      %v4362 = vadd.f32 %v4280, %v4357
      %v4363 = vpack.c.bf16 %v4126, %v4126
      %s4364 = scalar_lea.vmem %s8, 96
      %v4365 = vld [vmem:[%s4364] sm:$0xf]
      %v4366 = vld [vmem:[%s4364 + $0x4] sm:$0xf]
      %v4367 = vld [vmem:[%s4364 + $0x8] sm:$0xf]
      %v4368 = vld [vmem:[%s4364 + $0xc] sm:$0xf]
      %v4369 = vld [vmem:[%s4364 + $0x10] sm:$0xf]
      %v4370 = vld [vmem:[%s4364 + $0x14] sm:$0xf]
      %v4371 = vld [vmem:[%s4364 + $0x18] sm:$0xf]
      %v4372 = vld [vmem:[%s4364 + $0x1c] sm:$0xf]
      %v4381 = vunpack.c.l.b16 %v4365
      %v4382 = vunpack.c.l.b16 %v4366
      %v4383 = vunpack.c.l.b16 %v4367
      %v4384 = vunpack.c.l.b16 %v4368
      %v4385 = vunpack.c.l.b16 %v4369
      %v4386 = vunpack.c.l.b16 %v4370
      %v4387 = vunpack.c.l.b16 %v4371
      %v4388 = vunpack.c.l.b16 %v4372
      %v4389 = vpack.c.b16 %v4382, %v4381
      %v4390 = vpack.c.b16 %v4384, %v4383
      %v4391 = vpack.c.b16 %v4386, %v4385
      %v4392 = vpack.c.b16 %v4388, %v4387
      %v4398 = vsel %vm1267, %v4363, 0
      %4400 = vmatprep.subr.bf16.mxu0 0
      %4401 = vmatpush1.bf16.msra.mxu0 %v4389
      %4402 = vmatprep.subr.bf16.mxu0 0
      %4403 = vmatpush1.bf16.msra.mxu0 %v4390
      %4404 = vmatprep.subr.bf16.mxu0 0
      %4405 = vmatpush1.bf16.msra.mxu0 %v4391
      %4406 = vmatprep.subr.bf16.mxu0 0
      %4407 = vmatpush1.bf16.msra.mxu0 %v4392
      %4408 = vmatprep.subr.bf16.mxu0 0
      %4409 = vmatpush1.bf16.msra.mxu0 0
      %4410 = vmatprep.subr.bf16.mxu0 0
      %4411 = vmatpush1.bf16.msra.mxu0 0
      %4412 = vmatprep.subr.bf16.mxu0 0
      %4413 = vmatpush1.bf16.msra.mxu0 0
      %4414 = vmatprep.subr.bf16.mxu0 0
      %4415 = vmatpush1.bf16.msra.mxu0 0
      %4416 = vmatprep.subr.bf16.mxu0 0
      %4417 = vmatpush1.bf16.msra.mxu0 0
      %4418 = vmatprep.subr.bf16.mxu0 0
      %4419 = vmatpush1.bf16.msra.mxu0 0
      %4420 = vmatprep.subr.bf16.mxu0 0
      %4421 = vmatpush1.bf16.msra.mxu0 0
      %4422 = vmatprep.subr.bf16.mxu0 0
      %4423 = vmatpush1.bf16.msra.mxu0 0
      %4424 = vmatprep.subr.bf16.mxu0 0
      %4425 = vmatpush1.bf16.msra.mxu0 0
      %4426 = vmatprep.subr.bf16.mxu0 0
      %4427 = vmatpush1.bf16.msra.mxu0 0
      %4428 = vmatprep.subr.bf16.mxu0 0
      %4429 = vmatpush1.bf16.msra.mxu0 0
      %4430 = vmatprep.subr.bf16.mxu0 0
      %4431 = vmatpush1.bf16.msra.mxu0 0
      %4432 = vmatprep.mubr.bf16.mxu0 0
      %4433 = vmatmul.mubr.bf16.gmra.mrb[0].mxu0 %v4398
      %v4434 = vpop.f32.mrb[0].mxu0
      %v4435 = vadd.f32 0.0, %v4434
      %v4436 = vpop.f32.mrb[0].mxu0
      %v4437 = vpop.f32.mrb[0].mxu0
      %v4438 = vpop.f32.mrb[0].mxu0
      %4439 = vdwg.mxu0
      %v4440 = vadd.f32 %v4362, %v4435
      %v4441 = vpack.c.bf16 %v4127, %v4127
      %s4442 = scalar_lea.vmem %s8, 128
      %v4443 = vld [vmem:[%s4442] sm:$0xf]
      %v4444 = vld [vmem:[%s4442 + $0x4] sm:$0xf]
      %v4445 = vld [vmem:[%s4442 + $0x8] sm:$0xf]
      %v4446 = vld [vmem:[%s4442 + $0xc] sm:$0xf]
      %v4447 = vld [vmem:[%s4442 + $0x10] sm:$0xf]
      %v4448 = vld [vmem:[%s4442 + $0x14] sm:$0xf]
      %v4449 = vld [vmem:[%s4442 + $0x18] sm:$0xf]
      %v4450 = vld [vmem:[%s4442 + $0x1c] sm:$0xf]
      %v4459 = vunpack.c.l.b16 %v4443
      %v4460 = vunpack.c.l.b16 %v4444
      %v4461 = vunpack.c.l.b16 %v4445
      %v4462 = vunpack.c.l.b16 %v4446
      %v4463 = vunpack.c.l.b16 %v4447
      %v4464 = vunpack.c.l.b16 %v4448
      %v4465 = vunpack.c.l.b16 %v4449
      %v4466 = vunpack.c.l.b16 %v4450
      %v4467 = vpack.c.b16 %v4460, %v4459
      %v4468 = vpack.c.b16 %v4462, %v4461
      %v4469 = vpack.c.b16 %v4464, %v4463
      %v4470 = vpack.c.b16 %v4466, %v4465
      %v4476 = vsel %vm1267, %v4441, 0
      %4478 = vmatprep.subr.bf16.mxu0 0
      %4479 = vmatpush1.bf16.msra.mxu0 %v4467
      %4480 = vmatprep.subr.bf16.mxu0 0
      %4481 = vmatpush1.bf16.msra.mxu0 %v4468
      %4482 = vmatprep.subr.bf16.mxu0 0
      %4483 = vmatpush1.bf16.msra.mxu0 %v4469
      %4484 = vmatprep.subr.bf16.mxu0 0
      %4485 = vmatpush1.bf16.msra.mxu0 %v4470
      %4486 = vmatprep.subr.bf16.mxu0 0
      %4487 = vmatpush1.bf16.msra.mxu0 0
      %4488 = vmatprep.subr.bf16.mxu0 0
      %4489 = vmatpush1.bf16.msra.mxu0 0
      %4490 = vmatprep.subr.bf16.mxu0 0
      %4491 = vmatpush1.bf16.msra.mxu0 0
      %4492 = vmatprep.subr.bf16.mxu0 0
      %4493 = vmatpush1.bf16.msra.mxu0 0
      %4494 = vmatprep.subr.bf16.mxu0 0
      %4495 = vmatpush1.bf16.msra.mxu0 0
      %4496 = vmatprep.subr.bf16.mxu0 0
      %4497 = vmatpush1.bf16.msra.mxu0 0
      %4498 = vmatprep.subr.bf16.mxu0 0
      %4499 = vmatpush1.bf16.msra.mxu0 0
      %4500 = vmatprep.subr.bf16.mxu0 0
      %4501 = vmatpush1.bf16.msra.mxu0 0
      %4502 = vmatprep.subr.bf16.mxu0 0
      %4503 = vmatpush1.bf16.msra.mxu0 0
      %4504 = vmatprep.subr.bf16.mxu0 0
      %4505 = vmatpush1.bf16.msra.mxu0 0
      %4506 = vmatprep.subr.bf16.mxu0 0
      %4507 = vmatpush1.bf16.msra.mxu0 0
      %4508 = vmatprep.subr.bf16.mxu0 0
      %4509 = vmatpush1.bf16.msra.mxu0 0
      %4510 = vmatprep.mubr.bf16.mxu0 0
      %4511 = vmatmul.mubr.bf16.gmra.mrb[0].mxu0 %v4476
      %v4512 = vpop.f32.mrb[0].mxu0
      %v4513 = vadd.f32 0.0, %v4512
      %v4514 = vpop.f32.mrb[0].mxu0
      %v4515 = vpop.f32.mrb[0].mxu0
      %v4516 = vpop.f32.mrb[0].mxu0
      %4517 = vdwg.mxu0
      %v4518 = vadd.f32 %v4440, %v4513
      %v4519 = vpack.c.bf16 %v4128, %v4128
      %s4520 = scalar_lea.vmem %s8, 160
      %v4521 = vld [vmem:[%s4520] sm:$0xf]
      %v4522 = vld [vmem:[%s4520 + $0x4] sm:$0xf]
      %v4523 = vld [vmem:[%s4520 + $0x8] sm:$0xf]
      %v4524 = vld [vmem:[%s4520 + $0xc] sm:$0xf]
      %v4525 = vld [vmem:[%s4520 + $0x10] sm:$0xf]
      %v4526 = vld [vmem:[%s4520 + $0x14] sm:$0xf]
      %v4527 = vld [vmem:[%s4520 + $0x18] sm:$0xf]
      %v4528 = vld [vmem:[%s4520 + $0x1c] sm:$0xf]
      %v4537 = vunpack.c.l.b16 %v4521
      %v4538 = vunpack.c.l.b16 %v4522
      %v4539 = vunpack.c.l.b16 %v4523
      %v4540 = vunpack.c.l.b16 %v4524
      %v4541 = vunpack.c.l.b16 %v4525
      %v4542 = vunpack.c.l.b16 %v4526
      %v4543 = vunpack.c.l.b16 %v4527
      %v4544 = vunpack.c.l.b16 %v4528
      %v4545 = vpack.c.b16 %v4538, %v4537
      %v4546 = vpack.c.b16 %v4540, %v4539
      %v4547 = vpack.c.b16 %v4542, %v4541
      %v4548 = vpack.c.b16 %v4544, %v4543
      %v4554 = vsel %vm1267, %v4519, 0
      %4556 = vmatprep.subr.bf16.mxu0 0
      %4557 = vmatpush1.bf16.msra.mxu0 %v4545
      %4558 = vmatprep.subr.bf16.mxu0 0
      %4559 = vmatpush1.bf16.msra.mxu0 %v4546
      %4560 = vmatprep.subr.bf16.mxu0 0
      %4561 = vmatpush1.bf16.msra.mxu0 %v4547
      %4562 = vmatprep.subr.bf16.mxu0 0
      %4563 = vmatpush1.bf16.msra.mxu0 %v4548
      %4564 = vmatprep.subr.bf16.mxu0 0
      %4565 = vmatpush1.bf16.msra.mxu0 0
      %4566 = vmatprep.subr.bf16.mxu0 0
      %4567 = vmatpush1.bf16.msra.mxu0 0
      %4568 = vmatprep.subr.bf16.mxu0 0
      %4569 = vmatpush1.bf16.msra.mxu0 0
      %4570 = vmatprep.subr.bf16.mxu0 0
      %4571 = vmatpush1.bf16.msra.mxu0 0
      %4572 = vmatprep.subr.bf16.mxu0 0
      %4573 = vmatpush1.bf16.msra.mxu0 0
      %4574 = vmatprep.subr.bf16.mxu0 0
      %4575 = vmatpush1.bf16.msra.mxu0 0
      %4576 = vmatprep.subr.bf16.mxu0 0
      %4577 = vmatpush1.bf16.msra.mxu0 0
      %4578 = vmatprep.subr.bf16.mxu0 0
      %4579 = vmatpush1.bf16.msra.mxu0 0
      %4580 = vmatprep.subr.bf16.mxu0 0
      %4581 = vmatpush1.bf16.msra.mxu0 0
      %4582 = vmatprep.subr.bf16.mxu0 0
      %4583 = vmatpush1.bf16.msra.mxu0 0
      %4584 = vmatprep.subr.bf16.mxu0 0
      %4585 = vmatpush1.bf16.msra.mxu0 0
      %4586 = vmatprep.subr.bf16.mxu0 0
      %4587 = vmatpush1.bf16.msra.mxu0 0
      %4588 = vmatprep.mubr.bf16.mxu0 0
      %4589 = vmatmul.mubr.bf16.gmra.mrb[0].mxu0 %v4554
      %v4590 = vpop.f32.mrb[0].mxu0
      %v4591 = vadd.f32 0.0, %v4590
      %v4592 = vpop.f32.mrb[0].mxu0
      %v4593 = vpop.f32.mrb[0].mxu0
      %v4594 = vpop.f32.mrb[0].mxu0
      %4595 = vdwg.mxu0
      %v4596 = vadd.f32 %v4518, %v4591
      %v4597 = vpack.c.bf16 %v4129, %v4129
      %s4598 = scalar_lea.vmem %s8, 192
      %v4599 = vld [vmem:[%s4598] sm:$0xf]
      %v4600 = vld [vmem:[%s4598 + $0x4] sm:$0xf]
      %v4601 = vld [vmem:[%s4598 + $0x8] sm:$0xf]
      %v4602 = vld [vmem:[%s4598 + $0xc] sm:$0xf]
      %v4603 = vld [vmem:[%s4598 + $0x10] sm:$0xf]
      %v4604 = vld [vmem:[%s4598 + $0x14] sm:$0xf]
      %v4605 = vld [vmem:[%s4598 + $0x18] sm:$0xf]
      %v4606 = vld [vmem:[%s4598 + $0x1c] sm:$0xf]
      %v4615 = vunpack.c.l.b16 %v4599
      %v4616 = vunpack.c.l.b16 %v4600
      %v4617 = vunpack.c.l.b16 %v4601
      %v4618 = vunpack.c.l.b16 %v4602
      %v4619 = vunpack.c.l.b16 %v4603
      %v4620 = vunpack.c.l.b16 %v4604
      %v4621 = vunpack.c.l.b16 %v4605
      %v4622 = vunpack.c.l.b16 %v4606
      %v4623 = vpack.c.b16 %v4616, %v4615
      %v4624 = vpack.c.b16 %v4618, %v4617
      %v4625 = vpack.c.b16 %v4620, %v4619
      %v4626 = vpack.c.b16 %v4622, %v4621
      %v4632 = vsel %vm1267, %v4597, 0
      %4634 = vmatprep.subr.bf16.mxu0 0
      %4635 = vmatpush1.bf16.msra.mxu0 %v4623
      %4636 = vmatprep.subr.bf16.mxu0 0
      %4637 = vmatpush1.bf16.msra.mxu0 %v4624
      %4638 = vmatprep.subr.bf16.mxu0 0
      %4639 = vmatpush1.bf16.msra.mxu0 %v4625
      %4640 = vmatprep.subr.bf16.mxu0 0
      %4641 = vmatpush1.bf16.msra.mxu0 %v4626
      %4642 = vmatprep.subr.bf16.mxu0 0
      %4643 = vmatpush1.bf16.msra.mxu0 0
      %4644 = vmatprep.subr.bf16.mxu0 0
      %4645 = vmatpush1.bf16.msra.mxu0 0
      %4646 = vmatprep.subr.bf16.mxu0 0
      %4647 = vmatpush1.bf16.msra.mxu0 0
      %4648 = vmatprep.subr.bf16.mxu0 0
      %4649 = vmatpush1.bf16.msra.mxu0 0
      %4650 = vmatprep.subr.bf16.mxu0 0
      %4651 = vmatpush1.bf16.msra.mxu0 0
      %4652 = vmatprep.subr.bf16.mxu0 0
      %4653 = vmatpush1.bf16.msra.mxu0 0
      %4654 = vmatprep.subr.bf16.mxu0 0
      %4655 = vmatpush1.bf16.msra.mxu0 0
      %4656 = vmatprep.subr.bf16.mxu0 0
      %4657 = vmatpush1.bf16.msra.mxu0 0
      %4658 = vmatprep.subr.bf16.mxu0 0
      %4659 = vmatpush1.bf16.msra.mxu0 0
      %4660 = vmatprep.subr.bf16.mxu0 0
      %4661 = vmatpush1.bf16.msra.mxu0 0
      %4662 = vmatprep.subr.bf16.mxu0 0
      %4663 = vmatpush1.bf16.msra.mxu0 0
      %4664 = vmatprep.subr.bf16.mxu0 0
      %4665 = vmatpush1.bf16.msra.mxu0 0
      %4666 = vmatprep.mubr.bf16.mxu0 0
      %4667 = vmatmul.mubr.bf16.gmra.mrb[0].mxu0 %v4632
      %v4668 = vpop.f32.mrb[0].mxu0
      %v4669 = vadd.f32 0.0, %v4668
      %v4670 = vpop.f32.mrb[0].mxu0
      %v4671 = vpop.f32.mrb[0].mxu0
      %v4672 = vpop.f32.mrb[0].mxu0
      %4673 = vdwg.mxu0
      %v4674 = vadd.f32 %v4596, %v4669
      %v4675 = vpack.c.bf16 %v4130, %v4130
      %s4676 = scalar_lea.vmem %s8, 224
      %v4677 = vld [vmem:[%s4676] sm:$0xf]
      %v4678 = vld [vmem:[%s4676 + $0x4] sm:$0xf]
      %v4679 = vld [vmem:[%s4676 + $0x8] sm:$0xf]
      %v4680 = vld [vmem:[%s4676 + $0xc] sm:$0xf]
      %v4681 = vld [vmem:[%s4676 + $0x10] sm:$0xf]
      %v4682 = vld [vmem:[%s4676 + $0x14] sm:$0xf]
      %v4683 = vld [vmem:[%s4676 + $0x18] sm:$0xf]
      %v4684 = vld [vmem:[%s4676 + $0x1c] sm:$0xf]
      %v4693 = vunpack.c.l.b16 %v4677
      %v4694 = vunpack.c.l.b16 %v4678
      %v4695 = vunpack.c.l.b16 %v4679
      %v4696 = vunpack.c.l.b16 %v4680
      %v4697 = vunpack.c.l.b16 %v4681
      %v4698 = vunpack.c.l.b16 %v4682
      %v4699 = vunpack.c.l.b16 %v4683
      %v4700 = vunpack.c.l.b16 %v4684
      %v4701 = vpack.c.b16 %v4694, %v4693
      %v4702 = vpack.c.b16 %v4696, %v4695
      %v4703 = vpack.c.b16 %v4698, %v4697
      %v4704 = vpack.c.b16 %v4700, %v4699
      %v4710 = vsel %vm1267, %v4675, 0
      %4712 = vmatprep.subr.bf16.mxu0 0
      %4713 = vmatpush1.bf16.msra.mxu0 %v4701
      %4714 = vmatprep.subr.bf16.mxu0 0
      %4715 = vmatpush1.bf16.msra.mxu0 %v4702
      %4716 = vmatprep.subr.bf16.mxu0 0
      %4717 = vmatpush1.bf16.msra.mxu0 %v4703
      %4718 = vmatprep.subr.bf16.mxu0 0
      %4719 = vmatpush1.bf16.msra.mxu0 %v4704
      %4720 = vmatprep.subr.bf16.mxu0 0
      %4721 = vmatpush1.bf16.msra.mxu0 0
      %4722 = vmatprep.subr.bf16.mxu0 0
      %4723 = vmatpush1.bf16.msra.mxu0 0
      %4724 = vmatprep.subr.bf16.mxu0 0
      %4725 = vmatpush1.bf16.msra.mxu0 0
      %4726 = vmatprep.subr.bf16.mxu0 0
      %4727 = vmatpush1.bf16.msra.mxu0 0
      %4728 = vmatprep.subr.bf16.mxu0 0
      %4729 = vmatpush1.bf16.msra.mxu0 0
      %4730 = vmatprep.subr.bf16.mxu0 0
      %4731 = vmatpush1.bf16.msra.mxu0 0
      %4732 = vmatprep.subr.bf16.mxu0 0
      %4733 = vmatpush1.bf16.msra.mxu0 0
      %4734 = vmatprep.subr.bf16.mxu0 0
      %4735 = vmatpush1.bf16.msra.mxu0 0
      %4736 = vmatprep.subr.bf16.mxu0 0
      %4737 = vmatpush1.bf16.msra.mxu0 0
      %4738 = vmatprep.subr.bf16.mxu0 0
      %4739 = vmatpush1.bf16.msra.mxu0 0
      %4740 = vmatprep.subr.bf16.mxu0 0
      %4741 = vmatpush1.bf16.msra.mxu0 0
      %4742 = vmatprep.subr.bf16.mxu0 0
      %4743 = vmatpush1.bf16.msra.mxu0 0
      %4744 = vmatprep.mubr.bf16.mxu0 0
      %4745 = vmatmul.mubr.bf16.gmra.mrb[0].mxu0 %v4710
      %v4746 = vpop.f32.mrb[0].mxu0
      %v4747 = vadd.f32 0.0, %v4746
      %v4748 = vpop.f32.mrb[0].mxu0
      %v4749 = vpop.f32.mrb[0].mxu0
      %v4750 = vpop.f32.mrb[0].mxu0
      %4751 = vdwg.mxu0
      %v4752 = vadd.f32 %v4674, %v4747
      %v4753 = vpack.c.bf16 %v4131, %v4131
      %s4754 = scalar_lea.vmem %s8, 256
      %v4755 = vld [vmem:[%s4754] sm:$0xf]
      %v4756 = vld [vmem:[%s4754 + $0x4] sm:$0xf]
      %v4757 = vld [vmem:[%s4754 + $0x8] sm:$0xf]
      %v4758 = vld [vmem:[%s4754 + $0xc] sm:$0xf]
      %v4759 = vld [vmem:[%s4754 + $0x10] sm:$0xf]
      %v4760 = vld [vmem:[%s4754 + $0x14] sm:$0xf]
      %v4761 = vld [vmem:[%s4754 + $0x18] sm:$0xf]
      %v4762 = vld [vmem:[%s4754 + $0x1c] sm:$0xf]
      %v4771 = vunpack.c.l.b16 %v4755
      %v4772 = vunpack.c.l.b16 %v4756
      %v4773 = vunpack.c.l.b16 %v4757
      %v4774 = vunpack.c.l.b16 %v4758
      %v4775 = vunpack.c.l.b16 %v4759
      %v4776 = vunpack.c.l.b16 %v4760
      %v4777 = vunpack.c.l.b16 %v4761
      %v4778 = vunpack.c.l.b16 %v4762
      %v4779 = vpack.c.b16 %v4772, %v4771
      %v4780 = vpack.c.b16 %v4774, %v4773
      %v4781 = vpack.c.b16 %v4776, %v4775
      %v4782 = vpack.c.b16 %v4778, %v4777
      %v4788 = vsel %vm1267, %v4753, 0
      %4790 = vmatprep.subr.bf16.mxu0 0
      %4791 = vmatpush1.bf16.msra.mxu0 %v4779
      %4792 = vmatprep.subr.bf16.mxu0 0
      %4793 = vmatpush1.bf16.msra.mxu0 %v4780
      %4794 = vmatprep.subr.bf16.mxu0 0
      %4795 = vmatpush1.bf16.msra.mxu0 %v4781
      %4796 = vmatprep.subr.bf16.mxu0 0
      %4797 = vmatpush1.bf16.msra.mxu0 %v4782
      %4798 = vmatprep.subr.bf16.mxu0 0
      %4799 = vmatpush1.bf16.msra.mxu0 0
      %4800 = vmatprep.subr.bf16.mxu0 0
      %4801 = vmatpush1.bf16.msra.mxu0 0
      %4802 = vmatprep.subr.bf16.mxu0 0
      %4803 = vmatpush1.bf16.msra.mxu0 0
      %4804 = vmatprep.subr.bf16.mxu0 0
      %4805 = vmatpush1.bf16.msra.mxu0 0
      %4806 = vmatprep.subr.bf16.mxu0 0
      %4807 = vmatpush1.bf16.msra.mxu0 0
      %4808 = vmatprep.subr.bf16.mxu0 0
      %4809 = vmatpush1.bf16.msra.mxu0 0
      %4810 = vmatprep.subr.bf16.mxu0 0
      %4811 = vmatpush1.bf16.msra.mxu0 0
      %4812 = vmatprep.subr.bf16.mxu0 0
      %4813 = vmatpush1.bf16.msra.mxu0 0
      %4814 = vmatprep.subr.bf16.mxu0 0
      %4815 = vmatpush1.bf16.msra.mxu0 0
      %4816 = vmatprep.subr.bf16.mxu0 0
      %4817 = vmatpush1.bf16.msra.mxu0 0
      %4818 = vmatprep.subr.bf16.mxu0 0
      %4819 = vmatpush1.bf16.msra.mxu0 0
      %4820 = vmatprep.subr.bf16.mxu0 0
      %4821 = vmatpush1.bf16.msra.mxu0 0
      %4822 = vmatprep.mubr.bf16.mxu0 0
      %4823 = vmatmul.mubr.bf16.gmra.mrb[0].mxu0 %v4788
      %v4824 = vpop.f32.mrb[0].mxu0
      %v4825 = vadd.f32 0.0, %v4824
      %v4826 = vpop.f32.mrb[0].mxu0
      %v4827 = vpop.f32.mrb[0].mxu0
      %v4828 = vpop.f32.mrb[0].mxu0
      %4829 = vdwg.mxu0
      %v4830 = vadd.f32 %v4752, %v4825
      %v4831 = vld [vmem:[%s9] sm:$0x1]
      %v4833 = vlaneseq
      %v4834 = vshrl.u32 %v4833, 7
      %v4835 = vsub.s32 0, %v4834
      %v4836 = vrot.slane %v4831, %v4835
      %v4838 = vadd.f32 %v4830, %v4836
      %v4839 = vmax.f32 %v4838, 0.0
      %v4840 = vld [vmem:[#allocation2] sm:$0xff]
      %v4841 = vld [vmem:[#allocation3] sm:$0xff]
      %v4842 = vpack.c.bf16 %v4839, %v4839
      %v4843 = vld [vmem:[%s10] sm:$0xff]
      %v4844 = vld [vmem:[%s10 + $0x8] sm:$0xff]
      %v4845 = vld [vmem:[%s10 + $0x10] sm:$0xff]
      %v4846 = vld [vmem:[%s10 + $0x18] sm:$0xff]
      %v4847 = vld [vmem:[%s10 + $0x20] sm:$0xff]
      %v4848 = vld [vmem:[%s10 + $0x28] sm:$0xff]
      %v4849 = vld [vmem:[%s10 + $0x30] sm:$0xff]
      %v4850 = vld [vmem:[%s10 + $0x38] sm:$0xff]
      %v4851 = vld [vmem:[%s10 + $0x40] sm:$0xff]
      %v4852 = vld [vmem:[%s10 + $0x48] sm:$0xff]
      %v4853 = vld [vmem:[%s10 + $0x50] sm:$0xff]
      %v4854 = vld [vmem:[%s10 + $0x58] sm:$0xff]
      %v4855 = vld [vmem:[%s10 + $0x60] sm:$0xff]
      %v4856 = vld [vmem:[%s10 + $0x68] sm:$0xff]
      %v4857 = vld [vmem:[%s10 + $0x70] sm:$0xff]
      %v4858 = vld [vmem:[%s10 + $0x78] sm:$0xff]
      %v4859 = vld [vmem:[%s693] sm:$0xff]
      %v4860 = vpack.c.bf16 %v4859, %v4859
      %v4861 = vld [vmem:[%s11] sm:$0xff]
      %v4862 = vld [vmem:[%s11 + $0x8] sm:$0xff]
      %v4863 = vld [vmem:[%s11 + $0x10] sm:$0x77]
      %v4864 = vld [vmem:[%s11 + $0x18] sm:$0x77]
      %v4869 = vunpack.c.l.b16 %v4861
      %v4870 = vunpack.c.h.b16 %v4861
      %v4871 = vunpack.c.l.b16 %v4862
      %v4872 = vunpack.c.h.b16 %v4862
      %v4873 = vunpack.c.l.b16 %v4863
      %v4874 = vunpack.c.h.b16 %v4863
      %v4875 = vunpack.c.l.b16 %v4864
      %v4876 = vunpack.c.h.b16 %v4864
      %v4877 = vpack.c.b16 %v4873, %v4869
      %v4878 = vpack.c.b16 %v4874, %v4870
      %v4879 = vpack.c.b16 %v4875, %v4871
      %v4880 = vpack.c.b16 %v4876, %v4872
      %vm4881 = vcmask 113664
      %v4883 = vsel %vm4881, %v4860, 0
      %vm4885 = vcmask 1046528
      %v4887 = vsel %vm4885, %v4877, 0
      %v4890 = vsel %vm4885, %v4878, 0
      %v4893 = vsel %vm4885, %v4879, 0
      %v4896 = vsel %vm4885, %v4880, 0
      %4898 = vmatprep.subr.bf16.mxu0 %v4890
      %4899 = vmatpush1.bf16.msra.mxu0 %v4887
      %4900 = vmatprep.subr.bf16.mxu0 0
      %4901 = vmatpush1.bf16.msra.mxu0 0
      %4902 = vmatprep.subr.bf16.mxu0 0
      %4903 = vmatpush1.bf16.msra.mxu0 0
      %4904 = vmatprep.subr.bf16.mxu0 0
      %4905 = vmatpush1.bf16.msra.mxu0 0
      %4906 = vmatprep.subr.bf16.mxu0 0
      %4907 = vmatpush1.bf16.msra.mxu0 0
      %4908 = vmatprep.subr.bf16.mxu0 0
      %4909 = vmatpush1.bf16.msra.mxu0 0
      %4910 = vmatprep.subr.bf16.mxu0 0
      %4911 = vmatpush1.bf16.msra.mxu0 0
      %4912 = vmatprep.subr.bf16.mxu0 0
      %4913 = vmatpush1.bf16.msra.mxu0 0
      %4914 = vmatprep.subr.bf16.mxu0 0
      %4915 = vmatpush1.bf16.msra.mxu0 0
      %4916 = vmatprep.subr.bf16.mxu0 0
      %4917 = vmatpush1.bf16.msra.mxu0 0
      %4918 = vmatprep.subr.bf16.mxu0 0
      %4919 = vmatpush1.bf16.msra.mxu0 0
      %4920 = vmatprep.subr.bf16.mxu0 0
      %4921 = vmatpush1.bf16.msra.mxu0 0
      %4922 = vmatprep.subr.bf16.mxu0 0
      %4923 = vmatpush1.bf16.msra.mxu0 0
      %4924 = vmatprep.subr.bf16.mxu0 0
      %4925 = vmatpush1.bf16.msra.mxu0 0
      %4926 = vmatprep.subr.bf16.mxu0 0
      %4927 = vmatpush1.bf16.msra.mxu0 0
      %4928 = vmatprep.subr.bf16.mxu0 0
      %4929 = vmatpush1.bf16.msra.mxu0 0
      %4930 = vmatprep.mubr.bf16.mxu0 0
      %4931 = vmatmul.mubr.bf16.gmra.mrb[0].mxu0 %v4883
      %v4932 = vpop.f32.mrb[0].mxu0
      %v4933 = vadd.f32 0.0, %v4932
      %v4934 = vpop.f32.mrb[0].mxu0
      %v4935 = vadd.f32 0.0, %v4934
      %v4936 = vpop.f32.mrb[0].mxu0
      %v4937 = vpop.f32.mrb[0].mxu0
      %4938 = vdwg.mxu0
      %4939 = vmatprep.subr.bf16.mxu0 %v4896
      %4940 = vmatpush1.bf16.msra.mxu0 %v4893
      %4941 = vmatprep.subr.bf16.mxu0 0
      %4942 = vmatpush1.bf16.msra.mxu0 0
      %4943 = vmatprep.subr.bf16.mxu0 0
      %4944 = vmatpush1.bf16.msra.mxu0 0
      %4945 = vmatprep.subr.bf16.mxu0 0
      %4946 = vmatpush1.bf16.msra.mxu0 0
      %4947 = vmatprep.subr.bf16.mxu0 0
      %4948 = vmatpush1.bf16.msra.mxu0 0
      %4949 = vmatprep.subr.bf16.mxu0 0
      %4950 = vmatpush1.bf16.msra.mxu0 0
      %4951 = vmatprep.subr.bf16.mxu0 0
      %4952 = vmatpush1.bf16.msra.mxu0 0
      %4953 = vmatprep.subr.bf16.mxu0 0
      %4954 = vmatpush1.bf16.msra.mxu0 0
      %4955 = vmatprep.subr.bf16.mxu0 0
      %4956 = vmatpush1.bf16.msra.mxu0 0
      %4957 = vmatprep.subr.bf16.mxu0 0
      %4958 = vmatpush1.bf16.msra.mxu0 0
      %4959 = vmatprep.subr.bf16.mxu0 0
      %4960 = vmatpush1.bf16.msra.mxu0 0
      %4961 = vmatprep.subr.bf16.mxu0 0
      %4962 = vmatpush1.bf16.msra.mxu0 0
      %4963 = vmatprep.subr.bf16.mxu0 0
      %4964 = vmatpush1.bf16.msra.mxu0 0
      %4965 = vmatprep.subr.bf16.mxu0 0
      %4966 = vmatpush1.bf16.msra.mxu0 0
      %4967 = vmatprep.subr.bf16.mxu0 0
      %4968 = vmatpush1.bf16.msra.mxu0 0
      %4969 = vmatprep.subr.bf16.mxu0 0
      %4970 = vmatpush1.bf16.msra.mxu0 0
      %4971 = vmatprep.mubr.bf16.mxu0 0
      %4972 = vmatmul.mubr.bf16.gmra.mrb[0].mxu0 %v4883
      %v4973 = vpop.f32.mrb[0].mxu0
      %v4974 = vadd.f32 0.0, %v4973
      %v4975 = vpop.f32.mrb[0].mxu0
      %v4976 = vadd.f32 0.0, %v4975
      %v4977 = vpop.f32.mrb[0].mxu0
      %v4978 = vpop.f32.mrb[0].mxu0
      %4979 = vdwg.mxu0
      %v4996 = vunpack.c.l.b16 %v4843
      %v4997 = vunpack.c.h.b16 %v4843
      %v4998 = vunpack.c.l.b16 %v4844
      %v4999 = vunpack.c.h.b16 %v4844
      %v5000 = vunpack.c.l.b16 %v4845
      %v5001 = vunpack.c.h.b16 %v4845
      %v5002 = vunpack.c.l.b16 %v4846
      %v5003 = vunpack.c.h.b16 %v4846
      %v5004 = vunpack.c.l.b16 %v4847
      %v5005 = vunpack.c.h.b16 %v4847
      %v5006 = vunpack.c.l.b16 %v4848
      %v5007 = vunpack.c.h.b16 %v4848
      %v5008 = vunpack.c.l.b16 %v4849
      %v5009 = vunpack.c.h.b16 %v4849
      %v5010 = vunpack.c.l.b16 %v4850
      %v5011 = vunpack.c.h.b16 %v4850
      %v5012 = vunpack.c.l.b16 %v4851
      %v5013 = vunpack.c.h.b16 %v4851
      %v5014 = vunpack.c.l.b16 %v4852
      %v5015 = vunpack.c.h.b16 %v4852
      %v5016 = vunpack.c.l.b16 %v4853
      %v5017 = vunpack.c.h.b16 %v4853
      %v5018 = vunpack.c.l.b16 %v4854
      %v5019 = vunpack.c.h.b16 %v4854
      %v5020 = vunpack.c.l.b16 %v4855
      %v5021 = vunpack.c.h.b16 %v4855
      %v5022 = vunpack.c.l.b16 %v4856
      %v5023 = vunpack.c.h.b16 %v4856
      %v5024 = vunpack.c.l.b16 %v4857
      %v5025 = vunpack.c.h.b16 %v4857
      %v5026 = vunpack.c.l.b16 %v4858
      %v5027 = vunpack.c.h.b16 %v4858
      %v5028 = vpack.c.b16 %v5000, %v4996
      %v5029 = vpack.c.b16 %v5001, %v4997
      %v5030 = vpack.c.b16 %v5002, %v4998
      %v5031 = vpack.c.b16 %v5003, %v4999
      %v5032 = vpack.c.b16 %v5008, %v5004
      %v5033 = vpack.c.b16 %v5009, %v5005
      %v5034 = vpack.c.b16 %v5010, %v5006
      %v5035 = vpack.c.b16 %v5011, %v5007
      %v5036 = vpack.c.b16 %v5016, %v5012
      %v5037 = vpack.c.b16 %v5017, %v5013
      %v5038 = vpack.c.b16 %v5018, %v5014
      %v5039 = vpack.c.b16 %v5019, %v5015
      %v5040 = vpack.c.b16 %v5024, %v5020
      %v5041 = vpack.c.b16 %v5025, %v5021
      %v5042 = vpack.c.b16 %v5026, %v5022
      %v5043 = vpack.c.b16 %v5027, %v5023
      %v5061 = vsel %vm1267, %v4842, 0
      %5063 = vmatprep.subr.bf16.mxu0 %v5029
      %5064 = vmatpush1.bf16.msra.mxu0 %v5028
      %5065 = vmatprep.subr.bf16.mxu0 %v5033
      %5066 = vmatpush1.bf16.msra.mxu0 %v5032
      %5067 = vmatprep.subr.bf16.mxu0 %v5037
      %5068 = vmatpush1.bf16.msra.mxu0 %v5036
      %5069 = vmatprep.subr.bf16.mxu0 %v5041
      %5070 = vmatpush1.bf16.msra.mxu0 %v5040
      %5071 = vmatprep.subr.bf16.mxu0 0
      %5072 = vmatpush1.bf16.msra.mxu0 0
      %5073 = vmatprep.subr.bf16.mxu0 0
      %5074 = vmatpush1.bf16.msra.mxu0 0
      %5075 = vmatprep.subr.bf16.mxu0 0
      %5076 = vmatpush1.bf16.msra.mxu0 0
      %5077 = vmatprep.subr.bf16.mxu0 0
      %5078 = vmatpush1.bf16.msra.mxu0 0
      %5079 = vmatprep.subr.bf16.mxu0 0
      %5080 = vmatpush1.bf16.msra.mxu0 0
      %5081 = vmatprep.subr.bf16.mxu0 0
      %5082 = vmatpush1.bf16.msra.mxu0 0
      %5083 = vmatprep.subr.bf16.mxu0 0
      %5084 = vmatpush1.bf16.msra.mxu0 0
      %5085 = vmatprep.subr.bf16.mxu0 0
      %5086 = vmatpush1.bf16.msra.mxu0 0
      %5087 = vmatprep.subr.bf16.mxu0 0
      %5088 = vmatpush1.bf16.msra.mxu0 0
      %5089 = vmatprep.subr.bf16.mxu0 0
      %5090 = vmatpush1.bf16.msra.mxu0 0
      %5091 = vmatprep.subr.bf16.mxu0 0
      %5092 = vmatpush1.bf16.msra.mxu0 0
      %5093 = vmatprep.subr.bf16.mxu0 0
      %5094 = vmatpush1.bf16.msra.mxu0 0
      %5095 = vmatprep.mubr.bf16.mxu0 0
      %5096 = vmatmul.mubr.bf16.gmra.mrb[0].mxu0 %v5061
      %v5097 = vpop.f32.mrb[0].mxu0
      %v5098 = vadd.f32 %v4933, %v5097
      %v5099 = vpop.f32.mrb[0].mxu0
      %v5100 = vadd.f32 %v4935, %v5099
      %v5101 = vpop.f32.mrb[0].mxu0
      %v5102 = vpop.f32.mrb[0].mxu0
      %5103 = vdwg.mxu0
      %5104 = vmatprep.subr.bf16.mxu0 %v5031
      %5105 = vmatpush1.bf16.msra.mxu0 %v5030
      %5106 = vmatprep.subr.bf16.mxu0 %v5035
      %5107 = vmatpush1.bf16.msra.mxu0 %v5034
      %5108 = vmatprep.subr.bf16.mxu0 %v5039
      %5109 = vmatpush1.bf16.msra.mxu0 %v5038
      %5110 = vmatprep.subr.bf16.mxu0 %v5043
      %5111 = vmatpush1.bf16.msra.mxu0 %v5042
      %5112 = vmatprep.subr.bf16.mxu0 0
      %5113 = vmatpush1.bf16.msra.mxu0 0
      %5114 = vmatprep.subr.bf16.mxu0 0
      %5115 = vmatpush1.bf16.msra.mxu0 0
      %5116 = vmatprep.subr.bf16.mxu0 0
      %5117 = vmatpush1.bf16.msra.mxu0 0
      %5118 = vmatprep.subr.bf16.mxu0 0
      %5119 = vmatpush1.bf16.msra.mxu0 0
      %5120 = vmatprep.subr.bf16.mxu0 0
      %5121 = vmatpush1.bf16.msra.mxu0 0
      %5122 = vmatprep.subr.bf16.mxu0 0
      %5123 = vmatpush1.bf16.msra.mxu0 0
      %5124 = vmatprep.subr.bf16.mxu0 0
      %5125 = vmatpush1.bf16.msra.mxu0 0
      %5126 = vmatprep.subr.bf16.mxu0 0
      %5127 = vmatpush1.bf16.msra.mxu0 0
      %5128 = vmatprep.subr.bf16.mxu0 0
      %5129 = vmatpush1.bf16.msra.mxu0 0
      %5130 = vmatprep.subr.bf16.mxu0 0
      %5131 = vmatpush1.bf16.msra.mxu0 0
      %5132 = vmatprep.subr.bf16.mxu0 0
      %5133 = vmatpush1.bf16.msra.mxu0 0
      %5134 = vmatprep.subr.bf16.mxu0 0
      %5135 = vmatpush1.bf16.msra.mxu0 0
      %5136 = vmatprep.mubr.bf16.mxu0 0
      %5137 = vmatmul.mubr.bf16.gmra.mrb[0].mxu0 %v5061
      %v5138 = vpop.f32.mrb[0].mxu0
      %v5139 = vadd.f32 %v4974, %v5138
      %v5140 = vpop.f32.mrb[0].mxu0
      %v5141 = vadd.f32 %v4976, %v5140
      %v5142 = vpop.f32.mrb[0].mxu0
      %v5143 = vpop.f32.mrb[0].mxu0
      %5144 = vdwg.mxu0
      %v5145 = vpack.c.bf16 %v4840, %v4840
      %v5146 = vld [vmem:[%s12] sm:$0xff]
      %v5147 = vld [vmem:[%s12 + $0x8] sm:$0xff]
      %v5148 = vld [vmem:[%s12 + $0x10] sm:$0xff]
      %v5149 = vld [vmem:[%s12 + $0x18] sm:$0xff]
      %v5150 = vld [vmem:[%s12 + $0x20] sm:$0xff]
      %v5151 = vld [vmem:[%s12 + $0x28] sm:$0xff]
      %v5152 = vld [vmem:[%s12 + $0x30] sm:$0xff]
      %v5153 = vld [vmem:[%s12 + $0x38] sm:$0xff]
      %v5154 = vld [vmem:[%s12 + $0x40] sm:$0xff]
      %v5155 = vld [vmem:[%s12 + $0x48] sm:$0xff]
      %v5156 = vld [vmem:[%s12 + $0x50] sm:$0xff]
      %v5157 = vld [vmem:[%s12 + $0x58] sm:$0xff]
      %v5158 = vld [vmem:[%s12 + $0x60] sm:$0xff]
      %v5159 = vld [vmem:[%s12 + $0x68] sm:$0xff]
      %v5160 = vld [vmem:[%s12 + $0x70] sm:$0xff]
      %v5161 = vld [vmem:[%s12 + $0x78] sm:$0xff]
      %v5162 = vld [vmem:[%s12 + $0x80] sm:$0xff]
      %v5163 = vld [vmem:[%s12 + $0x88] sm:$0xff]
      %v5164 = vld [vmem:[%s12 + $0x90] sm:$0xff]
      %v5165 = vld [vmem:[%s12 + $0x98] sm:$0xff]
      %v5166 = vld [vmem:[%s12 + $0xa0] sm:$0xff]
      %v5167 = vld [vmem:[%s12 + $0xa8] sm:$0xff]
      %v5168 = vld [vmem:[%s12 + $0xb0] sm:$0xff]
      %v5169 = vld [vmem:[%s12 + $0xb8] sm:$0xff]
      %v5170 = vld [vmem:[%s12 + $0xc0] sm:$0xff]
      %v5171 = vld [vmem:[%s12 + $0xc8] sm:$0xff]
      %v5172 = vld [vmem:[%s12 + $0xd0] sm:$0xff]
      %v5173 = vld [vmem:[%s12 + $0xd8] sm:$0xff]
      %v5174 = vld [vmem:[%s12 + $0xe0] sm:$0xff]
      %v5175 = vld [vmem:[%s12 + $0xe8] sm:$0xff]
      %v5176 = vld [vmem:[%s12 + $0xf0] sm:$0xff]
      %v5177 = vld [vmem:[%s12 + $0xf8] sm:$0xff]
      %v5210 = vunpack.c.l.b16 %v5146
      %v5211 = vunpack.c.h.b16 %v5146
      %v5212 = vunpack.c.l.b16 %v5147
      %v5213 = vunpack.c.h.b16 %v5147
      %v5214 = vunpack.c.l.b16 %v5148
      %v5215 = vunpack.c.h.b16 %v5148
      %v5216 = vunpack.c.l.b16 %v5149
      %v5217 = vunpack.c.h.b16 %v5149
      %v5218 = vunpack.c.l.b16 %v5150
      %v5219 = vunpack.c.h.b16 %v5150
      %v5220 = vunpack.c.l.b16 %v5151
      %v5221 = vunpack.c.h.b16 %v5151
      %v5222 = vunpack.c.l.b16 %v5152
      %v5223 = vunpack.c.h.b16 %v5152
      %v5224 = vunpack.c.l.b16 %v5153
      %v5225 = vunpack.c.h.b16 %v5153
      %v5226 = vunpack.c.l.b16 %v5154
      %v5227 = vunpack.c.h.b16 %v5154
      %v5228 = vunpack.c.l.b16 %v5155
      %v5229 = vunpack.c.h.b16 %v5155
      %v5230 = vunpack.c.l.b16 %v5156
      %v5231 = vunpack.c.h.b16 %v5156
      %v5232 = vunpack.c.l.b16 %v5157
      %v5233 = vunpack.c.h.b16 %v5157
      %v5234 = vunpack.c.l.b16 %v5158
      %v5235 = vunpack.c.h.b16 %v5158
      %v5236 = vunpack.c.l.b16 %v5159
      %v5237 = vunpack.c.h.b16 %v5159
      %v5238 = vunpack.c.l.b16 %v5160
      %v5239 = vunpack.c.h.b16 %v5160
      %v5240 = vunpack.c.l.b16 %v5161
      %v5241 = vunpack.c.h.b16 %v5161
      %v5242 = vunpack.c.l.b16 %v5162
      %v5243 = vunpack.c.h.b16 %v5162
      %v5244 = vunpack.c.l.b16 %v5163
      %v5245 = vunpack.c.h.b16 %v5163
      %v5246 = vunpack.c.l.b16 %v5164
      %v5247 = vunpack.c.h.b16 %v5164
      %v5248 = vunpack.c.l.b16 %v5165
      %v5249 = vunpack.c.h.b16 %v5165
      %v5250 = vunpack.c.l.b16 %v5166
      %v5251 = vunpack.c.h.b16 %v5166
      %v5252 = vunpack.c.l.b16 %v5167
      %v5253 = vunpack.c.h.b16 %v5167
      %v5254 = vunpack.c.l.b16 %v5168
      %v5255 = vunpack.c.h.b16 %v5168
      %v5256 = vunpack.c.l.b16 %v5169
      %v5257 = vunpack.c.h.b16 %v5169
      %v5258 = vunpack.c.l.b16 %v5170
      %v5259 = vunpack.c.h.b16 %v5170
      %v5260 = vunpack.c.l.b16 %v5171
      %v5261 = vunpack.c.h.b16 %v5171
      %v5262 = vunpack.c.l.b16 %v5172
      %v5263 = vunpack.c.h.b16 %v5172
      %v5264 = vunpack.c.l.b16 %v5173
      %v5265 = vunpack.c.h.b16 %v5173
      %v5266 = vunpack.c.l.b16 %v5174
      %v5267 = vunpack.c.h.b16 %v5174
      %v5268 = vunpack.c.l.b16 %v5175
      %v5269 = vunpack.c.h.b16 %v5175
      %v5270 = vunpack.c.l.b16 %v5176
      %v5271 = vunpack.c.h.b16 %v5176
      %v5272 = vunpack.c.l.b16 %v5177
      %v5273 = vunpack.c.h.b16 %v5177
      %v5274 = vpack.c.b16 %v5214, %v5210
      %v5275 = vpack.c.b16 %v5215, %v5211
      %v5276 = vpack.c.b16 %v5216, %v5212
      %v5277 = vpack.c.b16 %v5217, %v5213
      %v5278 = vpack.c.b16 %v5222, %v5218
      %v5279 = vpack.c.b16 %v5223, %v5219
      %v5280 = vpack.c.b16 %v5224, %v5220
      %v5281 = vpack.c.b16 %v5225, %v5221
      %v5282 = vpack.c.b16 %v5230, %v5226
      %v5283 = vpack.c.b16 %v5231, %v5227
      %v5284 = vpack.c.b16 %v5232, %v5228
      %v5285 = vpack.c.b16 %v5233, %v5229
      %v5286 = vpack.c.b16 %v5238, %v5234
      %v5287 = vpack.c.b16 %v5239, %v5235
      %v5288 = vpack.c.b16 %v5240, %v5236
      %v5289 = vpack.c.b16 %v5241, %v5237
      %v5290 = vpack.c.b16 %v5246, %v5242
      %v5291 = vpack.c.b16 %v5247, %v5243
      %v5292 = vpack.c.b16 %v5248, %v5244
      %v5293 = vpack.c.b16 %v5249, %v5245
      %v5294 = vpack.c.b16 %v5254, %v5250
      %v5295 = vpack.c.b16 %v5255, %v5251
      %v5296 = vpack.c.b16 %v5256, %v5252
      %v5297 = vpack.c.b16 %v5257, %v5253
      %v5298 = vpack.c.b16 %v5262, %v5258
      %v5299 = vpack.c.b16 %v5263, %v5259
      %v5300 = vpack.c.b16 %v5264, %v5260
      %v5301 = vpack.c.b16 %v5265, %v5261
      %v5302 = vpack.c.b16 %v5270, %v5266
      %v5303 = vpack.c.b16 %v5271, %v5267
      %v5304 = vpack.c.b16 %v5272, %v5268
      %v5305 = vpack.c.b16 %v5273, %v5269
      %5338 = vmatprep.subr.bf16.mxu0 %v5275
      %5339 = vmatpush1.bf16.msra.mxu0 %v5274
      %5340 = vmatprep.subr.bf16.mxu0 %v5279
      %5341 = vmatpush1.bf16.msra.mxu0 %v5278
      %5342 = vmatprep.subr.bf16.mxu0 %v5283
      %5343 = vmatpush1.bf16.msra.mxu0 %v5282
      %5344 = vmatprep.subr.bf16.mxu0 %v5287
      %5345 = vmatpush1.bf16.msra.mxu0 %v5286
      %5346 = vmatprep.subr.bf16.mxu0 %v5291
      %5347 = vmatpush1.bf16.msra.mxu0 %v5290
      %5348 = vmatprep.subr.bf16.mxu0 %v5295
      %5349 = vmatpush1.bf16.msra.mxu0 %v5294
      %5350 = vmatprep.subr.bf16.mxu0 %v5299
      %5351 = vmatpush1.bf16.msra.mxu0 %v5298
      %5352 = vmatprep.subr.bf16.mxu0 %v5303
      %5353 = vmatpush1.bf16.msra.mxu0 %v5302
      %5354 = vmatprep.subr.bf16.mxu0 0
      %5355 = vmatpush1.bf16.msra.mxu0 0
      %5356 = vmatprep.subr.bf16.mxu0 0
      %5357 = vmatpush1.bf16.msra.mxu0 0
      %5358 = vmatprep.subr.bf16.mxu0 0
      %5359 = vmatpush1.bf16.msra.mxu0 0
      %5360 = vmatprep.subr.bf16.mxu0 0
      %5361 = vmatpush1.bf16.msra.mxu0 0
      %5362 = vmatprep.subr.bf16.mxu0 0
      %5363 = vmatpush1.bf16.msra.mxu0 0
      %5364 = vmatprep.subr.bf16.mxu0 0
      %5365 = vmatpush1.bf16.msra.mxu0 0
      %5366 = vmatprep.subr.bf16.mxu0 0
      %5367 = vmatpush1.bf16.msra.mxu0 0
      %5368 = vmatprep.subr.bf16.mxu0 0
      %5369 = vmatpush1.bf16.msra.mxu0 0
      %5370 = vmatprep.mubr.bf16.mxu0 0
      %5371 = vmatmul.mubr.bf16.gmra.mrb[0].mxu0 %v5145
      %v5372 = vpop.f32.mrb[0].mxu0
      %v5373 = vadd.f32 0.0, %v5372
      %v5374 = vpop.f32.mrb[0].mxu0
      %v5375 = vadd.f32 0.0, %v5374
      %v5376 = vpop.f32.mrb[0].mxu0
      %v5377 = vpop.f32.mrb[0].mxu0
      %5378 = vdwg.mxu0
      %5379 = vmatprep.subr.bf16.mxu0 %v5277
      %5380 = vmatpush1.bf16.msra.mxu0 %v5276
      %5381 = vmatprep.subr.bf16.mxu0 %v5281
      %5382 = vmatpush1.bf16.msra.mxu0 %v5280
      %5383 = vmatprep.subr.bf16.mxu0 %v5285
      %5384 = vmatpush1.bf16.msra.mxu0 %v5284
      %5385 = vmatprep.subr.bf16.mxu0 %v5289
      %5386 = vmatpush1.bf16.msra.mxu0 %v5288
      %5387 = vmatprep.subr.bf16.mxu0 %v5293
      %5388 = vmatpush1.bf16.msra.mxu0 %v5292
      %5389 = vmatprep.subr.bf16.mxu0 %v5297
      %5390 = vmatpush1.bf16.msra.mxu0 %v5296
      %5391 = vmatprep.subr.bf16.mxu0 %v5301
      %5392 = vmatpush1.bf16.msra.mxu0 %v5300
      %5393 = vmatprep.subr.bf16.mxu0 %v5305
      %5394 = vmatpush1.bf16.msra.mxu0 %v5304
      %5395 = vmatprep.subr.bf16.mxu0 0
      %5396 = vmatpush1.bf16.msra.mxu0 0
      %5397 = vmatprep.subr.bf16.mxu0 0
      %5398 = vmatpush1.bf16.msra.mxu0 0
      %5399 = vmatprep.subr.bf16.mxu0 0
      %5400 = vmatpush1.bf16.msra.mxu0 0
      %5401 = vmatprep.subr.bf16.mxu0 0
      %5402 = vmatpush1.bf16.msra.mxu0 0
      %5403 = vmatprep.subr.bf16.mxu0 0
      %5404 = vmatpush1.bf16.msra.mxu0 0
      %5405 = vmatprep.subr.bf16.mxu0 0
      %5406 = vmatpush1.bf16.msra.mxu0 0
      %5407 = vmatprep.subr.bf16.mxu0 0
      %5408 = vmatpush1.bf16.msra.mxu0 0
      %5409 = vmatprep.subr.bf16.mxu0 0
      %5410 = vmatpush1.bf16.msra.mxu0 0
      %5411 = vmatprep.mubr.bf16.mxu0 0
      %5412 = vmatmul.mubr.bf16.gmra.mrb[0].mxu0 %v5145
      %v5413 = vpop.f32.mrb[0].mxu0
      %v5414 = vadd.f32 0.0, %v5413
      %v5415 = vpop.f32.mrb[0].mxu0
      %v5416 = vadd.f32 0.0, %v5415
      %v5417 = vpop.f32.mrb[0].mxu0
      %v5418 = vpop.f32.mrb[0].mxu0
      %5419 = vdwg.mxu0
      %v5420 = vadd.f32 %v5098, %v5373
      %v5421 = vadd.f32 %v5100, %v5375
      %v5422 = vadd.f32 %v5139, %v5414
      %v5423 = vadd.f32 %v5141, %v5416
      %v5424 = vld [vmem:[%s13] sm:$0xf]
      %v5426 = vlaneseq
      %v5427 = vshrl.u32 %v5426, 7
      %v5428 = vsub.s32 0, %v5427
      %v5429 = vrot.slane %v5424, %v5428
      %v5430 = vlaneseq
      %v5431 = vshrl.u32 %v5430, 7
      %v5432 = vsub.s32 1, %v5431
      %v5433 = vrot.slane %v5424, %v5432
      %v5434 = vlaneseq
      %v5435 = vshrl.u32 %v5434, 7
      %v5436 = vsub.s32 2, %v5435
      %v5437 = vrot.slane %v5424, %v5436
      %v5438 = vlaneseq
      %v5439 = vshrl.u32 %v5438, 7
      %v5440 = vsub.s32 3, %v5439
      %v5441 = vrot.slane %v5424, %v5440
      %v5446 = vadd.f32 %v5420, %v5429
      %v5447 = vadd.f32 %v5421, %v5433
      %v5448 = vadd.f32 %v5422, %v5437
      %v5449 = vadd.f32 %v5423, %v5441
      %v5450 = vmul.f32 %v5446, 0.5
      %v5451 = vtanh.pop %v5450
      %v5452 = vmul.f32 %v5451, 0.5
      %v5453 = vadd.f32 %v5452, 0.5
      %v5454 = vmul.f32 %v5447, 0.5
      %v5455 = vtanh.pop %v5454
      %v5456 = vmul.f32 %v5455, 0.5
      %v5457 = vadd.f32 %v5456, 0.5
      %v5458 = vtanh.pop %v5448
      %v5459 = vmul.f32 %v5449, 0.5
      %v5460 = vtanh.pop %v5459
      %v5461 = vmul.f32 %v5460, 0.5
      %v5462 = vadd.f32 %v5461, 0.5
      %v5463 = vmul.f32 %v5457, %v4841
      %v5464 = vmul.f32 %v5453, %v5458
      %v5465 = vadd.f32 %v5463, %v5464
      %v5466 = vtanh.pop %v5465
      %v5467 = vmul.f32 %v5462, %v5466
      %5468 = vst [vmem:[#allocation2] sm:$0xff] %v5467
      %5469 = vst [vmem:[#allocation3] sm:$0xff] %v5465
      %5470 = vst [vmem:[%s714] sm:$0xff] %v5467
      %5471 = vst [vmem:[%s714 + $0x8] sm:$0xff] %v5465
      %v5472 = vpack.c.bf16 %v5467, %v5467
      %v5473 = vld [vmem:[%s14] sm:$0xff]
      %v5474 = vld [vmem:[%s14 + $0x8] sm:$0xff]
      %v5475 = vld [vmem:[%s14 + $0x10] sm:$0xff]
      %v5476 = vld [vmem:[%s14 + $0x18] sm:$0xff]
      %v5477 = vld [vmem:[%s14 + $0x20] sm:$0xff]
      %v5478 = vld [vmem:[%s14 + $0x28] sm:$0xff]
      %v5479 = vld [vmem:[%s14 + $0x30] sm:$0xff]
      %v5480 = vld [vmem:[%s14 + $0x38] sm:$0xff]
      %v5481 = vld [vmem:[%s14 + $0x40] sm:$0xff]
      %v5482 = vld [vmem:[%s14 + $0x48] sm:$0xff]
      %v5483 = vld [vmem:[%s14 + $0x50] sm:$0xff]
      %v5484 = vld [vmem:[%s14 + $0x58] sm:$0xff]
      %v5485 = vld [vmem:[%s14 + $0x60] sm:$0xff]
      %v5486 = vld [vmem:[%s14 + $0x68] sm:$0xff]
      %v5487 = vld [vmem:[%s14 + $0x70] sm:$0xff]
      %v5488 = vld [vmem:[%s14 + $0x78] sm:$0xff]
      %v5489 = vld [vmem:[%s14 + $0x80] sm:$0xff]
      %v5490 = vld [vmem:[%s14 + $0x88] sm:$0xff]
      %v5491 = vld [vmem:[%s14 + $0x90] sm:$0xff]
      %v5492 = vld [vmem:[%s14 + $0x98] sm:$0xff]
      %v5493 = vld [vmem:[%s14 + $0xa0] sm:$0xff]
      %v5494 = vld [vmem:[%s14 + $0xa8] sm:$0xff]
      %v5495 = vld [vmem:[%s14 + $0xb0] sm:$0xff]
      %v5496 = vld [vmem:[%s14 + $0xb8] sm:$0xff]
      %v5497 = vld [vmem:[%s14 + $0xc0] sm:$0xff]
      %v5498 = vld [vmem:[%s14 + $0xc8] sm:$0xff]
      %v5499 = vld [vmem:[%s14 + $0xd0] sm:$0xff]
      %v5500 = vld [vmem:[%s14 + $0xd8] sm:$0xff]
      %v5501 = vld [vmem:[%s14 + $0xe0] sm:$0xff]
      %v5502 = vld [vmem:[%s14 + $0xe8] sm:$0xff]
      %v5503 = vld [vmem:[%s14 + $0xf0] sm:$0xff]
      %v5504 = vld [vmem:[%s14 + $0xf8] sm:$0xff]
      %v5505 = vld [vmem:[%s14 + $0x100] sm:$0xff]
      %v5506 = vld [vmem:[%s14 + $0x108] sm:$0xff]
      %v5507 = vld [vmem:[%s14 + $0x110] sm:$0xff]
      %v5508 = vld [vmem:[%s14 + $0x118] sm:$0xff]
      %v5509 = vld [vmem:[%s14 + $0x120] sm:$0xff]
      %v5510 = vld [vmem:[%s14 + $0x128] sm:$0xff]
      %v5511 = vld [vmem:[%s14 + $0x130] sm:$0xff]
      %v5512 = vld [vmem:[%s14 + $0x138] sm:$0xff]
      %v5513 = vld [vmem:[%s14 + $0x140] sm:$0xff]
      %v5514 = vld [vmem:[%s14 + $0x148] sm:$0xff]
      %v5515 = vld [vmem:[%s14 + $0x150] sm:$0xff]
      %v5516 = vld [vmem:[%s14 + $0x158] sm:$0xff]
      %v5517 = vld [vmem:[%s14 + $0x160] sm:$0xff]
      %v5518 = vld [vmem:[%s14 + $0x168] sm:$0xff]
      %v5519 = vld [vmem:[%s14 + $0x170] sm:$0xff]
      %v5520 = vld [vmem:[%s14 + $0x178] sm:$0xff]
      %v5521 = vld [vmem:[%s14 + $0x180] sm:$0xff]
      %v5522 = vld [vmem:[%s14 + $0x188] sm:$0xff]
      %v5523 = vld [vmem:[%s14 + $0x190] sm:$0xff]
      %v5524 = vld [vmem:[%s14 + $0x198] sm:$0xff]
      %v5525 = vld [vmem:[%s14 + $0x1a0] sm:$0xff]
      %v5526 = vld [vmem:[%s14 + $0x1a8] sm:$0xff]
      %v5527 = vld [vmem:[%s14 + $0x1b0] sm:$0xff]
      %v5528 = vld [vmem:[%s14 + $0x1b8] sm:$0xff]
      %v5529 = vld [vmem:[%s14 + $0x1c0] sm:$0xff]
      %v5530 = vld [vmem:[%s14 + $0x1c8] sm:$0xff]
      %v5531 = vld [vmem:[%s14 + $0x1d0] sm:$0xff]
      %v5532 = vld [vmem:[%s14 + $0x1d8] sm:$0xff]
      %v5533 = vld [vmem:[%s14 + $0x1e0] sm:$0xff]
      %v5534 = vld [vmem:[%s14 + $0x1e8] sm:$0xff]
      %v5535 = vld [vmem:[%s14 + $0x1f0] sm:$0xff]
      %v5536 = vld [vmem:[%s14 + $0x1f8] sm:$0xff]
      %v5537 = vld [vmem:[%s15] sm:$0xff]
      %v5539 = vlaneseq
      %v5540 = vshrl.u32 %v5539, 7
      %v5541 = vsub.s32 0, %v5540
      %v5542 = vrot.slane %v5537, %v5541
      %v5543 = vlaneseq
      %v5544 = vshrl.u32 %v5543, 7
      %v5545 = vsub.s32 1, %v5544
      %v5546 = vrot.slane %v5537, %v5545
      %v5547 = vlaneseq
      %v5548 = vshrl.u32 %v5547, 7
      %v5549 = vsub.s32 2, %v5548
      %v5550 = vrot.slane %v5537, %v5549
      %v5551 = vlaneseq
      %v5552 = vshrl.u32 %v5551, 7
      %v5553 = vsub.s32 3, %v5552
      %v5554 = vrot.slane %v5537, %v5553
      %v5555 = vlaneseq
      %v5556 = vshrl.u32 %v5555, 7
      %v5557 = vsub.s32 4, %v5556
      %v5558 = vrot.slane %v5537, %v5557
      %v5559 = vlaneseq
      %v5560 = vshrl.u32 %v5559, 7
      %v5561 = vsub.s32 5, %v5560
      %v5562 = vrot.slane %v5537, %v5561
      %v5563 = vlaneseq
      %v5564 = vshrl.u32 %v5563, 7
      %v5565 = vsub.s32 6, %v5564
      %v5566 = vrot.slane %v5537, %v5565
      %v5567 = vlaneseq
      %v5568 = vshrl.u32 %v5567, 7
      %v5569 = vsub.s32 7, %v5568
      %v5570 = vrot.slane %v5537, %v5569
      %v5643 = vunpack.c.l.b16 %v5473
      %v5644 = vunpack.c.h.b16 %v5473
      %v5645 = vunpack.c.l.b16 %v5474
      %v5646 = vunpack.c.h.b16 %v5474
      %v5647 = vunpack.c.l.b16 %v5475
      %v5648 = vunpack.c.h.b16 %v5475
      %v5649 = vunpack.c.l.b16 %v5476
      %v5650 = vunpack.c.h.b16 %v5476
      %v5651 = vunpack.c.l.b16 %v5477
      %v5652 = vunpack.c.h.b16 %v5477
      %v5653 = vunpack.c.l.b16 %v5478
      %v5654 = vunpack.c.h.b16 %v5478
      %v5655 = vunpack.c.l.b16 %v5479
      %v5656 = vunpack.c.h.b16 %v5479
      %v5657 = vunpack.c.l.b16 %v5480
      %v5658 = vunpack.c.h.b16 %v5480
      %v5659 = vunpack.c.l.b16 %v5481
      %v5660 = vunpack.c.h.b16 %v5481
      %v5661 = vunpack.c.l.b16 %v5482
      %v5662 = vunpack.c.h.b16 %v5482
      %v5663 = vunpack.c.l.b16 %v5483
      %v5664 = vunpack.c.h.b16 %v5483
      %v5665 = vunpack.c.l.b16 %v5484
      %v5666 = vunpack.c.h.b16 %v5484
      %v5667 = vunpack.c.l.b16 %v5485
      %v5668 = vunpack.c.h.b16 %v5485
      %v5669 = vunpack.c.l.b16 %v5486
      %v5670 = vunpack.c.h.b16 %v5486
      %v5671 = vunpack.c.l.b16 %v5487
      %v5672 = vunpack.c.h.b16 %v5487
      %v5673 = vunpack.c.l.b16 %v5488
      %v5674 = vunpack.c.h.b16 %v5488
      %v5675 = vunpack.c.l.b16 %v5489
      %v5676 = vunpack.c.h.b16 %v5489
      %v5677 = vunpack.c.l.b16 %v5490
      %v5678 = vunpack.c.h.b16 %v5490
      %v5679 = vunpack.c.l.b16 %v5491
      %v5680 = vunpack.c.h.b16 %v5491
      %v5681 = vunpack.c.l.b16 %v5492
      %v5682 = vunpack.c.h.b16 %v5492
      %v5683 = vunpack.c.l.b16 %v5493
      %v5684 = vunpack.c.h.b16 %v5493
      %v5685 = vunpack.c.l.b16 %v5494
      %v5686 = vunpack.c.h.b16 %v5494
      %v5687 = vunpack.c.l.b16 %v5495
      %v5688 = vunpack.c.h.b16 %v5495
      %v5689 = vunpack.c.l.b16 %v5496
      %v5690 = vunpack.c.h.b16 %v5496
      %v5691 = vunpack.c.l.b16 %v5497
      %v5692 = vunpack.c.h.b16 %v5497
      %v5693 = vunpack.c.l.b16 %v5498
      %v5694 = vunpack.c.h.b16 %v5498
      %v5695 = vunpack.c.l.b16 %v5499
      %v5696 = vunpack.c.h.b16 %v5499
      %v5697 = vunpack.c.l.b16 %v5500
      %v5698 = vunpack.c.h.b16 %v5500
      %v5699 = vunpack.c.l.b16 %v5501
      %v5700 = vunpack.c.h.b16 %v5501
      %v5701 = vunpack.c.l.b16 %v5502
      %v5702 = vunpack.c.h.b16 %v5502
      %v5703 = vunpack.c.l.b16 %v5503
      %v5704 = vunpack.c.h.b16 %v5503
      %v5705 = vunpack.c.l.b16 %v5504
      %v5706 = vunpack.c.h.b16 %v5504
      %v5707 = vunpack.c.l.b16 %v5505
      %v5708 = vunpack.c.h.b16 %v5505
      %v5709 = vunpack.c.l.b16 %v5506
      %v5710 = vunpack.c.h.b16 %v5506
      %v5711 = vunpack.c.l.b16 %v5507
      %v5712 = vunpack.c.h.b16 %v5507
      %v5713 = vunpack.c.l.b16 %v5508
      %v5714 = vunpack.c.h.b16 %v5508
      %v5715 = vunpack.c.l.b16 %v5509
      %v5716 = vunpack.c.h.b16 %v5509
      %v5717 = vunpack.c.l.b16 %v5510
      %v5718 = vunpack.c.h.b16 %v5510
      %v5719 = vunpack.c.l.b16 %v5511
      %v5720 = vunpack.c.h.b16 %v5511
      %v5721 = vunpack.c.l.b16 %v5512
      %v5722 = vunpack.c.h.b16 %v5512
      %v5723 = vunpack.c.l.b16 %v5513
      %v5724 = vunpack.c.h.b16 %v5513
      %v5725 = vunpack.c.l.b16 %v5514
      %v5726 = vunpack.c.h.b16 %v5514
      %v5727 = vunpack.c.l.b16 %v5515
      %v5728 = vunpack.c.h.b16 %v5515
      %v5729 = vunpack.c.l.b16 %v5516
      %v5730 = vunpack.c.h.b16 %v5516
      %v5731 = vunpack.c.l.b16 %v5517
      %v5732 = vunpack.c.h.b16 %v5517
      %v5733 = vunpack.c.l.b16 %v5518
      %v5734 = vunpack.c.h.b16 %v5518
      %v5735 = vunpack.c.l.b16 %v5519
      %v5736 = vunpack.c.h.b16 %v5519
      %v5737 = vunpack.c.l.b16 %v5520
      %v5738 = vunpack.c.h.b16 %v5520
      %v5739 = vunpack.c.l.b16 %v5521
      %v5740 = vunpack.c.h.b16 %v5521
      %v5741 = vunpack.c.l.b16 %v5522
      %v5742 = vunpack.c.h.b16 %v5522
      %v5743 = vunpack.c.l.b16 %v5523
      %v5744 = vunpack.c.h.b16 %v5523
      %v5745 = vunpack.c.l.b16 %v5524
      %v5746 = vunpack.c.h.b16 %v5524
      %v5747 = vunpack.c.l.b16 %v5525
      %v5748 = vunpack.c.h.b16 %v5525
      %v5749 = vunpack.c.l.b16 %v5526
      %v5750 = vunpack.c.h.b16 %v5526
      %v5751 = vunpack.c.l.b16 %v5527
      %v5752 = vunpack.c.h.b16 %v5527
      %v5753 = vunpack.c.l.b16 %v5528
      %v5754 = vunpack.c.h.b16 %v5528
      %v5755 = vunpack.c.l.b16 %v5529
      %v5756 = vunpack.c.h.b16 %v5529
      %v5757 = vunpack.c.l.b16 %v5530
      %v5758 = vunpack.c.h.b16 %v5530
      %v5759 = vunpack.c.l.b16 %v5531
      %v5760 = vunpack.c.h.b16 %v5531
      %v5761 = vunpack.c.l.b16 %v5532
      %v5762 = vunpack.c.h.b16 %v5532
      %v5763 = vunpack.c.l.b16 %v5533
      %v5764 = vunpack.c.h.b16 %v5533
      %v5765 = vunpack.c.l.b16 %v5534
      %v5766 = vunpack.c.h.b16 %v5534
      %v5767 = vunpack.c.l.b16 %v5535
      %v5768 = vunpack.c.h.b16 %v5535
      %v5769 = vunpack.c.l.b16 %v5536
      %v5770 = vunpack.c.h.b16 %v5536
      %v5771 = vpack.c.b16 %v5651, %v5643
      %v5772 = vpack.c.b16 %v5652, %v5644
      %v5773 = vpack.c.b16 %v5653, %v5645
      %v5774 = vpack.c.b16 %v5654, %v5646
      %v5775 = vpack.c.b16 %v5655, %v5647
      %v5776 = vpack.c.b16 %v5656, %v5648
      %v5777 = vpack.c.b16 %v5657, %v5649
      %v5778 = vpack.c.b16 %v5658, %v5650
      %v5779 = vpack.c.b16 %v5667, %v5659
      %v5780 = vpack.c.b16 %v5668, %v5660
      %v5781 = vpack.c.b16 %v5669, %v5661
      %v5782 = vpack.c.b16 %v5670, %v5662
      %v5783 = vpack.c.b16 %v5671, %v5663
      %v5784 = vpack.c.b16 %v5672, %v5664
      %v5785 = vpack.c.b16 %v5673, %v5665
      %v5786 = vpack.c.b16 %v5674, %v5666
      %v5787 = vpack.c.b16 %v5683, %v5675
      %v5788 = vpack.c.b16 %v5684, %v5676
      %v5789 = vpack.c.b16 %v5685, %v5677
      %v5790 = vpack.c.b16 %v5686, %v5678
      %v5791 = vpack.c.b16 %v5687, %v5679
      %v5792 = vpack.c.b16 %v5688, %v5680
      %v5793 = vpack.c.b16 %v5689, %v5681
      %v5794 = vpack.c.b16 %v5690, %v5682
      %v5795 = vpack.c.b16 %v5699, %v5691
      %v5796 = vpack.c.b16 %v5700, %v5692
      %v5797 = vpack.c.b16 %v5701, %v5693
      %v5798 = vpack.c.b16 %v5702, %v5694
      %v5799 = vpack.c.b16 %v5703, %v5695
      %v5800 = vpack.c.b16 %v5704, %v5696
      %v5801 = vpack.c.b16 %v5705, %v5697
      %v5802 = vpack.c.b16 %v5706, %v5698
      %v5803 = vpack.c.b16 %v5715, %v5707
      %v5804 = vpack.c.b16 %v5716, %v5708
      %v5805 = vpack.c.b16 %v5717, %v5709
      %v5806 = vpack.c.b16 %v5718, %v5710
      %v5807 = vpack.c.b16 %v5719, %v5711
      %v5808 = vpack.c.b16 %v5720, %v5712
      %v5809 = vpack.c.b16 %v5721, %v5713
      %v5810 = vpack.c.b16 %v5722, %v5714
      %v5811 = vpack.c.b16 %v5731, %v5723
      %v5812 = vpack.c.b16 %v5732, %v5724
      %v5813 = vpack.c.b16 %v5733, %v5725
      %v5814 = vpack.c.b16 %v5734, %v5726
      %v5815 = vpack.c.b16 %v5735, %v5727
      %v5816 = vpack.c.b16 %v5736, %v5728
      %v5817 = vpack.c.b16 %v5737, %v5729
      %v5818 = vpack.c.b16 %v5738, %v5730
      %v5819 = vpack.c.b16 %v5747, %v5739
      %v5820 = vpack.c.b16 %v5748, %v5740
      %v5821 = vpack.c.b16 %v5749, %v5741
      %v5822 = vpack.c.b16 %v5750, %v5742
      %v5823 = vpack.c.b16 %v5751, %v5743
      %v5824 = vpack.c.b16 %v5752, %v5744
      %v5825 = vpack.c.b16 %v5753, %v5745
      %v5826 = vpack.c.b16 %v5754, %v5746
      %v5827 = vpack.c.b16 %v5763, %v5755
      %v5828 = vpack.c.b16 %v5764, %v5756
      %v5829 = vpack.c.b16 %v5765, %v5757
      %v5830 = vpack.c.b16 %v5766, %v5758
      %v5831 = vpack.c.b16 %v5767, %v5759
      %v5832 = vpack.c.b16 %v5768, %v5760
      %v5833 = vpack.c.b16 %v5769, %v5761
      %v5834 = vpack.c.b16 %v5770, %v5762
      %5899 = vmatprep.subr.bf16.mxu0 %v5772
      %5900 = vmatpush1.bf16.msra.mxu0 %v5771
      %5901 = vmatprep.subr.bf16.mxu0 %v5780
      %5902 = vmatpush1.bf16.msra.mxu0 %v5779
      %5903 = vmatprep.subr.bf16.mxu0 %v5788
      %5904 = vmatpush1.bf16.msra.mxu0 %v5787
      %5905 = vmatprep.subr.bf16.mxu0 %v5796
      %5906 = vmatpush1.bf16.msra.mxu0 %v5795
      %5907 = vmatprep.subr.bf16.mxu0 %v5804
      %5908 = vmatpush1.bf16.msra.mxu0 %v5803
      %5909 = vmatprep.subr.bf16.mxu0 %v5812
      %5910 = vmatpush1.bf16.msra.mxu0 %v5811
      %5911 = vmatprep.subr.bf16.mxu0 %v5820
      %5912 = vmatpush1.bf16.msra.mxu0 %v5819
      %5913 = vmatprep.subr.bf16.mxu0 %v5828
      %5914 = vmatpush1.bf16.msra.mxu0 %v5827
      %5915 = vmatprep.subr.bf16.mxu0 0
      %5916 = vmatpush1.bf16.msra.mxu0 0
      %5917 = vmatprep.subr.bf16.mxu0 0
      %5918 = vmatpush1.bf16.msra.mxu0 0
      %5919 = vmatprep.subr.bf16.mxu0 0
      %5920 = vmatpush1.bf16.msra.mxu0 0
      %5921 = vmatprep.subr.bf16.mxu0 0
      %5922 = vmatpush1.bf16.msra.mxu0 0
      %5923 = vmatprep.subr.bf16.mxu0 0
      %5924 = vmatpush1.bf16.msra.mxu0 0
      %5925 = vmatprep.subr.bf16.mxu0 0
      %5926 = vmatpush1.bf16.msra.mxu0 0
      %5927 = vmatprep.subr.bf16.mxu0 0
      %5928 = vmatpush1.bf16.msra.mxu0 0
      %5929 = vmatprep.subr.bf16.mxu0 0
      %5930 = vmatpush1.bf16.msra.mxu0 0
      %5931 = vmatprep.mubr.bf16.mxu0 0
      %5932 = vmatmul.mubr.bf16.gmra.mrb[0].mxu0 %v5472
      %v5933 = vpop.f32.mrb[0].mxu0
      %v5934 = vadd.f32 %v5542, %v5933
      %v5935 = vpop.f32.mrb[0].mxu0
      %v5936 = vadd.f32 %v5546, %v5935
      %v5937 = vpop.f32.mrb[0].mxu0
      %v5938 = vpop.f32.mrb[0].mxu0
      %5939 = vdwg.mxu0
      %5940 = vmatprep.subr.bf16.mxu0 %v5774
      %5941 = vmatpush1.bf16.msra.mxu0 %v5773
      %5942 = vmatprep.subr.bf16.mxu0 %v5782
      %5943 = vmatpush1.bf16.msra.mxu0 %v5781
      %5944 = vmatprep.subr.bf16.mxu0 %v5790
      %5945 = vmatpush1.bf16.msra.mxu0 %v5789
      %5946 = vmatprep.subr.bf16.mxu0 %v5798
      %5947 = vmatpush1.bf16.msra.mxu0 %v5797
      %5948 = vmatprep.subr.bf16.mxu0 %v5806
      %5949 = vmatpush1.bf16.msra.mxu0 %v5805
      %5950 = vmatprep.subr.bf16.mxu0 %v5814
      %5951 = vmatpush1.bf16.msra.mxu0 %v5813
      %5952 = vmatprep.subr.bf16.mxu0 %v5822
      %5953 = vmatpush1.bf16.msra.mxu0 %v5821
      %5954 = vmatprep.subr.bf16.mxu0 %v5830
      %5955 = vmatpush1.bf16.msra.mxu0 %v5829
      %5956 = vmatprep.subr.bf16.mxu0 0
      %5957 = vmatpush1.bf16.msra.mxu0 0
      %5958 = vmatprep.subr.bf16.mxu0 0
      %5959 = vmatpush1.bf16.msra.mxu0 0
      %5960 = vmatprep.subr.bf16.mxu0 0
      %5961 = vmatpush1.bf16.msra.mxu0 0
      %5962 = vmatprep.subr.bf16.mxu0 0
      %5963 = vmatpush1.bf16.msra.mxu0 0
      %5964 = vmatprep.subr.bf16.mxu0 0
      %5965 = vmatpush1.bf16.msra.mxu0 0
      %5966 = vmatprep.subr.bf16.mxu0 0
      %5967 = vmatpush1.bf16.msra.mxu0 0
      %5968 = vmatprep.subr.bf16.mxu0 0
      %5969 = vmatpush1.bf16.msra.mxu0 0
      %5970 = vmatprep.subr.bf16.mxu0 0
      %5971 = vmatpush1.bf16.msra.mxu0 0
      %5972 = vmatprep.mubr.bf16.mxu0 0
      %5973 = vmatmul.mubr.bf16.gmra.mrb[0].mxu0 %v5472
      %v5974 = vpop.f32.mrb[0].mxu0
      %v5975 = vadd.f32 %v5550, %v5974
      %v5976 = vpop.f32.mrb[0].mxu0
      %v5977 = vadd.f32 %v5554, %v5976
      %v5978 = vpop.f32.mrb[0].mxu0
      %v5979 = vpop.f32.mrb[0].mxu0
      %5980 = vdwg.mxu0
      %5981 = vmatprep.subr.bf16.mxu0 %v5776
      %5982 = vmatpush1.bf16.msra.mxu0 %v5775
      %5983 = vmatprep.subr.bf16.mxu0 %v5784
      %5984 = vmatpush1.bf16.msra.mxu0 %v5783
      %5985 = vmatprep.subr.bf16.mxu0 %v5792
      %5986 = vmatpush1.bf16.msra.mxu0 %v5791
      %5987 = vmatprep.subr.bf16.mxu0 %v5800
      %5988 = vmatpush1.bf16.msra.mxu0 %v5799
      %5989 = vmatprep.subr.bf16.mxu0 %v5808
      %5990 = vmatpush1.bf16.msra.mxu0 %v5807
      %5991 = vmatprep.subr.bf16.mxu0 %v5816
      %5992 = vmatpush1.bf16.msra.mxu0 %v5815
      %5993 = vmatprep.subr.bf16.mxu0 %v5824
      %5994 = vmatpush1.bf16.msra.mxu0 %v5823
      %5995 = vmatprep.subr.bf16.mxu0 %v5832
      %5996 = vmatpush1.bf16.msra.mxu0 %v5831
      %5997 = vmatprep.subr.bf16.mxu0 0
      %5998 = vmatpush1.bf16.msra.mxu0 0
      %5999 = vmatprep.subr.bf16.mxu0 0
      %6000 = vmatpush1.bf16.msra.mxu0 0
      %6001 = vmatprep.subr.bf16.mxu0 0
      %6002 = vmatpush1.bf16.msra.mxu0 0
      %6003 = vmatprep.subr.bf16.mxu0 0
      %6004 = vmatpush1.bf16.msra.mxu0 0
      %6005 = vmatprep.subr.bf16.mxu0 0
      %6006 = vmatpush1.bf16.msra.mxu0 0
      %6007 = vmatprep.subr.bf16.mxu0 0
      %6008 = vmatpush1.bf16.msra.mxu0 0
      %6009 = vmatprep.subr.bf16.mxu0 0
      %6010 = vmatpush1.bf16.msra.mxu0 0
      %6011 = vmatprep.subr.bf16.mxu0 0
      %6012 = vmatpush1.bf16.msra.mxu0 0
      %6013 = vmatprep.mubr.bf16.mxu0 0
      %6014 = vmatmul.mubr.bf16.gmra.mrb[0].mxu0 %v5472
      %v6015 = vpop.f32.mrb[0].mxu0
      %v6016 = vadd.f32 %v5558, %v6015
      %v6017 = vpop.f32.mrb[0].mxu0
      %v6018 = vadd.f32 %v5562, %v6017
      %v6019 = vpop.f32.mrb[0].mxu0
      %v6020 = vpop.f32.mrb[0].mxu0
      %6021 = vdwg.mxu0
      %6022 = vmatprep.subr.bf16.mxu0 %v5778
      %6023 = vmatpush1.bf16.msra.mxu0 %v5777
      %6024 = vmatprep.subr.bf16.mxu0 %v5786
      %6025 = vmatpush1.bf16.msra.mxu0 %v5785
      %6026 = vmatprep.subr.bf16.mxu0 %v5794
      %6027 = vmatpush1.bf16.msra.mxu0 %v5793
      %6028 = vmatprep.subr.bf16.mxu0 %v5802
      %6029 = vmatpush1.bf16.msra.mxu0 %v5801
      %6030 = vmatprep.subr.bf16.mxu0 %v5810
      %6031 = vmatpush1.bf16.msra.mxu0 %v5809
      %6032 = vmatprep.subr.bf16.mxu0 %v5818
      %6033 = vmatpush1.bf16.msra.mxu0 %v5817
      %6034 = vmatprep.subr.bf16.mxu0 %v5826
      %6035 = vmatpush1.bf16.msra.mxu0 %v5825
      %6036 = vmatprep.subr.bf16.mxu0 %v5834
      %6037 = vmatpush1.bf16.msra.mxu0 %v5833
      %6038 = vmatprep.subr.bf16.mxu0 0
      %6039 = vmatpush1.bf16.msra.mxu0 0
      %6040 = vmatprep.subr.bf16.mxu0 0
      %6041 = vmatpush1.bf16.msra.mxu0 0
      %6042 = vmatprep.subr.bf16.mxu0 0
      %6043 = vmatpush1.bf16.msra.mxu0 0
      %6044 = vmatprep.subr.bf16.mxu0 0
      %6045 = vmatpush1.bf16.msra.mxu0 0
      %6046 = vmatprep.subr.bf16.mxu0 0
      %6047 = vmatpush1.bf16.msra.mxu0 0
      %6048 = vmatprep.subr.bf16.mxu0 0
      %6049 = vmatpush1.bf16.msra.mxu0 0
      %6050 = vmatprep.subr.bf16.mxu0 0
      %6051 = vmatpush1.bf16.msra.mxu0 0
      %6052 = vmatprep.subr.bf16.mxu0 0
      %6053 = vmatpush1.bf16.msra.mxu0 0
      %6054 = vmatprep.mubr.bf16.mxu0 0
      %6055 = vmatmul.mubr.bf16.gmra.mrb[0].mxu0 %v5472
      %v6056 = vpop.f32.mrb[0].mxu0
      %v6057 = vadd.f32 %v5566, %v6056
      %v6058 = vpop.f32.mrb[0].mxu0
      %v6059 = vadd.f32 %v5570, %v6058
      %v6060 = vpop.f32.mrb[0].mxu0
      %v6061 = vpop.f32.mrb[0].mxu0
      %6062 = vdwg.mxu0
      %v6063 = vmax.f32 %v5934, 0.0
      %v6064 = vmax.f32 %v5936, 0.0
      %v6065 = vmax.f32 %v5975, 0.0
      %v6066 = vmax.f32 %v5977, 0.0
      %v6067 = vmax.f32 %v6016, 0.0
      %v6068 = vmax.f32 %v6018, 0.0
      %v6069 = vmax.f32 %v6057, 0.0
      %v6070 = vmax.f32 %v6059, 0.0
      %v6071 = vpack.c.bf16 %v6063, %v6063
      %v6072 = vpack.c.bf16 %v6064, %v6064
      %v6073 = vpack.c.bf16 %v6065, %v6065
      %v6074 = vpack.c.bf16 %v6066, %v6066
      %v6075 = vpack.c.bf16 %v6067, %v6067
      %v6076 = vpack.c.bf16 %v6068, %v6068
      %v6077 = vpack.c.bf16 %v6069, %v6069
      %v6078 = vpack.c.bf16 %v6070, %v6070
      %v6079 = vld [vmem:[%s16] sm:$0xf]
      %v6080 = vld [vmem:[%s16 + $0x4] sm:$0xf]
      %v6081 = vld [vmem:[%s16 + $0x8] sm:$0xf]
      %v6082 = vld [vmem:[%s16 + $0xc] sm:$0xf]
      %v6083 = vld [vmem:[%s16 + $0x10] sm:$0xf]
      %v6084 = vld [vmem:[%s16 + $0x14] sm:$0xf]
      %v6085 = vld [vmem:[%s16 + $0x18] sm:$0xf]
      %v6086 = vld [vmem:[%s16 + $0x1c] sm:$0xf]
      %v6087 = vld [vmem:[%s16 + $0x20] sm:$0xf]
      %v6088 = vld [vmem:[%s16 + $0x24] sm:$0xf]
      %v6089 = vld [vmem:[%s16 + $0x28] sm:$0xf]
      %v6090 = vld [vmem:[%s16 + $0x2c] sm:$0xf]
      %v6091 = vld [vmem:[%s16 + $0x30] sm:$0xf]
      %v6092 = vld [vmem:[%s16 + $0x34] sm:$0xf]
      %v6093 = vld [vmem:[%s16 + $0x38] sm:$0xf]
      %v6094 = vld [vmem:[%s16 + $0x3c] sm:$0xf]
      %v6095 = vld [vmem:[%s16 + $0x40] sm:$0xf]
      %v6096 = vld [vmem:[%s16 + $0x44] sm:$0xf]
      %v6097 = vld [vmem:[%s16 + $0x48] sm:$0xf]
      %v6098 = vld [vmem:[%s16 + $0x4c] sm:$0xf]
      %v6099 = vld [vmem:[%s16 + $0x50] sm:$0xf]
      %v6100 = vld [vmem:[%s16 + $0x54] sm:$0xf]
      %v6101 = vld [vmem:[%s16 + $0x58] sm:$0xf]
      %v6102 = vld [vmem:[%s16 + $0x5c] sm:$0xf]
      %v6103 = vld [vmem:[%s16 + $0x60] sm:$0xf]
      %v6104 = vld [vmem:[%s16 + $0x64] sm:$0xf]
      %v6105 = vld [vmem:[%s16 + $0x68] sm:$0xf]
      %v6106 = vld [vmem:[%s16 + $0x6c] sm:$0xf]
      %v6107 = vld [vmem:[%s16 + $0x70] sm:$0xf]
      %v6108 = vld [vmem:[%s16 + $0x74] sm:$0xf]
      %v6109 = vld [vmem:[%s16 + $0x78] sm:$0xf]
      %v6110 = vld [vmem:[%s16 + $0x7c] sm:$0xf]
      %v6111 = vld [vmem:[%s16 + $0x80] sm:$0xf]
      %v6112 = vld [vmem:[%s16 + $0x84] sm:$0xf]
      %v6113 = vld [vmem:[%s16 + $0x88] sm:$0xf]
      %v6114 = vld [vmem:[%s16 + $0x8c] sm:$0xf]
      %v6115 = vld [vmem:[%s16 + $0x90] sm:$0xf]
      %v6116 = vld [vmem:[%s16 + $0x94] sm:$0xf]
      %v6117 = vld [vmem:[%s16 + $0x98] sm:$0xf]
      %v6118 = vld [vmem:[%s16 + $0x9c] sm:$0xf]
      %v6119 = vld [vmem:[%s16 + $0xa0] sm:$0xf]
      %v6120 = vld [vmem:[%s16 + $0xa4] sm:$0xf]
      %v6121 = vld [vmem:[%s16 + $0xa8] sm:$0xf]
      %v6122 = vld [vmem:[%s16 + $0xac] sm:$0xf]
      %v6123 = vld [vmem:[%s16 + $0xb0] sm:$0xf]
      %v6124 = vld [vmem:[%s16 + $0xb4] sm:$0xf]
      %v6125 = vld [vmem:[%s16 + $0xb8] sm:$0xf]
      %v6126 = vld [vmem:[%s16 + $0xbc] sm:$0xf]
      %v6127 = vld [vmem:[%s16 + $0xc0] sm:$0xf]
      %v6128 = vld [vmem:[%s16 + $0xc4] sm:$0xf]
      %v6129 = vld [vmem:[%s16 + $0xc8] sm:$0xf]
      %v6130 = vld [vmem:[%s16 + $0xcc] sm:$0xf]
      %v6131 = vld [vmem:[%s16 + $0xd0] sm:$0xf]
      %v6132 = vld [vmem:[%s16 + $0xd4] sm:$0xf]
      %v6133 = vld [vmem:[%s16 + $0xd8] sm:$0xf]
      %v6134 = vld [vmem:[%s16 + $0xdc] sm:$0xf]
      %v6135 = vld [vmem:[%s16 + $0xe0] sm:$0xf]
      %v6136 = vld [vmem:[%s16 + $0xe4] sm:$0xf]
      %v6137 = vld [vmem:[%s16 + $0xe8] sm:$0xf]
      %v6138 = vld [vmem:[%s16 + $0xec] sm:$0xf]
      %v6139 = vld [vmem:[%s16 + $0xf0] sm:$0xf]
      %v6140 = vld [vmem:[%s16 + $0xf4] sm:$0xf]
      %v6141 = vld [vmem:[%s16 + $0xf8] sm:$0xf]
      %v6142 = vld [vmem:[%s16 + $0xfc] sm:$0xf]
      %v6143 = vld [vmem:[%s16 + $0x100] sm:$0xf]
      %v6144 = vld [vmem:[%s16 + $0x104] sm:$0xf]
      %v6145 = vld [vmem:[%s16 + $0x108] sm:$0xf]
      %v6146 = vld [vmem:[%s16 + $0x10c] sm:$0xf]
      %v6147 = vld [vmem:[%s16 + $0x110] sm:$0xf]
      %v6148 = vld [vmem:[%s16 + $0x114] sm:$0xf]
      %v6149 = vld [vmem:[%s16 + $0x118] sm:$0xf]
      %v6150 = vld [vmem:[%s16 + $0x11c] sm:$0xf]
      %v6151 = vld [vmem:[%s16 + $0x120] sm:$0xf]
      %v6152 = vld [vmem:[%s16 + $0x124] sm:$0xf]
      %v6153 = vld [vmem:[%s16 + $0x128] sm:$0xf]
      %v6154 = vld [vmem:[%s16 + $0x12c] sm:$0xf]
      %v6155 = vld [vmem:[%s16 + $0x130] sm:$0xf]
      %v6156 = vld [vmem:[%s16 + $0x134] sm:$0xf]
      %v6157 = vld [vmem:[%s16 + $0x138] sm:$0xf]
      %v6158 = vld [vmem:[%s16 + $0x13c] sm:$0xf]
      %v6159 = vld [vmem:[%s16 + $0x140] sm:$0xf]
      %v6160 = vld [vmem:[%s16 + $0x144] sm:$0xf]
      %v6161 = vld [vmem:[%s16 + $0x148] sm:$0xf]
      %v6162 = vld [vmem:[%s16 + $0x14c] sm:$0xf]
      %v6163 = vld [vmem:[%s16 + $0x150] sm:$0xf]
      %v6164 = vld [vmem:[%s16 + $0x154] sm:$0xf]
      %v6165 = vld [vmem:[%s16 + $0x158] sm:$0xf]
      %v6166 = vld [vmem:[%s16 + $0x15c] sm:$0xf]
      %v6167 = vld [vmem:[%s16 + $0x160] sm:$0xf]
      %v6168 = vld [vmem:[%s16 + $0x164] sm:$0xf]
      %v6169 = vld [vmem:[%s16 + $0x168] sm:$0xf]
      %v6170 = vld [vmem:[%s16 + $0x16c] sm:$0xf]
      %v6171 = vld [vmem:[%s16 + $0x170] sm:$0xf]
      %v6172 = vld [vmem:[%s16 + $0x174] sm:$0xf]
      %v6173 = vld [vmem:[%s16 + $0x178] sm:$0xf]
      %v6174 = vld [vmem:[%s16 + $0x17c] sm:$0xf]
      %v6175 = vld [vmem:[%s16 + $0x180] sm:$0xf]
      %v6176 = vld [vmem:[%s16 + $0x184] sm:$0xf]
      %v6177 = vld [vmem:[%s16 + $0x188] sm:$0xf]
      %v6178 = vld [vmem:[%s16 + $0x18c] sm:$0xf]
      %v6179 = vld [vmem:[%s16 + $0x190] sm:$0xf]
      %v6180 = vld [vmem:[%s16 + $0x194] sm:$0xf]
      %v6181 = vld [vmem:[%s16 + $0x198] sm:$0xf]
      %v6182 = vld [vmem:[%s16 + $0x19c] sm:$0xf]
      %v6183 = vld [vmem:[%s16 + $0x1a0] sm:$0xf]
      %v6184 = vld [vmem:[%s16 + $0x1a4] sm:$0xf]
      %v6185 = vld [vmem:[%s16 + $0x1a8] sm:$0xf]
      %v6186 = vld [vmem:[%s16 + $0x1ac] sm:$0xf]
      %v6187 = vld [vmem:[%s16 + $0x1b0] sm:$0xf]
      %v6188 = vld [vmem:[%s16 + $0x1b4] sm:$0xf]
      %v6189 = vld [vmem:[%s16 + $0x1b8] sm:$0xf]
      %v6190 = vld [vmem:[%s16 + $0x1bc] sm:$0xf]
      %v6191 = vld [vmem:[%s16 + $0x1c0] sm:$0xf]
      %v6192 = vld [vmem:[%s16 + $0x1c4] sm:$0xf]
      %v6193 = vld [vmem:[%s16 + $0x1c8] sm:$0xf]
      %v6194 = vld [vmem:[%s16 + $0x1cc] sm:$0xf]
      %v6195 = vld [vmem:[%s16 + $0x1d0] sm:$0xf]
      %v6196 = vld [vmem:[%s16 + $0x1d4] sm:$0xf]
      %v6197 = vld [vmem:[%s16 + $0x1d8] sm:$0xf]
      %v6198 = vld [vmem:[%s16 + $0x1dc] sm:$0xf]
      %v6199 = vld [vmem:[%s16 + $0x1e0] sm:$0xf]
      %v6200 = vld [vmem:[%s16 + $0x1e4] sm:$0xf]
      %v6201 = vld [vmem:[%s16 + $0x1e8] sm:$0xf]
      %v6202 = vld [vmem:[%s16 + $0x1ec] sm:$0xf]
      %v6203 = vld [vmem:[%s16 + $0x1f0] sm:$0xf]
      %v6204 = vld [vmem:[%s16 + $0x1f4] sm:$0xf]
      %v6205 = vld [vmem:[%s16 + $0x1f8] sm:$0xf]
      %v6206 = vld [vmem:[%s16 + $0x1fc] sm:$0xf]
      %v6207 = vld [vmem:[%s17] sm:$0x1]
      %v6209 = vlaneseq
      %v6210 = vshrl.u32 %v6209, 7
      %v6211 = vsub.s32 0, %v6210
      %v6212 = vrot.slane %v6207, %v6211
      %v6342 = vunpack.c.l.b16 %v6079
      %v6343 = vunpack.c.l.b16 %v6080
      %v6344 = vunpack.c.l.b16 %v6081
      %v6345 = vunpack.c.l.b16 %v6082
      %v6346 = vunpack.c.l.b16 %v6083
      %v6347 = vunpack.c.l.b16 %v6084
      %v6348 = vunpack.c.l.b16 %v6085
      %v6349 = vunpack.c.l.b16 %v6086
      %v6350 = vunpack.c.l.b16 %v6087
      %v6351 = vunpack.c.l.b16 %v6088
      %v6352 = vunpack.c.l.b16 %v6089
      %v6353 = vunpack.c.l.b16 %v6090
      %v6354 = vunpack.c.l.b16 %v6091
      %v6355 = vunpack.c.l.b16 %v6092
      %v6356 = vunpack.c.l.b16 %v6093
      %v6357 = vunpack.c.l.b16 %v6094
      %v6358 = vunpack.c.l.b16 %v6095
      %v6359 = vunpack.c.l.b16 %v6096
      %v6360 = vunpack.c.l.b16 %v6097
      %v6361 = vunpack.c.l.b16 %v6098
      %v6362 = vunpack.c.l.b16 %v6099
      %v6363 = vunpack.c.l.b16 %v6100
      %v6364 = vunpack.c.l.b16 %v6101
      %v6365 = vunpack.c.l.b16 %v6102
      %v6366 = vunpack.c.l.b16 %v6103
      %v6367 = vunpack.c.l.b16 %v6104
      %v6368 = vunpack.c.l.b16 %v6105
      %v6369 = vunpack.c.l.b16 %v6106
      %v6370 = vunpack.c.l.b16 %v6107
      %v6371 = vunpack.c.l.b16 %v6108
      %v6372 = vunpack.c.l.b16 %v6109
      %v6373 = vunpack.c.l.b16 %v6110
      %v6374 = vunpack.c.l.b16 %v6111
      %v6375 = vunpack.c.l.b16 %v6112
      %v6376 = vunpack.c.l.b16 %v6113
      %v6377 = vunpack.c.l.b16 %v6114
      %v6378 = vunpack.c.l.b16 %v6115
      %v6379 = vunpack.c.l.b16 %v6116
      %v6380 = vunpack.c.l.b16 %v6117
      %v6381 = vunpack.c.l.b16 %v6118
      %v6382 = vunpack.c.l.b16 %v6119
      %v6383 = vunpack.c.l.b16 %v6120
      %v6384 = vunpack.c.l.b16 %v6121
      %v6385 = vunpack.c.l.b16 %v6122
      %v6386 = vunpack.c.l.b16 %v6123
      %v6387 = vunpack.c.l.b16 %v6124
      %v6388 = vunpack.c.l.b16 %v6125
      %v6389 = vunpack.c.l.b16 %v6126
      %v6390 = vunpack.c.l.b16 %v6127
      %v6391 = vunpack.c.l.b16 %v6128
      %v6392 = vunpack.c.l.b16 %v6129
      %v6393 = vunpack.c.l.b16 %v6130
      %v6394 = vunpack.c.l.b16 %v6131
      %v6395 = vunpack.c.l.b16 %v6132
      %v6396 = vunpack.c.l.b16 %v6133
      %v6397 = vunpack.c.l.b16 %v6134
      %v6398 = vunpack.c.l.b16 %v6135
      %v6399 = vunpack.c.l.b16 %v6136
      %v6400 = vunpack.c.l.b16 %v6137
      %v6401 = vunpack.c.l.b16 %v6138
      %v6402 = vunpack.c.l.b16 %v6139
      %v6403 = vunpack.c.l.b16 %v6140
      %v6404 = vunpack.c.l.b16 %v6141
      %v6405 = vunpack.c.l.b16 %v6142
      %v6406 = vunpack.c.l.b16 %v6143
      %v6407 = vunpack.c.l.b16 %v6144
      %v6408 = vunpack.c.l.b16 %v6145
      %v6409 = vunpack.c.l.b16 %v6146
      %v6410 = vunpack.c.l.b16 %v6147
      %v6411 = vunpack.c.l.b16 %v6148
      %v6412 = vunpack.c.l.b16 %v6149
      %v6413 = vunpack.c.l.b16 %v6150
      %v6414 = vunpack.c.l.b16 %v6151
      %v6415 = vunpack.c.l.b16 %v6152
      %v6416 = vunpack.c.l.b16 %v6153
      %v6417 = vunpack.c.l.b16 %v6154
      %v6418 = vunpack.c.l.b16 %v6155
      %v6419 = vunpack.c.l.b16 %v6156
      %v6420 = vunpack.c.l.b16 %v6157
      %v6421 = vunpack.c.l.b16 %v6158
      %v6422 = vunpack.c.l.b16 %v6159
      %v6423 = vunpack.c.l.b16 %v6160
      %v6424 = vunpack.c.l.b16 %v6161
      %v6425 = vunpack.c.l.b16 %v6162
      %v6426 = vunpack.c.l.b16 %v6163
      %v6427 = vunpack.c.l.b16 %v6164
      %v6428 = vunpack.c.l.b16 %v6165
      %v6429 = vunpack.c.l.b16 %v6166
      %v6430 = vunpack.c.l.b16 %v6167
      %v6431 = vunpack.c.l.b16 %v6168
      %v6432 = vunpack.c.l.b16 %v6169
      %v6433 = vunpack.c.l.b16 %v6170
      %v6434 = vunpack.c.l.b16 %v6171
      %v6435 = vunpack.c.l.b16 %v6172
      %v6436 = vunpack.c.l.b16 %v6173
      %v6437 = vunpack.c.l.b16 %v6174
      %v6438 = vunpack.c.l.b16 %v6175
      %v6439 = vunpack.c.l.b16 %v6176
      %v6440 = vunpack.c.l.b16 %v6177
      %v6441 = vunpack.c.l.b16 %v6178
      %v6442 = vunpack.c.l.b16 %v6179
      %v6443 = vunpack.c.l.b16 %v6180
      %v6444 = vunpack.c.l.b16 %v6181
      %v6445 = vunpack.c.l.b16 %v6182
      %v6446 = vunpack.c.l.b16 %v6183
      %v6447 = vunpack.c.l.b16 %v6184
      %v6448 = vunpack.c.l.b16 %v6185
      %v6449 = vunpack.c.l.b16 %v6186
      %v6450 = vunpack.c.l.b16 %v6187
      %v6451 = vunpack.c.l.b16 %v6188
      %v6452 = vunpack.c.l.b16 %v6189
      %v6453 = vunpack.c.l.b16 %v6190
      %v6454 = vunpack.c.l.b16 %v6191
      %v6455 = vunpack.c.l.b16 %v6192
      %v6456 = vunpack.c.l.b16 %v6193
      %v6457 = vunpack.c.l.b16 %v6194
      %v6458 = vunpack.c.l.b16 %v6195
      %v6459 = vunpack.c.l.b16 %v6196
      %v6460 = vunpack.c.l.b16 %v6197
      %v6461 = vunpack.c.l.b16 %v6198
      %v6462 = vunpack.c.l.b16 %v6199
      %v6463 = vunpack.c.l.b16 %v6200
      %v6464 = vunpack.c.l.b16 %v6201
      %v6465 = vunpack.c.l.b16 %v6202
      %v6466 = vunpack.c.l.b16 %v6203
      %v6467 = vunpack.c.l.b16 %v6204
      %v6468 = vunpack.c.l.b16 %v6205
      %v6469 = vunpack.c.l.b16 %v6206
      %v6470 = vpack.c.b16 %v6343, %v6342
      %v6471 = vpack.c.b16 %v6345, %v6344
      %v6472 = vpack.c.b16 %v6347, %v6346
      %v6473 = vpack.c.b16 %v6349, %v6348
      %v6474 = vpack.c.b16 %v6351, %v6350
      %v6475 = vpack.c.b16 %v6353, %v6352
      %v6476 = vpack.c.b16 %v6355, %v6354
      %v6477 = vpack.c.b16 %v6357, %v6356
      %v6478 = vpack.c.b16 %v6359, %v6358
      %v6479 = vpack.c.b16 %v6361, %v6360
      %v6480 = vpack.c.b16 %v6363, %v6362
      %v6481 = vpack.c.b16 %v6365, %v6364
      %v6482 = vpack.c.b16 %v6367, %v6366
      %v6483 = vpack.c.b16 %v6369, %v6368
      %v6484 = vpack.c.b16 %v6371, %v6370
      %v6485 = vpack.c.b16 %v6373, %v6372
      %v6486 = vpack.c.b16 %v6375, %v6374
      %v6487 = vpack.c.b16 %v6377, %v6376
      %v6488 = vpack.c.b16 %v6379, %v6378
      %v6489 = vpack.c.b16 %v6381, %v6380
      %v6490 = vpack.c.b16 %v6383, %v6382
      %v6491 = vpack.c.b16 %v6385, %v6384
      %v6492 = vpack.c.b16 %v6387, %v6386
      %v6493 = vpack.c.b16 %v6389, %v6388
      %v6494 = vpack.c.b16 %v6391, %v6390
      %v6495 = vpack.c.b16 %v6393, %v6392
      %v6496 = vpack.c.b16 %v6395, %v6394
      %v6497 = vpack.c.b16 %v6397, %v6396
      %v6498 = vpack.c.b16 %v6399, %v6398
      %v6499 = vpack.c.b16 %v6401, %v6400
      %v6500 = vpack.c.b16 %v6403, %v6402
      %v6501 = vpack.c.b16 %v6405, %v6404
      %v6502 = vpack.c.b16 %v6407, %v6406
      %v6503 = vpack.c.b16 %v6409, %v6408
      %v6504 = vpack.c.b16 %v6411, %v6410
      %v6505 = vpack.c.b16 %v6413, %v6412
      %v6506 = vpack.c.b16 %v6415, %v6414
      %v6507 = vpack.c.b16 %v6417, %v6416
      %v6508 = vpack.c.b16 %v6419, %v6418
      %v6509 = vpack.c.b16 %v6421, %v6420
      %v6510 = vpack.c.b16 %v6423, %v6422
      %v6511 = vpack.c.b16 %v6425, %v6424
      %v6512 = vpack.c.b16 %v6427, %v6426
      %v6513 = vpack.c.b16 %v6429, %v6428
      %v6514 = vpack.c.b16 %v6431, %v6430
      %v6515 = vpack.c.b16 %v6433, %v6432
      %v6516 = vpack.c.b16 %v6435, %v6434
      %v6517 = vpack.c.b16 %v6437, %v6436
      %v6518 = vpack.c.b16 %v6439, %v6438
      %v6519 = vpack.c.b16 %v6441, %v6440
      %v6520 = vpack.c.b16 %v6443, %v6442
      %v6521 = vpack.c.b16 %v6445, %v6444
      %v6522 = vpack.c.b16 %v6447, %v6446
      %v6523 = vpack.c.b16 %v6449, %v6448
      %v6524 = vpack.c.b16 %v6451, %v6450
      %v6525 = vpack.c.b16 %v6453, %v6452
      %v6526 = vpack.c.b16 %v6455, %v6454
      %v6527 = vpack.c.b16 %v6457, %v6456
      %v6528 = vpack.c.b16 %v6459, %v6458
      %v6529 = vpack.c.b16 %v6461, %v6460
      %v6530 = vpack.c.b16 %v6463, %v6462
      %v6531 = vpack.c.b16 %v6465, %v6464
      %v6532 = vpack.c.b16 %v6467, %v6466
      %v6533 = vpack.c.b16 %v6469, %v6468
      %6598 = vmatprep.subr.bf16.mxu0 0
      %6599 = vmatpush1.bf16.msra.mxu0 %v6470
      %6600 = vmatprep.subr.bf16.mxu0 0
      %6601 = vmatpush1.bf16.msra.mxu0 %v6471
      %6602 = vmatprep.subr.bf16.mxu0 0
      %6603 = vmatpush1.bf16.msra.mxu0 %v6472
      %6604 = vmatprep.subr.bf16.mxu0 0
      %6605 = vmatpush1.bf16.msra.mxu0 %v6473
      %6606 = vmatprep.subr.bf16.mxu0 0
      %6607 = vmatpush1.bf16.msra.mxu0 %v6474
      %6608 = vmatprep.subr.bf16.mxu0 0
      %6609 = vmatpush1.bf16.msra.mxu0 %v6475
      %6610 = vmatprep.subr.bf16.mxu0 0
      %6611 = vmatpush1.bf16.msra.mxu0 %v6476
      %6612 = vmatprep.subr.bf16.mxu0 0
      %6613 = vmatpush1.bf16.msra.mxu0 %v6477
      %6614 = vmatprep.subr.bf16.mxu0 0
      %6615 = vmatpush1.bf16.msra.mxu0 %v6478
      %6616 = vmatprep.subr.bf16.mxu0 0
      %6617 = vmatpush1.bf16.msra.mxu0 %v6479
      %6618 = vmatprep.subr.bf16.mxu0 0
      %6619 = vmatpush1.bf16.msra.mxu0 %v6480
      %6620 = vmatprep.subr.bf16.mxu0 0
      %6621 = vmatpush1.bf16.msra.mxu0 %v6481
      %6622 = vmatprep.subr.bf16.mxu0 0
      %6623 = vmatpush1.bf16.msra.mxu0 %v6482
      %6624 = vmatprep.subr.bf16.mxu0 0
      %6625 = vmatpush1.bf16.msra.mxu0 %v6483
      %6626 = vmatprep.subr.bf16.mxu0 0
      %6627 = vmatpush1.bf16.msra.mxu0 %v6484
      %6628 = vmatprep.subr.bf16.mxu0 0
      %6629 = vmatpush1.bf16.msra.mxu0 %v6485
      %6630 = vmatprep.mubr.bf16.mxu0 %v6072
      %6631 = vmatmul.mubr.bf16.gmra.mrb[0].mxu0 %v6071
      %v6632 = vpop.f32.mrb[0].mxu0
      %v6633 = vadd.f32 %v6212, %v6632
      %v6634 = vpop.f32.mrb[0].mxu0
      %v6635 = vpop.f32.mrb[0].mxu0
      %v6636 = vpop.f32.mrb[0].mxu0
      %6637 = vdwg.mxu0
      %6638 = vmatprep.subr.bf16.mxu0 0
      %6639 = vmatpush1.bf16.msra.mxu0 %v6486
      %6640 = vmatprep.subr.bf16.mxu0 0
      %6641 = vmatpush1.bf16.msra.mxu0 %v6487
      %6642 = vmatprep.subr.bf16.mxu0 0
      %6643 = vmatpush1.bf16.msra.mxu0 %v6488
      %6644 = vmatprep.subr.bf16.mxu0 0
      %6645 = vmatpush1.bf16.msra.mxu0 %v6489
      %6646 = vmatprep.subr.bf16.mxu0 0
      %6647 = vmatpush1.bf16.msra.mxu0 %v6490
      %6648 = vmatprep.subr.bf16.mxu0 0
      %6649 = vmatpush1.bf16.msra.mxu0 %v6491
      %6650 = vmatprep.subr.bf16.mxu0 0
      %6651 = vmatpush1.bf16.msra.mxu0 %v6492
      %6652 = vmatprep.subr.bf16.mxu0 0
      %6653 = vmatpush1.bf16.msra.mxu0 %v6493
      %6654 = vmatprep.subr.bf16.mxu0 0
      %6655 = vmatpush1.bf16.msra.mxu0 %v6494
      %6656 = vmatprep.subr.bf16.mxu0 0
      %6657 = vmatpush1.bf16.msra.mxu0 %v6495
      %6658 = vmatprep.subr.bf16.mxu0 0
      %6659 = vmatpush1.bf16.msra.mxu0 %v6496
      %6660 = vmatprep.subr.bf16.mxu0 0
      %6661 = vmatpush1.bf16.msra.mxu0 %v6497
      %6662 = vmatprep.subr.bf16.mxu0 0
      %6663 = vmatpush1.bf16.msra.mxu0 %v6498
      %6664 = vmatprep.subr.bf16.mxu0 0
      %6665 = vmatpush1.bf16.msra.mxu0 %v6499
      %6666 = vmatprep.subr.bf16.mxu0 0
      %6667 = vmatpush1.bf16.msra.mxu0 %v6500
      %6668 = vmatprep.subr.bf16.mxu0 0
      %6669 = vmatpush1.bf16.msra.mxu0 %v6501
      %6670 = vmatprep.mubr.bf16.mxu0 %v6074
      %6671 = vmatmul.mubr.bf16.gmra.mrb[0].mxu0 %v6073
      %v6672 = vpop.f32.mrb[0].mxu0
      %v6673 = vadd.f32 %v6633, %v6672
      %v6674 = vpop.f32.mrb[0].mxu0
      %v6675 = vpop.f32.mrb[0].mxu0
      %v6676 = vpop.f32.mrb[0].mxu0
      %6677 = vdwg.mxu0
      %6678 = vmatprep.subr.bf16.mxu0 0
      %6679 = vmatpush1.bf16.msra.mxu0 %v6502
      %6680 = vmatprep.subr.bf16.mxu0 0
      %6681 = vmatpush1.bf16.msra.mxu0 %v6503
      %6682 = vmatprep.subr.bf16.mxu0 0
      %6683 = vmatpush1.bf16.msra.mxu0 %v6504
      %6684 = vmatprep.subr.bf16.mxu0 0
      %6685 = vmatpush1.bf16.msra.mxu0 %v6505
      %6686 = vmatprep.subr.bf16.mxu0 0
      %6687 = vmatpush1.bf16.msra.mxu0 %v6506
      %6688 = vmatprep.subr.bf16.mxu0 0
      %6689 = vmatpush1.bf16.msra.mxu0 %v6507
      %6690 = vmatprep.subr.bf16.mxu0 0
      %6691 = vmatpush1.bf16.msra.mxu0 %v6508
      %6692 = vmatprep.subr.bf16.mxu0 0
      %6693 = vmatpush1.bf16.msra.mxu0 %v6509
      %6694 = vmatprep.subr.bf16.mxu0 0
      %6695 = vmatpush1.bf16.msra.mxu0 %v6510
      %6696 = vmatprep.subr.bf16.mxu0 0
      %6697 = vmatpush1.bf16.msra.mxu0 %v6511
      %6698 = vmatprep.subr.bf16.mxu0 0
      %6699 = vmatpush1.bf16.msra.mxu0 %v6512
      %6700 = vmatprep.subr.bf16.mxu0 0
      %6701 = vmatpush1.bf16.msra.mxu0 %v6513
      %6702 = vmatprep.subr.bf16.mxu0 0
      %6703 = vmatpush1.bf16.msra.mxu0 %v6514
      %6704 = vmatprep.subr.bf16.mxu0 0
      %6705 = vmatpush1.bf16.msra.mxu0 %v6515
      %6706 = vmatprep.subr.bf16.mxu0 0
      %6707 = vmatpush1.bf16.msra.mxu0 %v6516
      %6708 = vmatprep.subr.bf16.mxu0 0
      %6709 = vmatpush1.bf16.msra.mxu0 %v6517
      %6710 = vmatprep.mubr.bf16.mxu0 %v6076
      %6711 = vmatmul.mubr.bf16.gmra.mrb[0].mxu0 %v6075
      %v6712 = vpop.f32.mrb[0].mxu0
      %v6713 = vadd.f32 %v6673, %v6712
      %v6714 = vpop.f32.mrb[0].mxu0
      %v6715 = vpop.f32.mrb[0].mxu0
      %v6716 = vpop.f32.mrb[0].mxu0
      %6717 = vdwg.mxu0
      %6718 = vmatprep.subr.bf16.mxu0 0
      %6719 = vmatpush1.bf16.msra.mxu0 %v6518
      %6720 = vmatprep.subr.bf16.mxu0 0
      %6721 = vmatpush1.bf16.msra.mxu0 %v6519
      %6722 = vmatprep.subr.bf16.mxu0 0
      %6723 = vmatpush1.bf16.msra.mxu0 %v6520
      %6724 = vmatprep.subr.bf16.mxu0 0
      %6725 = vmatpush1.bf16.msra.mxu0 %v6521
      %6726 = vmatprep.subr.bf16.mxu0 0
      %6727 = vmatpush1.bf16.msra.mxu0 %v6522
      %6728 = vmatprep.subr.bf16.mxu0 0
      %6729 = vmatpush1.bf16.msra.mxu0 %v6523
      %6730 = vmatprep.subr.bf16.mxu0 0
      %6731 = vmatpush1.bf16.msra.mxu0 %v6524
      %6732 = vmatprep.subr.bf16.mxu0 0
      %6733 = vmatpush1.bf16.msra.mxu0 %v6525
      %6734 = vmatprep.subr.bf16.mxu0 0
      %6735 = vmatpush1.bf16.msra.mxu0 %v6526
      %6736 = vmatprep.subr.bf16.mxu0 0
      %6737 = vmatpush1.bf16.msra.mxu0 %v6527
      %6738 = vmatprep.subr.bf16.mxu0 0
      %6739 = vmatpush1.bf16.msra.mxu0 %v6528
      %6740 = vmatprep.subr.bf16.mxu0 0
      %6741 = vmatpush1.bf16.msra.mxu0 %v6529
      %6742 = vmatprep.subr.bf16.mxu0 0
      %6743 = vmatpush1.bf16.msra.mxu0 %v6530
      %6744 = vmatprep.subr.bf16.mxu0 0
      %6745 = vmatpush1.bf16.msra.mxu0 %v6531
      %6746 = vmatprep.subr.bf16.mxu0 0
      %6747 = vmatpush1.bf16.msra.mxu0 %v6532
      %6748 = vmatprep.subr.bf16.mxu0 0
      %6749 = vmatpush1.bf16.msra.mxu0 %v6533
      %6750 = vmatprep.mubr.bf16.mxu0 %v6078
      %6751 = vmatmul.mubr.bf16.gmra.mrb[0].mxu0 %v6077
      %v6752 = vpop.f32.mrb[0].mxu0
      %v6753 = vadd.f32 %v6713, %v6752
      %v6754 = vpop.f32.mrb[0].mxu0
      %v6755 = vpop.f32.mrb[0].mxu0
      %v6756 = vpop.f32.mrb[0].mxu0
      %6757 = vdwg.mxu0
      %6758 = vst [vmem:[%s709] sm:$0xff] %v6753
      %p6759 = scmp.lt.s32.totalorder %s36, 7
      %s6760 = scalar_select %p6759, %s36, 7
      %p6761 = scmp.lt.s32.totalorder %s35, 1
      %s6762 = scalar_select %p6761, %s35, 1
      %s6763 = smul.addr %s6760, 2
      %s6764 = sadd.s32 %s6762, %s6763
      %s6765 = smul.addr %s6764, 8
      %s6766 = scalar_lea.vmem %s18, %s6765
      %p6767 = scmp.lt.s32.totalorder %s35, 1
      %s6768 = scalar_select %p6767, %s35, 1
      %s6769 = smul.addr %s6768, 2
      %s6770 = smul.addr %s6769, 8
      %s6771 = scalar_lea.vmem %s19, %s6770
      // Predicated region
      $region97: #{dueling_lstm_forward.1} parent=91 // pred_check
        %p6772 = pneg %p465
      $region98: #{dueling_lstm_forward.1} parent=91 // pred_check_branch
        %6774 = sbr.rel (%p6772) target = $region100
      $region99: #{dueling_lstm_forward.1} parent=91 // pred_region
        _
      $region100: #{dueling_lstm_forward.1} parent=91 // pred_fallthru
        _
      // Predicated region
      $region101: #{dueling_lstm_forward.1} parent=91 // pred_check
        %p6775 = pneg %p491
      $region102: #{dueling_lstm_forward.1} parent=91 // pred_check_branch
        %6777 = sbr.rel (%p6775) target = $region104
      $region103: #{dueling_lstm_forward.1} parent=91 // pred_region
        _
      $region104: #{dueling_lstm_forward.1} parent=91 // pred_fallthru
        _
    $region92: #{dueling_lstm_forward.1} parent=5 // pred_fallthru
      _
    %p6778 = scmp.le.s32.totalorder 2, %s26
    // Predicated region
    $region105: #{dueling_lstm_forward.1} parent=5 // pred_check
      %p6779 = pneg %p6778
    $region106: #{dueling_lstm_forward.1} parent=5 // pred_check_branch
      %6781 = sbr.rel (%p6779) target = $region108
    $region107: #{dueling_lstm_forward.1} parent=5 // pred_region
      %s6782 = ssub.s32 %s26, 2
      // Predicated region
      $region109: #{dueling_lstm_forward.1} parent=107 // pred_check
        %p6783 = pneg %p471
      $region110: #{dueling_lstm_forward.1} parent=107 // pred_check_branch
        %6785 = sbr.rel (%p6783) target = $region112
      $region111: #{dueling_lstm_forward.1} parent=107 // pred_region
        %p6786 = scmp.lt.s32.totalorder %s38, 7
        %s6787 = scalar_select %p6786, %s38, 7
        %p6788 = scmp.lt.s32.totalorder %s37, 1
        %s6789 = scalar_select %p6788, %s37, 1
        %s6790 = smul.addr %s6787, 2
        %s6791 = sadd.s32 %s6789, %s6790
        %s6792 = smul.addr %s6791, 8
        %s6793 = scalar_lea.vmem %s18, %s6792
      $region112: #{dueling_lstm_forward.1} parent=107 // pred_fallthru
        _
      // Predicated region
      $region113: #{dueling_lstm_forward.1} parent=107 // pred_check
        %p6794 = pneg %p497
      $region114: #{dueling_lstm_forward.1} parent=107 // pred_check_branch
        %6796 = sbr.rel (%p6794) target = $region116
      $region115: #{dueling_lstm_forward.1} parent=107 // pred_region
        %p6797 = scmp.lt.s32.totalorder %s37, 1
        %s6798 = scalar_select %p6797, %s37, 1
        %s6799 = smul.addr %s6798, 2
        %s6800 = smul.addr %s6799, 8
        %s6801 = scalar_lea.vmem %s19, %s6800
      $region116: #{dueling_lstm_forward.1} parent=107 // pred_fallthru
        _
    $region108: #{dueling_lstm_forward.1} parent=5 // pred_fallthru
      _
  $region6: #{dueling_lstm_forward.1} parent=0 // loop_footer
    %s30 = sadd.s32 1, %s26
  $region7: #{dueling_lstm_forward.1} parent=0 // loop_footer_branch
    %25 = sbr.rel target = $region3
  $region8: #{dueling_lstm_forward.1} parent=0 // loop_exit
    _

</llo_original>
